<compile_context>
chip_gen: v7x
topology: tpu7x:2x2x1
jax: 0.10.0
libtpu: 0.0.40
codegen_flags: <defaults>
</compile_context>

<pallas_src>
import functools

import jax
import jax.numpy as jnp
from jax.experimental import pallas as pl
from jax.experimental.pallas import tpu as pltpu

# Logical (PyTorch) hidden sizes and their 128-lane-padded counterparts.
H1, H2 = 400, 300
H1P, H2P = 512, 384
SUB = 64  # rows per in-kernel sub-block (keeps h1 at 32 vregs: no spills)


def _round_up(x, m):
    return (x + m - 1) // m * m


def _cdiv(a, b):
    return -(-a // b)


def qfunc_kernel(x_ref, w1_ref, b1_ref, w2_ref, b2_ref, w3_ref, b3_ref,
                 o_ref, *, precision):
    """One (tb, KP) batch tile of the fused 3-layer MLP.

    h1 = relu(x @ W1 + b1); h2 = relu(h1 @ W2 + b2);
    q  = sum(h2 * w3_row, -1) + b3   (VPU multiply + XLU lane reduction,
                                      no 1/256-utilized MXU tile)
    Processed in SUB(=64)-row sub-blocks so live activations stay inside the
    vreg file.  Padded batch rows produce bias-only garbage rows that the
    wrapper slices off.
    """
    n_sub = o_ref.shape[1]
    mm_dtype = w1_ref.dtype

    # Hoist bias / final-layer loads out of the sub-block loop.
    b1 = b1_ref[...]
    b2 = b2_ref[...]
    w3 = w3_ref[...]
    b3 = b3_ref[0, 0]

    def body(s, carry):
        r0 = pl.multiple_of(s * SUB, SUB)
        x = x_ref[pl.ds(r0, SUB), :]
        h1 = jnp.dot(x.astype(mm_dtype), w1_ref[...],
                     preferred_element_type=jnp.float32, precision=precision)
        h1 = jnp.maximum(h1 + b1, 0.0)
        h2 = jnp.dot(h1.astype(mm_dtype), w2_ref[...],
                     preferred_element_type=jnp.float32, precision=precision)
        h2 = jnp.maximum(h2 + b2, 0.0)
        q = jnp.sum(h2 * w3, axis=-1) + b3            # (SUB,)
        o_ref[0, s, :] = q.astype(o_ref.dtype)        # one lane-major store
        return carry

    jax.lax.fori_loop(0, n_sub, body, 0, unroll=True)


def q_func_forward(state, inp, kernel_params, *, max_block_rows=512):
    """state: (B, N_state), inp: (B, N_input) -> (B, 1) float32."""
    w1p, b1p, w2p, b2p, w3row, b3p = kernel_params
    B = state.shape[0]
    d_in = state.shape[1] + inp.shape[1]
    KP = w1p.shape[0]
    assert d_in <= KP, "padded K dim too small for state+input"

    # --- batch tiling -------------------------------------------------------
    # Enough grid steps that each tile <= max_block_rows, and >= 2 steps
    # whenever the batch can be split (keeps both v7x TensorCores busy);
    # tiles are balanced so the last step is not mostly padding.
    n_steps = _cdiv(B, max_block_rows)
    if B >= 2 * SUB:
        n_steps = max(n_steps, 2)
    tb = _round_up(_cdiv(B, n_steps), SUB)
    grid = _cdiv(B, tb)
    b_pad = grid * tb
    n_sub = tb // SUB

    # Zero-padded [state | action] slab.  Padded K-columns multiply zero W1
    # rows (inert); padded batch rows compute bias-only garbage q values that
    # are sliced off below -- out[B:] is NOT valid data.
    x = jnp.concatenate([state, inp], axis=1)
    x = jnp.pad(x, ((0, b_pad - B), (0, KP - d_in)))

    mm_dtype = w1p.dtype
    precision = (None if mm_dtype == jnp.bfloat16
                 else jax.lax.Precision.HIGHEST)

    # Constant index_map => weights/biases stay VMEM-resident across the grid.
    resident = lambda shape: pl.BlockSpec(shape, lambda i: (0, 0))

    itemsize = jnp.dtype(mm_dtype).itemsize
    cost = pl.CostEstimate(
        flops=2 * b_pad * (KP * H1P + H1P * H2P + H2P),
        transcendentals=0,
        bytes_accessed=(x.size * 4
                        + (KP * H1P + H1P * H2P) * itemsize
                        + (H1P + 2 * H2P + 1) * 4
                        + b_pad * 4),
    )

    out = pl.pallas_call(
        functools.partial(qfunc_kernel, precision=precision),
        out_shape=jax.ShapeDtypeStruct((grid, n_sub, SUB), jnp.float32),
        grid=(grid,),
        in_specs=[
            pl.BlockSpec((tb, KP), lambda i: (i, 0)),   # [state|action] tile
            resident((KP, H1P)),                        # W1 (padded)
            resident((1, H1P)),                         # b1 (padded)
            resident((H1P, H2P)),                       # W2 (padded)
            resident((1, H2P)),                         # b2 (padded)
            resident((1, H2P)),                         # w3 row (padded)
            resident((1, 1)),                           # b3
        ],
        out_specs=pl.BlockSpec((1, n_sub, SUB), lambda i: (i, 0, 0)),
        compiler_params=pltpu.CompilerParams(
            dimension_semantics=("parallel",)),
        cost_estimate=cost,
    )(x, w1p, b1p, w2p, b2p, w3row, b3p)

    return out.reshape(b_pad, 1)[:B]


def init_params(key, n_state, n_input):
    """nn.Linear-style U(-1/sqrt(fan_in)) init; weights stored (in, out)."""
    d_in = n_state + n_input
    ks = jax.random.split(key, 6)

    def lin(kw, kb, fan_in, fan_out):
        bound = 1.0 / jnp.sqrt(jnp.float32(fan_in))
        w = jax.random.uniform(kw, (fan_in, fan_out), jnp.float32, -bound, bound)
        b = jax.random.uniform(kb, (1, fan_out), jnp.float32, -bound, bound)
        return w, b

    w1, b1 = lin(ks[0], ks[1], d_in, H1)
    w2, b2 = lin(ks[2], ks[3], H1, H2)
    w3, b3 = lin(ks[4], ks[5], H2, 1)
    return (w1, b1, w2, b2, w3, b3)


def prepare_params(params, *, use_bf16=False):
    """Zero-pad feature dims to 128-lane multiples (d_in->128, 400->512,
    300->384).  use_bf16=True stores the matmul weights in bf16; the kernel
    then casts activations to bf16 for the MXU operands (faster, looser
    numerics)."""
    w1, b1, w2, b2, w3, b3 = params
    d_in = w1.shape[0]
    kp = max(128, _round_up(d_in, 128))
    w1p = jnp.zeros((kp, H1P), jnp.float32).at[:d_in, :H1].set(w1)
    b1p = jnp.zeros((1, H1P), jnp.float32).at[:, :H1].set(b1)
    w2p = jnp.zeros((H1P, H2P), jnp.float32).at[:H1, :H2].set(w2)
    b2p = jnp.zeros((1, H2P), jnp.float32).at[:, :H2].set(b2)
    w3row = jnp.zeros((1, H2P), jnp.float32).at[:, :H2].set(w3.reshape(1, H2))
    b3p = b3.reshape(1, 1)
    if use_bf16:
        w1p = w1p.astype(jnp.bfloat16)
        w2p = w2p.astype(jnp.bfloat16)
    return (w1p, b1p, w2p, b2p, w3row, b3p)


if __name__ == "__main__":
    key = jax.random.PRNGKey(0)
    k_p, k_s, k_a = jax.random.split(key, 3)

    B, N_state, N_input = 2, 8, 4
    params = init_params(k_p, N_state, N_input)

    state = jax.random.normal(k_s, (B, N_state), jnp.float32)
    action = jax.random.normal(k_a, (B, N_input), jnp.float32)

    # Pure-JAX reference of the same math (unpadded weights, f32 precision).
    w1, b1, w2, b2, w3, b3 = params
    xc = jnp.concatenate([state, action], axis=1)
    hp = jax.lax.Precision.HIGHEST
    ref = jnp.maximum(jnp.dot(xc, w1, precision=hp) + b1, 0.0)
    ref = jnp.maximum(jnp.dot(ref, w2, precision=hp) + b2, 0.0)
    ref = jnp.dot(ref, w3, precision=hp) + b3

    # Default f32 (Precision.HIGHEST) kernel.
    kparams = prepare_params(params)
    q = q_func_forward(state, action, kparams)
    jax.block_until_ready(q)
    assert q.shape == (B, 1)
    assert jnp.allclose(q, ref, atol=1e-4, rtol=1e-4), float(
        jnp.max(jnp.abs(q - ref)))

    # Optional bf16-operand mode (faster MXU path, relaxed tolerance).
    kparams_bf16 = prepare_params(params, use_bf16=True)
    q16 = q_func_forward(state, action, kparams_bf16)
    jax.block_until_ready(q16)
    assert q16.shape == (B, 1)
    assert jnp.allclose(q16, ref, atol=1e-1, rtol=1e-1), float(
        jnp.max(jnp.abs(q16 - ref)))

    print("KERNEL_OK")
</pallas_src>

<mosaic_0001>
module attributes {stable_mosaic.version = 11 : i64} {
  func.func @qfunc_kernel(%arg0: i32, %arg1: memref<64x128xf32, #tpu.memory_space<vmem>>, %arg2: memref<128x512xf32, #tpu.memory_space<vmem>>, %arg3: memref<1x512xf32, #tpu.memory_space<vmem>>, %arg4: memref<512x384xf32, #tpu.memory_space<vmem>>, %arg5: memref<1x384xf32, #tpu.memory_space<vmem>>, %arg6: memref<1x384xf32, #tpu.memory_space<vmem>>, %arg7: memref<1x1xf32, #tpu.memory_space<vmem>>, %arg8: memref<1x1x64xf32, #tpu.memory_space<vmem>>) attributes {dimension_semantics = [#tpu.dimension_semantics<parallel>], iteration_bounds = array<i64: 1>, scalar_prefetch = 0 : i64, scratch_operands = 0 : i64, tpu.core_type = #tpu.core_type<tc>, window_params = [{transform_indices = @transform_0, window_bounds = array<i64: 64, 128>}, {pipeline_mode = #tpu.pipeline_mode<synchronous>, transform_indices = @transform_1, window_bounds = array<i64: 128, 512>}, {pipeline_mode = #tpu.pipeline_mode<synchronous>, transform_indices = @transform_2, window_bounds = array<i64: 1, 512>}, {pipeline_mode = #tpu.pipeline_mode<synchronous>, transform_indices = @transform_3, window_bounds = array<i64: 512, 384>}, {pipeline_mode = #tpu.pipeline_mode<synchronous>, transform_indices = @transform_4, window_bounds = array<i64: 1, 384>}, {pipeline_mode = #tpu.pipeline_mode<synchronous>, transform_indices = @transform_5, window_bounds = array<i64: 1, 384>}, {pipeline_mode = #tpu.pipeline_mode<synchronous>, transform_indices = @transform_6, window_bounds = array<i64: 1, 1>}, {transform_indices = @transform_7, window_bounds = array<i64: 1, 1, 64>}]} {
    %c0 = arith.constant 0 : index
    %c0_0 = arith.constant 0 : index
    %0 = vector.load %arg3[%c0, %c0_0] : memref<1x512xf32, #tpu.memory_space<vmem>>, vector<1x512xf32>
    %c0_1 = arith.constant 0 : index
    %c0_2 = arith.constant 0 : index
    %1 = vector.load %arg5[%c0_1, %c0_2] : memref<1x384xf32, #tpu.memory_space<vmem>>, vector<1x384xf32>
    %c0_3 = arith.constant 0 : index
    %c0_4 = arith.constant 0 : index
    %2 = vector.load %arg6[%c0_3, %c0_4] : memref<1x384xf32, #tpu.memory_space<vmem>>, vector<1x384xf32>
    %c0_5 = arith.constant 0 : index
    %c0_6 = arith.constant 0 : index
    %3 = vector.load %arg7[%c0_5, %c0_6] : memref<1x1xf32, #tpu.memory_space<vmem>>, vector<1x1xf32>
    %4 = vector.extract %3[0, 0] : f32 from vector<1x1xf32>
    %c0_i32 = arith.constant 0 : i32
    %c64_i32 = arith.constant 64 : i32
    %5 = arith.muli %c0_i32, %c64_i32 : i32
    %6 = tpu.assume_multiple %5, 64 : i32
    %7 = arith.index_cast %6 : i32 to index
    %c0_7 = arith.constant 0 : index
    %8 = vector.load %arg1[%7, %c0_7] : memref<64x128xf32, #tpu.memory_space<vmem>>, vector<64x128xf32>
    %c0_8 = arith.constant 0 : index
    %c0_9 = arith.constant 0 : index
    %9 = vector.load %arg2[%c0_8, %c0_9] : memref<128x512xf32, #tpu.memory_space<vmem>>, vector<128x512xf32>
    %cst = arith.constant dense<0.000000e+00> : vector<64x512xf32>
    %10 = tpu.matmul %8, %9, %cst {dimension_numbers = #tpu.dot_dimension_numbers<[1], [0], [0], [1], [0, 0, 1, 1], [], []>, precision = #tpu.contract_precision<fp32>} : vector<64x128xf32>, vector<128x512xf32>, vector<64x512xf32> -> vector<64x512xf32>
    %11 = vector.broadcast %0 : vector<1x512xf32> to vector<64x512xf32>
    %12 = arith.addf %10, %11 : vector<64x512xf32>
    %cst_10 = arith.constant 0.000000e+00 : f32
    %13 = vector.broadcast %cst_10 : f32 to vector<64x512xf32>
    %14 = arith.maximumf %12, %13 : vector<64x512xf32>
    %c0_11 = arith.constant 0 : index
    %c0_12 = arith.constant 0 : index
    %15 = vector.load %arg4[%c0_11, %c0_12] : memref<512x384xf32, #tpu.memory_space<vmem>>, vector<512x384xf32>
    %cst_13 = arith.constant dense<0.000000e+00> : vector<64x384xf32>
    %16 = tpu.matmul %14, %15, %cst_13 {dimension_numbers = #tpu.dot_dimension_numbers<[1], [0], [0], [1], [0, 0, 1, 1], [], []>, precision = #tpu.contract_precision<fp32>} : vector<64x512xf32>, vector<512x384xf32>, vector<64x384xf32> -> vector<64x384xf32>
    %17 = vector.broadcast %1 : vector<1x384xf32> to vector<64x384xf32>
    %18 = arith.addf %16, %17 : vector<64x384xf32>
    %cst_14 = arith.constant 0.000000e+00 : f32
    %19 = vector.broadcast %cst_14 : f32 to vector<64x384xf32>
    %20 = arith.maximumf %18, %19 : vector<64x384xf32>
    %21 = vector.broadcast %2 : vector<1x384xf32> to vector<64x384xf32>
    %22 = arith.mulf %20, %21 : vector<64x384xf32>
    %cst_15 = arith.constant dense<0.000000e+00> : vector<64xf32>
    %23 = vector.multi_reduction <add>, %22, %cst_15 [1] : vector<64x384xf32> to vector<64xf32>
    %24 = vector.broadcast %4 : f32 to vector<64xf32>
    %25 = arith.addf %23, %24 : vector<64xf32>
    %c0_16 = arith.constant 0 : index
    %26 = arith.index_cast %c0_i32 : i32 to index
    %c0_17 = arith.constant 0 : index
    %27 = vector.load %arg8[%c0_16, %26, %c0_17] : memref<1x1x64xf32, #tpu.memory_space<vmem>>, vector<1x1x64xf32>
    %28 = vector.shape_cast %27 : vector<1x1x64xf32> to vector<64xf32>
    %29 = vector.shape_cast %25 : vector<64xf32> to vector<1x1x64xf32>
    tpu.vector_store %arg8[%c0_16, %26, %c0_17], %29 {strides = array<i32>} : memref<1x1x64xf32, #tpu.memory_space<vmem>>, vector<1x1x64xf32>,
    %c1_i32 = arith.constant 1 : i32
    return
  }
  func.func @transform_0(%arg0: i32) -> (i32, i32) {
    %c0_i32 = arith.constant 0 : i32
    %c0_i32_0 = arith.constant 0 : i32
    return %arg0, %c0_i32 : i32, i32
  }
  func.func @transform_1(%arg0: i32) -> (i32, i32) {
    %c0_i32 = arith.constant 0 : i32
    %c0_i32_0 = arith.constant 0 : i32
    %c0_i32_1 = arith.constant 0 : i32
    return %c0_i32, %c0_i32_0 : i32, i32
  }
  func.func @transform_2(%arg0: i32) -> (i32, i32) {
    %c0_i32 = arith.constant 0 : i32
    %c0_i32_0 = arith.constant 0 : i32
    %c0_i32_1 = arith.constant 0 : i32
    return %c0_i32, %c0_i32_0 : i32, i32
  }
  func.func @transform_3(%arg0: i32) -> (i32, i32) {
    %c0_i32 = arith.constant 0 : i32
    %c0_i32_0 = arith.constant 0 : i32
    %c0_i32_1 = arith.constant 0 : i32
    return %c0_i32, %c0_i32_0 : i32, i32
  }
  func.func @transform_4(%arg0: i32) -> (i32, i32) {
    %c0_i32 = arith.constant 0 : i32
    %c0_i32_0 = arith.constant 0 : i32
    %c0_i32_1 = arith.constant 0 : i32
    return %c0_i32, %c0_i32_0 : i32, i32
  }
  func.func @transform_5(%arg0: i32) -> (i32, i32) {
    %c0_i32 = arith.constant 0 : i32
    %c0_i32_0 = arith.constant 0 : i32
    %c0_i32_1 = arith.constant 0 : i32
    return %c0_i32, %c0_i32_0 : i32, i32
  }
  func.func @transform_6(%arg0: i32) -> (i32, i32) {
    %c0_i32 = arith.constant 0 : i32
    %c0_i32_0 = arith.constant 0 : i32
    %c0_i32_1 = arith.constant 0 : i32
    return %c0_i32, %c0_i32_0 : i32, i32
  }
  func.func @transform_7(%arg0: i32) -> (i32, i32, i32) {
    %c0_i32 = arith.constant 0 : i32
    %c0_i32_0 = arith.constant 0 : i32
    %c0_i32_1 = arith.constant 0 : i32
    return %arg0, %c0_i32, %c0_i32_0 : i32, i32, i32
  }
}

</mosaic_0001>

<llo_original>
// kernel: tpu_custom_call.1
$region0: #{tpu_custom_call.1}
  #allocation0 [shape = 'u32[]', space=smem, size = 0x4, offset = 0x4, fixed_abs, tag = 'smem constant byte address 0x4 - core index']
  #allocation1 [shape = 'u32[144,128]{1,0:T(1,128)}', space=vmem, size = 0x12000, scoped, tag = 'internal scratch']
  #allocation2 [shape = 'f32[1,1]{1,0:T(1,128)S(1)}', space=vmem, size = 0x200, scoped, tag = 'scoped memory for tpu_custom_call.1']
  %s0 = inlined_call_operand.hbm [shape: f32[64,128], index: 0, kind: input, shape index: {}]
  %s1 = inlined_call_operand.hbm [shape: f32[128,512], index: 1, kind: input, shape index: {}]
  %s2 = inlined_call_operand.vmem [shape: f32[1,512], index: 2, kind: input, shape index: {}]
  %s3 = inlined_call_operand.hbm [shape: f32[512,384], index: 3, kind: input, shape index: {}]
  %s4 = inlined_call_operand.vmem [shape: f32[1,384], index: 4, kind: input, shape index: {}]
  %s5 = inlined_call_operand.vmem [shape: f32[1,384], index: 5, kind: input, shape index: {}]
  %s6 = inlined_call_operand.<no memory space> [shape: f32[1,1], index: 6, kind: input, shape index: {}]
  %s7 = inlined_call_operand.hbm [shape: f32[1,1,64], index: 7, kind: output, shape index: {}]
  %s8 = sld [smem:[#allocation0]]
  $region50: #{tpu_custom_call.1} parent=0
    _
  %s10 = ssub.s32 1, %s8
  %s11 = scalar_select 0, %s10, %s8
  %v12 = vstv %s6
  %13 = vst [vmem:[#allocation2] sm:$0x1] %v12
  $region1: #{tpu_custom_call.1} parent=0
    #allocation3 [shape = 'u8[32768]{0}', space=vmem, size = 0x8000, scoped, tag = 'input window, operand 0, single buffered']
    #allocation4 [shape = 's32[1]{0}', space=sflag, size = 0x4, scoped, tag = 'scoped memory for tpu_custom_call.1']
    #allocation5 [shape = 's32[1]{0}', space=sflag, size = 0x4, scoped, tag = 'scoped memory for tpu_custom_call.1']
    #allocation6 [shape = 'u8[262144]{0}', space=vmem, size = 0x40000, scoped, tag = 'input window, operand 1, single buffered']
    #allocation7 [shape = 's32[1]{0}', space=sflag, size = 0x4, scoped, tag = 'scoped memory for tpu_custom_call.1']
    #allocation8 [shape = 'u8[786432]{0}', space=vmem, size = 0xc0000, scoped, tag = 'input window, operand 3, single buffered']
    #allocation9 [shape = 'u8[512]{0}', space=vmem, size = 0x400, scoped, tag = 'output window, operand 0, single buffered']
    %14 = vsyncpa [#allocation4], 0
    %15 = vsyncpa [#allocation7], 0
    %16 = vsyncpa [#allocation5], 0
    // Predicated region
    $region2: #{tpu_custom_call.1} parent=1 // pred_check
      _
    $region3: #{tpu_custom_call.1} parent=1 // pred_check_branch
      %18 = sbr.rel (0) target = $region5
    $region4: #{tpu_custom_call.1} parent=1 // pred_region
      %s20 = ssub.s32 1024, 1024
      %21 = vsyncadd [#allocation4], %s20
      %s22 = sshll.u32 [#allocation3], 4
      %s23 = int_to_ptr.vmem [resolvable:$true] %s22
      %28 = dma.hbm_to_vmem [thread:$0]  %s0, 1024, %s23, [#allocation4], 128, 128, 8
    $region5: #{tpu_custom_call.1} parent=1 // pred_fallthru
      _
    // Predicated region
    $region6: #{tpu_custom_call.1} parent=1 // pred_check
      _
    $region7: #{tpu_custom_call.1} parent=1 // pred_check_branch
      %30 = sbr.rel (0) target = $region9
    $region8: #{tpu_custom_call.1} parent=1 // pred_region
      %s32 = ssub.s32 8192, 8192
      %33 = vsyncadd [#allocation7], %s32
      %s34 = sshll.u32 [#allocation6], 4
      %s35 = int_to_ptr.vmem [resolvable:$true] %s34
      %40 = dma.hbm_to_vmem [thread:$0]  %s1, 8192, %s35, [#allocation7], 512, 512, 32
    $region9: #{tpu_custom_call.1} parent=1 // pred_fallthru
      _
    // Predicated region
    $region10: #{tpu_custom_call.1} parent=1 // pred_check
      _
    $region11: #{tpu_custom_call.1} parent=1 // pred_check_branch
      %42 = sbr.rel (0) target = $region13
    $region12: #{tpu_custom_call.1} parent=1 // pred_region
      _
    $region13: #{tpu_custom_call.1} parent=1 // pred_fallthru
      _
    // Predicated region
    $region14: #{tpu_custom_call.1} parent=1 // pred_check
      _
    $region15: #{tpu_custom_call.1} parent=1 // pred_check_branch
      %44 = sbr.rel (0) target = $region17
    $region16: #{tpu_custom_call.1} parent=1 // pred_region
      %s46 = ssub.s32 24576, 24576
      %47 = vsyncadd [#allocation7], %s46
      %s48 = sshll.u32 [#allocation8], 4
      %s49 = int_to_ptr.vmem [resolvable:$true] %s48
      %54 = dma.hbm_to_vmem [thread:$0]  %s3, 24576, %s49, [#allocation7], 384, 384, 24
    $region17: #{tpu_custom_call.1} parent=1 // pred_fallthru
      _
    // Predicated region
    $region18: #{tpu_custom_call.1} parent=1 // pred_check
      _
    $region19: #{tpu_custom_call.1} parent=1 // pred_check_branch
      %56 = sbr.rel (0) target = $region21
    $region20: #{tpu_custom_call.1} parent=1 // pred_region
      _
    $region21: #{tpu_custom_call.1} parent=1 // pred_fallthru
      _
    // Predicated region
    $region22: #{tpu_custom_call.1} parent=1 // pred_check
      _
    $region23: #{tpu_custom_call.1} parent=1 // pred_check_branch
      %58 = sbr.rel (0) target = $region25
    $region24: #{tpu_custom_call.1} parent=1 // pred_region
      _
    $region25: #{tpu_custom_call.1} parent=1 // pred_fallthru
      _
    // Predicated region
    $region26: #{tpu_custom_call.1} parent=1 // pred_check
      _
    $region27: #{tpu_custom_call.1} parent=1 // pred_check_branch
      %60 = sbr.rel (0) target = $region29
    $region28: #{tpu_custom_call.1} parent=1 // pred_region
      _
    $region29: #{tpu_custom_call.1} parent=1 // pred_fallthru
      _
    // Predicated region
    $region30: #{tpu_custom_call.1} parent=1 // pred_check
      _
    $region31: #{tpu_custom_call.1} parent=1 // pred_check_branch
      %62 = sbr.rel (0) target = $region33
    $region32: #{tpu_custom_call.1} parent=1 // pred_region
      %63 = dma.done [#allocation4], 1024
    $region33: #{tpu_custom_call.1} parent=1 // pred_fallthru
      _
    // Predicated region
    $region34: #{tpu_custom_call.1} parent=1 // pred_check
      _
    $region35: #{tpu_custom_call.1} parent=1 // pred_check_branch
      %65 = sbr.rel (0) target = $region37
    $region36: #{tpu_custom_call.1} parent=1 // pred_region
      %66 = dma.done [#allocation7], 8192
    $region37: #{tpu_custom_call.1} parent=1 // pred_fallthru
      _
    // Predicated region
    $region38: #{tpu_custom_call.1} parent=1 // pred_check
      _
    $region39: #{tpu_custom_call.1} parent=1 // pred_check_branch
      %68 = sbr.rel (0) target = $region41
    $region40: #{tpu_custom_call.1} parent=1 // pred_region
      %69 = dma.done [#allocation7], 24576
    $region41: #{tpu_custom_call.1} parent=1 // pred_fallthru
      _
    %v70 = vld [vmem:[%s2] sm:$0xf]
    %v71 = vld [vmem:[%s4] sm:$0x7]
    %v72 = vld [vmem:[%s5] sm:$0x7]
    %v73 = vld [vmem:[#allocation2] sm:$0x1]
    %s74 = vtos %v73
    %v75 = vld [vmem:[#allocation3] sm:$0xff]
    %v76 = vld [vmem:[#allocation3 + $0x8] sm:$0xff]
    %v77 = vld [vmem:[#allocation3 + $0x10] sm:$0xff]
    %v78 = vld [vmem:[#allocation3 + $0x18] sm:$0xff]
    %v79 = vld [vmem:[#allocation3 + $0x20] sm:$0xff]
    %v80 = vld [vmem:[#allocation3 + $0x28] sm:$0xff]
    %v81 = vld [vmem:[#allocation3 + $0x30] sm:$0xff]
    %v82 = vld [vmem:[#allocation3 + $0x38] sm:$0xff]
    %v83 = vld [vmem:[#allocation6] sm:$0xff]
    %v84 = vld [vmem:[#allocation6 + $0x8] sm:$0xff]
    %v85 = vld [vmem:[#allocation6 + $0x10] sm:$0xff]
    %v86 = vld [vmem:[#allocation6 + $0x18] sm:$0xff]
    %v87 = vld [vmem:[#allocation6 + $0x20] sm:$0xff]
    %v88 = vld [vmem:[#allocation6 + $0x28] sm:$0xff]
    %v89 = vld [vmem:[#allocation6 + $0x30] sm:$0xff]
    %v90 = vld [vmem:[#allocation6 + $0x38] sm:$0xff]
    %v91 = vld [vmem:[#allocation6 + $0x40] sm:$0xff]
    %v92 = vld [vmem:[#allocation6 + $0x48] sm:$0xff]
    %v93 = vld [vmem:[#allocation6 + $0x50] sm:$0xff]
    %v94 = vld [vmem:[#allocation6 + $0x58] sm:$0xff]
    %v95 = vld [vmem:[#allocation6 + $0x60] sm:$0xff]
    %v96 = vld [vmem:[#allocation6 + $0x68] sm:$0xff]
    %v97 = vld [vmem:[#allocation6 + $0x70] sm:$0xff]
    %v98 = vld [vmem:[#allocation6 + $0x78] sm:$0xff]
    %v99 = vld [vmem:[#allocation6 + $0x80] sm:$0xff]
    %v100 = vld [vmem:[#allocation6 + $0x88] sm:$0xff]
    %v101 = vld [vmem:[#allocation6 + $0x90] sm:$0xff]
    %v102 = vld [vmem:[#allocation6 + $0x98] sm:$0xff]
    %v103 = vld [vmem:[#allocation6 + $0xa0] sm:$0xff]
    %v104 = vld [vmem:[#allocation6 + $0xa8] sm:$0xff]
    %v105 = vld [vmem:[#allocation6 + $0xb0] sm:$0xff]
    %v106 = vld [vmem:[#allocation6 + $0xb8] sm:$0xff]
    %v107 = vld [vmem:[#allocation6 + $0xc0] sm:$0xff]
    %v108 = vld [vmem:[#allocation6 + $0xc8] sm:$0xff]
    %v109 = vld [vmem:[#allocation6 + $0xd0] sm:$0xff]
    %v110 = vld [vmem:[#allocation6 + $0xd8] sm:$0xff]
    %v111 = vld [vmem:[#allocation6 + $0xe0] sm:$0xff]
    %v112 = vld [vmem:[#allocation6 + $0xe8] sm:$0xff]
    %v113 = vld [vmem:[#allocation6 + $0xf0] sm:$0xff]
    %v114 = vld [vmem:[#allocation6 + $0xf8] sm:$0xff]
    %v115 = vld [vmem:[#allocation6 + $0x100] sm:$0xff]
    %v116 = vld [vmem:[#allocation6 + $0x108] sm:$0xff]
    %v117 = vld [vmem:[#allocation6 + $0x110] sm:$0xff]
    %v118 = vld [vmem:[#allocation6 + $0x118] sm:$0xff]
    %v119 = vld [vmem:[#allocation6 + $0x120] sm:$0xff]
    %v120 = vld [vmem:[#allocation6 + $0x128] sm:$0xff]
    %v121 = vld [vmem:[#allocation6 + $0x130] sm:$0xff]
    %v122 = vld [vmem:[#allocation6 + $0x138] sm:$0xff]
    %v123 = vld [vmem:[#allocation6 + $0x140] sm:$0xff]
    %v124 = vld [vmem:[#allocation6 + $0x148] sm:$0xff]
    %v125 = vld [vmem:[#allocation6 + $0x150] sm:$0xff]
    %v126 = vld [vmem:[#allocation6 + $0x158] sm:$0xff]
    %v127 = vld [vmem:[#allocation6 + $0x160] sm:$0xff]
    %v128 = vld [vmem:[#allocation6 + $0x168] sm:$0xff]
    %v129 = vld [vmem:[#allocation6 + $0x170] sm:$0xff]
    %v130 = vld [vmem:[#allocation6 + $0x178] sm:$0xff]
    %v131 = vld [vmem:[#allocation6 + $0x180] sm:$0xff]
    %v132 = vld [vmem:[#allocation6 + $0x188] sm:$0xff]
    %v133 = vld [vmem:[#allocation6 + $0x190] sm:$0xff]
    %v134 = vld [vmem:[#allocation6 + $0x198] sm:$0xff]
    %v135 = vld [vmem:[#allocation6 + $0x1a0] sm:$0xff]
    %v136 = vld [vmem:[#allocation6 + $0x1a8] sm:$0xff]
    %v137 = vld [vmem:[#allocation6 + $0x1b0] sm:$0xff]
    %v138 = vld [vmem:[#allocation6 + $0x1b8] sm:$0xff]
    %v139 = vld [vmem:[#allocation6 + $0x1c0] sm:$0xff]
    %v140 = vld [vmem:[#allocation6 + $0x1c8] sm:$0xff]
    %v141 = vld [vmem:[#allocation6 + $0x1d0] sm:$0xff]
    %v142 = vld [vmem:[#allocation6 + $0x1d8] sm:$0xff]
    %v143 = vld [vmem:[#allocation6 + $0x1e0] sm:$0xff]
    %v144 = vld [vmem:[#allocation6 + $0x1e8] sm:$0xff]
    %v145 = vld [vmem:[#allocation6 + $0x1f0] sm:$0xff]
    %v146 = vld [vmem:[#allocation6 + $0x1f8] sm:$0xff]
    %v148 = vlaneseq
    %v149 = vshrl.u32 %v148, 7
    %v150 = vsub.s32 0, %v149
    %v151 = vrot.slane %v70, %v150
    %v152 = vlaneseq
    %v153 = vshrl.u32 %v152, 7
    %v154 = vsub.s32 1, %v153
    %v155 = vrot.slane %v70, %v154
    %v156 = vlaneseq
    %v157 = vshrl.u32 %v156, 7
    %v158 = vsub.s32 2, %v157
    %v159 = vrot.slane %v70, %v158
    %v160 = vlaneseq
    %v161 = vshrl.u32 %v160, 7
    %v162 = vsub.s32 3, %v161
    %v163 = vrot.slane %v70, %v162
    %v168 = vand.u32 %v84, 4294901760
    %169 = vmatprep.subr.mxu0 %v168
    %v170 = vand.u32 %v83, 4294901760
    %171 = vmatpush1.msra.mxu0 %v170
    %v172 = vand.u32 %v88, 4294901760
    %173 = vmatprep.subr.mxu0 %v172
    %v174 = vand.u32 %v87, 4294901760
    %175 = vmatpush1.msra.mxu0 %v174
    %v176 = vand.u32 %v92, 4294901760
    %177 = vmatprep.subr.mxu0 %v176
    %v178 = vand.u32 %v91, 4294901760
    %179 = vmatpush1.msra.mxu0 %v178
    %v180 = vand.u32 %v96, 4294901760
    %181 = vmatprep.subr.mxu0 %v180
    %v182 = vand.u32 %v95, 4294901760
    %183 = vmatpush1.msra.mxu0 %v182
    %v184 = vand.u32 %v100, 4294901760
    %185 = vmatprep.subr.mxu0 %v184
    %v186 = vand.u32 %v99, 4294901760
    %187 = vmatpush1.msra.mxu0 %v186
    %v188 = vand.u32 %v104, 4294901760
    %189 = vmatprep.subr.mxu0 %v188
    %v190 = vand.u32 %v103, 4294901760
    %191 = vmatpush1.msra.mxu0 %v190
    %v192 = vand.u32 %v108, 4294901760
    %193 = vmatprep.subr.mxu0 %v192
    %v194 = vand.u32 %v107, 4294901760
    %195 = vmatpush1.msra.mxu0 %v194
    %v196 = vand.u32 %v112, 4294901760
    %197 = vmatprep.subr.mxu0 %v196
    %v198 = vand.u32 %v111, 4294901760
    %199 = vmatpush1.msra.mxu0 %v198
    %v200 = vand.u32 %v116, 4294901760
    %201 = vmatprep.subr.mxu0 %v200
    %v202 = vand.u32 %v115, 4294901760
    %203 = vmatpush1.msra.mxu0 %v202
    %v204 = vand.u32 %v120, 4294901760
    %205 = vmatprep.subr.mxu0 %v204
    %v206 = vand.u32 %v119, 4294901760
    %207 = vmatpush1.msra.mxu0 %v206
    %v208 = vand.u32 %v124, 4294901760
    %209 = vmatprep.subr.mxu0 %v208
    %v210 = vand.u32 %v123, 4294901760
    %211 = vmatpush1.msra.mxu0 %v210
    %v212 = vand.u32 %v128, 4294901760
    %213 = vmatprep.subr.mxu0 %v212
    %v214 = vand.u32 %v127, 4294901760
    %215 = vmatpush1.msra.mxu0 %v214
    %v216 = vand.u32 %v132, 4294901760
    %217 = vmatprep.subr.mxu0 %v216
    %v218 = vand.u32 %v131, 4294901760
    %219 = vmatpush1.msra.mxu0 %v218
    %v220 = vand.u32 %v136, 4294901760
    %221 = vmatprep.subr.mxu0 %v220
    %v222 = vand.u32 %v135, 4294901760
    %223 = vmatpush1.msra.mxu0 %v222
    %v224 = vand.u32 %v140, 4294901760
    %225 = vmatprep.subr.mxu0 %v224
    %v226 = vand.u32 %v139, 4294901760
    %227 = vmatpush1.msra.mxu0 %v226
    %v228 = vand.u32 %v144, 4294901760
    %229 = vmatprep.subr.mxu0 %v228
    %v230 = vand.u32 %v143, 4294901760
    %231 = vmatpush1.msra.mxu0 %v230
    %232 = vmatprep.subr.mxu0 0.0
    %233 = vmatpush1.msra.mxu0 0.0
    %234 = vmatprep.subr.mxu0 0.0
    %235 = vmatpush1.msra.mxu0 0.0
    %236 = vmatprep.subr.mxu0 0.0
    %237 = vmatpush1.msra.mxu0 0.0
    %238 = vmatprep.subr.mxu0 0.0
    %239 = vmatpush1.msra.mxu0 0.0
    %240 = vmatprep.subr.mxu0 0.0
    %241 = vmatpush1.msra.mxu0 0.0
    %242 = vmatprep.subr.mxu0 0.0
    %243 = vmatpush1.msra.mxu0 0.0
    %244 = vmatprep.subr.mxu0 0.0
    %245 = vmatpush1.msra.mxu0 0.0
    %246 = vmatprep.subr.mxu0 0.0
    %247 = vmatpush1.msra.mxu0 0.0
    %248 = vmatprep.subr.mxu0 0.0
    %249 = vmatpush1.msra.mxu0 0.0
    %250 = vmatprep.subr.mxu0 0.0
    %251 = vmatpush1.msra.mxu0 0.0
    %252 = vmatprep.subr.mxu0 0.0
    %253 = vmatpush1.msra.mxu0 0.0
    %254 = vmatprep.subr.mxu0 0.0
    %255 = vmatpush1.msra.mxu0 0.0
    %256 = vmatprep.subr.mxu0 0.0
    %257 = vmatpush1.msra.mxu0 0.0
    %258 = vmatprep.subr.mxu0 0.0
    %259 = vmatpush1.msra.mxu0 0.0
    %260 = vmatprep.subr.mxu0 0.0
    %261 = vmatpush1.msra.mxu0 0.0
    %262 = vmatprep.subr.mxu0 0.0
    %263 = vmatpush1.msra.mxu0 0.0
    %264 = vmatprep.mubr.f32.mxu0 0.0
    %v265 = vand.u32 %v75, 4294901760
    %v266 = vsub.f32 %v75, %v265
    %v267 = vand.u32 %v266, 4294901760
    %v268 = vsub.f32 %v266, %v267
    %v269 = vand.u32 %v268, 4294901760
    %270 = vmatmul.mubr.f32.gmra.mrb[0].mxu0 %v269
    %v271 = vpop.f32.mrb[0].mxu0
    %v272 = vadd.f32 %v151, %v271
    %v273 = vpop.f32.mrb[0].mxu0
    %v274 = vadd.f32 %v155, %v273
    %275 = vmatprep.mubr.f32.mxu0 0.0
    %v276 = vand.u32 %v76, 4294901760
    %v277 = vsub.f32 %v76, %v276
    %v278 = vand.u32 %v277, 4294901760
    %v279 = vsub.f32 %v277, %v278
    %v280 = vand.u32 %v279, 4294901760
    %281 = vmatmul.mubr.f32.gmra.mrb[0].mxu0 %v280
    %v282 = vpop.f32.mrb[0].mxu0
    %v283 = vadd.f32 %v151, %v282
    %v284 = vpop.f32.mrb[0].mxu0
    %v285 = vadd.f32 %v155, %v284
    %286 = vmatprep.mubr.f32.mxu0 0.0
    %v287 = vand.u32 %v77, 4294901760
    %v288 = vsub.f32 %v77, %v287
    %v289 = vand.u32 %v288, 4294901760
    %v290 = vsub.f32 %v288, %v289
    %v291 = vand.u32 %v290, 4294901760
    %292 = vmatmul.mubr.f32.gmra.mrb[0].mxu0 %v291
    %v293 = vpop.f32.mrb[0].mxu0
    %v294 = vadd.f32 %v151, %v293
    %v295 = vpop.f32.mrb[0].mxu0
    %v296 = vadd.f32 %v155, %v295
    %297 = vmatprep.mubr.f32.mxu0 0.0
    %v298 = vand.u32 %v78, 4294901760
    %v299 = vsub.f32 %v78, %v298
    %v300 = vand.u32 %v299, 4294901760
    %v301 = vsub.f32 %v299, %v300
    %v302 = vand.u32 %v301, 4294901760
    %303 = vmatmul.mubr.f32.gmra.mrb[0].mxu0 %v302
    %v304 = vpop.f32.mrb[0].mxu0
    %v305 = vadd.f32 %v151, %v304
    %v306 = vpop.f32.mrb[0].mxu0
    %v307 = vadd.f32 %v155, %v306
    %308 = vmatprep.mubr.f32.mxu0 0.0
    %v309 = vand.u32 %v79, 4294901760
    %v310 = vsub.f32 %v79, %v309
    %v311 = vand.u32 %v310, 4294901760
    %v312 = vsub.f32 %v310, %v311
    %v313 = vand.u32 %v312, 4294901760
    %314 = vmatmul.mubr.f32.gmra.mrb[0].mxu0 %v313
    %v315 = vpop.f32.mrb[0].mxu0
    %v316 = vadd.f32 %v151, %v315
    %v317 = vpop.f32.mrb[0].mxu0
    %v318 = vadd.f32 %v155, %v317
    %319 = vmatprep.mubr.f32.mxu0 0.0
    %v320 = vand.u32 %v80, 4294901760
    %v321 = vsub.f32 %v80, %v320
    %v322 = vand.u32 %v321, 4294901760
    %v323 = vsub.f32 %v321, %v322
    %v324 = vand.u32 %v323, 4294901760
    %325 = vmatmul.mubr.f32.gmra.mrb[0].mxu0 %v324
    %v326 = vpop.f32.mrb[0].mxu0
    %v327 = vadd.f32 %v151, %v326
    %v328 = vpop.f32.mrb[0].mxu0
    %v329 = vadd.f32 %v155, %v328
    %330 = vmatprep.mubr.f32.mxu0 0.0
    %v331 = vand.u32 %v81, 4294901760
    %v332 = vsub.f32 %v81, %v331
    %v333 = vand.u32 %v332, 4294901760
    %v334 = vsub.f32 %v332, %v333
    %v335 = vand.u32 %v334, 4294901760
    %336 = vmatmul.mubr.f32.gmra.mrb[0].mxu0 %v335
    %v337 = vpop.f32.mrb[0].mxu0
    %v338 = vadd.f32 %v151, %v337
    %v339 = vpop.f32.mrb[0].mxu0
    %v340 = vadd.f32 %v155, %v339
    %341 = vmatprep.mubr.f32.mxu0 0.0
    %v342 = vand.u32 %v82, 4294901760
    %v343 = vsub.f32 %v82, %v342
    %v344 = vand.u32 %v343, 4294901760
    %v345 = vsub.f32 %v343, %v344
    %v346 = vand.u32 %v345, 4294901760
    %347 = vmatmul.mubr.f32.gmra.mrb[0].mxu0 %v346
    %v348 = vpop.f32.mrb[0].mxu0
    %v349 = vadd.f32 %v151, %v348
    %v350 = vpop.f32.mrb[0].mxu0
    %v351 = vadd.f32 %v155, %v350
    %352 = vdwg.mxu0
    %v353 = vand.u32 %v84, 4294901760
    %v354 = vsub.f32 %v84, %v353
    %v355 = vand.u32 %v354, 4294901760
    %v356 = vsub.f32 %v354, %v355
    %v357 = vand.u32 %v356, 4294901760
    %358 = vmatprep.subr.mxu0 %v357
    %v359 = vand.u32 %v83, 4294901760
    %v360 = vsub.f32 %v83, %v359
    %v361 = vand.u32 %v360, 4294901760
    %v362 = vsub.f32 %v360, %v361
    %v363 = vand.u32 %v362, 4294901760
    %364 = vmatpush1.msra.mxu0 %v363
    %v365 = vand.u32 %v88, 4294901760
    %v366 = vsub.f32 %v88, %v365
    %v367 = vand.u32 %v366, 4294901760
    %v368 = vsub.f32 %v366, %v367
    %v369 = vand.u32 %v368, 4294901760
    %370 = vmatprep.subr.mxu0 %v369
    %v371 = vand.u32 %v87, 4294901760
    %v372 = vsub.f32 %v87, %v371
    %v373 = vand.u32 %v372, 4294901760
    %v374 = vsub.f32 %v372, %v373
    %v375 = vand.u32 %v374, 4294901760
    %376 = vmatpush1.msra.mxu0 %v375
    %v377 = vand.u32 %v92, 4294901760
    %v378 = vsub.f32 %v92, %v377
    %v379 = vand.u32 %v378, 4294901760
    %v380 = vsub.f32 %v378, %v379
    %v381 = vand.u32 %v380, 4294901760
    %382 = vmatprep.subr.mxu0 %v381
    %v383 = vand.u32 %v91, 4294901760
    %v384 = vsub.f32 %v91, %v383
    %v385 = vand.u32 %v384, 4294901760
    %v386 = vsub.f32 %v384, %v385
    %v387 = vand.u32 %v386, 4294901760
    %388 = vmatpush1.msra.mxu0 %v387
    %v389 = vand.u32 %v96, 4294901760
    %v390 = vsub.f32 %v96, %v389
    %v391 = vand.u32 %v390, 4294901760
    %v392 = vsub.f32 %v390, %v391
    %v393 = vand.u32 %v392, 4294901760
    %394 = vmatprep.subr.mxu0 %v393
    %v395 = vand.u32 %v95, 4294901760
    %v396 = vsub.f32 %v95, %v395
    %v397 = vand.u32 %v396, 4294901760
    %v398 = vsub.f32 %v396, %v397
    %v399 = vand.u32 %v398, 4294901760
    %400 = vmatpush1.msra.mxu0 %v399
    %v401 = vand.u32 %v100, 4294901760
    %v402 = vsub.f32 %v100, %v401
    %v403 = vand.u32 %v402, 4294901760
    %v404 = vsub.f32 %v402, %v403
    %v405 = vand.u32 %v404, 4294901760
    %406 = vmatprep.subr.mxu0 %v405
    %v407 = vand.u32 %v99, 4294901760
    %v408 = vsub.f32 %v99, %v407
    %v409 = vand.u32 %v408, 4294901760
    %v410 = vsub.f32 %v408, %v409
    %v411 = vand.u32 %v410, 4294901760
    %412 = vmatpush1.msra.mxu0 %v411
    %v413 = vand.u32 %v104, 4294901760
    %v414 = vsub.f32 %v104, %v413
    %v415 = vand.u32 %v414, 4294901760
    %v416 = vsub.f32 %v414, %v415
    %v417 = vand.u32 %v416, 4294901760
    %418 = vmatprep.subr.mxu0 %v417
    %v419 = vand.u32 %v103, 4294901760
    %v420 = vsub.f32 %v103, %v419
    %v421 = vand.u32 %v420, 4294901760
    %v422 = vsub.f32 %v420, %v421
    %v423 = vand.u32 %v422, 4294901760
    %424 = vmatpush1.msra.mxu0 %v423
    %v425 = vand.u32 %v108, 4294901760
    %v426 = vsub.f32 %v108, %v425
    %v427 = vand.u32 %v426, 4294901760
    %v428 = vsub.f32 %v426, %v427
    %v429 = vand.u32 %v428, 4294901760
    %430 = vmatprep.subr.mxu0 %v429
    %v431 = vand.u32 %v107, 4294901760
    %v432 = vsub.f32 %v107, %v431
    %v433 = vand.u32 %v432, 4294901760
    %v434 = vsub.f32 %v432, %v433
    %v435 = vand.u32 %v434, 4294901760
    %436 = vmatpush1.msra.mxu0 %v435
    %v437 = vand.u32 %v112, 4294901760
    %v438 = vsub.f32 %v112, %v437
    %v439 = vand.u32 %v438, 4294901760
    %v440 = vsub.f32 %v438, %v439
    %v441 = vand.u32 %v440, 4294901760
    %442 = vmatprep.subr.mxu0 %v441
    %v443 = vand.u32 %v111, 4294901760
    %v444 = vsub.f32 %v111, %v443
    %v445 = vand.u32 %v444, 4294901760
    %v446 = vsub.f32 %v444, %v445
    %v447 = vand.u32 %v446, 4294901760
    %448 = vmatpush1.msra.mxu0 %v447
    %v449 = vand.u32 %v116, 4294901760
    %v450 = vsub.f32 %v116, %v449
    %v451 = vand.u32 %v450, 4294901760
    %v452 = vsub.f32 %v450, %v451
    %v453 = vand.u32 %v452, 4294901760
    %454 = vmatprep.subr.mxu0 %v453
    %v455 = vand.u32 %v115, 4294901760
    %v456 = vsub.f32 %v115, %v455
    %v457 = vand.u32 %v456, 4294901760
    %v458 = vsub.f32 %v456, %v457
    %v459 = vand.u32 %v458, 4294901760
    %460 = vmatpush1.msra.mxu0 %v459
    %v461 = vand.u32 %v120, 4294901760
    %v462 = vsub.f32 %v120, %v461
    %v463 = vand.u32 %v462, 4294901760
    %v464 = vsub.f32 %v462, %v463
    %v465 = vand.u32 %v464, 4294901760
    %466 = vmatprep.subr.mxu0 %v465
    %v467 = vand.u32 %v119, 4294901760
    %v468 = vsub.f32 %v119, %v467
    %v469 = vand.u32 %v468, 4294901760
    %v470 = vsub.f32 %v468, %v469
    %v471 = vand.u32 %v470, 4294901760
    %472 = vmatpush1.msra.mxu0 %v471
    %v473 = vand.u32 %v124, 4294901760
    %v474 = vsub.f32 %v124, %v473
    %v475 = vand.u32 %v474, 4294901760
    %v476 = vsub.f32 %v474, %v475
    %v477 = vand.u32 %v476, 4294901760
    %478 = vmatprep.subr.mxu0 %v477
    %v479 = vand.u32 %v123, 4294901760
    %v480 = vsub.f32 %v123, %v479
    %v481 = vand.u32 %v480, 4294901760
    %v482 = vsub.f32 %v480, %v481
    %v483 = vand.u32 %v482, 4294901760
    %484 = vmatpush1.msra.mxu0 %v483
    %v485 = vand.u32 %v128, 4294901760
    %v486 = vsub.f32 %v128, %v485
    %v487 = vand.u32 %v486, 4294901760
    %v488 = vsub.f32 %v486, %v487
    %v489 = vand.u32 %v488, 4294901760
    %490 = vmatprep.subr.mxu0 %v489
    %v491 = vand.u32 %v127, 4294901760
    %v492 = vsub.f32 %v127, %v491
    %v493 = vand.u32 %v492, 4294901760
    %v494 = vsub.f32 %v492, %v493
    %v495 = vand.u32 %v494, 4294901760
    %496 = vmatpush1.msra.mxu0 %v495
    %v497 = vand.u32 %v132, 4294901760
    %v498 = vsub.f32 %v132, %v497
    %v499 = vand.u32 %v498, 4294901760
    %v500 = vsub.f32 %v498, %v499
    %v501 = vand.u32 %v500, 4294901760
    %502 = vmatprep.subr.mxu0 %v501
    %v503 = vand.u32 %v131, 4294901760
    %v504 = vsub.f32 %v131, %v503
    %v505 = vand.u32 %v504, 4294901760
    %v506 = vsub.f32 %v504, %v505
    %v507 = vand.u32 %v506, 4294901760
    %508 = vmatpush1.msra.mxu0 %v507
    %v509 = vand.u32 %v136, 4294901760
    %v510 = vsub.f32 %v136, %v509
    %v511 = vand.u32 %v510, 4294901760
    %v512 = vsub.f32 %v510, %v511
    %v513 = vand.u32 %v512, 4294901760
    %514 = vmatprep.subr.mxu0 %v513
    %v515 = vand.u32 %v135, 4294901760
    %v516 = vsub.f32 %v135, %v515
    %v517 = vand.u32 %v516, 4294901760
    %v518 = vsub.f32 %v516, %v517
    %v519 = vand.u32 %v518, 4294901760
    %520 = vmatpush1.msra.mxu0 %v519
    %v521 = vand.u32 %v140, 4294901760
    %v522 = vsub.f32 %v140, %v521
    %v523 = vand.u32 %v522, 4294901760
    %v524 = vsub.f32 %v522, %v523
    %v525 = vand.u32 %v524, 4294901760
    %526 = vmatprep.subr.mxu0 %v525
    %v527 = vand.u32 %v139, 4294901760
    %v528 = vsub.f32 %v139, %v527
    %v529 = vand.u32 %v528, 4294901760
    %v530 = vsub.f32 %v528, %v529
    %v531 = vand.u32 %v530, 4294901760
    %532 = vmatpush1.msra.mxu0 %v531
    %v533 = vand.u32 %v144, 4294901760
    %v534 = vsub.f32 %v144, %v533
    %v535 = vand.u32 %v534, 4294901760
    %v536 = vsub.f32 %v534, %v535
    %v537 = vand.u32 %v536, 4294901760
    %538 = vmatprep.subr.mxu0 %v537
    %v539 = vand.u32 %v143, 4294901760
    %v540 = vsub.f32 %v143, %v539
    %v541 = vand.u32 %v540, 4294901760
    %v542 = vsub.f32 %v540, %v541
    %v543 = vand.u32 %v542, 4294901760
    %544 = vmatpush1.msra.mxu0 %v543
    %545 = vmatprep.subr.mxu0 0.0
    %546 = vmatpush1.msra.mxu0 0.0
    %547 = vmatprep.subr.mxu0 0.0
    %548 = vmatpush1.msra.mxu0 0.0
    %549 = vmatprep.subr.mxu0 0.0
    %550 = vmatpush1.msra.mxu0 0.0
    %551 = vmatprep.subr.mxu0 0.0
    %552 = vmatpush1.msra.mxu0 0.0
    %553 = vmatprep.subr.mxu0 0.0
    %554 = vmatpush1.msra.mxu0 0.0
    %555 = vmatprep.subr.mxu0 0.0
    %556 = vmatpush1.msra.mxu0 0.0
    %557 = vmatprep.subr.mxu0 0.0
    %558 = vmatpush1.msra.mxu0 0.0
    %559 = vmatprep.subr.mxu0 0.0
    %560 = vmatpush1.msra.mxu0 0.0
    %561 = vmatprep.subr.mxu0 0.0
    %562 = vmatpush1.msra.mxu0 0.0
    %563 = vmatprep.subr.mxu0 0.0
    %564 = vmatpush1.msra.mxu0 0.0
    %565 = vmatprep.subr.mxu0 0.0
    %566 = vmatpush1.msra.mxu0 0.0
    %567 = vmatprep.subr.mxu0 0.0
    %568 = vmatpush1.msra.mxu0 0.0
    %569 = vmatprep.subr.mxu0 0.0
    %570 = vmatpush1.msra.mxu0 0.0
    %571 = vmatprep.subr.mxu0 0.0
    %572 = vmatpush1.msra.mxu0 0.0
    %573 = vmatprep.subr.mxu0 0.0
    %574 = vmatpush1.msra.mxu0 0.0
    %575 = vmatprep.subr.mxu0 0.0
    %576 = vmatpush1.msra.mxu0 0.0
    %577 = vmatprep.mubr.f32.mxu0 0.0
    %v578 = vand.u32 %v75, 4294901760
    %579 = vmatmul.mubr.f32.gmra.mrb[0].mxu0 %v578
    %v580 = vpop.f32.mrb[0].mxu0
    %v581 = vadd.f32 %v272, %v580
    %v582 = vpop.f32.mrb[0].mxu0
    %v583 = vadd.f32 %v274, %v582
    %584 = vmatprep.mubr.f32.mxu0 0.0
    %v585 = vand.u32 %v76, 4294901760
    %586 = vmatmul.mubr.f32.gmra.mrb[0].mxu0 %v585
    %v587 = vpop.f32.mrb[0].mxu0
    %v588 = vadd.f32 %v283, %v587
    %v589 = vpop.f32.mrb[0].mxu0
    %v590 = vadd.f32 %v285, %v589
    %591 = vmatprep.mubr.f32.mxu0 0.0
    %v592 = vand.u32 %v77, 4294901760
    %593 = vmatmul.mubr.f32.gmra.mrb[0].mxu0 %v592
    %v594 = vpop.f32.mrb[0].mxu0
    %v595 = vadd.f32 %v294, %v594
    %v596 = vpop.f32.mrb[0].mxu0
    %v597 = vadd.f32 %v296, %v596
    %598 = vmatprep.mubr.f32.mxu0 0.0
    %v599 = vand.u32 %v78, 4294901760
    %600 = vmatmul.mubr.f32.gmra.mrb[0].mxu0 %v599
    %v601 = vpop.f32.mrb[0].mxu0
    %v602 = vadd.f32 %v305, %v601
    %v603 = vpop.f32.mrb[0].mxu0
    %v604 = vadd.f32 %v307, %v603
    %605 = vmatprep.mubr.f32.mxu0 0.0
    %v606 = vand.u32 %v79, 4294901760
    %607 = vmatmul.mubr.f32.gmra.mrb[0].mxu0 %v606
    %v608 = vpop.f32.mrb[0].mxu0
    %v609 = vadd.f32 %v316, %v608
    %v610 = vpop.f32.mrb[0].mxu0
    %v611 = vadd.f32 %v318, %v610
    %612 = vmatprep.mubr.f32.mxu0 0.0
    %v613 = vand.u32 %v80, 4294901760
    %614 = vmatmul.mubr.f32.gmra.mrb[0].mxu0 %v613
    %v615 = vpop.f32.mrb[0].mxu0
    %v616 = vadd.f32 %v327, %v615
    %v617 = vpop.f32.mrb[0].mxu0
    %v618 = vadd.f32 %v329, %v617
    %619 = vmatprep.mubr.f32.mxu0 0.0
    %v620 = vand.u32 %v81, 4294901760
    %621 = vmatmul.mubr.f32.gmra.mrb[0].mxu0 %v620
    %v622 = vpop.f32.mrb[0].mxu0
    %v623 = vadd.f32 %v338, %v622
    %v624 = vpop.f32.mrb[0].mxu0
    %v625 = vadd.f32 %v340, %v624
    %626 = vmatprep.mubr.f32.mxu0 0.0
    %v627 = vand.u32 %v82, 4294901760
    %628 = vmatmul.mubr.f32.gmra.mrb[0].mxu0 %v627
    %v629 = vpop.f32.mrb[0].mxu0
    %v630 = vadd.f32 %v349, %v629
    %v631 = vpop.f32.mrb[0].mxu0
    %v632 = vadd.f32 %v351, %v631
    %633 = vdwg.mxu0
    %v634 = vand.u32 %v84, 4294901760
    %v635 = vsub.f32 %v84, %v634
    %636 = vmatprep.subr.mxu0 %v635
    %v637 = vand.u32 %v83, 4294901760
    %v638 = vsub.f32 %v83, %v637
    %639 = vmatpush1.msra.mxu0 %v638
    %v640 = vand.u32 %v88, 4294901760
    %v641 = vsub.f32 %v88, %v640
    %642 = vmatprep.subr.mxu0 %v641
    %v643 = vand.u32 %v87, 4294901760
    %v644 = vsub.f32 %v87, %v643
    %645 = vmatpush1.msra.mxu0 %v644
    %v646 = vand.u32 %v92, 4294901760
    %v647 = vsub.f32 %v92, %v646
    %648 = vmatprep.subr.mxu0 %v647
    %v649 = vand.u32 %v91, 4294901760
    %v650 = vsub.f32 %v91, %v649
    %651 = vmatpush1.msra.mxu0 %v650
    %v652 = vand.u32 %v96, 4294901760
    %v653 = vsub.f32 %v96, %v652
    %654 = vmatprep.subr.mxu0 %v653
    %v655 = vand.u32 %v95, 4294901760
    %v656 = vsub.f32 %v95, %v655
    %657 = vmatpush1.msra.mxu0 %v656
    %v658 = vand.u32 %v100, 4294901760
    %v659 = vsub.f32 %v100, %v658
    %660 = vmatprep.subr.mxu0 %v659
    %v661 = vand.u32 %v99, 4294901760
    %v662 = vsub.f32 %v99, %v661
    %663 = vmatpush1.msra.mxu0 %v662
    %v664 = vand.u32 %v104, 4294901760
    %v665 = vsub.f32 %v104, %v664
    %666 = vmatprep.subr.mxu0 %v665
    %v667 = vand.u32 %v103, 4294901760
    %v668 = vsub.f32 %v103, %v667
    %669 = vmatpush1.msra.mxu0 %v668
    %v670 = vand.u32 %v108, 4294901760
    %v671 = vsub.f32 %v108, %v670
    %672 = vmatprep.subr.mxu0 %v671
    %v673 = vand.u32 %v107, 4294901760
    %v674 = vsub.f32 %v107, %v673
    %675 = vmatpush1.msra.mxu0 %v674
    %v676 = vand.u32 %v112, 4294901760
    %v677 = vsub.f32 %v112, %v676
    %678 = vmatprep.subr.mxu0 %v677
    %v679 = vand.u32 %v111, 4294901760
    %v680 = vsub.f32 %v111, %v679
    %681 = vmatpush1.msra.mxu0 %v680
    %v682 = vand.u32 %v116, 4294901760
    %v683 = vsub.f32 %v116, %v682
    %684 = vmatprep.subr.mxu0 %v683
    %v685 = vand.u32 %v115, 4294901760
    %v686 = vsub.f32 %v115, %v685
    %687 = vmatpush1.msra.mxu0 %v686
    %v688 = vand.u32 %v120, 4294901760
    %v689 = vsub.f32 %v120, %v688
    %690 = vmatprep.subr.mxu0 %v689
    %v691 = vand.u32 %v119, 4294901760
    %v692 = vsub.f32 %v119, %v691
    %693 = vmatpush1.msra.mxu0 %v692
    %v694 = vand.u32 %v124, 4294901760
    %v695 = vsub.f32 %v124, %v694
    %696 = vmatprep.subr.mxu0 %v695
    %v697 = vand.u32 %v123, 4294901760
    %v698 = vsub.f32 %v123, %v697
    %699 = vmatpush1.msra.mxu0 %v698
    %v700 = vand.u32 %v128, 4294901760
    %v701 = vsub.f32 %v128, %v700
    %702 = vmatprep.subr.mxu0 %v701
    %v703 = vand.u32 %v127, 4294901760
    %v704 = vsub.f32 %v127, %v703
    %705 = vmatpush1.msra.mxu0 %v704
    %v706 = vand.u32 %v132, 4294901760
    %v707 = vsub.f32 %v132, %v706
    %708 = vmatprep.subr.mxu0 %v707
    %v709 = vand.u32 %v131, 4294901760
    %v710 = vsub.f32 %v131, %v709
    %711 = vmatpush1.msra.mxu0 %v710
    %v712 = vand.u32 %v136, 4294901760
    %v713 = vsub.f32 %v136, %v712
    %714 = vmatprep.subr.mxu0 %v713
    %v715 = vand.u32 %v135, 4294901760
    %v716 = vsub.f32 %v135, %v715
    %717 = vmatpush1.msra.mxu0 %v716
    %v718 = vand.u32 %v140, 4294901760
    %v719 = vsub.f32 %v140, %v718
    %720 = vmatprep.subr.mxu0 %v719
    %v721 = vand.u32 %v139, 4294901760
    %v722 = vsub.f32 %v139, %v721
    %723 = vmatpush1.msra.mxu0 %v722
    %v724 = vand.u32 %v144, 4294901760
    %v725 = vsub.f32 %v144, %v724
    %726 = vmatprep.subr.mxu0 %v725
    %v727 = vand.u32 %v143, 4294901760
    %v728 = vsub.f32 %v143, %v727
    %729 = vmatpush1.msra.mxu0 %v728
    %730 = vmatprep.subr.mxu0 0.0
    %731 = vmatpush1.msra.mxu0 0.0
    %732 = vmatprep.subr.mxu0 0.0
    %733 = vmatpush1.msra.mxu0 0.0
    %734 = vmatprep.subr.mxu0 0.0
    %735 = vmatpush1.msra.mxu0 0.0
    %736 = vmatprep.subr.mxu0 0.0
    %737 = vmatpush1.msra.mxu0 0.0
    %738 = vmatprep.subr.mxu0 0.0
    %739 = vmatpush1.msra.mxu0 0.0
    %740 = vmatprep.subr.mxu0 0.0
    %741 = vmatpush1.msra.mxu0 0.0
    %742 = vmatprep.subr.mxu0 0.0
    %743 = vmatpush1.msra.mxu0 0.0
    %744 = vmatprep.subr.mxu0 0.0
    %745 = vmatpush1.msra.mxu0 0.0
    %746 = vmatprep.subr.mxu0 0.0
    %747 = vmatpush1.msra.mxu0 0.0
    %748 = vmatprep.subr.mxu0 0.0
    %749 = vmatpush1.msra.mxu0 0.0
    %750 = vmatprep.subr.mxu0 0.0
    %751 = vmatpush1.msra.mxu0 0.0
    %752 = vmatprep.subr.mxu0 0.0
    %753 = vmatpush1.msra.mxu0 0.0
    %754 = vmatprep.subr.mxu0 0.0
    %755 = vmatpush1.msra.mxu0 0.0
    %756 = vmatprep.subr.mxu0 0.0
    %757 = vmatpush1.msra.mxu0 0.0
    %758 = vmatprep.subr.mxu0 0.0
    %759 = vmatpush1.msra.mxu0 0.0
    %760 = vmatprep.subr.mxu0 0.0
    %761 = vmatpush1.msra.mxu0 0.0
    %762 = vmatprep.mubr.f32.mxu0 0.0
    %v763 = vand.u32 %v75, 4294901760
    %v764 = vsub.f32 %v75, %v763
    %765 = vmatmul.mubr.f32.gmra.mrb[0].mxu0 %v764
    %v766 = vpop.f32.mrb[0].mxu0
    %v767 = vadd.f32 %v581, %v766
    %v768 = vpop.f32.mrb[0].mxu0
    %v769 = vadd.f32 %v583, %v768
    %770 = vmatprep.mubr.f32.mxu0 0.0
    %v771 = vand.u32 %v76, 4294901760
    %v772 = vsub.f32 %v76, %v771
    %773 = vmatmul.mubr.f32.gmra.mrb[0].mxu0 %v772
    %v774 = vpop.f32.mrb[0].mxu0
    %v775 = vadd.f32 %v588, %v774
    %v776 = vpop.f32.mrb[0].mxu0
    %v777 = vadd.f32 %v590, %v776
    %778 = vmatprep.mubr.f32.mxu0 0.0
    %v779 = vand.u32 %v77, 4294901760
    %v780 = vsub.f32 %v77, %v779
    %781 = vmatmul.mubr.f32.gmra.mrb[0].mxu0 %v780
    %v782 = vpop.f32.mrb[0].mxu0
    %v783 = vadd.f32 %v595, %v782
    %v784 = vpop.f32.mrb[0].mxu0
    %v785 = vadd.f32 %v597, %v784
    %786 = vmatprep.mubr.f32.mxu0 0.0
    %v787 = vand.u32 %v78, 4294901760
    %v788 = vsub.f32 %v78, %v787
    %789 = vmatmul.mubr.f32.gmra.mrb[0].mxu0 %v788
    %v790 = vpop.f32.mrb[0].mxu0
    %v791 = vadd.f32 %v602, %v790
    %v792 = vpop.f32.mrb[0].mxu0
    %v793 = vadd.f32 %v604, %v792
    %794 = vmatprep.mubr.f32.mxu0 0.0
    %v795 = vand.u32 %v79, 4294901760
    %v796 = vsub.f32 %v79, %v795
    %797 = vmatmul.mubr.f32.gmra.mrb[0].mxu0 %v796
    %v798 = vpop.f32.mrb[0].mxu0
    %v799 = vadd.f32 %v609, %v798
    %v800 = vpop.f32.mrb[0].mxu0
    %v801 = vadd.f32 %v611, %v800
    %802 = vmatprep.mubr.f32.mxu0 0.0
    %v803 = vand.u32 %v80, 4294901760
    %v804 = vsub.f32 %v80, %v803
    %805 = vmatmul.mubr.f32.gmra.mrb[0].mxu0 %v804
    %v806 = vpop.f32.mrb[0].mxu0
    %v807 = vadd.f32 %v616, %v806
    %v808 = vpop.f32.mrb[0].mxu0
    %v809 = vadd.f32 %v618, %v808
    %810 = vmatprep.mubr.f32.mxu0 0.0
    %v811 = vand.u32 %v81, 4294901760
    %v812 = vsub.f32 %v81, %v811
    %813 = vmatmul.mubr.f32.gmra.mrb[0].mxu0 %v812
    %v814 = vpop.f32.mrb[0].mxu0
    %v815 = vadd.f32 %v623, %v814
    %v816 = vpop.f32.mrb[0].mxu0
    %v817 = vadd.f32 %v625, %v816
    %818 = vmatprep.mubr.f32.mxu0 0.0
    %v819 = vand.u32 %v82, 4294901760
    %v820 = vsub.f32 %v82, %v819
    %821 = vmatmul.mubr.f32.gmra.mrb[0].mxu0 %v820
    %v822 = vpop.f32.mrb[0].mxu0
    %v823 = vadd.f32 %v630, %v822
    %v824 = vpop.f32.mrb[0].mxu0
    %v825 = vadd.f32 %v632, %v824
    %826 = vdwg.mxu0
    %v827 = vand.u32 %v84, 4294901760
    %828 = vmatprep.subr.mxu0 %v827
    %v829 = vand.u32 %v83, 4294901760
    %830 = vmatpush1.msra.mxu0 %v829
    %v831 = vand.u32 %v88, 4294901760
    %832 = vmatprep.subr.mxu0 %v831
    %v833 = vand.u32 %v87, 4294901760
    %834 = vmatpush1.msra.mxu0 %v833
    %v835 = vand.u32 %v92, 4294901760
    %836 = vmatprep.subr.mxu0 %v835
    %v837 = vand.u32 %v91, 4294901760
    %838 = vmatpush1.msra.mxu0 %v837
    %v839 = vand.u32 %v96, 4294901760
    %840 = vmatprep.subr.mxu0 %v839
    %v841 = vand.u32 %v95, 4294901760
    %842 = vmatpush1.msra.mxu0 %v841
    %v843 = vand.u32 %v100, 4294901760
    %844 = vmatprep.subr.mxu0 %v843
    %v845 = vand.u32 %v99, 4294901760
    %846 = vmatpush1.msra.mxu0 %v845
    %v847 = vand.u32 %v104, 4294901760
    %848 = vmatprep.subr.mxu0 %v847
    %v849 = vand.u32 %v103, 4294901760
    %850 = vmatpush1.msra.mxu0 %v849
    %v851 = vand.u32 %v108, 4294901760
    %852 = vmatprep.subr.mxu0 %v851
    %v853 = vand.u32 %v107, 4294901760
    %854 = vmatpush1.msra.mxu0 %v853
    %v855 = vand.u32 %v112, 4294901760
    %856 = vmatprep.subr.mxu0 %v855
    %v857 = vand.u32 %v111, 4294901760
    %858 = vmatpush1.msra.mxu0 %v857
    %v859 = vand.u32 %v116, 4294901760
    %860 = vmatprep.subr.mxu0 %v859
    %v861 = vand.u32 %v115, 4294901760
    %862 = vmatpush1.msra.mxu0 %v861
    %v863 = vand.u32 %v120, 4294901760
    %864 = vmatprep.subr.mxu0 %v863
    %v865 = vand.u32 %v119, 4294901760
    %866 = vmatpush1.msra.mxu0 %v865
    %v867 = vand.u32 %v124, 4294901760
    %868 = vmatprep.subr.mxu0 %v867
    %v869 = vand.u32 %v123, 4294901760
    %870 = vmatpush1.msra.mxu0 %v869
    %v871 = vand.u32 %v128, 4294901760
    %872 = vmatprep.subr.mxu0 %v871
    %v873 = vand.u32 %v127, 4294901760
    %874 = vmatpush1.msra.mxu0 %v873
    %v875 = vand.u32 %v132, 4294901760
    %876 = vmatprep.subr.mxu0 %v875
    %v877 = vand.u32 %v131, 4294901760
    %878 = vmatpush1.msra.mxu0 %v877
    %v879 = vand.u32 %v136, 4294901760
    %880 = vmatprep.subr.mxu0 %v879
    %v881 = vand.u32 %v135, 4294901760
    %882 = vmatpush1.msra.mxu0 %v881
    %v883 = vand.u32 %v140, 4294901760
    %884 = vmatprep.subr.mxu0 %v883
    %v885 = vand.u32 %v139, 4294901760
    %886 = vmatpush1.msra.mxu0 %v885
    %v887 = vand.u32 %v144, 4294901760
    %888 = vmatprep.subr.mxu0 %v887
    %v889 = vand.u32 %v143, 4294901760
    %890 = vmatpush1.msra.mxu0 %v889
    %891 = vmatprep.subr.mxu0 0.0
    %892 = vmatpush1.msra.mxu0 0.0
    %893 = vmatprep.subr.mxu0 0.0
    %894 = vmatpush1.msra.mxu0 0.0
    %895 = vmatprep.subr.mxu0 0.0
    %896 = vmatpush1.msra.mxu0 0.0
    %897 = vmatprep.subr.mxu0 0.0
    %898 = vmatpush1.msra.mxu0 0.0
    %899 = vmatprep.subr.mxu0 0.0
    %900 = vmatpush1.msra.mxu0 0.0
    %901 = vmatprep.subr.mxu0 0.0
    %902 = vmatpush1.msra.mxu0 0.0
    %903 = vmatprep.subr.mxu0 0.0
    %904 = vmatpush1.msra.mxu0 0.0
    %905 = vmatprep.subr.mxu0 0.0
    %906 = vmatpush1.msra.mxu0 0.0
    %907 = vmatprep.subr.mxu0 0.0
    %908 = vmatpush1.msra.mxu0 0.0
    %909 = vmatprep.subr.mxu0 0.0
    %910 = vmatpush1.msra.mxu0 0.0
    %911 = vmatprep.subr.mxu0 0.0
    %912 = vmatpush1.msra.mxu0 0.0
    %913 = vmatprep.subr.mxu0 0.0
    %914 = vmatpush1.msra.mxu0 0.0
    %915 = vmatprep.subr.mxu0 0.0
    %916 = vmatpush1.msra.mxu0 0.0
    %917 = vmatprep.subr.mxu0 0.0
    %918 = vmatpush1.msra.mxu0 0.0
    %919 = vmatprep.subr.mxu0 0.0
    %920 = vmatpush1.msra.mxu0 0.0
    %921 = vmatprep.subr.mxu0 0.0
    %922 = vmatpush1.msra.mxu0 0.0
    %923 = vmatprep.mubr.f32.mxu0 0.0
    %v924 = vand.u32 %v75, 4294901760
    %v925 = vsub.f32 %v75, %v924
    %v926 = vand.u32 %v925, 4294901760
    %927 = vmatmul.mubr.f32.gmra.mrb[0].mxu0 %v926
    %v928 = vpop.f32.mrb[0].mxu0
    %v929 = vadd.f32 %v767, %v928
    %v930 = vpop.f32.mrb[0].mxu0
    %v931 = vadd.f32 %v769, %v930
    %932 = vmatprep.mubr.f32.mxu0 0.0
    %v933 = vand.u32 %v76, 4294901760
    %v934 = vsub.f32 %v76, %v933
    %v935 = vand.u32 %v934, 4294901760
    %936 = vmatmul.mubr.f32.gmra.mrb[0].mxu0 %v935
    %v937 = vpop.f32.mrb[0].mxu0
    %v938 = vadd.f32 %v775, %v937
    %v939 = vpop.f32.mrb[0].mxu0
    %v940 = vadd.f32 %v777, %v939
    %941 = vmatprep.mubr.f32.mxu0 0.0
    %v942 = vand.u32 %v77, 4294901760
    %v943 = vsub.f32 %v77, %v942
    %v944 = vand.u32 %v943, 4294901760
    %945 = vmatmul.mubr.f32.gmra.mrb[0].mxu0 %v944
    %v946 = vpop.f32.mrb[0].mxu0
    %v947 = vadd.f32 %v783, %v946
    %v948 = vpop.f32.mrb[0].mxu0
    %v949 = vadd.f32 %v785, %v948
    %950 = vmatprep.mubr.f32.mxu0 0.0
    %v951 = vand.u32 %v78, 4294901760
    %v952 = vsub.f32 %v78, %v951
    %v953 = vand.u32 %v952, 4294901760
    %954 = vmatmul.mubr.f32.gmra.mrb[0].mxu0 %v953
    %v955 = vpop.f32.mrb[0].mxu0
    %v956 = vadd.f32 %v791, %v955
    %v957 = vpop.f32.mrb[0].mxu0
    %v958 = vadd.f32 %v793, %v957
    %959 = vmatprep.mubr.f32.mxu0 0.0
    %v960 = vand.u32 %v79, 4294901760
    %v961 = vsub.f32 %v79, %v960
    %v962 = vand.u32 %v961, 4294901760
    %963 = vmatmul.mubr.f32.gmra.mrb[0].mxu0 %v962
    %v964 = vpop.f32.mrb[0].mxu0
    %v965 = vadd.f32 %v799, %v964
    %v966 = vpop.f32.mrb[0].mxu0
    %v967 = vadd.f32 %v801, %v966
    %968 = vmatprep.mubr.f32.mxu0 0.0
    %v969 = vand.u32 %v80, 4294901760
    %v970 = vsub.f32 %v80, %v969
    %v971 = vand.u32 %v970, 4294901760
    %972 = vmatmul.mubr.f32.gmra.mrb[0].mxu0 %v971
    %v973 = vpop.f32.mrb[0].mxu0
    %v974 = vadd.f32 %v807, %v973
    %v975 = vpop.f32.mrb[0].mxu0
    %v976 = vadd.f32 %v809, %v975
    %977 = vmatprep.mubr.f32.mxu0 0.0
    %v978 = vand.u32 %v81, 4294901760
    %v979 = vsub.f32 %v81, %v978
    %v980 = vand.u32 %v979, 4294901760
    %981 = vmatmul.mubr.f32.gmra.mrb[0].mxu0 %v980
    %v982 = vpop.f32.mrb[0].mxu0
    %v983 = vadd.f32 %v815, %v982
    %v984 = vpop.f32.mrb[0].mxu0
    %v985 = vadd.f32 %v817, %v984
    %986 = vmatprep.mubr.f32.mxu0 0.0
    %v987 = vand.u32 %v82, 4294901760
    %v988 = vsub.f32 %v82, %v987
    %v989 = vand.u32 %v988, 4294901760
    %990 = vmatmul.mubr.f32.gmra.mrb[0].mxu0 %v989
    %v991 = vpop.f32.mrb[0].mxu0
    %v992 = vadd.f32 %v823, %v991
    %v993 = vpop.f32.mrb[0].mxu0
    %v994 = vadd.f32 %v825, %v993
    %995 = vdwg.mxu0
    %v996 = vand.u32 %v84, 4294901760
    %v997 = vsub.f32 %v84, %v996
    %v998 = vand.u32 %v997, 4294901760
    %999 = vmatprep.subr.mxu0 %v998
    %v1000 = vand.u32 %v83, 4294901760
    %v1001 = vsub.f32 %v83, %v1000
    %v1002 = vand.u32 %v1001, 4294901760
    %1003 = vmatpush1.msra.mxu0 %v1002
    %v1004 = vand.u32 %v88, 4294901760
    %v1005 = vsub.f32 %v88, %v1004
    %v1006 = vand.u32 %v1005, 4294901760
    %1007 = vmatprep.subr.mxu0 %v1006
    %v1008 = vand.u32 %v87, 4294901760
    %v1009 = vsub.f32 %v87, %v1008
    %v1010 = vand.u32 %v1009, 4294901760
    %1011 = vmatpush1.msra.mxu0 %v1010
    %v1012 = vand.u32 %v92, 4294901760
    %v1013 = vsub.f32 %v92, %v1012
    %v1014 = vand.u32 %v1013, 4294901760
    %1015 = vmatprep.subr.mxu0 %v1014
    %v1016 = vand.u32 %v91, 4294901760
    %v1017 = vsub.f32 %v91, %v1016
    %v1018 = vand.u32 %v1017, 4294901760
    %1019 = vmatpush1.msra.mxu0 %v1018
    %v1020 = vand.u32 %v96, 4294901760
    %v1021 = vsub.f32 %v96, %v1020
    %v1022 = vand.u32 %v1021, 4294901760
    %1023 = vmatprep.subr.mxu0 %v1022
    %v1024 = vand.u32 %v95, 4294901760
    %v1025 = vsub.f32 %v95, %v1024
    %v1026 = vand.u32 %v1025, 4294901760
    %1027 = vmatpush1.msra.mxu0 %v1026
    %v1028 = vand.u32 %v100, 4294901760
    %v1029 = vsub.f32 %v100, %v1028
    %v1030 = vand.u32 %v1029, 4294901760
    %1031 = vmatprep.subr.mxu0 %v1030
    %v1032 = vand.u32 %v99, 4294901760
    %v1033 = vsub.f32 %v99, %v1032
    %v1034 = vand.u32 %v1033, 4294901760
    %1035 = vmatpush1.msra.mxu0 %v1034
    %v1036 = vand.u32 %v104, 4294901760
    %v1037 = vsub.f32 %v104, %v1036
    %v1038 = vand.u32 %v1037, 4294901760
    %1039 = vmatprep.subr.mxu0 %v1038
    %v1040 = vand.u32 %v103, 4294901760
    %v1041 = vsub.f32 %v103, %v1040
    %v1042 = vand.u32 %v1041, 4294901760
    %1043 = vmatpush1.msra.mxu0 %v1042
    %v1044 = vand.u32 %v108, 4294901760
    %v1045 = vsub.f32 %v108, %v1044
    %v1046 = vand.u32 %v1045, 4294901760
    %1047 = vmatprep.subr.mxu0 %v1046
    %v1048 = vand.u32 %v107, 4294901760
    %v1049 = vsub.f32 %v107, %v1048
    %v1050 = vand.u32 %v1049, 4294901760
    %1051 = vmatpush1.msra.mxu0 %v1050
    %v1052 = vand.u32 %v112, 4294901760
    %v1053 = vsub.f32 %v112, %v1052
    %v1054 = vand.u32 %v1053, 4294901760
    %1055 = vmatprep.subr.mxu0 %v1054
    %v1056 = vand.u32 %v111, 4294901760
    %v1057 = vsub.f32 %v111, %v1056
    %v1058 = vand.u32 %v1057, 4294901760
    %1059 = vmatpush1.msra.mxu0 %v1058
    %v1060 = vand.u32 %v116, 4294901760
    %v1061 = vsub.f32 %v116, %v1060
    %v1062 = vand.u32 %v1061, 4294901760
    %1063 = vmatprep.subr.mxu0 %v1062
    %v1064 = vand.u32 %v115, 4294901760
    %v1065 = vsub.f32 %v115, %v1064
    %v1066 = vand.u32 %v1065, 4294901760
    %1067 = vmatpush1.msra.mxu0 %v1066
    %v1068 = vand.u32 %v120, 4294901760
    %v1069 = vsub.f32 %v120, %v1068
    %v1070 = vand.u32 %v1069, 4294901760
    %1071 = vmatprep.subr.mxu0 %v1070
    %v1072 = vand.u32 %v119, 4294901760
    %v1073 = vsub.f32 %v119, %v1072
    %v1074 = vand.u32 %v1073, 4294901760
    %1075 = vmatpush1.msra.mxu0 %v1074
    %v1076 = vand.u32 %v124, 4294901760
    %v1077 = vsub.f32 %v124, %v1076
    %v1078 = vand.u32 %v1077, 4294901760
    %1079 = vmatprep.subr.mxu0 %v1078
    %v1080 = vand.u32 %v123, 4294901760
    %v1081 = vsub.f32 %v123, %v1080
    %v1082 = vand.u32 %v1081, 4294901760
    %1083 = vmatpush1.msra.mxu0 %v1082
    %v1084 = vand.u32 %v128, 4294901760
    %v1085 = vsub.f32 %v128, %v1084
    %v1086 = vand.u32 %v1085, 4294901760
    %1087 = vmatprep.subr.mxu0 %v1086
    %v1088 = vand.u32 %v127, 4294901760
    %v1089 = vsub.f32 %v127, %v1088
    %v1090 = vand.u32 %v1089, 4294901760
    %1091 = vmatpush1.msra.mxu0 %v1090
    %v1092 = vand.u32 %v132, 4294901760
    %v1093 = vsub.f32 %v132, %v1092
    %v1094 = vand.u32 %v1093, 4294901760
    %1095 = vmatprep.subr.mxu0 %v1094
    %v1096 = vand.u32 %v131, 4294901760
    %v1097 = vsub.f32 %v131, %v1096
    %v1098 = vand.u32 %v1097, 4294901760
    %1099 = vmatpush1.msra.mxu0 %v1098
    %v1100 = vand.u32 %v136, 4294901760
    %v1101 = vsub.f32 %v136, %v1100
    %v1102 = vand.u32 %v1101, 4294901760
    %1103 = vmatprep.subr.mxu0 %v1102
    %v1104 = vand.u32 %v135, 4294901760
    %v1105 = vsub.f32 %v135, %v1104
    %v1106 = vand.u32 %v1105, 4294901760
    %1107 = vmatpush1.msra.mxu0 %v1106
    %v1108 = vand.u32 %v140, 4294901760
    %v1109 = vsub.f32 %v140, %v1108
    %v1110 = vand.u32 %v1109, 4294901760
    %1111 = vmatprep.subr.mxu0 %v1110
    %v1112 = vand.u32 %v139, 4294901760
    %v1113 = vsub.f32 %v139, %v1112
    %v1114 = vand.u32 %v1113, 4294901760
    %1115 = vmatpush1.msra.mxu0 %v1114
    %v1116 = vand.u32 %v144, 4294901760
    %v1117 = vsub.f32 %v144, %v1116
    %v1118 = vand.u32 %v1117, 4294901760
    %1119 = vmatprep.subr.mxu0 %v1118
    %v1120 = vand.u32 %v143, 4294901760
    %v1121 = vsub.f32 %v143, %v1120
    %v1122 = vand.u32 %v1121, 4294901760
    %1123 = vmatpush1.msra.mxu0 %v1122
    %1124 = vmatprep.subr.mxu0 0.0
    %1125 = vmatpush1.msra.mxu0 0.0
    %1126 = vmatprep.subr.mxu0 0.0
    %1127 = vmatpush1.msra.mxu0 0.0
    %1128 = vmatprep.subr.mxu0 0.0
    %1129 = vmatpush1.msra.mxu0 0.0
    %1130 = vmatprep.subr.mxu0 0.0
    %1131 = vmatpush1.msra.mxu0 0.0
    %1132 = vmatprep.subr.mxu0 0.0
    %1133 = vmatpush1.msra.mxu0 0.0
    %1134 = vmatprep.subr.mxu0 0.0
    %1135 = vmatpush1.msra.mxu0 0.0
    %1136 = vmatprep.subr.mxu0 0.0
    %1137 = vmatpush1.msra.mxu0 0.0
    %1138 = vmatprep.subr.mxu0 0.0
    %1139 = vmatpush1.msra.mxu0 0.0
    %1140 = vmatprep.subr.mxu0 0.0
    %1141 = vmatpush1.msra.mxu0 0.0
    %1142 = vmatprep.subr.mxu0 0.0
    %1143 = vmatpush1.msra.mxu0 0.0
    %1144 = vmatprep.subr.mxu0 0.0
    %1145 = vmatpush1.msra.mxu0 0.0
    %1146 = vmatprep.subr.mxu0 0.0
    %1147 = vmatpush1.msra.mxu0 0.0
    %1148 = vmatprep.subr.mxu0 0.0
    %1149 = vmatpush1.msra.mxu0 0.0
    %1150 = vmatprep.subr.mxu0 0.0
    %1151 = vmatpush1.msra.mxu0 0.0
    %1152 = vmatprep.subr.mxu0 0.0
    %1153 = vmatpush1.msra.mxu0 0.0
    %1154 = vmatprep.subr.mxu0 0.0
    %1155 = vmatpush1.msra.mxu0 0.0
    %1156 = vmatprep.mubr.f32.mxu0 0.0
    %v1157 = vand.u32 %v75, 4294901760
    %1158 = vmatmul.mubr.f32.gmra.mrb[0].mxu0 %v1157
    %v1159 = vpop.f32.mrb[0].mxu0
    %v1160 = vadd.f32 %v929, %v1159
    %v1161 = vpop.f32.mrb[0].mxu0
    %v1162 = vadd.f32 %v931, %v1161
    %1163 = vmatprep.mubr.f32.mxu0 0.0
    %v1164 = vand.u32 %v76, 4294901760
    %1165 = vmatmul.mubr.f32.gmra.mrb[0].mxu0 %v1164
    %v1166 = vpop.f32.mrb[0].mxu0
    %v1167 = vadd.f32 %v938, %v1166
    %v1168 = vpop.f32.mrb[0].mxu0
    %v1169 = vadd.f32 %v940, %v1168
    %1170 = vmatprep.mubr.f32.mxu0 0.0
    %v1171 = vand.u32 %v77, 4294901760
    %1172 = vmatmul.mubr.f32.gmra.mrb[0].mxu0 %v1171
    %v1173 = vpop.f32.mrb[0].mxu0
    %v1174 = vadd.f32 %v947, %v1173
    %v1175 = vpop.f32.mrb[0].mxu0
    %v1176 = vadd.f32 %v949, %v1175
    %1177 = vmatprep.mubr.f32.mxu0 0.0
    %v1178 = vand.u32 %v78, 4294901760
    %1179 = vmatmul.mubr.f32.gmra.mrb[0].mxu0 %v1178
    %v1180 = vpop.f32.mrb[0].mxu0
    %v1181 = vadd.f32 %v956, %v1180
    %v1182 = vpop.f32.mrb[0].mxu0
    %v1183 = vadd.f32 %v958, %v1182
    %1184 = vmatprep.mubr.f32.mxu0 0.0
    %v1185 = vand.u32 %v79, 4294901760
    %1186 = vmatmul.mubr.f32.gmra.mrb[0].mxu0 %v1185
    %v1187 = vpop.f32.mrb[0].mxu0
    %v1188 = vadd.f32 %v965, %v1187
    %v1189 = vpop.f32.mrb[0].mxu0
    %v1190 = vadd.f32 %v967, %v1189
    %1191 = vmatprep.mubr.f32.mxu0 0.0
    %v1192 = vand.u32 %v80, 4294901760
    %1193 = vmatmul.mubr.f32.gmra.mrb[0].mxu0 %v1192
    %v1194 = vpop.f32.mrb[0].mxu0
    %v1195 = vadd.f32 %v974, %v1194
    %v1196 = vpop.f32.mrb[0].mxu0
    %v1197 = vadd.f32 %v976, %v1196
    %1198 = vmatprep.mubr.f32.mxu0 0.0
    %v1199 = vand.u32 %v81, 4294901760
    %1200 = vmatmul.mubr.f32.gmra.mrb[0].mxu0 %v1199
    %v1201 = vpop.f32.mrb[0].mxu0
    %v1202 = vadd.f32 %v983, %v1201
    %v1203 = vpop.f32.mrb[0].mxu0
    %v1204 = vadd.f32 %v985, %v1203
    %1205 = vmatprep.mubr.f32.mxu0 0.0
    %v1206 = vand.u32 %v82, 4294901760
    %1207 = vmatmul.mubr.f32.gmra.mrb[0].mxu0 %v1206
    %v1208 = vpop.f32.mrb[0].mxu0
    %v1209 = vadd.f32 %v992, %v1208
    %v1210 = vpop.f32.mrb[0].mxu0
    %v1211 = vadd.f32 %v994, %v1210
    %1212 = vdwg.mxu0
    %v1213 = vand.u32 %v84, 4294901760
    %1214 = vmatprep.subr.mxu0 %v1213
    %v1215 = vand.u32 %v83, 4294901760
    %1216 = vmatpush1.msra.mxu0 %v1215
    %v1217 = vand.u32 %v88, 4294901760
    %1218 = vmatprep.subr.mxu0 %v1217
    %v1219 = vand.u32 %v87, 4294901760
    %1220 = vmatpush1.msra.mxu0 %v1219
    %v1221 = vand.u32 %v92, 4294901760
    %1222 = vmatprep.subr.mxu0 %v1221
    %v1223 = vand.u32 %v91, 4294901760
    %1224 = vmatpush1.msra.mxu0 %v1223
    %v1225 = vand.u32 %v96, 4294901760
    %1226 = vmatprep.subr.mxu0 %v1225
    %v1227 = vand.u32 %v95, 4294901760
    %1228 = vmatpush1.msra.mxu0 %v1227
    %v1229 = vand.u32 %v100, 4294901760
    %1230 = vmatprep.subr.mxu0 %v1229
    %v1231 = vand.u32 %v99, 4294901760
    %1232 = vmatpush1.msra.mxu0 %v1231
    %v1233 = vand.u32 %v104, 4294901760
    %1234 = vmatprep.subr.mxu0 %v1233
    %v1235 = vand.u32 %v103, 4294901760
    %1236 = vmatpush1.msra.mxu0 %v1235
    %v1237 = vand.u32 %v108, 4294901760
    %1238 = vmatprep.subr.mxu0 %v1237
    %v1239 = vand.u32 %v107, 4294901760
    %1240 = vmatpush1.msra.mxu0 %v1239
    %v1241 = vand.u32 %v112, 4294901760
    %1242 = vmatprep.subr.mxu0 %v1241
    %v1243 = vand.u32 %v111, 4294901760
    %1244 = vmatpush1.msra.mxu0 %v1243
    %v1245 = vand.u32 %v116, 4294901760
    %1246 = vmatprep.subr.mxu0 %v1245
    %v1247 = vand.u32 %v115, 4294901760
    %1248 = vmatpush1.msra.mxu0 %v1247
    %v1249 = vand.u32 %v120, 4294901760
    %1250 = vmatprep.subr.mxu0 %v1249
    %v1251 = vand.u32 %v119, 4294901760
    %1252 = vmatpush1.msra.mxu0 %v1251
    %v1253 = vand.u32 %v124, 4294901760
    %1254 = vmatprep.subr.mxu0 %v1253
    %v1255 = vand.u32 %v123, 4294901760
    %1256 = vmatpush1.msra.mxu0 %v1255
    %v1257 = vand.u32 %v128, 4294901760
    %1258 = vmatprep.subr.mxu0 %v1257
    %v1259 = vand.u32 %v127, 4294901760
    %1260 = vmatpush1.msra.mxu0 %v1259
    %v1261 = vand.u32 %v132, 4294901760
    %1262 = vmatprep.subr.mxu0 %v1261
    %v1263 = vand.u32 %v131, 4294901760
    %1264 = vmatpush1.msra.mxu0 %v1263
    %v1265 = vand.u32 %v136, 4294901760
    %1266 = vmatprep.subr.mxu0 %v1265
    %v1267 = vand.u32 %v135, 4294901760
    %1268 = vmatpush1.msra.mxu0 %v1267
    %v1269 = vand.u32 %v140, 4294901760
    %1270 = vmatprep.subr.mxu0 %v1269
    %v1271 = vand.u32 %v139, 4294901760
    %1272 = vmatpush1.msra.mxu0 %v1271
    %v1273 = vand.u32 %v144, 4294901760
    %1274 = vmatprep.subr.mxu0 %v1273
    %v1275 = vand.u32 %v143, 4294901760
    %1276 = vmatpush1.msra.mxu0 %v1275
    %1277 = vmatprep.subr.mxu0 0.0
    %1278 = vmatpush1.msra.mxu0 0.0
    %1279 = vmatprep.subr.mxu0 0.0
    %1280 = vmatpush1.msra.mxu0 0.0
    %1281 = vmatprep.subr.mxu0 0.0
    %1282 = vmatpush1.msra.mxu0 0.0
    %1283 = vmatprep.subr.mxu0 0.0
    %1284 = vmatpush1.msra.mxu0 0.0
    %1285 = vmatprep.subr.mxu0 0.0
    %1286 = vmatpush1.msra.mxu0 0.0
    %1287 = vmatprep.subr.mxu0 0.0
    %1288 = vmatpush1.msra.mxu0 0.0
    %1289 = vmatprep.subr.mxu0 0.0
    %1290 = vmatpush1.msra.mxu0 0.0
    %1291 = vmatprep.subr.mxu0 0.0
    %1292 = vmatpush1.msra.mxu0 0.0
    %1293 = vmatprep.subr.mxu0 0.0
    %1294 = vmatpush1.msra.mxu0 0.0
    %1295 = vmatprep.subr.mxu0 0.0
    %1296 = vmatpush1.msra.mxu0 0.0
    %1297 = vmatprep.subr.mxu0 0.0
    %1298 = vmatpush1.msra.mxu0 0.0
    %1299 = vmatprep.subr.mxu0 0.0
    %1300 = vmatpush1.msra.mxu0 0.0
    %1301 = vmatprep.subr.mxu0 0.0
    %1302 = vmatpush1.msra.mxu0 0.0
    %1303 = vmatprep.subr.mxu0 0.0
    %1304 = vmatpush1.msra.mxu0 0.0
    %1305 = vmatprep.subr.mxu0 0.0
    %1306 = vmatpush1.msra.mxu0 0.0
    %1307 = vmatprep.subr.mxu0 0.0
    %1308 = vmatpush1.msra.mxu0 0.0
    %1309 = vmatprep.mubr.f32.mxu0 0.0
    %v1310 = vand.u32 %v75, 4294901760
    %1311 = vmatmul.mubr.f32.gmra.mrb[0].mxu0 %v1310
    %v1312 = vpop.f32.mrb[0].mxu0
    %v1313 = vadd.f32 %v1160, %v1312
    %v1314 = vpop.f32.mrb[0].mxu0
    %v1315 = vadd.f32 %v1162, %v1314
    %1316 = vmatprep.mubr.f32.mxu0 0.0
    %v1317 = vand.u32 %v76, 4294901760
    %1318 = vmatmul.mubr.f32.gmra.mrb[0].mxu0 %v1317
    %v1319 = vpop.f32.mrb[0].mxu0
    %v1320 = vadd.f32 %v1167, %v1319
    %v1321 = vpop.f32.mrb[0].mxu0
    %v1322 = vadd.f32 %v1169, %v1321
    %1323 = vmatprep.mubr.f32.mxu0 0.0
    %v1324 = vand.u32 %v77, 4294901760
    %1325 = vmatmul.mubr.f32.gmra.mrb[0].mxu0 %v1324
    %v1326 = vpop.f32.mrb[0].mxu0
    %v1327 = vadd.f32 %v1174, %v1326
    %v1328 = vpop.f32.mrb[0].mxu0
    %v1329 = vadd.f32 %v1176, %v1328
    %1330 = vmatprep.mubr.f32.mxu0 0.0
    %v1331 = vand.u32 %v78, 4294901760
    %1332 = vmatmul.mubr.f32.gmra.mrb[0].mxu0 %v1331
    %v1333 = vpop.f32.mrb[0].mxu0
    %v1334 = vadd.f32 %v1181, %v1333
    %v1335 = vpop.f32.mrb[0].mxu0
    %v1336 = vadd.f32 %v1183, %v1335
    %1337 = vmatprep.mubr.f32.mxu0 0.0
    %v1338 = vand.u32 %v79, 4294901760
    %1339 = vmatmul.mubr.f32.gmra.mrb[0].mxu0 %v1338
    %v1340 = vpop.f32.mrb[0].mxu0
    %v1341 = vadd.f32 %v1188, %v1340
    %v1342 = vpop.f32.mrb[0].mxu0
    %v1343 = vadd.f32 %v1190, %v1342
    %1344 = vmatprep.mubr.f32.mxu0 0.0
    %v1345 = vand.u32 %v80, 4294901760
    %1346 = vmatmul.mubr.f32.gmra.mrb[0].mxu0 %v1345
    %v1347 = vpop.f32.mrb[0].mxu0
    %v1348 = vadd.f32 %v1195, %v1347
    %v1349 = vpop.f32.mrb[0].mxu0
    %v1350 = vadd.f32 %v1197, %v1349
    %1351 = vmatprep.mubr.f32.mxu0 0.0
    %v1352 = vand.u32 %v81, 4294901760
    %1353 = vmatmul.mubr.f32.gmra.mrb[0].mxu0 %v1352
    %v1354 = vpop.f32.mrb[0].mxu0
    %v1355 = vadd.f32 %v1202, %v1354
    %v1356 = vpop.f32.mrb[0].mxu0
    %v1357 = vadd.f32 %v1204, %v1356
    %1358 = vmatprep.mubr.f32.mxu0 0.0
    %v1359 = vand.u32 %v82, 4294901760
    %1360 = vmatmul.mubr.f32.gmra.mrb[0].mxu0 %v1359
    %v1361 = vpop.f32.mrb[0].mxu0
    %v1362 = vadd.f32 %v1209, %v1361
    %v1363 = vpop.f32.mrb[0].mxu0
    %v1364 = vadd.f32 %v1211, %v1363
    %1365 = vdwg.mxu0
    %v1366 = vand.u32 %v86, 4294901760
    %1367 = vmatprep.subr.mxu0 %v1366
    %v1368 = vand.u32 %v85, 4294901760
    %1369 = vmatpush1.msra.mxu0 %v1368
    %v1370 = vand.u32 %v90, 4294901760
    %1371 = vmatprep.subr.mxu0 %v1370
    %v1372 = vand.u32 %v89, 4294901760
    %1373 = vmatpush1.msra.mxu0 %v1372
    %v1374 = vand.u32 %v94, 4294901760
    %1375 = vmatprep.subr.mxu0 %v1374
    %v1376 = vand.u32 %v93, 4294901760
    %1377 = vmatpush1.msra.mxu0 %v1376
    %v1378 = vand.u32 %v98, 4294901760
    %1379 = vmatprep.subr.mxu0 %v1378
    %v1380 = vand.u32 %v97, 4294901760
    %1381 = vmatpush1.msra.mxu0 %v1380
    %v1382 = vand.u32 %v102, 4294901760
    %1383 = vmatprep.subr.mxu0 %v1382
    %v1384 = vand.u32 %v101, 4294901760
    %1385 = vmatpush1.msra.mxu0 %v1384
    %v1386 = vand.u32 %v106, 4294901760
    %1387 = vmatprep.subr.mxu0 %v1386
    %v1388 = vand.u32 %v105, 4294901760
    %1389 = vmatpush1.msra.mxu0 %v1388
    %v1390 = vand.u32 %v110, 4294901760
    %1391 = vmatprep.subr.mxu0 %v1390
    %v1392 = vand.u32 %v109, 4294901760
    %1393 = vmatpush1.msra.mxu0 %v1392
    %v1394 = vand.u32 %v114, 4294901760
    %1395 = vmatprep.subr.mxu0 %v1394
    %v1396 = vand.u32 %v113, 4294901760
    %1397 = vmatpush1.msra.mxu0 %v1396
    %v1398 = vand.u32 %v118, 4294901760
    %1399 = vmatprep.subr.mxu0 %v1398
    %v1400 = vand.u32 %v117, 4294901760
    %1401 = vmatpush1.msra.mxu0 %v1400
    %v1402 = vand.u32 %v122, 4294901760
    %1403 = vmatprep.subr.mxu0 %v1402
    %v1404 = vand.u32 %v121, 4294901760
    %1405 = vmatpush1.msra.mxu0 %v1404
    %v1406 = vand.u32 %v126, 4294901760
    %1407 = vmatprep.subr.mxu0 %v1406
    %v1408 = vand.u32 %v125, 4294901760
    %1409 = vmatpush1.msra.mxu0 %v1408
    %v1410 = vand.u32 %v130, 4294901760
    %1411 = vmatprep.subr.mxu0 %v1410
    %v1412 = vand.u32 %v129, 4294901760
    %1413 = vmatpush1.msra.mxu0 %v1412
    %v1414 = vand.u32 %v134, 4294901760
    %1415 = vmatprep.subr.mxu0 %v1414
    %v1416 = vand.u32 %v133, 4294901760
    %1417 = vmatpush1.msra.mxu0 %v1416
    %v1418 = vand.u32 %v138, 4294901760
    %1419 = vmatprep.subr.mxu0 %v1418
    %v1420 = vand.u32 %v137, 4294901760
    %1421 = vmatpush1.msra.mxu0 %v1420
    %v1422 = vand.u32 %v142, 4294901760
    %1423 = vmatprep.subr.mxu0 %v1422
    %v1424 = vand.u32 %v141, 4294901760
    %1425 = vmatpush1.msra.mxu0 %v1424
    %v1426 = vand.u32 %v146, 4294901760
    %1427 = vmatprep.subr.mxu0 %v1426
    %v1428 = vand.u32 %v145, 4294901760
    %1429 = vmatpush1.msra.mxu0 %v1428
    %1430 = vmatprep.subr.mxu0 0.0
    %1431 = vmatpush1.msra.mxu0 0.0
    %1432 = vmatprep.subr.mxu0 0.0
    %1433 = vmatpush1.msra.mxu0 0.0
    %1434 = vmatprep.subr.mxu0 0.0
    %1435 = vmatpush1.msra.mxu0 0.0
    %1436 = vmatprep.subr.mxu0 0.0
    %1437 = vmatpush1.msra.mxu0 0.0
    %1438 = vmatprep.subr.mxu0 0.0
    %1439 = vmatpush1.msra.mxu0 0.0
    %1440 = vmatprep.subr.mxu0 0.0
    %1441 = vmatpush1.msra.mxu0 0.0
    %1442 = vmatprep.subr.mxu0 0.0
    %1443 = vmatpush1.msra.mxu0 0.0
    %1444 = vmatprep.subr.mxu0 0.0
    %1445 = vmatpush1.msra.mxu0 0.0
    %1446 = vmatprep.subr.mxu0 0.0
    %1447 = vmatpush1.msra.mxu0 0.0
    %1448 = vmatprep.subr.mxu0 0.0
    %1449 = vmatpush1.msra.mxu0 0.0
    %1450 = vmatprep.subr.mxu0 0.0
    %1451 = vmatpush1.msra.mxu0 0.0
    %1452 = vmatprep.subr.mxu0 0.0
    %1453 = vmatpush1.msra.mxu0 0.0
    %1454 = vmatprep.subr.mxu0 0.0
    %1455 = vmatpush1.msra.mxu0 0.0
    %1456 = vmatprep.subr.mxu0 0.0
    %1457 = vmatpush1.msra.mxu0 0.0
    %1458 = vmatprep.subr.mxu0 0.0
    %1459 = vmatpush1.msra.mxu0 0.0
    %1460 = vmatprep.subr.mxu0 0.0
    %1461 = vmatpush1.msra.mxu0 0.0
    %1462 = vmatprep.mubr.f32.mxu0 0.0
    %v1463 = vand.u32 %v75, 4294901760
    %v1464 = vsub.f32 %v75, %v1463
    %v1465 = vand.u32 %v1464, 4294901760
    %v1466 = vsub.f32 %v1464, %v1465
    %v1467 = vand.u32 %v1466, 4294901760
    %1468 = vmatmul.mubr.f32.gmra.mrb[0].mxu0 %v1467
    %v1469 = vpop.f32.mrb[0].mxu0
    %v1470 = vadd.f32 %v159, %v1469
    %v1471 = vpop.f32.mrb[0].mxu0
    %v1472 = vadd.f32 %v163, %v1471
    %1473 = vmatprep.mubr.f32.mxu0 0.0
    %v1474 = vand.u32 %v76, 4294901760
    %v1475 = vsub.f32 %v76, %v1474
    %v1476 = vand.u32 %v1475, 4294901760
    %v1477 = vsub.f32 %v1475, %v1476
    %v1478 = vand.u32 %v1477, 4294901760
    %1479 = vmatmul.mubr.f32.gmra.mrb[0].mxu0 %v1478
    %v1480 = vpop.f32.mrb[0].mxu0
    %v1481 = vadd.f32 %v159, %v1480
    %v1482 = vpop.f32.mrb[0].mxu0
    %v1483 = vadd.f32 %v163, %v1482
    %1484 = vmatprep.mubr.f32.mxu0 0.0
    %v1485 = vand.u32 %v77, 4294901760
    %v1486 = vsub.f32 %v77, %v1485
    %v1487 = vand.u32 %v1486, 4294901760
    %v1488 = vsub.f32 %v1486, %v1487
    %v1489 = vand.u32 %v1488, 4294901760
    %1490 = vmatmul.mubr.f32.gmra.mrb[0].mxu0 %v1489
    %v1491 = vpop.f32.mrb[0].mxu0
    %v1492 = vadd.f32 %v159, %v1491
    %v1493 = vpop.f32.mrb[0].mxu0
    %v1494 = vadd.f32 %v163, %v1493
    %1495 = vmatprep.mubr.f32.mxu0 0.0
    %v1496 = vand.u32 %v78, 4294901760
    %v1497 = vsub.f32 %v78, %v1496
    %v1498 = vand.u32 %v1497, 4294901760
    %v1499 = vsub.f32 %v1497, %v1498
    %v1500 = vand.u32 %v1499, 4294901760
    %1501 = vmatmul.mubr.f32.gmra.mrb[0].mxu0 %v1500
    %v1502 = vpop.f32.mrb[0].mxu0
    %v1503 = vadd.f32 %v159, %v1502
    %v1504 = vpop.f32.mrb[0].mxu0
    %v1505 = vadd.f32 %v163, %v1504
    %1506 = vmatprep.mubr.f32.mxu0 0.0
    %v1507 = vand.u32 %v79, 4294901760
    %v1508 = vsub.f32 %v79, %v1507
    %v1509 = vand.u32 %v1508, 4294901760
    %v1510 = vsub.f32 %v1508, %v1509
    %v1511 = vand.u32 %v1510, 4294901760
    %1512 = vmatmul.mubr.f32.gmra.mrb[0].mxu0 %v1511
    %v1513 = vpop.f32.mrb[0].mxu0
    %v1514 = vadd.f32 %v159, %v1513
    %v1515 = vpop.f32.mrb[0].mxu0
    %v1516 = vadd.f32 %v163, %v1515
    %1517 = vmatprep.mubr.f32.mxu0 0.0
    %v1518 = vand.u32 %v80, 4294901760
    %v1519 = vsub.f32 %v80, %v1518
    %v1520 = vand.u32 %v1519, 4294901760
    %v1521 = vsub.f32 %v1519, %v1520
    %v1522 = vand.u32 %v1521, 4294901760
    %1523 = vmatmul.mubr.f32.gmra.mrb[0].mxu0 %v1522
    %v1524 = vpop.f32.mrb[0].mxu0
    %v1525 = vadd.f32 %v159, %v1524
    %v1526 = vpop.f32.mrb[0].mxu0
    %v1527 = vadd.f32 %v163, %v1526
    %1528 = vmatprep.mubr.f32.mxu0 0.0
    %v1529 = vand.u32 %v81, 4294901760
    %v1530 = vsub.f32 %v81, %v1529
    %v1531 = vand.u32 %v1530, 4294901760
    %v1532 = vsub.f32 %v1530, %v1531
    %v1533 = vand.u32 %v1532, 4294901760
    %1534 = vmatmul.mubr.f32.gmra.mrb[0].mxu0 %v1533
    %v1535 = vpop.f32.mrb[0].mxu0
    %v1536 = vadd.f32 %v159, %v1535
    %v1537 = vpop.f32.mrb[0].mxu0
    %v1538 = vadd.f32 %v163, %v1537
    %1539 = vmatprep.mubr.f32.mxu0 0.0
    %v1540 = vand.u32 %v82, 4294901760
    %v1541 = vsub.f32 %v82, %v1540
    %v1542 = vand.u32 %v1541, 4294901760
    %v1543 = vsub.f32 %v1541, %v1542
    %v1544 = vand.u32 %v1543, 4294901760
    %1545 = vmatmul.mubr.f32.gmra.mrb[0].mxu0 %v1544
    %v1546 = vpop.f32.mrb[0].mxu0
    %v1547 = vadd.f32 %v159, %v1546
    %v1548 = vpop.f32.mrb[0].mxu0
    %v1549 = vadd.f32 %v163, %v1548
    %1550 = vdwg.mxu0
    %v1551 = vand.u32 %v86, 4294901760
    %v1552 = vsub.f32 %v86, %v1551
    %v1553 = vand.u32 %v1552, 4294901760
    %v1554 = vsub.f32 %v1552, %v1553
    %v1555 = vand.u32 %v1554, 4294901760
    %1556 = vmatprep.subr.mxu0 %v1555
    %v1557 = vand.u32 %v85, 4294901760
    %v1558 = vsub.f32 %v85, %v1557
    %v1559 = vand.u32 %v1558, 4294901760
    %v1560 = vsub.f32 %v1558, %v1559
    %v1561 = vand.u32 %v1560, 4294901760
    %1562 = vmatpush1.msra.mxu0 %v1561
    %v1563 = vand.u32 %v90, 4294901760
    %v1564 = vsub.f32 %v90, %v1563
    %v1565 = vand.u32 %v1564, 4294901760
    %v1566 = vsub.f32 %v1564, %v1565
    %v1567 = vand.u32 %v1566, 4294901760
    %1568 = vmatprep.subr.mxu0 %v1567
    %v1569 = vand.u32 %v89, 4294901760
    %v1570 = vsub.f32 %v89, %v1569
    %v1571 = vand.u32 %v1570, 4294901760
    %v1572 = vsub.f32 %v1570, %v1571
    %v1573 = vand.u32 %v1572, 4294901760
    %1574 = vmatpush1.msra.mxu0 %v1573
    %v1575 = vand.u32 %v94, 4294901760
    %v1576 = vsub.f32 %v94, %v1575
    %v1577 = vand.u32 %v1576, 4294901760
    %v1578 = vsub.f32 %v1576, %v1577
    %v1579 = vand.u32 %v1578, 4294901760
    %1580 = vmatprep.subr.mxu0 %v1579
    %v1581 = vand.u32 %v93, 4294901760
    %v1582 = vsub.f32 %v93, %v1581
    %v1583 = vand.u32 %v1582, 4294901760
    %v1584 = vsub.f32 %v1582, %v1583
    %v1585 = vand.u32 %v1584, 4294901760
    %1586 = vmatpush1.msra.mxu0 %v1585
    %v1587 = vand.u32 %v98, 4294901760
    %v1588 = vsub.f32 %v98, %v1587
    %v1589 = vand.u32 %v1588, 4294901760
    %v1590 = vsub.f32 %v1588, %v1589
    %v1591 = vand.u32 %v1590, 4294901760
    %1592 = vmatprep.subr.mxu0 %v1591
    %v1593 = vand.u32 %v97, 4294901760
    %v1594 = vsub.f32 %v97, %v1593
    %v1595 = vand.u32 %v1594, 4294901760
    %v1596 = vsub.f32 %v1594, %v1595
    %v1597 = vand.u32 %v1596, 4294901760
    %1598 = vmatpush1.msra.mxu0 %v1597
    %v1599 = vand.u32 %v102, 4294901760
    %v1600 = vsub.f32 %v102, %v1599
    %v1601 = vand.u32 %v1600, 4294901760
    %v1602 = vsub.f32 %v1600, %v1601
    %v1603 = vand.u32 %v1602, 4294901760
    %1604 = vmatprep.subr.mxu0 %v1603
    %v1605 = vand.u32 %v101, 4294901760
    %v1606 = vsub.f32 %v101, %v1605
    %v1607 = vand.u32 %v1606, 4294901760
    %v1608 = vsub.f32 %v1606, %v1607
    %v1609 = vand.u32 %v1608, 4294901760
    %1610 = vmatpush1.msra.mxu0 %v1609
    %v1611 = vand.u32 %v106, 4294901760
    %v1612 = vsub.f32 %v106, %v1611
    %v1613 = vand.u32 %v1612, 4294901760
    %v1614 = vsub.f32 %v1612, %v1613
    %v1615 = vand.u32 %v1614, 4294901760
    %1616 = vmatprep.subr.mxu0 %v1615
    %v1617 = vand.u32 %v105, 4294901760
    %v1618 = vsub.f32 %v105, %v1617
    %v1619 = vand.u32 %v1618, 4294901760
    %v1620 = vsub.f32 %v1618, %v1619
    %v1621 = vand.u32 %v1620, 4294901760
    %1622 = vmatpush1.msra.mxu0 %v1621
    %v1623 = vand.u32 %v110, 4294901760
    %v1624 = vsub.f32 %v110, %v1623
    %v1625 = vand.u32 %v1624, 4294901760
    %v1626 = vsub.f32 %v1624, %v1625
    %v1627 = vand.u32 %v1626, 4294901760
    %1628 = vmatprep.subr.mxu0 %v1627
    %v1629 = vand.u32 %v109, 4294901760
    %v1630 = vsub.f32 %v109, %v1629
    %v1631 = vand.u32 %v1630, 4294901760
    %v1632 = vsub.f32 %v1630, %v1631
    %v1633 = vand.u32 %v1632, 4294901760
    %1634 = vmatpush1.msra.mxu0 %v1633
    %v1635 = vand.u32 %v114, 4294901760
    %v1636 = vsub.f32 %v114, %v1635
    %v1637 = vand.u32 %v1636, 4294901760
    %v1638 = vsub.f32 %v1636, %v1637
    %v1639 = vand.u32 %v1638, 4294901760
    %1640 = vmatprep.subr.mxu0 %v1639
    %v1641 = vand.u32 %v113, 4294901760
    %v1642 = vsub.f32 %v113, %v1641
    %v1643 = vand.u32 %v1642, 4294901760
    %v1644 = vsub.f32 %v1642, %v1643
    %v1645 = vand.u32 %v1644, 4294901760
    %1646 = vmatpush1.msra.mxu0 %v1645
    %v1647 = vand.u32 %v118, 4294901760
    %v1648 = vsub.f32 %v118, %v1647
    %v1649 = vand.u32 %v1648, 4294901760
    %v1650 = vsub.f32 %v1648, %v1649
    %v1651 = vand.u32 %v1650, 4294901760
    %1652 = vmatprep.subr.mxu0 %v1651
    %v1653 = vand.u32 %v117, 4294901760
    %v1654 = vsub.f32 %v117, %v1653
    %v1655 = vand.u32 %v1654, 4294901760
    %v1656 = vsub.f32 %v1654, %v1655
    %v1657 = vand.u32 %v1656, 4294901760
    %1658 = vmatpush1.msra.mxu0 %v1657
    %v1659 = vand.u32 %v122, 4294901760
    %v1660 = vsub.f32 %v122, %v1659
    %v1661 = vand.u32 %v1660, 4294901760
    %v1662 = vsub.f32 %v1660, %v1661
    %v1663 = vand.u32 %v1662, 4294901760
    %1664 = vmatprep.subr.mxu0 %v1663
    %v1665 = vand.u32 %v121, 4294901760
    %v1666 = vsub.f32 %v121, %v1665
    %v1667 = vand.u32 %v1666, 4294901760
    %v1668 = vsub.f32 %v1666, %v1667
    %v1669 = vand.u32 %v1668, 4294901760
    %1670 = vmatpush1.msra.mxu0 %v1669
    %v1671 = vand.u32 %v126, 4294901760
    %v1672 = vsub.f32 %v126, %v1671
    %v1673 = vand.u32 %v1672, 4294901760
    %v1674 = vsub.f32 %v1672, %v1673
    %v1675 = vand.u32 %v1674, 4294901760
    %1676 = vmatprep.subr.mxu0 %v1675
    %v1677 = vand.u32 %v125, 4294901760
    %v1678 = vsub.f32 %v125, %v1677
    %v1679 = vand.u32 %v1678, 4294901760
    %v1680 = vsub.f32 %v1678, %v1679
    %v1681 = vand.u32 %v1680, 4294901760
    %1682 = vmatpush1.msra.mxu0 %v1681
    %v1683 = vand.u32 %v130, 4294901760
    %v1684 = vsub.f32 %v130, %v1683
    %v1685 = vand.u32 %v1684, 4294901760
    %v1686 = vsub.f32 %v1684, %v1685
    %v1687 = vand.u32 %v1686, 4294901760
    %1688 = vmatprep.subr.mxu0 %v1687
    %v1689 = vand.u32 %v129, 4294901760
    %v1690 = vsub.f32 %v129, %v1689
    %v1691 = vand.u32 %v1690, 4294901760
    %v1692 = vsub.f32 %v1690, %v1691
    %v1693 = vand.u32 %v1692, 4294901760
    %1694 = vmatpush1.msra.mxu0 %v1693
    %v1695 = vand.u32 %v134, 4294901760
    %v1696 = vsub.f32 %v134, %v1695
    %v1697 = vand.u32 %v1696, 4294901760
    %v1698 = vsub.f32 %v1696, %v1697
    %v1699 = vand.u32 %v1698, 4294901760
    %1700 = vmatprep.subr.mxu0 %v1699
    %v1701 = vand.u32 %v133, 4294901760
    %v1702 = vsub.f32 %v133, %v1701
    %v1703 = vand.u32 %v1702, 4294901760
    %v1704 = vsub.f32 %v1702, %v1703
    %v1705 = vand.u32 %v1704, 4294901760
    %1706 = vmatpush1.msra.mxu0 %v1705
    %v1707 = vand.u32 %v138, 4294901760
    %v1708 = vsub.f32 %v138, %v1707
    %v1709 = vand.u32 %v1708, 4294901760
    %v1710 = vsub.f32 %v1708, %v1709
    %v1711 = vand.u32 %v1710, 4294901760
    %1712 = vmatprep.subr.mxu0 %v1711
    %v1713 = vand.u32 %v137, 4294901760
    %v1714 = vsub.f32 %v137, %v1713
    %v1715 = vand.u32 %v1714, 4294901760
    %v1716 = vsub.f32 %v1714, %v1715
    %v1717 = vand.u32 %v1716, 4294901760
    %1718 = vmatpush1.msra.mxu0 %v1717
    %v1719 = vand.u32 %v142, 4294901760
    %v1720 = vsub.f32 %v142, %v1719
    %v1721 = vand.u32 %v1720, 4294901760
    %v1722 = vsub.f32 %v1720, %v1721
    %v1723 = vand.u32 %v1722, 4294901760
    %1724 = vmatprep.subr.mxu0 %v1723
    %v1725 = vand.u32 %v141, 4294901760
    %v1726 = vsub.f32 %v141, %v1725
    %v1727 = vand.u32 %v1726, 4294901760
    %v1728 = vsub.f32 %v1726, %v1727
    %v1729 = vand.u32 %v1728, 4294901760
    %1730 = vmatpush1.msra.mxu0 %v1729
    %v1731 = vand.u32 %v146, 4294901760
    %v1732 = vsub.f32 %v146, %v1731
    %v1733 = vand.u32 %v1732, 4294901760
    %v1734 = vsub.f32 %v1732, %v1733
    %v1735 = vand.u32 %v1734, 4294901760
    %1736 = vmatprep.subr.mxu0 %v1735
    %v1737 = vand.u32 %v145, 4294901760
    %v1738 = vsub.f32 %v145, %v1737
    %v1739 = vand.u32 %v1738, 4294901760
    %v1740 = vsub.f32 %v1738, %v1739
    %v1741 = vand.u32 %v1740, 4294901760
    %1742 = vmatpush1.msra.mxu0 %v1741
    %1743 = vmatprep.subr.mxu0 0.0
    %1744 = vmatpush1.msra.mxu0 0.0
    %1745 = vmatprep.subr.mxu0 0.0
    %1746 = vmatpush1.msra.mxu0 0.0
    %1747 = vmatprep.subr.mxu0 0.0
    %1748 = vmatpush1.msra.mxu0 0.0
    %1749 = vmatprep.subr.mxu0 0.0
    %1750 = vmatpush1.msra.mxu0 0.0
    %1751 = vmatprep.subr.mxu0 0.0
    %1752 = vmatpush1.msra.mxu0 0.0
    %1753 = vmatprep.subr.mxu0 0.0
    %1754 = vmatpush1.msra.mxu0 0.0
    %1755 = vmatprep.subr.mxu0 0.0
    %1756 = vmatpush1.msra.mxu0 0.0
    %1757 = vmatprep.subr.mxu0 0.0
    %1758 = vmatpush1.msra.mxu0 0.0
    %1759 = vmatprep.subr.mxu0 0.0
    %1760 = vmatpush1.msra.mxu0 0.0
    %1761 = vmatprep.subr.mxu0 0.0
    %1762 = vmatpush1.msra.mxu0 0.0
    %1763 = vmatprep.subr.mxu0 0.0
    %1764 = vmatpush1.msra.mxu0 0.0
    %1765 = vmatprep.subr.mxu0 0.0
    %1766 = vmatpush1.msra.mxu0 0.0
    %1767 = vmatprep.subr.mxu0 0.0
    %1768 = vmatpush1.msra.mxu0 0.0
    %1769 = vmatprep.subr.mxu0 0.0
    %1770 = vmatpush1.msra.mxu0 0.0
    %1771 = vmatprep.subr.mxu0 0.0
    %1772 = vmatpush1.msra.mxu0 0.0
    %1773 = vmatprep.subr.mxu0 0.0
    %1774 = vmatpush1.msra.mxu0 0.0
    %1775 = vmatprep.mubr.f32.mxu0 0.0
    %v1776 = vand.u32 %v75, 4294901760
    %1777 = vmatmul.mubr.f32.gmra.mrb[0].mxu0 %v1776
    %v1778 = vpop.f32.mrb[0].mxu0
    %v1779 = vadd.f32 %v1470, %v1778
    %v1780 = vpop.f32.mrb[0].mxu0
    %v1781 = vadd.f32 %v1472, %v1780
    %1782 = vmatprep.mubr.f32.mxu0 0.0
    %v1783 = vand.u32 %v76, 4294901760
    %1784 = vmatmul.mubr.f32.gmra.mrb[0].mxu0 %v1783
    %v1785 = vpop.f32.mrb[0].mxu0
    %v1786 = vadd.f32 %v1481, %v1785
    %v1787 = vpop.f32.mrb[0].mxu0
    %v1788 = vadd.f32 %v1483, %v1787
    %1789 = vmatprep.mubr.f32.mxu0 0.0
    %v1790 = vand.u32 %v77, 4294901760
    %1791 = vmatmul.mubr.f32.gmra.mrb[0].mxu0 %v1790
    %v1792 = vpop.f32.mrb[0].mxu0
    %v1793 = vadd.f32 %v1492, %v1792
    %v1794 = vpop.f32.mrb[0].mxu0
    %v1795 = vadd.f32 %v1494, %v1794
    %1796 = vmatprep.mubr.f32.mxu0 0.0
    %v1797 = vand.u32 %v78, 4294901760
    %1798 = vmatmul.mubr.f32.gmra.mrb[0].mxu0 %v1797
    %v1799 = vpop.f32.mrb[0].mxu0
    %v1800 = vadd.f32 %v1503, %v1799
    %v1801 = vpop.f32.mrb[0].mxu0
    %v1802 = vadd.f32 %v1505, %v1801
    %1803 = vmatprep.mubr.f32.mxu0 0.0
    %v1804 = vand.u32 %v79, 4294901760
    %1805 = vmatmul.mubr.f32.gmra.mrb[0].mxu0 %v1804
    %v1806 = vpop.f32.mrb[0].mxu0
    %v1807 = vadd.f32 %v1514, %v1806
    %v1808 = vpop.f32.mrb[0].mxu0
    %v1809 = vadd.f32 %v1516, %v1808
    %1810 = vmatprep.mubr.f32.mxu0 0.0
    %v1811 = vand.u32 %v80, 4294901760
    %1812 = vmatmul.mubr.f32.gmra.mrb[0].mxu0 %v1811
    %v1813 = vpop.f32.mrb[0].mxu0
    %v1814 = vadd.f32 %v1525, %v1813
    %v1815 = vpop.f32.mrb[0].mxu0
    %v1816 = vadd.f32 %v1527, %v1815
    %1817 = vmatprep.mubr.f32.mxu0 0.0
    %v1818 = vand.u32 %v81, 4294901760
    %1819 = vmatmul.mubr.f32.gmra.mrb[0].mxu0 %v1818
    %v1820 = vpop.f32.mrb[0].mxu0
    %v1821 = vadd.f32 %v1536, %v1820
    %v1822 = vpop.f32.mrb[0].mxu0
    %v1823 = vadd.f32 %v1538, %v1822
    %1824 = vmatprep.mubr.f32.mxu0 0.0
    %v1825 = vand.u32 %v82, 4294901760
    %1826 = vmatmul.mubr.f32.gmra.mrb[0].mxu0 %v1825
    %v1827 = vpop.f32.mrb[0].mxu0
    %v1828 = vadd.f32 %v1547, %v1827
    %v1829 = vpop.f32.mrb[0].mxu0
    %v1830 = vadd.f32 %v1549, %v1829
    %1831 = vdwg.mxu0
    %v1832 = vand.u32 %v86, 4294901760
    %v1833 = vsub.f32 %v86, %v1832
    %1834 = vmatprep.subr.mxu0 %v1833
    %v1835 = vand.u32 %v85, 4294901760
    %v1836 = vsub.f32 %v85, %v1835
    %1837 = vmatpush1.msra.mxu0 %v1836
    %v1838 = vand.u32 %v90, 4294901760
    %v1839 = vsub.f32 %v90, %v1838
    %1840 = vmatprep.subr.mxu0 %v1839
    %v1841 = vand.u32 %v89, 4294901760
    %v1842 = vsub.f32 %v89, %v1841
    %1843 = vmatpush1.msra.mxu0 %v1842
    %v1844 = vand.u32 %v94, 4294901760
    %v1845 = vsub.f32 %v94, %v1844
    %1846 = vmatprep.subr.mxu0 %v1845
    %v1847 = vand.u32 %v93, 4294901760
    %v1848 = vsub.f32 %v93, %v1847
    %1849 = vmatpush1.msra.mxu0 %v1848
    %v1850 = vand.u32 %v98, 4294901760
    %v1851 = vsub.f32 %v98, %v1850
    %1852 = vmatprep.subr.mxu0 %v1851
    %v1853 = vand.u32 %v97, 4294901760
    %v1854 = vsub.f32 %v97, %v1853
    %1855 = vmatpush1.msra.mxu0 %v1854
    %v1856 = vand.u32 %v102, 4294901760
    %v1857 = vsub.f32 %v102, %v1856
    %1858 = vmatprep.subr.mxu0 %v1857
    %v1859 = vand.u32 %v101, 4294901760
    %v1860 = vsub.f32 %v101, %v1859
    %1861 = vmatpush1.msra.mxu0 %v1860
    %v1862 = vand.u32 %v106, 4294901760
    %v1863 = vsub.f32 %v106, %v1862
    %1864 = vmatprep.subr.mxu0 %v1863
    %v1865 = vand.u32 %v105, 4294901760
    %v1866 = vsub.f32 %v105, %v1865
    %1867 = vmatpush1.msra.mxu0 %v1866
    %v1868 = vand.u32 %v110, 4294901760
    %v1869 = vsub.f32 %v110, %v1868
    %1870 = vmatprep.subr.mxu0 %v1869
    %v1871 = vand.u32 %v109, 4294901760
    %v1872 = vsub.f32 %v109, %v1871
    %1873 = vmatpush1.msra.mxu0 %v1872
    %v1874 = vand.u32 %v114, 4294901760
    %v1875 = vsub.f32 %v114, %v1874
    %1876 = vmatprep.subr.mxu0 %v1875
    %v1877 = vand.u32 %v113, 4294901760
    %v1878 = vsub.f32 %v113, %v1877
    %1879 = vmatpush1.msra.mxu0 %v1878
    %v1880 = vand.u32 %v118, 4294901760
    %v1881 = vsub.f32 %v118, %v1880
    %1882 = vmatprep.subr.mxu0 %v1881
    %v1883 = vand.u32 %v117, 4294901760
    %v1884 = vsub.f32 %v117, %v1883
    %1885 = vmatpush1.msra.mxu0 %v1884
    %v1886 = vand.u32 %v122, 4294901760
    %v1887 = vsub.f32 %v122, %v1886
    %1888 = vmatprep.subr.mxu0 %v1887
    %v1889 = vand.u32 %v121, 4294901760
    %v1890 = vsub.f32 %v121, %v1889
    %1891 = vmatpush1.msra.mxu0 %v1890
    %v1892 = vand.u32 %v126, 4294901760
    %v1893 = vsub.f32 %v126, %v1892
    %1894 = vmatprep.subr.mxu0 %v1893
    %v1895 = vand.u32 %v125, 4294901760
    %v1896 = vsub.f32 %v125, %v1895
    %1897 = vmatpush1.msra.mxu0 %v1896
    %v1898 = vand.u32 %v130, 4294901760
    %v1899 = vsub.f32 %v130, %v1898
    %1900 = vmatprep.subr.mxu0 %v1899
    %v1901 = vand.u32 %v129, 4294901760
    %v1902 = vsub.f32 %v129, %v1901
    %1903 = vmatpush1.msra.mxu0 %v1902
    %v1904 = vand.u32 %v134, 4294901760
    %v1905 = vsub.f32 %v134, %v1904
    %1906 = vmatprep.subr.mxu0 %v1905
    %v1907 = vand.u32 %v133, 4294901760
    %v1908 = vsub.f32 %v133, %v1907
    %1909 = vmatpush1.msra.mxu0 %v1908
    %v1910 = vand.u32 %v138, 4294901760
    %v1911 = vsub.f32 %v138, %v1910
    %1912 = vmatprep.subr.mxu0 %v1911
    %v1913 = vand.u32 %v137, 4294901760
    %v1914 = vsub.f32 %v137, %v1913
    %1915 = vmatpush1.msra.mxu0 %v1914
    %v1916 = vand.u32 %v142, 4294901760
    %v1917 = vsub.f32 %v142, %v1916
    %1918 = vmatprep.subr.mxu0 %v1917
    %v1919 = vand.u32 %v141, 4294901760
    %v1920 = vsub.f32 %v141, %v1919
    %1921 = vmatpush1.msra.mxu0 %v1920
    %v1922 = vand.u32 %v146, 4294901760
    %v1923 = vsub.f32 %v146, %v1922
    %1924 = vmatprep.subr.mxu0 %v1923
    %v1925 = vand.u32 %v145, 4294901760
    %v1926 = vsub.f32 %v145, %v1925
    %1927 = vmatpush1.msra.mxu0 %v1926
    %1928 = vmatprep.subr.mxu0 0.0
    %1929 = vmatpush1.msra.mxu0 0.0
    %1930 = vmatprep.subr.mxu0 0.0
    %1931 = vmatpush1.msra.mxu0 0.0
    %1932 = vmatprep.subr.mxu0 0.0
    %1933 = vmatpush1.msra.mxu0 0.0
    %1934 = vmatprep.subr.mxu0 0.0
    %1935 = vmatpush1.msra.mxu0 0.0
    %1936 = vmatprep.subr.mxu0 0.0
    %1937 = vmatpush1.msra.mxu0 0.0
    %1938 = vmatprep.subr.mxu0 0.0
    %1939 = vmatpush1.msra.mxu0 0.0
    %1940 = vmatprep.subr.mxu0 0.0
    %1941 = vmatpush1.msra.mxu0 0.0
    %1942 = vmatprep.subr.mxu0 0.0
    %1943 = vmatpush1.msra.mxu0 0.0
    %1944 = vmatprep.subr.mxu0 0.0
    %1945 = vmatpush1.msra.mxu0 0.0
    %1946 = vmatprep.subr.mxu0 0.0
    %1947 = vmatpush1.msra.mxu0 0.0
    %1948 = vmatprep.subr.mxu0 0.0
    %1949 = vmatpush1.msra.mxu0 0.0
    %1950 = vmatprep.subr.mxu0 0.0
    %1951 = vmatpush1.msra.mxu0 0.0
    %1952 = vmatprep.subr.mxu0 0.0
    %1953 = vmatpush1.msra.mxu0 0.0
    %1954 = vmatprep.subr.mxu0 0.0
    %1955 = vmatpush1.msra.mxu0 0.0
    %1956 = vmatprep.subr.mxu0 0.0
    %1957 = vmatpush1.msra.mxu0 0.0
    %1958 = vmatprep.subr.mxu0 0.0
    %1959 = vmatpush1.msra.mxu0 0.0
    %1960 = vmatprep.mubr.f32.mxu0 0.0
    %v1961 = vand.u32 %v75, 4294901760
    %v1962 = vsub.f32 %v75, %v1961
    %1963 = vmatmul.mubr.f32.gmra.mrb[0].mxu0 %v1962
    %v1964 = vpop.f32.mrb[0].mxu0
    %v1965 = vadd.f32 %v1779, %v1964
    %v1966 = vpop.f32.mrb[0].mxu0
    %v1967 = vadd.f32 %v1781, %v1966
    %1968 = vmatprep.mubr.f32.mxu0 0.0
    %v1969 = vand.u32 %v76, 4294901760
    %v1970 = vsub.f32 %v76, %v1969
    %1971 = vmatmul.mubr.f32.gmra.mrb[0].mxu0 %v1970
    %v1972 = vpop.f32.mrb[0].mxu0
    %v1973 = vadd.f32 %v1786, %v1972
    %v1974 = vpop.f32.mrb[0].mxu0
    %v1975 = vadd.f32 %v1788, %v1974
    %1976 = vmatprep.mubr.f32.mxu0 0.0
    %v1977 = vand.u32 %v77, 4294901760
    %v1978 = vsub.f32 %v77, %v1977
    %1979 = vmatmul.mubr.f32.gmra.mrb[0].mxu0 %v1978
    %v1980 = vpop.f32.mrb[0].mxu0
    %v1981 = vadd.f32 %v1793, %v1980
    %v1982 = vpop.f32.mrb[0].mxu0
    %v1983 = vadd.f32 %v1795, %v1982
    %1984 = vmatprep.mubr.f32.mxu0 0.0
    %v1985 = vand.u32 %v78, 4294901760
    %v1986 = vsub.f32 %v78, %v1985
    %1987 = vmatmul.mubr.f32.gmra.mrb[0].mxu0 %v1986
    %v1988 = vpop.f32.mrb[0].mxu0
    %v1989 = vadd.f32 %v1800, %v1988
    %v1990 = vpop.f32.mrb[0].mxu0
    %v1991 = vadd.f32 %v1802, %v1990
    %1992 = vmatprep.mubr.f32.mxu0 0.0
    %v1993 = vand.u32 %v79, 4294901760
    %v1994 = vsub.f32 %v79, %v1993
    %1995 = vmatmul.mubr.f32.gmra.mrb[0].mxu0 %v1994
    %v1996 = vpop.f32.mrb[0].mxu0
    %v1997 = vadd.f32 %v1807, %v1996
    %v1998 = vpop.f32.mrb[0].mxu0
    %v1999 = vadd.f32 %v1809, %v1998
    %2000 = vmatprep.mubr.f32.mxu0 0.0
    %v2001 = vand.u32 %v80, 4294901760
    %v2002 = vsub.f32 %v80, %v2001
    %2003 = vmatmul.mubr.f32.gmra.mrb[0].mxu0 %v2002
    %v2004 = vpop.f32.mrb[0].mxu0
    %v2005 = vadd.f32 %v1814, %v2004
    %v2006 = vpop.f32.mrb[0].mxu0
    %v2007 = vadd.f32 %v1816, %v2006
    %2008 = vmatprep.mubr.f32.mxu0 0.0
    %v2009 = vand.u32 %v81, 4294901760
    %v2010 = vsub.f32 %v81, %v2009
    %2011 = vmatmul.mubr.f32.gmra.mrb[0].mxu0 %v2010
    %v2012 = vpop.f32.mrb[0].mxu0
    %v2013 = vadd.f32 %v1821, %v2012
    %v2014 = vpop.f32.mrb[0].mxu0
    %v2015 = vadd.f32 %v1823, %v2014
    %2016 = vmatprep.mubr.f32.mxu0 0.0
    %v2017 = vand.u32 %v82, 4294901760
    %v2018 = vsub.f32 %v82, %v2017
    %2019 = vmatmul.mubr.f32.gmra.mrb[0].mxu0 %v2018
    %v2020 = vpop.f32.mrb[0].mxu0
    %v2021 = vadd.f32 %v1828, %v2020
    %v2022 = vpop.f32.mrb[0].mxu0
    %v2023 = vadd.f32 %v1830, %v2022
    %2024 = vdwg.mxu0
    %v2025 = vand.u32 %v86, 4294901760
    %2026 = vmatprep.subr.mxu0 %v2025
    %v2027 = vand.u32 %v85, 4294901760
    %2028 = vmatpush1.msra.mxu0 %v2027
    %v2029 = vand.u32 %v90, 4294901760
    %2030 = vmatprep.subr.mxu0 %v2029
    %v2031 = vand.u32 %v89, 4294901760
    %2032 = vmatpush1.msra.mxu0 %v2031
    %v2033 = vand.u32 %v94, 4294901760
    %2034 = vmatprep.subr.mxu0 %v2033
    %v2035 = vand.u32 %v93, 4294901760
    %2036 = vmatpush1.msra.mxu0 %v2035
    %v2037 = vand.u32 %v98, 4294901760
    %2038 = vmatprep.subr.mxu0 %v2037
    %v2039 = vand.u32 %v97, 4294901760
    %2040 = vmatpush1.msra.mxu0 %v2039
    %v2041 = vand.u32 %v102, 4294901760
    %2042 = vmatprep.subr.mxu0 %v2041
    %v2043 = vand.u32 %v101, 4294901760
    %2044 = vmatpush1.msra.mxu0 %v2043
    %v2045 = vand.u32 %v106, 4294901760
    %2046 = vmatprep.subr.mxu0 %v2045
    %v2047 = vand.u32 %v105, 4294901760
    %2048 = vmatpush1.msra.mxu0 %v2047
    %v2049 = vand.u32 %v110, 4294901760
    %2050 = vmatprep.subr.mxu0 %v2049
    %v2051 = vand.u32 %v109, 4294901760
    %2052 = vmatpush1.msra.mxu0 %v2051
    %v2053 = vand.u32 %v114, 4294901760
    %2054 = vmatprep.subr.mxu0 %v2053
    %v2055 = vand.u32 %v113, 4294901760
    %2056 = vmatpush1.msra.mxu0 %v2055
    %v2057 = vand.u32 %v118, 4294901760
    %2058 = vmatprep.subr.mxu0 %v2057
    %v2059 = vand.u32 %v117, 4294901760
    %2060 = vmatpush1.msra.mxu0 %v2059
    %v2061 = vand.u32 %v122, 4294901760
    %2062 = vmatprep.subr.mxu0 %v2061
    %v2063 = vand.u32 %v121, 4294901760
    %2064 = vmatpush1.msra.mxu0 %v2063
    %v2065 = vand.u32 %v126, 4294901760
    %2066 = vmatprep.subr.mxu0 %v2065
    %v2067 = vand.u32 %v125, 4294901760
    %2068 = vmatpush1.msra.mxu0 %v2067
    %v2069 = vand.u32 %v130, 4294901760
    %2070 = vmatprep.subr.mxu0 %v2069
    %v2071 = vand.u32 %v129, 4294901760
    %2072 = vmatpush1.msra.mxu0 %v2071
    %v2073 = vand.u32 %v134, 4294901760
    %2074 = vmatprep.subr.mxu0 %v2073
    %v2075 = vand.u32 %v133, 4294901760
    %2076 = vmatpush1.msra.mxu0 %v2075
    %v2077 = vand.u32 %v138, 4294901760
    %2078 = vmatprep.subr.mxu0 %v2077
    %v2079 = vand.u32 %v137, 4294901760
    %2080 = vmatpush1.msra.mxu0 %v2079
    %v2081 = vand.u32 %v142, 4294901760
    %2082 = vmatprep.subr.mxu0 %v2081
    %v2083 = vand.u32 %v141, 4294901760
    %2084 = vmatpush1.msra.mxu0 %v2083
    %v2085 = vand.u32 %v146, 4294901760
    %2086 = vmatprep.subr.mxu0 %v2085
    %v2087 = vand.u32 %v145, 4294901760
    %2088 = vmatpush1.msra.mxu0 %v2087
    %2089 = vmatprep.subr.mxu0 0.0
    %2090 = vmatpush1.msra.mxu0 0.0
    %2091 = vmatprep.subr.mxu0 0.0
    %2092 = vmatpush1.msra.mxu0 0.0
    %2093 = vmatprep.subr.mxu0 0.0
    %2094 = vmatpush1.msra.mxu0 0.0
    %2095 = vmatprep.subr.mxu0 0.0
    %2096 = vmatpush1.msra.mxu0 0.0
    %2097 = vmatprep.subr.mxu0 0.0
    %2098 = vmatpush1.msra.mxu0 0.0
    %2099 = vmatprep.subr.mxu0 0.0
    %2100 = vmatpush1.msra.mxu0 0.0
    %2101 = vmatprep.subr.mxu0 0.0
    %2102 = vmatpush1.msra.mxu0 0.0
    %2103 = vmatprep.subr.mxu0 0.0
    %2104 = vmatpush1.msra.mxu0 0.0
    %2105 = vmatprep.subr.mxu0 0.0
    %2106 = vmatpush1.msra.mxu0 0.0
    %2107 = vmatprep.subr.mxu0 0.0
    %2108 = vmatpush1.msra.mxu0 0.0
    %2109 = vmatprep.subr.mxu0 0.0
    %2110 = vmatpush1.msra.mxu0 0.0
    %2111 = vmatprep.subr.mxu0 0.0
    %2112 = vmatpush1.msra.mxu0 0.0
    %2113 = vmatprep.subr.mxu0 0.0
    %2114 = vmatpush1.msra.mxu0 0.0
    %2115 = vmatprep.subr.mxu0 0.0
    %2116 = vmatpush1.msra.mxu0 0.0
    %2117 = vmatprep.subr.mxu0 0.0
    %2118 = vmatpush1.msra.mxu0 0.0
    %2119 = vmatprep.subr.mxu0 0.0
    %2120 = vmatpush1.msra.mxu0 0.0
    %2121 = vmatprep.mubr.f32.mxu0 0.0
    %v2122 = vand.u32 %v75, 4294901760
    %v2123 = vsub.f32 %v75, %v2122
    %v2124 = vand.u32 %v2123, 4294901760
    %2125 = vmatmul.mubr.f32.gmra.mrb[0].mxu0 %v2124
    %v2126 = vpop.f32.mrb[0].mxu0
    %v2127 = vadd.f32 %v1965, %v2126
    %v2128 = vpop.f32.mrb[0].mxu0
    %v2129 = vadd.f32 %v1967, %v2128
    %2130 = vmatprep.mubr.f32.mxu0 0.0
    %v2131 = vand.u32 %v76, 4294901760
    %v2132 = vsub.f32 %v76, %v2131
    %v2133 = vand.u32 %v2132, 4294901760
    %2134 = vmatmul.mubr.f32.gmra.mrb[0].mxu0 %v2133
    %v2135 = vpop.f32.mrb[0].mxu0
    %v2136 = vadd.f32 %v1973, %v2135
    %v2137 = vpop.f32.mrb[0].mxu0
    %v2138 = vadd.f32 %v1975, %v2137
    %2139 = vmatprep.mubr.f32.mxu0 0.0
    %v2140 = vand.u32 %v77, 4294901760
    %v2141 = vsub.f32 %v77, %v2140
    %v2142 = vand.u32 %v2141, 4294901760
    %2143 = vmatmul.mubr.f32.gmra.mrb[0].mxu0 %v2142
    %v2144 = vpop.f32.mrb[0].mxu0
    %v2145 = vadd.f32 %v1981, %v2144
    %v2146 = vpop.f32.mrb[0].mxu0
    %v2147 = vadd.f32 %v1983, %v2146
    %2148 = vmatprep.mubr.f32.mxu0 0.0
    %v2149 = vand.u32 %v78, 4294901760
    %v2150 = vsub.f32 %v78, %v2149
    %v2151 = vand.u32 %v2150, 4294901760
    %2152 = vmatmul.mubr.f32.gmra.mrb[0].mxu0 %v2151
    %v2153 = vpop.f32.mrb[0].mxu0
    %v2154 = vadd.f32 %v1989, %v2153
    %v2155 = vpop.f32.mrb[0].mxu0
    %v2156 = vadd.f32 %v1991, %v2155
    %2157 = vmatprep.mubr.f32.mxu0 0.0
    %v2158 = vand.u32 %v79, 4294901760
    %v2159 = vsub.f32 %v79, %v2158
    %v2160 = vand.u32 %v2159, 4294901760
    %2161 = vmatmul.mubr.f32.gmra.mrb[0].mxu0 %v2160
    %v2162 = vpop.f32.mrb[0].mxu0
    %v2163 = vadd.f32 %v1997, %v2162
    %v2164 = vpop.f32.mrb[0].mxu0
    %v2165 = vadd.f32 %v1999, %v2164
    %2166 = vmatprep.mubr.f32.mxu0 0.0
    %v2167 = vand.u32 %v80, 4294901760
    %v2168 = vsub.f32 %v80, %v2167
    %v2169 = vand.u32 %v2168, 4294901760
    %2170 = vmatmul.mubr.f32.gmra.mrb[0].mxu0 %v2169
    %v2171 = vpop.f32.mrb[0].mxu0
    %v2172 = vadd.f32 %v2005, %v2171
    %v2173 = vpop.f32.mrb[0].mxu0
    %v2174 = vadd.f32 %v2007, %v2173
    %2175 = vmatprep.mubr.f32.mxu0 0.0
    %v2176 = vand.u32 %v81, 4294901760
    %v2177 = vsub.f32 %v81, %v2176
    %v2178 = vand.u32 %v2177, 4294901760
    %2179 = vmatmul.mubr.f32.gmra.mrb[0].mxu0 %v2178
    %v2180 = vpop.f32.mrb[0].mxu0
    %v2181 = vadd.f32 %v2013, %v2180
    %v2182 = vpop.f32.mrb[0].mxu0
    %v2183 = vadd.f32 %v2015, %v2182
    %2184 = vmatprep.mubr.f32.mxu0 0.0
    %v2185 = vand.u32 %v82, 4294901760
    %v2186 = vsub.f32 %v82, %v2185
    %v2187 = vand.u32 %v2186, 4294901760
    %2188 = vmatmul.mubr.f32.gmra.mrb[0].mxu0 %v2187
    %v2189 = vpop.f32.mrb[0].mxu0
    %v2190 = vadd.f32 %v2021, %v2189
    %v2191 = vpop.f32.mrb[0].mxu0
    %v2192 = vadd.f32 %v2023, %v2191
    %2193 = vdwg.mxu0
    %v2194 = vand.u32 %v86, 4294901760
    %v2195 = vsub.f32 %v86, %v2194
    %v2196 = vand.u32 %v2195, 4294901760
    %2197 = vmatprep.subr.mxu0 %v2196
    %v2198 = vand.u32 %v85, 4294901760
    %v2199 = vsub.f32 %v85, %v2198
    %v2200 = vand.u32 %v2199, 4294901760
    %2201 = vmatpush1.msra.mxu0 %v2200
    %v2202 = vand.u32 %v90, 4294901760
    %v2203 = vsub.f32 %v90, %v2202
    %v2204 = vand.u32 %v2203, 4294901760
    %2205 = vmatprep.subr.mxu0 %v2204
    %v2206 = vand.u32 %v89, 4294901760
    %v2207 = vsub.f32 %v89, %v2206
    %v2208 = vand.u32 %v2207, 4294901760
    %2209 = vmatpush1.msra.mxu0 %v2208
    %v2210 = vand.u32 %v94, 4294901760
    %v2211 = vsub.f32 %v94, %v2210
    %v2212 = vand.u32 %v2211, 4294901760
    %2213 = vmatprep.subr.mxu0 %v2212
    %v2214 = vand.u32 %v93, 4294901760
    %v2215 = vsub.f32 %v93, %v2214
    %v2216 = vand.u32 %v2215, 4294901760
    %2217 = vmatpush1.msra.mxu0 %v2216
    %v2218 = vand.u32 %v98, 4294901760
    %v2219 = vsub.f32 %v98, %v2218
    %v2220 = vand.u32 %v2219, 4294901760
    %2221 = vmatprep.subr.mxu0 %v2220
    %v2222 = vand.u32 %v97, 4294901760
    %v2223 = vsub.f32 %v97, %v2222
    %v2224 = vand.u32 %v2223, 4294901760
    %2225 = vmatpush1.msra.mxu0 %v2224
    %v2226 = vand.u32 %v102, 4294901760
    %v2227 = vsub.f32 %v102, %v2226
    %v2228 = vand.u32 %v2227, 4294901760
    %2229 = vmatprep.subr.mxu0 %v2228
    %v2230 = vand.u32 %v101, 4294901760
    %v2231 = vsub.f32 %v101, %v2230
    %v2232 = vand.u32 %v2231, 4294901760
    %2233 = vmatpush1.msra.mxu0 %v2232
    %v2234 = vand.u32 %v106, 4294901760
    %v2235 = vsub.f32 %v106, %v2234
    %v2236 = vand.u32 %v2235, 4294901760
    %2237 = vmatprep.subr.mxu0 %v2236
    %v2238 = vand.u32 %v105, 4294901760
    %v2239 = vsub.f32 %v105, %v2238
    %v2240 = vand.u32 %v2239, 4294901760
    %2241 = vmatpush1.msra.mxu0 %v2240
    %v2242 = vand.u32 %v110, 4294901760
    %v2243 = vsub.f32 %v110, %v2242
    %v2244 = vand.u32 %v2243, 4294901760
    %2245 = vmatprep.subr.mxu0 %v2244
    %v2246 = vand.u32 %v109, 4294901760
    %v2247 = vsub.f32 %v109, %v2246
    %v2248 = vand.u32 %v2247, 4294901760
    %2249 = vmatpush1.msra.mxu0 %v2248
    %v2250 = vand.u32 %v114, 4294901760
    %v2251 = vsub.f32 %v114, %v2250
    %v2252 = vand.u32 %v2251, 4294901760
    %2253 = vmatprep.subr.mxu0 %v2252
    %v2254 = vand.u32 %v113, 4294901760
    %v2255 = vsub.f32 %v113, %v2254
    %v2256 = vand.u32 %v2255, 4294901760
    %2257 = vmatpush1.msra.mxu0 %v2256
    %v2258 = vand.u32 %v118, 4294901760
    %v2259 = vsub.f32 %v118, %v2258
    %v2260 = vand.u32 %v2259, 4294901760
    %2261 = vmatprep.subr.mxu0 %v2260
    %v2262 = vand.u32 %v117, 4294901760
    %v2263 = vsub.f32 %v117, %v2262
    %v2264 = vand.u32 %v2263, 4294901760
    %2265 = vmatpush1.msra.mxu0 %v2264
    %v2266 = vand.u32 %v122, 4294901760
    %v2267 = vsub.f32 %v122, %v2266
    %v2268 = vand.u32 %v2267, 4294901760
    %2269 = vmatprep.subr.mxu0 %v2268
    %v2270 = vand.u32 %v121, 4294901760
    %v2271 = vsub.f32 %v121, %v2270
    %v2272 = vand.u32 %v2271, 4294901760
    %2273 = vmatpush1.msra.mxu0 %v2272
    %v2274 = vand.u32 %v126, 4294901760
    %v2275 = vsub.f32 %v126, %v2274
    %v2276 = vand.u32 %v2275, 4294901760
    %2277 = vmatprep.subr.mxu0 %v2276
    %v2278 = vand.u32 %v125, 4294901760
    %v2279 = vsub.f32 %v125, %v2278
    %v2280 = vand.u32 %v2279, 4294901760
    %2281 = vmatpush1.msra.mxu0 %v2280
    %v2282 = vand.u32 %v130, 4294901760
    %v2283 = vsub.f32 %v130, %v2282
    %v2284 = vand.u32 %v2283, 4294901760
    %2285 = vmatprep.subr.mxu0 %v2284
    %v2286 = vand.u32 %v129, 4294901760
    %v2287 = vsub.f32 %v129, %v2286
    %v2288 = vand.u32 %v2287, 4294901760
    %2289 = vmatpush1.msra.mxu0 %v2288
    %v2290 = vand.u32 %v134, 4294901760
    %v2291 = vsub.f32 %v134, %v2290
    %v2292 = vand.u32 %v2291, 4294901760
    %2293 = vmatprep.subr.mxu0 %v2292
    %v2294 = vand.u32 %v133, 4294901760
    %v2295 = vsub.f32 %v133, %v2294
    %v2296 = vand.u32 %v2295, 4294901760
    %2297 = vmatpush1.msra.mxu0 %v2296
    %v2298 = vand.u32 %v138, 4294901760
    %v2299 = vsub.f32 %v138, %v2298
    %v2300 = vand.u32 %v2299, 4294901760
    %2301 = vmatprep.subr.mxu0 %v2300
    %v2302 = vand.u32 %v137, 4294901760
    %v2303 = vsub.f32 %v137, %v2302
    %v2304 = vand.u32 %v2303, 4294901760
    %2305 = vmatpush1.msra.mxu0 %v2304
    %v2306 = vand.u32 %v142, 4294901760
    %v2307 = vsub.f32 %v142, %v2306
    %v2308 = vand.u32 %v2307, 4294901760
    %2309 = vmatprep.subr.mxu0 %v2308
    %v2310 = vand.u32 %v141, 4294901760
    %v2311 = vsub.f32 %v141, %v2310
    %v2312 = vand.u32 %v2311, 4294901760
    %2313 = vmatpush1.msra.mxu0 %v2312
    %v2314 = vand.u32 %v146, 4294901760
    %v2315 = vsub.f32 %v146, %v2314
    %v2316 = vand.u32 %v2315, 4294901760
    %2317 = vmatprep.subr.mxu0 %v2316
    %v2318 = vand.u32 %v145, 4294901760
    %v2319 = vsub.f32 %v145, %v2318
    %v2320 = vand.u32 %v2319, 4294901760
    %2321 = vmatpush1.msra.mxu0 %v2320
    %2322 = vmatprep.subr.mxu0 0.0
    %2323 = vmatpush1.msra.mxu0 0.0
    %2324 = vmatprep.subr.mxu0 0.0
    %2325 = vmatpush1.msra.mxu0 0.0
    %2326 = vmatprep.subr.mxu0 0.0
    %2327 = vmatpush1.msra.mxu0 0.0
    %2328 = vmatprep.subr.mxu0 0.0
    %2329 = vmatpush1.msra.mxu0 0.0
    %2330 = vmatprep.subr.mxu0 0.0
    %2331 = vmatpush1.msra.mxu0 0.0
    %2332 = vmatprep.subr.mxu0 0.0
    %2333 = vmatpush1.msra.mxu0 0.0
    %2334 = vmatprep.subr.mxu0 0.0
    %2335 = vmatpush1.msra.mxu0 0.0
    %2336 = vmatprep.subr.mxu0 0.0
    %2337 = vmatpush1.msra.mxu0 0.0
    %2338 = vmatprep.subr.mxu0 0.0
    %2339 = vmatpush1.msra.mxu0 0.0
    %2340 = vmatprep.subr.mxu0 0.0
    %2341 = vmatpush1.msra.mxu0 0.0
    %2342 = vmatprep.subr.mxu0 0.0
    %2343 = vmatpush1.msra.mxu0 0.0
    %2344 = vmatprep.subr.mxu0 0.0
    %2345 = vmatpush1.msra.mxu0 0.0
    %2346 = vmatprep.subr.mxu0 0.0
    %2347 = vmatpush1.msra.mxu0 0.0
    %2348 = vmatprep.subr.mxu0 0.0
    %2349 = vmatpush1.msra.mxu0 0.0
    %2350 = vmatprep.subr.mxu0 0.0
    %2351 = vmatpush1.msra.mxu0 0.0
    %2352 = vmatprep.subr.mxu0 0.0
    %2353 = vmatpush1.msra.mxu0 0.0
    %2354 = vmatprep.mubr.f32.mxu0 0.0
    %v2355 = vand.u32 %v75, 4294901760
    %2356 = vmatmul.mubr.f32.gmra.mrb[0].mxu0 %v2355
    %v2357 = vpop.f32.mrb[0].mxu0
    %v2358 = vadd.f32 %v2127, %v2357
    %v2359 = vpop.f32.mrb[0].mxu0
    %v2360 = vadd.f32 %v2129, %v2359
    %2361 = vmatprep.mubr.f32.mxu0 0.0
    %v2362 = vand.u32 %v76, 4294901760
    %2363 = vmatmul.mubr.f32.gmra.mrb[0].mxu0 %v2362
    %v2364 = vpop.f32.mrb[0].mxu0
    %v2365 = vadd.f32 %v2136, %v2364
    %v2366 = vpop.f32.mrb[0].mxu0
    %v2367 = vadd.f32 %v2138, %v2366
    %2368 = vmatprep.mubr.f32.mxu0 0.0
    %v2369 = vand.u32 %v77, 4294901760
    %2370 = vmatmul.mubr.f32.gmra.mrb[0].mxu0 %v2369
    %v2371 = vpop.f32.mrb[0].mxu0
    %v2372 = vadd.f32 %v2145, %v2371
    %v2373 = vpop.f32.mrb[0].mxu0
    %v2374 = vadd.f32 %v2147, %v2373
    %2375 = vmatprep.mubr.f32.mxu0 0.0
    %v2376 = vand.u32 %v78, 4294901760
    %2377 = vmatmul.mubr.f32.gmra.mrb[0].mxu0 %v2376
    %v2378 = vpop.f32.mrb[0].mxu0
    %v2379 = vadd.f32 %v2154, %v2378
    %v2380 = vpop.f32.mrb[0].mxu0
    %v2381 = vadd.f32 %v2156, %v2380
    %2382 = vmatprep.mubr.f32.mxu0 0.0
    %v2383 = vand.u32 %v79, 4294901760
    %2384 = vmatmul.mubr.f32.gmra.mrb[0].mxu0 %v2383
    %v2385 = vpop.f32.mrb[0].mxu0
    %v2386 = vadd.f32 %v2163, %v2385
    %v2387 = vpop.f32.mrb[0].mxu0
    %v2388 = vadd.f32 %v2165, %v2387
    %2389 = vmatprep.mubr.f32.mxu0 0.0
    %v2390 = vand.u32 %v80, 4294901760
    %2391 = vmatmul.mubr.f32.gmra.mrb[0].mxu0 %v2390
    %v2392 = vpop.f32.mrb[0].mxu0
    %v2393 = vadd.f32 %v2172, %v2392
    %v2394 = vpop.f32.mrb[0].mxu0
    %v2395 = vadd.f32 %v2174, %v2394
    %2396 = vmatprep.mubr.f32.mxu0 0.0
    %v2397 = vand.u32 %v81, 4294901760
    %2398 = vmatmul.mubr.f32.gmra.mrb[0].mxu0 %v2397
    %v2399 = vpop.f32.mrb[0].mxu0
    %v2400 = vadd.f32 %v2181, %v2399
    %v2401 = vpop.f32.mrb[0].mxu0
    %v2402 = vadd.f32 %v2183, %v2401
    %2403 = vmatprep.mubr.f32.mxu0 0.0
    %v2404 = vand.u32 %v82, 4294901760
    %2405 = vmatmul.mubr.f32.gmra.mrb[0].mxu0 %v2404
    %v2406 = vpop.f32.mrb[0].mxu0
    %v2407 = vadd.f32 %v2190, %v2406
    %v2408 = vpop.f32.mrb[0].mxu0
    %v2409 = vadd.f32 %v2192, %v2408
    %2410 = vdwg.mxu0
    %v2411 = vand.u32 %v86, 4294901760
    %2412 = vmatprep.subr.mxu0 %v2411
    %v2413 = vand.u32 %v85, 4294901760
    %2414 = vmatpush1.msra.mxu0 %v2413
    %v2415 = vand.u32 %v90, 4294901760
    %2416 = vmatprep.subr.mxu0 %v2415
    %v2417 = vand.u32 %v89, 4294901760
    %2418 = vmatpush1.msra.mxu0 %v2417
    %v2419 = vand.u32 %v94, 4294901760
    %2420 = vmatprep.subr.mxu0 %v2419
    %v2421 = vand.u32 %v93, 4294901760
    %2422 = vmatpush1.msra.mxu0 %v2421
    %v2423 = vand.u32 %v98, 4294901760
    %2424 = vmatprep.subr.mxu0 %v2423
    %v2425 = vand.u32 %v97, 4294901760
    %2426 = vmatpush1.msra.mxu0 %v2425
    %v2427 = vand.u32 %v102, 4294901760
    %2428 = vmatprep.subr.mxu0 %v2427
    %v2429 = vand.u32 %v101, 4294901760
    %2430 = vmatpush1.msra.mxu0 %v2429
    %v2431 = vand.u32 %v106, 4294901760
    %2432 = vmatprep.subr.mxu0 %v2431
    %v2433 = vand.u32 %v105, 4294901760
    %2434 = vmatpush1.msra.mxu0 %v2433
    %v2435 = vand.u32 %v110, 4294901760
    %2436 = vmatprep.subr.mxu0 %v2435
    %v2437 = vand.u32 %v109, 4294901760
    %2438 = vmatpush1.msra.mxu0 %v2437
    %v2439 = vand.u32 %v114, 4294901760
    %2440 = vmatprep.subr.mxu0 %v2439
    %v2441 = vand.u32 %v113, 4294901760
    %2442 = vmatpush1.msra.mxu0 %v2441
    %v2443 = vand.u32 %v118, 4294901760
    %2444 = vmatprep.subr.mxu0 %v2443
    %v2445 = vand.u32 %v117, 4294901760
    %2446 = vmatpush1.msra.mxu0 %v2445
    %v2447 = vand.u32 %v122, 4294901760
    %2448 = vmatprep.subr.mxu0 %v2447
    %v2449 = vand.u32 %v121, 4294901760
    %2450 = vmatpush1.msra.mxu0 %v2449
    %v2451 = vand.u32 %v126, 4294901760
    %2452 = vmatprep.subr.mxu0 %v2451
    %v2453 = vand.u32 %v125, 4294901760
    %2454 = vmatpush1.msra.mxu0 %v2453
    %v2455 = vand.u32 %v130, 4294901760
    %2456 = vmatprep.subr.mxu0 %v2455
    %v2457 = vand.u32 %v129, 4294901760
    %2458 = vmatpush1.msra.mxu0 %v2457
    %v2459 = vand.u32 %v134, 4294901760
    %2460 = vmatprep.subr.mxu0 %v2459
    %v2461 = vand.u32 %v133, 4294901760
    %2462 = vmatpush1.msra.mxu0 %v2461
    %v2463 = vand.u32 %v138, 4294901760
    %2464 = vmatprep.subr.mxu0 %v2463
    %v2465 = vand.u32 %v137, 4294901760
    %2466 = vmatpush1.msra.mxu0 %v2465
    %v2467 = vand.u32 %v142, 4294901760
    %2468 = vmatprep.subr.mxu0 %v2467
    %v2469 = vand.u32 %v141, 4294901760
    %2470 = vmatpush1.msra.mxu0 %v2469
    %v2471 = vand.u32 %v146, 4294901760
    %2472 = vmatprep.subr.mxu0 %v2471
    %v2473 = vand.u32 %v145, 4294901760
    %2474 = vmatpush1.msra.mxu0 %v2473
    %2475 = vmatprep.subr.mxu0 0.0
    %2476 = vmatpush1.msra.mxu0 0.0
    %2477 = vmatprep.subr.mxu0 0.0
    %2478 = vmatpush1.msra.mxu0 0.0
    %2479 = vmatprep.subr.mxu0 0.0
    %2480 = vmatpush1.msra.mxu0 0.0
    %2481 = vmatprep.subr.mxu0 0.0
    %2482 = vmatpush1.msra.mxu0 0.0
    %2483 = vmatprep.subr.mxu0 0.0
    %2484 = vmatpush1.msra.mxu0 0.0
    %2485 = vmatprep.subr.mxu0 0.0
    %2486 = vmatpush1.msra.mxu0 0.0
    %2487 = vmatprep.subr.mxu0 0.0
    %2488 = vmatpush1.msra.mxu0 0.0
    %2489 = vmatprep.subr.mxu0 0.0
    %2490 = vmatpush1.msra.mxu0 0.0
    %2491 = vmatprep.subr.mxu0 0.0
    %2492 = vmatpush1.msra.mxu0 0.0
    %2493 = vmatprep.subr.mxu0 0.0
    %2494 = vmatpush1.msra.mxu0 0.0
    %2495 = vmatprep.subr.mxu0 0.0
    %2496 = vmatpush1.msra.mxu0 0.0
    %2497 = vmatprep.subr.mxu0 0.0
    %2498 = vmatpush1.msra.mxu0 0.0
    %2499 = vmatprep.subr.mxu0 0.0
    %2500 = vmatpush1.msra.mxu0 0.0
    %2501 = vmatprep.subr.mxu0 0.0
    %2502 = vmatpush1.msra.mxu0 0.0
    %2503 = vmatprep.subr.mxu0 0.0
    %2504 = vmatpush1.msra.mxu0 0.0
    %2505 = vmatprep.subr.mxu0 0.0
    %2506 = vmatpush1.msra.mxu0 0.0
    %2507 = vmatprep.mubr.f32.mxu0 0.0
    %v2508 = vand.u32 %v75, 4294901760
    %2509 = vmatmul.mubr.f32.gmra.mrb[0].mxu0 %v2508
    %v2510 = vpop.f32.mrb[0].mxu0
    %v2511 = vadd.f32 %v2358, %v2510
    %v2512 = vpop.f32.mrb[0].mxu0
    %v2513 = vadd.f32 %v2360, %v2512
    %2514 = vmatprep.mubr.f32.mxu0 0.0
    %v2515 = vand.u32 %v76, 4294901760
    %2516 = vmatmul.mubr.f32.gmra.mrb[0].mxu0 %v2515
    %v2517 = vpop.f32.mrb[0].mxu0
    %v2518 = vadd.f32 %v2365, %v2517
    %v2519 = vpop.f32.mrb[0].mxu0
    %v2520 = vadd.f32 %v2367, %v2519
    %2521 = vmatprep.mubr.f32.mxu0 0.0
    %v2522 = vand.u32 %v77, 4294901760
    %2523 = vmatmul.mubr.f32.gmra.mrb[0].mxu0 %v2522
    %v2524 = vpop.f32.mrb[0].mxu0
    %v2525 = vadd.f32 %v2372, %v2524
    %v2526 = vpop.f32.mrb[0].mxu0
    %v2527 = vadd.f32 %v2374, %v2526
    %2528 = vmatprep.mubr.f32.mxu0 0.0
    %v2529 = vand.u32 %v78, 4294901760
    %2530 = vmatmul.mubr.f32.gmra.mrb[0].mxu0 %v2529
    %v2531 = vpop.f32.mrb[0].mxu0
    %v2532 = vadd.f32 %v2379, %v2531
    %v2533 = vpop.f32.mrb[0].mxu0
    %v2534 = vadd.f32 %v2381, %v2533
    %2535 = vmatprep.mubr.f32.mxu0 0.0
    %v2536 = vand.u32 %v79, 4294901760
    %2537 = vmatmul.mubr.f32.gmra.mrb[0].mxu0 %v2536
    %v2538 = vpop.f32.mrb[0].mxu0
    %v2539 = vadd.f32 %v2386, %v2538
    %v2540 = vpop.f32.mrb[0].mxu0
    %v2541 = vadd.f32 %v2388, %v2540
    %2542 = vmatprep.mubr.f32.mxu0 0.0
    %v2543 = vand.u32 %v80, 4294901760
    %2544 = vmatmul.mubr.f32.gmra.mrb[0].mxu0 %v2543
    %v2545 = vpop.f32.mrb[0].mxu0
    %v2546 = vadd.f32 %v2393, %v2545
    %v2547 = vpop.f32.mrb[0].mxu0
    %v2548 = vadd.f32 %v2395, %v2547
    %2549 = vmatprep.mubr.f32.mxu0 0.0
    %v2550 = vand.u32 %v81, 4294901760
    %2551 = vmatmul.mubr.f32.gmra.mrb[0].mxu0 %v2550
    %v2552 = vpop.f32.mrb[0].mxu0
    %v2553 = vadd.f32 %v2400, %v2552
    %v2554 = vpop.f32.mrb[0].mxu0
    %v2555 = vadd.f32 %v2402, %v2554
    %2556 = vmatprep.mubr.f32.mxu0 0.0
    %v2557 = vand.u32 %v82, 4294901760
    %2558 = vmatmul.mubr.f32.gmra.mrb[0].mxu0 %v2557
    %v2559 = vpop.f32.mrb[0].mxu0
    %v2560 = vadd.f32 %v2407, %v2559
    %v2561 = vpop.f32.mrb[0].mxu0
    %v2562 = vadd.f32 %v2409, %v2561
    %2563 = vdwg.mxu0
    %v2564 = vmax.f32 %v1313, 0.0
    %v2565 = vmax.f32 %v1315, 0.0
    %v2566 = vmax.f32 %v2511, 0.0
    %v2567 = vmax.f32 %v2513, 0.0
    %v2568 = vmax.f32 %v1320, 0.0
    %v2569 = vmax.f32 %v1322, 0.0
    %v2570 = vmax.f32 %v2518, 0.0
    %v2571 = vmax.f32 %v2520, 0.0
    %v2572 = vmax.f32 %v1327, 0.0
    %v2573 = vmax.f32 %v1329, 0.0
    %v2574 = vmax.f32 %v2525, 0.0
    %v2575 = vmax.f32 %v2527, 0.0
    %v2576 = vmax.f32 %v1334, 0.0
    %v2577 = vmax.f32 %v1336, 0.0
    %v2578 = vmax.f32 %v2532, 0.0
    %v2579 = vmax.f32 %v2534, 0.0
    %v2580 = vmax.f32 %v1341, 0.0
    %v2581 = vmax.f32 %v1343, 0.0
    %v2582 = vmax.f32 %v2539, 0.0
    %v2583 = vmax.f32 %v2541, 0.0
    %v2584 = vmax.f32 %v1348, 0.0
    %v2585 = vmax.f32 %v1350, 0.0
    %v2586 = vmax.f32 %v2546, 0.0
    %v2587 = vmax.f32 %v2548, 0.0
    %v2588 = vmax.f32 %v1355, 0.0
    %v2589 = vmax.f32 %v1357, 0.0
    %v2590 = vmax.f32 %v2553, 0.0
    %v2591 = vmax.f32 %v2555, 0.0
    %v2592 = vmax.f32 %v1362, 0.0
    %v2593 = vmax.f32 %v1364, 0.0
    %v2594 = vmax.f32 %v2560, 0.0
    %v2595 = vmax.f32 %v2562, 0.0
    %v2596 = vld [vmem:[#allocation8] sm:$0xff]
    %v2597 = vld [vmem:[#allocation8 + $0x8] sm:$0xff]
    %v2598 = vld [vmem:[#allocation8 + $0x10] sm:$0xff]
    %v2599 = vld [vmem:[#allocation8 + $0x18] sm:$0xff]
    %v2600 = vld [vmem:[#allocation8 + $0x20] sm:$0xff]
    %v2601 = vld [vmem:[#allocation8 + $0x28] sm:$0xff]
    %v2602 = vld [vmem:[#allocation8 + $0x30] sm:$0xff]
    %v2603 = vld [vmem:[#allocation8 + $0x38] sm:$0xff]
    %v2604 = vld [vmem:[#allocation8 + $0x40] sm:$0xff]
    %v2605 = vld [vmem:[#allocation8 + $0x48] sm:$0xff]
    %v2606 = vld [vmem:[#allocation8 + $0x50] sm:$0xff]
    %v2607 = vld [vmem:[#allocation8 + $0x58] sm:$0xff]
    %v2608 = vld [vmem:[#allocation8 + $0x60] sm:$0xff]
    %v2609 = vld [vmem:[#allocation8 + $0x68] sm:$0xff]
    %v2610 = vld [vmem:[#allocation8 + $0x70] sm:$0xff]
    %v2611 = vld [vmem:[#allocation8 + $0x78] sm:$0xff]
    %v2612 = vld [vmem:[#allocation8 + $0x80] sm:$0xff]
    %v2613 = vld [vmem:[#allocation8 + $0x88] sm:$0xff]
    %v2614 = vld [vmem:[#allocation8 + $0x90] sm:$0xff]
    %v2615 = vld [vmem:[#allocation8 + $0x98] sm:$0xff]
    %v2616 = vld [vmem:[#allocation8 + $0xa0] sm:$0xff]
    %v2617 = vld [vmem:[#allocation8 + $0xa8] sm:$0xff]
    %v2618 = vld [vmem:[#allocation8 + $0xb0] sm:$0xff]
    %v2619 = vld [vmem:[#allocation8 + $0xb8] sm:$0xff]
    %v2620 = vld [vmem:[#allocation8 + $0xc0] sm:$0xff]
    %v2621 = vld [vmem:[#allocation8 + $0xc8] sm:$0xff]
    %v2622 = vld [vmem:[#allocation8 + $0xd0] sm:$0xff]
    %v2623 = vld [vmem:[#allocation8 + $0xd8] sm:$0xff]
    %v2624 = vld [vmem:[#allocation8 + $0xe0] sm:$0xff]
    %v2625 = vld [vmem:[#allocation8 + $0xe8] sm:$0xff]
    %v2626 = vld [vmem:[#allocation8 + $0xf0] sm:$0xff]
    %v2627 = vld [vmem:[#allocation8 + $0xf8] sm:$0xff]
    %v2628 = vld [vmem:[#allocation8 + $0x100] sm:$0xff]
    %v2629 = vld [vmem:[#allocation8 + $0x108] sm:$0xff]
    %v2630 = vld [vmem:[#allocation8 + $0x110] sm:$0xff]
    %v2631 = vld [vmem:[#allocation8 + $0x118] sm:$0xff]
    %v2632 = vld [vmem:[#allocation8 + $0x120] sm:$0xff]
    %v2633 = vld [vmem:[#allocation8 + $0x128] sm:$0xff]
    %v2634 = vld [vmem:[#allocation8 + $0x130] sm:$0xff]
    %v2635 = vld [vmem:[#allocation8 + $0x138] sm:$0xff]
    %v2636 = vld [vmem:[#allocation8 + $0x140] sm:$0xff]
    %v2637 = vld [vmem:[#allocation8 + $0x148] sm:$0xff]
    %v2638 = vld [vmem:[#allocation8 + $0x150] sm:$0xff]
    %v2639 = vld [vmem:[#allocation8 + $0x158] sm:$0xff]
    %v2640 = vld [vmem:[#allocation8 + $0x160] sm:$0xff]
    %v2641 = vld [vmem:[#allocation8 + $0x168] sm:$0xff]
    %v2642 = vld [vmem:[#allocation8 + $0x170] sm:$0xff]
    %v2643 = vld [vmem:[#allocation8 + $0x178] sm:$0xff]
    %v2644 = vld [vmem:[#allocation8 + $0x180] sm:$0xff]
    %v2645 = vld [vmem:[#allocation8 + $0x188] sm:$0xff]
    %v2646 = vld [vmem:[#allocation8 + $0x190] sm:$0xff]
    %v2647 = vld [vmem:[#allocation8 + $0x198] sm:$0xff]
    %v2648 = vld [vmem:[#allocation8 + $0x1a0] sm:$0xff]
    %v2649 = vld [vmem:[#allocation8 + $0x1a8] sm:$0xff]
    %v2650 = vld [vmem:[#allocation8 + $0x1b0] sm:$0xff]
    %v2651 = vld [vmem:[#allocation8 + $0x1b8] sm:$0xff]
    %v2652 = vld [vmem:[#allocation8 + $0x1c0] sm:$0xff]
    %v2653 = vld [vmem:[#allocation8 + $0x1c8] sm:$0xff]
    %v2654 = vld [vmem:[#allocation8 + $0x1d0] sm:$0xff]
    %v2655 = vld [vmem:[#allocation8 + $0x1d8] sm:$0xff]
    %v2656 = vld [vmem:[#allocation8 + $0x1e0] sm:$0xff]
    %v2657 = vld [vmem:[#allocation8 + $0x1e8] sm:$0xff]
    %v2658 = vld [vmem:[#allocation8 + $0x1f0] sm:$0xff]
    %v2659 = vld [vmem:[#allocation8 + $0x1f8] sm:$0xff]
    %v2660 = vld [vmem:[#allocation8 + $0x200] sm:$0xff]
    %v2661 = vld [vmem:[#allocation8 + $0x208] sm:$0xff]
    %v2662 = vld [vmem:[#allocation8 + $0x210] sm:$0xff]
    %v2663 = vld [vmem:[#allocation8 + $0x218] sm:$0xff]
    %v2664 = vld [vmem:[#allocation8 + $0x220] sm:$0xff]
    %v2665 = vld [vmem:[#allocation8 + $0x228] sm:$0xff]
    %v2666 = vld [vmem:[#allocation8 + $0x230] sm:$0xff]
    %v2667 = vld [vmem:[#allocation8 + $0x238] sm:$0xff]
    %v2668 = vld [vmem:[#allocation8 + $0x240] sm:$0xff]
    %v2669 = vld [vmem:[#allocation8 + $0x248] sm:$0xff]
    %v2670 = vld [vmem:[#allocation8 + $0x250] sm:$0xff]
    %v2671 = vld [vmem:[#allocation8 + $0x258] sm:$0xff]
    %v2672 = vld [vmem:[#allocation8 + $0x260] sm:$0xff]
    %v2673 = vld [vmem:[#allocation8 + $0x268] sm:$0xff]
    %v2674 = vld [vmem:[#allocation8 + $0x270] sm:$0xff]
    %v2675 = vld [vmem:[#allocation8 + $0x278] sm:$0xff]
    %v2676 = vld [vmem:[#allocation8 + $0x280] sm:$0xff]
    %v2677 = vld [vmem:[#allocation8 + $0x288] sm:$0xff]
    %v2678 = vld [vmem:[#allocation8 + $0x290] sm:$0xff]
    %v2679 = vld [vmem:[#allocation8 + $0x298] sm:$0xff]
    %v2680 = vld [vmem:[#allocation8 + $0x2a0] sm:$0xff]
    %v2681 = vld [vmem:[#allocation8 + $0x2a8] sm:$0xff]
    %v2682 = vld [vmem:[#allocation8 + $0x2b0] sm:$0xff]
    %v2683 = vld [vmem:[#allocation8 + $0x2b8] sm:$0xff]
    %v2684 = vld [vmem:[#allocation8 + $0x2c0] sm:$0xff]
    %v2685 = vld [vmem:[#allocation8 + $0x2c8] sm:$0xff]
    %v2686 = vld [vmem:[#allocation8 + $0x2d0] sm:$0xff]
    %v2687 = vld [vmem:[#allocation8 + $0x2d8] sm:$0xff]
    %v2688 = vld [vmem:[#allocation8 + $0x2e0] sm:$0xff]
    %v2689 = vld [vmem:[#allocation8 + $0x2e8] sm:$0xff]
    %v2690 = vld [vmem:[#allocation8 + $0x2f0] sm:$0xff]
    %v2691 = vld [vmem:[#allocation8 + $0x2f8] sm:$0xff]
    %v2692 = vld [vmem:[#allocation8 + $0x300] sm:$0xff]
    %v2693 = vld [vmem:[#allocation8 + $0x308] sm:$0xff]
    %v2694 = vld [vmem:[#allocation8 + $0x310] sm:$0xff]
    %v2695 = vld [vmem:[#allocation8 + $0x318] sm:$0xff]
    %v2696 = vld [vmem:[#allocation8 + $0x320] sm:$0xff]
    %v2697 = vld [vmem:[#allocation8 + $0x328] sm:$0xff]
    %v2698 = vld [vmem:[#allocation8 + $0x330] sm:$0xff]
    %v2699 = vld [vmem:[#allocation8 + $0x338] sm:$0xff]
    %v2700 = vld [vmem:[#allocation8 + $0x340] sm:$0xff]
    %v2701 = vld [vmem:[#allocation8 + $0x348] sm:$0xff]
    %v2702 = vld [vmem:[#allocation8 + $0x350] sm:$0xff]
    %v2703 = vld [vmem:[#allocation8 + $0x358] sm:$0xff]
    %v2704 = vld [vmem:[#allocation8 + $0x360] sm:$0xff]
    %v2705 = vld [vmem:[#allocation8 + $0x368] sm:$0xff]
    %v2706 = vld [vmem:[#allocation8 + $0x370] sm:$0xff]
    %v2707 = vld [vmem:[#allocation8 + $0x378] sm:$0xff]
    %v2708 = vld [vmem:[#allocation8 + $0x380] sm:$0xff]
    %v2709 = vld [vmem:[#allocation8 + $0x388] sm:$0xff]
    %v2710 = vld [vmem:[#allocation8 + $0x390] sm:$0xff]
    %v2711 = vld [vmem:[#allocation8 + $0x398] sm:$0xff]
    %v2712 = vld [vmem:[#allocation8 + $0x3a0] sm:$0xff]
    %v2713 = vld [vmem:[#allocation8 + $0x3a8] sm:$0xff]
    %v2714 = vld [vmem:[#allocation8 + $0x3b0] sm:$0xff]
    %v2715 = vld [vmem:[#allocation8 + $0x3b8] sm:$0xff]
    %v2716 = vld [vmem:[#allocation8 + $0x3c0] sm:$0xff]
    %v2717 = vld [vmem:[#allocation8 + $0x3c8] sm:$0xff]
    %v2718 = vld [vmem:[#allocation8 + $0x3d0] sm:$0xff]
    %v2719 = vld [vmem:[#allocation8 + $0x3d8] sm:$0xff]
    %v2720 = vld [vmem:[#allocation8 + $0x3e0] sm:$0xff]
    %v2721 = vld [vmem:[#allocation8 + $0x3e8] sm:$0xff]
    %v2722 = vld [vmem:[#allocation8 + $0x3f0] sm:$0xff]
    %v2723 = vld [vmem:[#allocation8 + $0x3f8] sm:$0xff]
    %v2724 = vld [vmem:[#allocation8 + $0x400] sm:$0xff]
    %v2725 = vld [vmem:[#allocation8 + $0x408] sm:$0xff]
    %v2726 = vld [vmem:[#allocation8 + $0x410] sm:$0xff]
    %v2727 = vld [vmem:[#allocation8 + $0x418] sm:$0xff]
    %v2728 = vld [vmem:[#allocation8 + $0x420] sm:$0xff]
    %v2729 = vld [vmem:[#allocation8 + $0x428] sm:$0xff]
    %v2730 = vld [vmem:[#allocation8 + $0x430] sm:$0xff]
    %v2731 = vld [vmem:[#allocation8 + $0x438] sm:$0xff]
    %v2732 = vld [vmem:[#allocation8 + $0x440] sm:$0xff]
    %v2733 = vld [vmem:[#allocation8 + $0x448] sm:$0xff]
    %v2734 = vld [vmem:[#allocation8 + $0x450] sm:$0xff]
    %v2735 = vld [vmem:[#allocation8 + $0x458] sm:$0xff]
    %v2736 = vld [vmem:[#allocation8 + $0x460] sm:$0xff]
    %v2737 = vld [vmem:[#allocation8 + $0x468] sm:$0xff]
    %v2738 = vld [vmem:[#allocation8 + $0x470] sm:$0xff]
    %v2739 = vld [vmem:[#allocation8 + $0x478] sm:$0xff]
    %v2740 = vld [vmem:[#allocation8 + $0x480] sm:$0xff]
    %v2741 = vld [vmem:[#allocation8 + $0x488] sm:$0xff]
    %v2742 = vld [vmem:[#allocation8 + $0x490] sm:$0xff]
    %v2743 = vld [vmem:[#allocation8 + $0x498] sm:$0xff]
    %v2744 = vld [vmem:[#allocation8 + $0x4a0] sm:$0xff]
    %v2745 = vld [vmem:[#allocation8 + $0x4a8] sm:$0xff]
    %v2746 = vld [vmem:[#allocation8 + $0x4b0] sm:$0xff]
    %v2747 = vld [vmem:[#allocation8 + $0x4b8] sm:$0xff]
    %v2748 = vld [vmem:[#allocation8 + $0x4c0] sm:$0xff]
    %v2749 = vld [vmem:[#allocation8 + $0x4c8] sm:$0xff]
    %v2750 = vld [vmem:[#allocation8 + $0x4d0] sm:$0xff]
    %v2751 = vld [vmem:[#allocation8 + $0x4d8] sm:$0xff]
    %v2752 = vld [vmem:[#allocation8 + $0x4e0] sm:$0xff]
    %v2753 = vld [vmem:[#allocation8 + $0x4e8] sm:$0xff]
    %v2754 = vld [vmem:[#allocation8 + $0x4f0] sm:$0xff]
    %v2755 = vld [vmem:[#allocation8 + $0x4f8] sm:$0xff]
    %v2756 = vld [vmem:[#allocation8 + $0x500] sm:$0xff]
    %v2757 = vld [vmem:[#allocation8 + $0x508] sm:$0xff]
    %v2758 = vld [vmem:[#allocation8 + $0x510] sm:$0xff]
    %v2759 = vld [vmem:[#allocation8 + $0x518] sm:$0xff]
    %v2760 = vld [vmem:[#allocation8 + $0x520] sm:$0xff]
    %v2761 = vld [vmem:[#allocation8 + $0x528] sm:$0xff]
    %v2762 = vld [vmem:[#allocation8 + $0x530] sm:$0xff]
    %v2763 = vld [vmem:[#allocation8 + $0x538] sm:$0xff]
    %v2764 = vld [vmem:[#allocation8 + $0x540] sm:$0xff]
    %v2765 = vld [vmem:[#allocation8 + $0x548] sm:$0xff]
    %v2766 = vld [vmem:[#allocation8 + $0x550] sm:$0xff]
    %v2767 = vld [vmem:[#allocation8 + $0x558] sm:$0xff]
    %v2768 = vld [vmem:[#allocation8 + $0x560] sm:$0xff]
    %v2769 = vld [vmem:[#allocation8 + $0x568] sm:$0xff]
    %v2770 = vld [vmem:[#allocation8 + $0x570] sm:$0xff]
    %v2771 = vld [vmem:[#allocation8 + $0x578] sm:$0xff]
    %v2772 = vld [vmem:[#allocation8 + $0x580] sm:$0xff]
    %v2773 = vld [vmem:[#allocation8 + $0x588] sm:$0xff]
    %v2774 = vld [vmem:[#allocation8 + $0x590] sm:$0xff]
    %v2775 = vld [vmem:[#allocation8 + $0x598] sm:$0xff]
    %v2776 = vld [vmem:[#allocation8 + $0x5a0] sm:$0xff]
    %v2777 = vld [vmem:[#allocation8 + $0x5a8] sm:$0xff]
    %v2778 = vld [vmem:[#allocation8 + $0x5b0] sm:$0xff]
    %v2779 = vld [vmem:[#allocation8 + $0x5b8] sm:$0xff]
    %v2780 = vld [vmem:[#allocation8 + $0x5c0] sm:$0xff]
    %v2781 = vld [vmem:[#allocation8 + $0x5c8] sm:$0xff]
    %v2782 = vld [vmem:[#allocation8 + $0x5d0] sm:$0xff]
    %v2783 = vld [vmem:[#allocation8 + $0x5d8] sm:$0xff]
    %v2784 = vld [vmem:[#allocation8 + $0x5e0] sm:$0xff]
    %v2785 = vld [vmem:[#allocation8 + $0x5e8] sm:$0xff]
    %v2786 = vld [vmem:[#allocation8 + $0x5f0] sm:$0xff]
    %v2787 = vld [vmem:[#allocation8 + $0x5f8] sm:$0xff]
    %v2789 = vlaneseq
    %v2790 = vshrl.u32 %v2789, 7
    %v2791 = vsub.s32 0, %v2790
    %v2792 = vrot.slane %v71, %v2791
    %v2793 = vlaneseq
    %v2794 = vshrl.u32 %v2793, 7
    %v2795 = vsub.s32 1, %v2794
    %v2796 = vrot.slane %v71, %v2795
    %v2797 = vlaneseq
    %v2798 = vshrl.u32 %v2797, 7
    %v2799 = vsub.s32 2, %v2798
    %v2800 = vrot.slane %v71, %v2799
    %v2804 = vand.u32 %v2597, 4294901760
    %2805 = vmatprep.subr.mxu0 %v2804
    %v2806 = vand.u32 %v2596, 4294901760
    %2807 = vmatpush1.msra.mxu0 %v2806
    %v2808 = vand.u32 %v2600, 4294901760
    %2809 = vmatprep.subr.mxu0 %v2808
    %v2810 = vand.u32 %v2599, 4294901760
    %2811 = vmatpush1.msra.mxu0 %v2810
    %v2812 = vand.u32 %v2603, 4294901760
    %2813 = vmatprep.subr.mxu0 %v2812
    %v2814 = vand.u32 %v2602, 4294901760
    %2815 = vmatpush1.msra.mxu0 %v2814
    %v2816 = vand.u32 %v2606, 4294901760
    %2817 = vmatprep.subr.mxu0 %v2816
    %v2818 = vand.u32 %v2605, 4294901760
    %2819 = vmatpush1.msra.mxu0 %v2818
    %v2820 = vand.u32 %v2609, 4294901760
    %2821 = vmatprep.subr.mxu0 %v2820
    %v2822 = vand.u32 %v2608, 4294901760
    %2823 = vmatpush1.msra.mxu0 %v2822
    %v2824 = vand.u32 %v2612, 4294901760
    %2825 = vmatprep.subr.mxu0 %v2824
    %v2826 = vand.u32 %v2611, 4294901760
    %2827 = vmatpush1.msra.mxu0 %v2826
    %v2828 = vand.u32 %v2615, 4294901760
    %2829 = vmatprep.subr.mxu0 %v2828
    %v2830 = vand.u32 %v2614, 4294901760
    %2831 = vmatpush1.msra.mxu0 %v2830
    %v2832 = vand.u32 %v2618, 4294901760
    %2833 = vmatprep.subr.mxu0 %v2832
    %v2834 = vand.u32 %v2617, 4294901760
    %2835 = vmatpush1.msra.mxu0 %v2834
    %v2836 = vand.u32 %v2621, 4294901760
    %2837 = vmatprep.subr.mxu0 %v2836
    %v2838 = vand.u32 %v2620, 4294901760
    %2839 = vmatpush1.msra.mxu0 %v2838
    %v2840 = vand.u32 %v2624, 4294901760
    %2841 = vmatprep.subr.mxu0 %v2840
    %v2842 = vand.u32 %v2623, 4294901760
    %2843 = vmatpush1.msra.mxu0 %v2842
    %v2844 = vand.u32 %v2627, 4294901760
    %2845 = vmatprep.subr.mxu0 %v2844
    %v2846 = vand.u32 %v2626, 4294901760
    %2847 = vmatpush1.msra.mxu0 %v2846
    %v2848 = vand.u32 %v2630, 4294901760
    %2849 = vmatprep.subr.mxu0 %v2848
    %v2850 = vand.u32 %v2629, 4294901760
    %2851 = vmatpush1.msra.mxu0 %v2850
    %v2852 = vand.u32 %v2633, 4294901760
    %2853 = vmatprep.subr.mxu0 %v2852
    %v2854 = vand.u32 %v2632, 4294901760
    %2855 = vmatpush1.msra.mxu0 %v2854
    %v2856 = vand.u32 %v2636, 4294901760
    %2857 = vmatprep.subr.mxu0 %v2856
    %v2858 = vand.u32 %v2635, 4294901760
    %2859 = vmatpush1.msra.mxu0 %v2858
    %v2860 = vand.u32 %v2639, 4294901760
    %2861 = vmatprep.subr.mxu0 %v2860
    %v2862 = vand.u32 %v2638, 4294901760
    %2863 = vmatpush1.msra.mxu0 %v2862
    %v2864 = vand.u32 %v2642, 4294901760
    %2865 = vmatprep.subr.mxu0 %v2864
    %v2866 = vand.u32 %v2641, 4294901760
    %2867 = vmatpush1.msra.mxu0 %v2866
    %v2868 = vand.u32 %v2645, 4294901760
    %2869 = vmatprep.subr.mxu0 %v2868
    %v2870 = vand.u32 %v2644, 4294901760
    %2871 = vmatpush1.msra.mxu0 %v2870
    %v2872 = vand.u32 %v2648, 4294901760
    %2873 = vmatprep.subr.mxu0 %v2872
    %v2874 = vand.u32 %v2647, 4294901760
    %2875 = vmatpush1.msra.mxu0 %v2874
    %v2876 = vand.u32 %v2651, 4294901760
    %2877 = vmatprep.subr.mxu0 %v2876
    %v2878 = vand.u32 %v2650, 4294901760
    %2879 = vmatpush1.msra.mxu0 %v2878
    %v2880 = vand.u32 %v2654, 4294901760
    %2881 = vmatprep.subr.mxu0 %v2880
    %v2882 = vand.u32 %v2653, 4294901760
    %2883 = vmatpush1.msra.mxu0 %v2882
    %v2884 = vand.u32 %v2657, 4294901760
    %2885 = vmatprep.subr.mxu0 %v2884
    %v2886 = vand.u32 %v2656, 4294901760
    %2887 = vmatpush1.msra.mxu0 %v2886
    %v2888 = vand.u32 %v2660, 4294901760
    %2889 = vmatprep.subr.mxu0 %v2888
    %v2890 = vand.u32 %v2659, 4294901760
    %2891 = vmatpush1.msra.mxu0 %v2890
    %v2892 = vand.u32 %v2663, 4294901760
    %2893 = vmatprep.subr.mxu0 %v2892
    %v2894 = vand.u32 %v2662, 4294901760
    %2895 = vmatpush1.msra.mxu0 %v2894
    %v2896 = vand.u32 %v2666, 4294901760
    %2897 = vmatprep.subr.mxu0 %v2896
    %v2898 = vand.u32 %v2665, 4294901760
    %2899 = vmatpush1.msra.mxu0 %v2898
    %v2900 = vand.u32 %v2669, 4294901760
    %2901 = vmatprep.subr.mxu0 %v2900
    %v2902 = vand.u32 %v2668, 4294901760
    %2903 = vmatpush1.msra.mxu0 %v2902
    %v2904 = vand.u32 %v2672, 4294901760
    %2905 = vmatprep.subr.mxu0 %v2904
    %v2906 = vand.u32 %v2671, 4294901760
    %2907 = vmatpush1.msra.mxu0 %v2906
    %v2908 = vand.u32 %v2675, 4294901760
    %2909 = vmatprep.subr.mxu0 %v2908
    %v2910 = vand.u32 %v2674, 4294901760
    %2911 = vmatpush1.msra.mxu0 %v2910
    %v2912 = vand.u32 %v2678, 4294901760
    %2913 = vmatprep.subr.mxu0 %v2912
    %v2914 = vand.u32 %v2677, 4294901760
    %2915 = vmatpush1.msra.mxu0 %v2914
    %v2916 = vand.u32 %v2681, 4294901760
    %2917 = vmatprep.subr.mxu0 %v2916
    %v2918 = vand.u32 %v2680, 4294901760
    %2919 = vmatpush1.msra.mxu0 %v2918
    %v2920 = vand.u32 %v2684, 4294901760
    %2921 = vmatprep.subr.mxu0 %v2920
    %v2922 = vand.u32 %v2683, 4294901760
    %2923 = vmatpush1.msra.mxu0 %v2922
    %v2924 = vand.u32 %v2687, 4294901760
    %2925 = vmatprep.subr.mxu0 %v2924
    %v2926 = vand.u32 %v2686, 4294901760
    %2927 = vmatpush1.msra.mxu0 %v2926
    %v2928 = vand.u32 %v2690, 4294901760
    %2929 = vmatprep.subr.mxu0 %v2928
    %v2930 = vand.u32 %v2689, 4294901760
    %2931 = vmatpush1.msra.mxu0 %v2930
    %v2932 = vand.u32 %v2565, 4294901760
    %v2933 = vsub.f32 %v2565, %v2932
    %v2934 = vand.u32 %v2933, 4294901760
    %v2935 = vsub.f32 %v2933, %v2934
    %v2936 = vand.u32 %v2935, 4294901760
    %2937 = vmatprep.mubr.f32.mxu0 %v2936
    %v2938 = vand.u32 %v2564, 4294901760
    %v2939 = vsub.f32 %v2564, %v2938
    %v2940 = vand.u32 %v2939, 4294901760
    %v2941 = vsub.f32 %v2939, %v2940
    %v2942 = vand.u32 %v2941, 4294901760
    %2943 = vmatmul.mubr.f32.gmra.mrb[0].mxu0 %v2942
    %v2944 = vpop.f32.mrb[0].mxu0
    %v2945 = vadd.f32 %v2792, %v2944
    %v2946 = vpop.f32.mrb[0].mxu0
    %v2947 = vadd.f32 %v2796, %v2946
    %v2948 = vand.u32 %v2569, 4294901760
    %v2949 = vsub.f32 %v2569, %v2948
    %v2950 = vand.u32 %v2949, 4294901760
    %v2951 = vsub.f32 %v2949, %v2950
    %v2952 = vand.u32 %v2951, 4294901760
    %2953 = vmatprep.mubr.f32.mxu0 %v2952
    %v2954 = vand.u32 %v2568, 4294901760
    %v2955 = vsub.f32 %v2568, %v2954
    %v2956 = vand.u32 %v2955, 4294901760
    %v2957 = vsub.f32 %v2955, %v2956
    %v2958 = vand.u32 %v2957, 4294901760
    %2959 = vmatmul.mubr.f32.gmra.mrb[0].mxu0 %v2958
    %v2960 = vpop.f32.mrb[0].mxu0
    %v2961 = vadd.f32 %v2792, %v2960
    %v2962 = vpop.f32.mrb[0].mxu0
    %v2963 = vadd.f32 %v2796, %v2962
    %v2964 = vand.u32 %v2573, 4294901760
    %v2965 = vsub.f32 %v2573, %v2964
    %v2966 = vand.u32 %v2965, 4294901760
    %v2967 = vsub.f32 %v2965, %v2966
    %v2968 = vand.u32 %v2967, 4294901760
    %2969 = vmatprep.mubr.f32.mxu0 %v2968
    %v2970 = vand.u32 %v2572, 4294901760
    %v2971 = vsub.f32 %v2572, %v2970
    %v2972 = vand.u32 %v2971, 4294901760
    %v2973 = vsub.f32 %v2971, %v2972
    %v2974 = vand.u32 %v2973, 4294901760
    %2975 = vmatmul.mubr.f32.gmra.mrb[0].mxu0 %v2974
    %v2976 = vpop.f32.mrb[0].mxu0
    %v2977 = vadd.f32 %v2792, %v2976
    %v2978 = vpop.f32.mrb[0].mxu0
    %v2979 = vadd.f32 %v2796, %v2978
    %v2980 = vand.u32 %v2577, 4294901760
    %v2981 = vsub.f32 %v2577, %v2980
    %v2982 = vand.u32 %v2981, 4294901760
    %v2983 = vsub.f32 %v2981, %v2982
    %v2984 = vand.u32 %v2983, 4294901760
    %2985 = vmatprep.mubr.f32.mxu0 %v2984
    %v2986 = vand.u32 %v2576, 4294901760
    %v2987 = vsub.f32 %v2576, %v2986
    %v2988 = vand.u32 %v2987, 4294901760
    %v2989 = vsub.f32 %v2987, %v2988
    %v2990 = vand.u32 %v2989, 4294901760
    %2991 = vmatmul.mubr.f32.gmra.mrb[0].mxu0 %v2990
    %v2992 = vpop.f32.mrb[0].mxu0
    %v2993 = vadd.f32 %v2792, %v2992
    %v2994 = vpop.f32.mrb[0].mxu0
    %v2995 = vadd.f32 %v2796, %v2994
    %v2996 = vand.u32 %v2581, 4294901760
    %v2997 = vsub.f32 %v2581, %v2996
    %v2998 = vand.u32 %v2997, 4294901760
    %v2999 = vsub.f32 %v2997, %v2998
    %v3000 = vand.u32 %v2999, 4294901760
    %3001 = vmatprep.mubr.f32.mxu0 %v3000
    %v3002 = vand.u32 %v2580, 4294901760
    %v3003 = vsub.f32 %v2580, %v3002
    %v3004 = vand.u32 %v3003, 4294901760
    %v3005 = vsub.f32 %v3003, %v3004
    %v3006 = vand.u32 %v3005, 4294901760
    %3007 = vmatmul.mubr.f32.gmra.mrb[0].mxu0 %v3006
    %v3008 = vpop.f32.mrb[0].mxu0
    %v3009 = vadd.f32 %v2792, %v3008
    %v3010 = vpop.f32.mrb[0].mxu0
    %v3011 = vadd.f32 %v2796, %v3010
    %v3012 = vand.u32 %v2585, 4294901760
    %v3013 = vsub.f32 %v2585, %v3012
    %v3014 = vand.u32 %v3013, 4294901760
    %v3015 = vsub.f32 %v3013, %v3014
    %v3016 = vand.u32 %v3015, 4294901760
    %3017 = vmatprep.mubr.f32.mxu0 %v3016
    %v3018 = vand.u32 %v2584, 4294901760
    %v3019 = vsub.f32 %v2584, %v3018
    %v3020 = vand.u32 %v3019, 4294901760
    %v3021 = vsub.f32 %v3019, %v3020
    %v3022 = vand.u32 %v3021, 4294901760
    %3023 = vmatmul.mubr.f32.gmra.mrb[0].mxu0 %v3022
    %v3024 = vpop.f32.mrb[0].mxu0
    %v3025 = vadd.f32 %v2792, %v3024
    %v3026 = vpop.f32.mrb[0].mxu0
    %v3027 = vadd.f32 %v2796, %v3026
    %v3028 = vand.u32 %v2589, 4294901760
    %v3029 = vsub.f32 %v2589, %v3028
    %v3030 = vand.u32 %v3029, 4294901760
    %v3031 = vsub.f32 %v3029, %v3030
    %v3032 = vand.u32 %v3031, 4294901760
    %3033 = vmatprep.mubr.f32.mxu0 %v3032
    %v3034 = vand.u32 %v2588, 4294901760
    %v3035 = vsub.f32 %v2588, %v3034
    %v3036 = vand.u32 %v3035, 4294901760
    %v3037 = vsub.f32 %v3035, %v3036
    %v3038 = vand.u32 %v3037, 4294901760
    %3039 = vmatmul.mubr.f32.gmra.mrb[0].mxu0 %v3038
    %v3040 = vpop.f32.mrb[0].mxu0
    %v3041 = vadd.f32 %v2792, %v3040
    %v3042 = vpop.f32.mrb[0].mxu0
    %v3043 = vadd.f32 %v2796, %v3042
    %v3044 = vand.u32 %v2593, 4294901760
    %v3045 = vsub.f32 %v2593, %v3044
    %v3046 = vand.u32 %v3045, 4294901760
    %v3047 = vsub.f32 %v3045, %v3046
    %v3048 = vand.u32 %v3047, 4294901760
    %3049 = vmatprep.mubr.f32.mxu0 %v3048
    %v3050 = vand.u32 %v2592, 4294901760
    %v3051 = vsub.f32 %v2592, %v3050
    %v3052 = vand.u32 %v3051, 4294901760
    %v3053 = vsub.f32 %v3051, %v3052
    %v3054 = vand.u32 %v3053, 4294901760
    %3055 = vmatmul.mubr.f32.gmra.mrb[0].mxu0 %v3054
    %v3056 = vpop.f32.mrb[0].mxu0
    %v3057 = vadd.f32 %v2792, %v3056
    %v3058 = vpop.f32.mrb[0].mxu0
    %v3059 = vadd.f32 %v2796, %v3058
    %3060 = vdwg.mxu0
    %v3061 = vand.u32 %v2597, 4294901760
    %v3062 = vsub.f32 %v2597, %v3061
    %v3063 = vand.u32 %v3062, 4294901760
    %v3064 = vsub.f32 %v3062, %v3063
    %v3065 = vand.u32 %v3064, 4294901760
    %3066 = vmatprep.subr.mxu0 %v3065
    %v3067 = vand.u32 %v2596, 4294901760
    %v3068 = vsub.f32 %v2596, %v3067
    %v3069 = vand.u32 %v3068, 4294901760
    %v3070 = vsub.f32 %v3068, %v3069
    %v3071 = vand.u32 %v3070, 4294901760
    %3072 = vmatpush1.msra.mxu0 %v3071
    %v3073 = vand.u32 %v2600, 4294901760
    %v3074 = vsub.f32 %v2600, %v3073
    %v3075 = vand.u32 %v3074, 4294901760
    %v3076 = vsub.f32 %v3074, %v3075
    %v3077 = vand.u32 %v3076, 4294901760
    %3078 = vmatprep.subr.mxu0 %v3077
    %v3079 = vand.u32 %v2599, 4294901760
    %v3080 = vsub.f32 %v2599, %v3079
    %v3081 = vand.u32 %v3080, 4294901760
    %v3082 = vsub.f32 %v3080, %v3081
    %v3083 = vand.u32 %v3082, 4294901760
    %3084 = vmatpush1.msra.mxu0 %v3083
    %v3085 = vand.u32 %v2603, 4294901760
    %v3086 = vsub.f32 %v2603, %v3085
    %v3087 = vand.u32 %v3086, 4294901760
    %v3088 = vsub.f32 %v3086, %v3087
    %v3089 = vand.u32 %v3088, 4294901760
    %3090 = vmatprep.subr.mxu0 %v3089
    %v3091 = vand.u32 %v2602, 4294901760
    %v3092 = vsub.f32 %v2602, %v3091
    %v3093 = vand.u32 %v3092, 4294901760
    %v3094 = vsub.f32 %v3092, %v3093
    %v3095 = vand.u32 %v3094, 4294901760
    %3096 = vmatpush1.msra.mxu0 %v3095
    %v3097 = vand.u32 %v2606, 4294901760
    %v3098 = vsub.f32 %v2606, %v3097
    %v3099 = vand.u32 %v3098, 4294901760
    %v3100 = vsub.f32 %v3098, %v3099
    %v3101 = vand.u32 %v3100, 4294901760
    %3102 = vmatprep.subr.mxu0 %v3101
    %v3103 = vand.u32 %v2605, 4294901760
    %v3104 = vsub.f32 %v2605, %v3103
    %v3105 = vand.u32 %v3104, 4294901760
    %v3106 = vsub.f32 %v3104, %v3105
    %v3107 = vand.u32 %v3106, 4294901760
    %3108 = vmatpush1.msra.mxu0 %v3107
    %v3109 = vand.u32 %v2609, 4294901760
    %v3110 = vsub.f32 %v2609, %v3109
    %v3111 = vand.u32 %v3110, 4294901760
    %v3112 = vsub.f32 %v3110, %v3111
    %v3113 = vand.u32 %v3112, 4294901760
    %3114 = vmatprep.subr.mxu0 %v3113
    %v3115 = vand.u32 %v2608, 4294901760
    %v3116 = vsub.f32 %v2608, %v3115
    %v3117 = vand.u32 %v3116, 4294901760
    %v3118 = vsub.f32 %v3116, %v3117
    %v3119 = vand.u32 %v3118, 4294901760
    %3120 = vmatpush1.msra.mxu0 %v3119
    %v3121 = vand.u32 %v2612, 4294901760
    %v3122 = vsub.f32 %v2612, %v3121
    %v3123 = vand.u32 %v3122, 4294901760
    %v3124 = vsub.f32 %v3122, %v3123
    %v3125 = vand.u32 %v3124, 4294901760
    %3126 = vmatprep.subr.mxu0 %v3125
    %v3127 = vand.u32 %v2611, 4294901760
    %v3128 = vsub.f32 %v2611, %v3127
    %v3129 = vand.u32 %v3128, 4294901760
    %v3130 = vsub.f32 %v3128, %v3129
    %v3131 = vand.u32 %v3130, 4294901760
    %3132 = vmatpush1.msra.mxu0 %v3131
    %v3133 = vand.u32 %v2615, 4294901760
    %v3134 = vsub.f32 %v2615, %v3133
    %v3135 = vand.u32 %v3134, 4294901760
    %v3136 = vsub.f32 %v3134, %v3135
    %v3137 = vand.u32 %v3136, 4294901760
    %3138 = vmatprep.subr.mxu0 %v3137
    %v3139 = vand.u32 %v2614, 4294901760
    %v3140 = vsub.f32 %v2614, %v3139
    %v3141 = vand.u32 %v3140, 4294901760
    %v3142 = vsub.f32 %v3140, %v3141
    %v3143 = vand.u32 %v3142, 4294901760
    %3144 = vmatpush1.msra.mxu0 %v3143
    %v3145 = vand.u32 %v2618, 4294901760
    %v3146 = vsub.f32 %v2618, %v3145
    %v3147 = vand.u32 %v3146, 4294901760
    %v3148 = vsub.f32 %v3146, %v3147
    %v3149 = vand.u32 %v3148, 4294901760
    %3150 = vmatprep.subr.mxu0 %v3149
    %v3151 = vand.u32 %v2617, 4294901760
    %v3152 = vsub.f32 %v2617, %v3151
    %v3153 = vand.u32 %v3152, 4294901760
    %v3154 = vsub.f32 %v3152, %v3153
    %v3155 = vand.u32 %v3154, 4294901760
    %3156 = vmatpush1.msra.mxu0 %v3155
    %v3157 = vand.u32 %v2621, 4294901760
    %v3158 = vsub.f32 %v2621, %v3157
    %v3159 = vand.u32 %v3158, 4294901760
    %v3160 = vsub.f32 %v3158, %v3159
    %v3161 = vand.u32 %v3160, 4294901760
    %3162 = vmatprep.subr.mxu0 %v3161
    %v3163 = vand.u32 %v2620, 4294901760
    %v3164 = vsub.f32 %v2620, %v3163
    %v3165 = vand.u32 %v3164, 4294901760
    %v3166 = vsub.f32 %v3164, %v3165
    %v3167 = vand.u32 %v3166, 4294901760
    %3168 = vmatpush1.msra.mxu0 %v3167
    %v3169 = vand.u32 %v2624, 4294901760
    %v3170 = vsub.f32 %v2624, %v3169
    %v3171 = vand.u32 %v3170, 4294901760
    %v3172 = vsub.f32 %v3170, %v3171
    %v3173 = vand.u32 %v3172, 4294901760
    %3174 = vmatprep.subr.mxu0 %v3173
    %v3175 = vand.u32 %v2623, 4294901760
    %v3176 = vsub.f32 %v2623, %v3175
    %v3177 = vand.u32 %v3176, 4294901760
    %v3178 = vsub.f32 %v3176, %v3177
    %v3179 = vand.u32 %v3178, 4294901760
    %3180 = vmatpush1.msra.mxu0 %v3179
    %v3181 = vand.u32 %v2627, 4294901760
    %v3182 = vsub.f32 %v2627, %v3181
    %v3183 = vand.u32 %v3182, 4294901760
    %v3184 = vsub.f32 %v3182, %v3183
    %v3185 = vand.u32 %v3184, 4294901760
    %3186 = vmatprep.subr.mxu0 %v3185
    %v3187 = vand.u32 %v2626, 4294901760
    %v3188 = vsub.f32 %v2626, %v3187
    %v3189 = vand.u32 %v3188, 4294901760
    %v3190 = vsub.f32 %v3188, %v3189
    %v3191 = vand.u32 %v3190, 4294901760
    %3192 = vmatpush1.msra.mxu0 %v3191
    %v3193 = vand.u32 %v2630, 4294901760
    %v3194 = vsub.f32 %v2630, %v3193
    %v3195 = vand.u32 %v3194, 4294901760
    %v3196 = vsub.f32 %v3194, %v3195
    %v3197 = vand.u32 %v3196, 4294901760
    %3198 = vmatprep.subr.mxu0 %v3197
    %v3199 = vand.u32 %v2629, 4294901760
    %v3200 = vsub.f32 %v2629, %v3199
    %v3201 = vand.u32 %v3200, 4294901760
    %v3202 = vsub.f32 %v3200, %v3201
    %v3203 = vand.u32 %v3202, 4294901760
    %3204 = vmatpush1.msra.mxu0 %v3203
    %v3205 = vand.u32 %v2633, 4294901760
    %v3206 = vsub.f32 %v2633, %v3205
    %v3207 = vand.u32 %v3206, 4294901760
    %v3208 = vsub.f32 %v3206, %v3207
    %v3209 = vand.u32 %v3208, 4294901760
    %3210 = vmatprep.subr.mxu0 %v3209
    %v3211 = vand.u32 %v2632, 4294901760
    %v3212 = vsub.f32 %v2632, %v3211
    %v3213 = vand.u32 %v3212, 4294901760
    %v3214 = vsub.f32 %v3212, %v3213
    %v3215 = vand.u32 %v3214, 4294901760
    %3216 = vmatpush1.msra.mxu0 %v3215
    %v3217 = vand.u32 %v2636, 4294901760
    %v3218 = vsub.f32 %v2636, %v3217
    %v3219 = vand.u32 %v3218, 4294901760
    %v3220 = vsub.f32 %v3218, %v3219
    %v3221 = vand.u32 %v3220, 4294901760
    %3222 = vmatprep.subr.mxu0 %v3221
    %v3223 = vand.u32 %v2635, 4294901760
    %v3224 = vsub.f32 %v2635, %v3223
    %v3225 = vand.u32 %v3224, 4294901760
    %v3226 = vsub.f32 %v3224, %v3225
    %v3227 = vand.u32 %v3226, 4294901760
    %3228 = vmatpush1.msra.mxu0 %v3227
    %v3229 = vand.u32 %v2639, 4294901760
    %v3230 = vsub.f32 %v2639, %v3229
    %v3231 = vand.u32 %v3230, 4294901760
    %v3232 = vsub.f32 %v3230, %v3231
    %v3233 = vand.u32 %v3232, 4294901760
    %3234 = vmatprep.subr.mxu0 %v3233
    %v3235 = vand.u32 %v2638, 4294901760
    %v3236 = vsub.f32 %v2638, %v3235
    %v3237 = vand.u32 %v3236, 4294901760
    %v3238 = vsub.f32 %v3236, %v3237
    %v3239 = vand.u32 %v3238, 4294901760
    %3240 = vmatpush1.msra.mxu0 %v3239
    %v3241 = vand.u32 %v2642, 4294901760
    %v3242 = vsub.f32 %v2642, %v3241
    %v3243 = vand.u32 %v3242, 4294901760
    %v3244 = vsub.f32 %v3242, %v3243
    %v3245 = vand.u32 %v3244, 4294901760
    %3246 = vmatprep.subr.mxu0 %v3245
    %v3247 = vand.u32 %v2641, 4294901760
    %v3248 = vsub.f32 %v2641, %v3247
    %v3249 = vand.u32 %v3248, 4294901760
    %v3250 = vsub.f32 %v3248, %v3249
    %v3251 = vand.u32 %v3250, 4294901760
    %3252 = vmatpush1.msra.mxu0 %v3251
    %v3253 = vand.u32 %v2645, 4294901760
    %v3254 = vsub.f32 %v2645, %v3253
    %v3255 = vand.u32 %v3254, 4294901760
    %v3256 = vsub.f32 %v3254, %v3255
    %v3257 = vand.u32 %v3256, 4294901760
    %3258 = vmatprep.subr.mxu0 %v3257
    %v3259 = vand.u32 %v2644, 4294901760
    %v3260 = vsub.f32 %v2644, %v3259
    %v3261 = vand.u32 %v3260, 4294901760
    %v3262 = vsub.f32 %v3260, %v3261
    %v3263 = vand.u32 %v3262, 4294901760
    %3264 = vmatpush1.msra.mxu0 %v3263
    %v3265 = vand.u32 %v2648, 4294901760
    %v3266 = vsub.f32 %v2648, %v3265
    %v3267 = vand.u32 %v3266, 4294901760
    %v3268 = vsub.f32 %v3266, %v3267
    %v3269 = vand.u32 %v3268, 4294901760
    %3270 = vmatprep.subr.mxu0 %v3269
    %v3271 = vand.u32 %v2647, 4294901760
    %v3272 = vsub.f32 %v2647, %v3271
    %v3273 = vand.u32 %v3272, 4294901760
    %v3274 = vsub.f32 %v3272, %v3273
    %v3275 = vand.u32 %v3274, 4294901760
    %3276 = vmatpush1.msra.mxu0 %v3275
    %v3277 = vand.u32 %v2651, 4294901760
    %v3278 = vsub.f32 %v2651, %v3277
    %v3279 = vand.u32 %v3278, 4294901760
    %v3280 = vsub.f32 %v3278, %v3279
    %v3281 = vand.u32 %v3280, 4294901760
    %3282 = vmatprep.subr.mxu0 %v3281
    %v3283 = vand.u32 %v2650, 4294901760
    %v3284 = vsub.f32 %v2650, %v3283
    %v3285 = vand.u32 %v3284, 4294901760
    %v3286 = vsub.f32 %v3284, %v3285
    %v3287 = vand.u32 %v3286, 4294901760
    %3288 = vmatpush1.msra.mxu0 %v3287
    %v3289 = vand.u32 %v2654, 4294901760
    %v3290 = vsub.f32 %v2654, %v3289
    %v3291 = vand.u32 %v3290, 4294901760
    %v3292 = vsub.f32 %v3290, %v3291
    %v3293 = vand.u32 %v3292, 4294901760
    %3294 = vmatprep.subr.mxu0 %v3293
    %v3295 = vand.u32 %v2653, 4294901760
    %v3296 = vsub.f32 %v2653, %v3295
    %v3297 = vand.u32 %v3296, 4294901760
    %v3298 = vsub.f32 %v3296, %v3297
    %v3299 = vand.u32 %v3298, 4294901760
    %3300 = vmatpush1.msra.mxu0 %v3299
    %v3301 = vand.u32 %v2657, 4294901760
    %v3302 = vsub.f32 %v2657, %v3301
    %v3303 = vand.u32 %v3302, 4294901760
    %v3304 = vsub.f32 %v3302, %v3303
    %v3305 = vand.u32 %v3304, 4294901760
    %3306 = vmatprep.subr.mxu0 %v3305
    %v3307 = vand.u32 %v2656, 4294901760
    %v3308 = vsub.f32 %v2656, %v3307
    %v3309 = vand.u32 %v3308, 4294901760
    %v3310 = vsub.f32 %v3308, %v3309
    %v3311 = vand.u32 %v3310, 4294901760
    %3312 = vmatpush1.msra.mxu0 %v3311
    %v3313 = vand.u32 %v2660, 4294901760
    %v3314 = vsub.f32 %v2660, %v3313
    %v3315 = vand.u32 %v3314, 4294901760
    %v3316 = vsub.f32 %v3314, %v3315
    %v3317 = vand.u32 %v3316, 4294901760
    %3318 = vmatprep.subr.mxu0 %v3317
    %v3319 = vand.u32 %v2659, 4294901760
    %v3320 = vsub.f32 %v2659, %v3319
    %v3321 = vand.u32 %v3320, 4294901760
    %v3322 = vsub.f32 %v3320, %v3321
    %v3323 = vand.u32 %v3322, 4294901760
    %3324 = vmatpush1.msra.mxu0 %v3323
    %v3325 = vand.u32 %v2663, 4294901760
    %v3326 = vsub.f32 %v2663, %v3325
    %v3327 = vand.u32 %v3326, 4294901760
    %v3328 = vsub.f32 %v3326, %v3327
    %v3329 = vand.u32 %v3328, 4294901760
    %3330 = vmatprep.subr.mxu0 %v3329
    %v3331 = vand.u32 %v2662, 4294901760
    %v3332 = vsub.f32 %v2662, %v3331
    %v3333 = vand.u32 %v3332, 4294901760
    %v3334 = vsub.f32 %v3332, %v3333
    %v3335 = vand.u32 %v3334, 4294901760
    %3336 = vmatpush1.msra.mxu0 %v3335
    %v3337 = vand.u32 %v2666, 4294901760
    %v3338 = vsub.f32 %v2666, %v3337
    %v3339 = vand.u32 %v3338, 4294901760
    %v3340 = vsub.f32 %v3338, %v3339
    %v3341 = vand.u32 %v3340, 4294901760
    %3342 = vmatprep.subr.mxu0 %v3341
    %v3343 = vand.u32 %v2665, 4294901760
    %v3344 = vsub.f32 %v2665, %v3343
    %v3345 = vand.u32 %v3344, 4294901760
    %v3346 = vsub.f32 %v3344, %v3345
    %v3347 = vand.u32 %v3346, 4294901760
    %3348 = vmatpush1.msra.mxu0 %v3347
    %v3349 = vand.u32 %v2669, 4294901760
    %v3350 = vsub.f32 %v2669, %v3349
    %v3351 = vand.u32 %v3350, 4294901760
    %v3352 = vsub.f32 %v3350, %v3351
    %v3353 = vand.u32 %v3352, 4294901760
    %3354 = vmatprep.subr.mxu0 %v3353
    %v3355 = vand.u32 %v2668, 4294901760
    %v3356 = vsub.f32 %v2668, %v3355
    %v3357 = vand.u32 %v3356, 4294901760
    %v3358 = vsub.f32 %v3356, %v3357
    %v3359 = vand.u32 %v3358, 4294901760
    %3360 = vmatpush1.msra.mxu0 %v3359
    %v3361 = vand.u32 %v2672, 4294901760
    %v3362 = vsub.f32 %v2672, %v3361
    %v3363 = vand.u32 %v3362, 4294901760
    %v3364 = vsub.f32 %v3362, %v3363
    %v3365 = vand.u32 %v3364, 4294901760
    %3366 = vmatprep.subr.mxu0 %v3365
    %v3367 = vand.u32 %v2671, 4294901760
    %v3368 = vsub.f32 %v2671, %v3367
    %v3369 = vand.u32 %v3368, 4294901760
    %v3370 = vsub.f32 %v3368, %v3369
    %v3371 = vand.u32 %v3370, 4294901760
    %3372 = vmatpush1.msra.mxu0 %v3371
    %v3373 = vand.u32 %v2675, 4294901760
    %v3374 = vsub.f32 %v2675, %v3373
    %v3375 = vand.u32 %v3374, 4294901760
    %v3376 = vsub.f32 %v3374, %v3375
    %v3377 = vand.u32 %v3376, 4294901760
    %3378 = vmatprep.subr.mxu0 %v3377
    %v3379 = vand.u32 %v2674, 4294901760
    %v3380 = vsub.f32 %v2674, %v3379
    %v3381 = vand.u32 %v3380, 4294901760
    %v3382 = vsub.f32 %v3380, %v3381
    %v3383 = vand.u32 %v3382, 4294901760
    %3384 = vmatpush1.msra.mxu0 %v3383
    %v3385 = vand.u32 %v2678, 4294901760
    %v3386 = vsub.f32 %v2678, %v3385
    %v3387 = vand.u32 %v3386, 4294901760
    %v3388 = vsub.f32 %v3386, %v3387
    %v3389 = vand.u32 %v3388, 4294901760
    %3390 = vmatprep.subr.mxu0 %v3389
    %v3391 = vand.u32 %v2677, 4294901760
    %v3392 = vsub.f32 %v2677, %v3391
    %v3393 = vand.u32 %v3392, 4294901760
    %v3394 = vsub.f32 %v3392, %v3393
    %v3395 = vand.u32 %v3394, 4294901760
    %3396 = vmatpush1.msra.mxu0 %v3395
    %v3397 = vand.u32 %v2681, 4294901760
    %v3398 = vsub.f32 %v2681, %v3397
    %v3399 = vand.u32 %v3398, 4294901760
    %v3400 = vsub.f32 %v3398, %v3399
    %v3401 = vand.u32 %v3400, 4294901760
    %3402 = vmatprep.subr.mxu0 %v3401
    %v3403 = vand.u32 %v2680, 4294901760
    %v3404 = vsub.f32 %v2680, %v3403
    %v3405 = vand.u32 %v3404, 4294901760
    %v3406 = vsub.f32 %v3404, %v3405
    %v3407 = vand.u32 %v3406, 4294901760
    %3408 = vmatpush1.msra.mxu0 %v3407
    %v3409 = vand.u32 %v2684, 4294901760
    %v3410 = vsub.f32 %v2684, %v3409
    %v3411 = vand.u32 %v3410, 4294901760
    %v3412 = vsub.f32 %v3410, %v3411
    %v3413 = vand.u32 %v3412, 4294901760
    %3414 = vmatprep.subr.mxu0 %v3413
    %v3415 = vand.u32 %v2683, 4294901760
    %v3416 = vsub.f32 %v2683, %v3415
    %v3417 = vand.u32 %v3416, 4294901760
    %v3418 = vsub.f32 %v3416, %v3417
    %v3419 = vand.u32 %v3418, 4294901760
    %3420 = vmatpush1.msra.mxu0 %v3419
    %v3421 = vand.u32 %v2687, 4294901760
    %v3422 = vsub.f32 %v2687, %v3421
    %v3423 = vand.u32 %v3422, 4294901760
    %v3424 = vsub.f32 %v3422, %v3423
    %v3425 = vand.u32 %v3424, 4294901760
    %3426 = vmatprep.subr.mxu0 %v3425
    %v3427 = vand.u32 %v2686, 4294901760
    %v3428 = vsub.f32 %v2686, %v3427
    %v3429 = vand.u32 %v3428, 4294901760
    %v3430 = vsub.f32 %v3428, %v3429
    %v3431 = vand.u32 %v3430, 4294901760
    %3432 = vmatpush1.msra.mxu0 %v3431
    %v3433 = vand.u32 %v2690, 4294901760
    %v3434 = vsub.f32 %v2690, %v3433
    %v3435 = vand.u32 %v3434, 4294901760
    %v3436 = vsub.f32 %v3434, %v3435
    %v3437 = vand.u32 %v3436, 4294901760
    %3438 = vmatprep.subr.mxu0 %v3437
    %v3439 = vand.u32 %v2689, 4294901760
    %v3440 = vsub.f32 %v2689, %v3439
    %v3441 = vand.u32 %v3440, 4294901760
    %v3442 = vsub.f32 %v3440, %v3441
    %v3443 = vand.u32 %v3442, 4294901760
    %3444 = vmatpush1.msra.mxu0 %v3443
    %v3445 = vand.u32 %v2565, 4294901760
    %3446 = vmatprep.mubr.f32.mxu0 %v3445
    %v3447 = vand.u32 %v2564, 4294901760
    %3448 = vmatmul.mubr.f32.gmra.mrb[0].mxu0 %v3447
    %v3449 = vpop.f32.mrb[0].mxu0
    %v3450 = vadd.f32 %v2945, %v3449
    %v3451 = vpop.f32.mrb[0].mxu0
    %v3452 = vadd.f32 %v2947, %v3451
    %v3453 = vand.u32 %v2569, 4294901760
    %3454 = vmatprep.mubr.f32.mxu0 %v3453
    %v3455 = vand.u32 %v2568, 4294901760
    %3456 = vmatmul.mubr.f32.gmra.mrb[0].mxu0 %v3455
    %v3457 = vpop.f32.mrb[0].mxu0
    %v3458 = vadd.f32 %v2961, %v3457
    %v3459 = vpop.f32.mrb[0].mxu0
    %v3460 = vadd.f32 %v2963, %v3459
    %v3461 = vand.u32 %v2573, 4294901760
    %3462 = vmatprep.mubr.f32.mxu0 %v3461
    %v3463 = vand.u32 %v2572, 4294901760
    %3464 = vmatmul.mubr.f32.gmra.mrb[0].mxu0 %v3463
    %v3465 = vpop.f32.mrb[0].mxu0
    %v3466 = vadd.f32 %v2977, %v3465
    %v3467 = vpop.f32.mrb[0].mxu0
    %v3468 = vadd.f32 %v2979, %v3467
    %v3469 = vand.u32 %v2577, 4294901760
    %3470 = vmatprep.mubr.f32.mxu0 %v3469
    %v3471 = vand.u32 %v2576, 4294901760
    %3472 = vmatmul.mubr.f32.gmra.mrb[0].mxu0 %v3471
    %v3473 = vpop.f32.mrb[0].mxu0
    %v3474 = vadd.f32 %v2993, %v3473
    %v3475 = vpop.f32.mrb[0].mxu0
    %v3476 = vadd.f32 %v2995, %v3475
    %v3477 = vand.u32 %v2581, 4294901760
    %3478 = vmatprep.mubr.f32.mxu0 %v3477
    %v3479 = vand.u32 %v2580, 4294901760
    %3480 = vmatmul.mubr.f32.gmra.mrb[0].mxu0 %v3479
    %v3481 = vpop.f32.mrb[0].mxu0
    %v3482 = vadd.f32 %v3009, %v3481
    %v3483 = vpop.f32.mrb[0].mxu0
    %v3484 = vadd.f32 %v3011, %v3483
    %v3485 = vand.u32 %v2585, 4294901760
    %3486 = vmatprep.mubr.f32.mxu0 %v3485
    %v3487 = vand.u32 %v2584, 4294901760
    %3488 = vmatmul.mubr.f32.gmra.mrb[0].mxu0 %v3487
    %v3489 = vpop.f32.mrb[0].mxu0
    %v3490 = vadd.f32 %v3025, %v3489
    %v3491 = vpop.f32.mrb[0].mxu0
    %v3492 = vadd.f32 %v3027, %v3491
    %v3493 = vand.u32 %v2589, 4294901760
    %3494 = vmatprep.mubr.f32.mxu0 %v3493
    %v3495 = vand.u32 %v2588, 4294901760
    %3496 = vmatmul.mubr.f32.gmra.mrb[0].mxu0 %v3495
    %v3497 = vpop.f32.mrb[0].mxu0
    %v3498 = vadd.f32 %v3041, %v3497
    %v3499 = vpop.f32.mrb[0].mxu0
    %v3500 = vadd.f32 %v3043, %v3499
    %v3501 = vand.u32 %v2593, 4294901760
    %3502 = vmatprep.mubr.f32.mxu0 %v3501
    %v3503 = vand.u32 %v2592, 4294901760
    %3504 = vmatmul.mubr.f32.gmra.mrb[0].mxu0 %v3503
    %v3505 = vpop.f32.mrb[0].mxu0
    %v3506 = vadd.f32 %v3057, %v3505
    %v3507 = vpop.f32.mrb[0].mxu0
    %v3508 = vadd.f32 %v3059, %v3507
    %3509 = vdwg.mxu0
    %v3510 = vand.u32 %v2597, 4294901760
    %v3511 = vsub.f32 %v2597, %v3510
    %3512 = vmatprep.subr.mxu0 %v3511
    %v3513 = vand.u32 %v2596, 4294901760
    %v3514 = vsub.f32 %v2596, %v3513
    %3515 = vmatpush1.msra.mxu0 %v3514
    %v3516 = vand.u32 %v2600, 4294901760
    %v3517 = vsub.f32 %v2600, %v3516
    %3518 = vmatprep.subr.mxu0 %v3517
    %v3519 = vand.u32 %v2599, 4294901760
    %v3520 = vsub.f32 %v2599, %v3519
    %3521 = vmatpush1.msra.mxu0 %v3520
    %v3522 = vand.u32 %v2603, 4294901760
    %v3523 = vsub.f32 %v2603, %v3522
    %3524 = vmatprep.subr.mxu0 %v3523
    %v3525 = vand.u32 %v2602, 4294901760
    %v3526 = vsub.f32 %v2602, %v3525
    %3527 = vmatpush1.msra.mxu0 %v3526
    %v3528 = vand.u32 %v2606, 4294901760
    %v3529 = vsub.f32 %v2606, %v3528
    %3530 = vmatprep.subr.mxu0 %v3529
    %v3531 = vand.u32 %v2605, 4294901760
    %v3532 = vsub.f32 %v2605, %v3531
    %3533 = vmatpush1.msra.mxu0 %v3532
    %v3534 = vand.u32 %v2609, 4294901760
    %v3535 = vsub.f32 %v2609, %v3534
    %3536 = vmatprep.subr.mxu0 %v3535
    %v3537 = vand.u32 %v2608, 4294901760
    %v3538 = vsub.f32 %v2608, %v3537
    %3539 = vmatpush1.msra.mxu0 %v3538
    %v3540 = vand.u32 %v2612, 4294901760
    %v3541 = vsub.f32 %v2612, %v3540
    %3542 = vmatprep.subr.mxu0 %v3541
    %v3543 = vand.u32 %v2611, 4294901760
    %v3544 = vsub.f32 %v2611, %v3543
    %3545 = vmatpush1.msra.mxu0 %v3544
    %v3546 = vand.u32 %v2615, 4294901760
    %v3547 = vsub.f32 %v2615, %v3546
    %3548 = vmatprep.subr.mxu0 %v3547
    %v3549 = vand.u32 %v2614, 4294901760
    %v3550 = vsub.f32 %v2614, %v3549
    %3551 = vmatpush1.msra.mxu0 %v3550
    %v3552 = vand.u32 %v2618, 4294901760
    %v3553 = vsub.f32 %v2618, %v3552
    %3554 = vmatprep.subr.mxu0 %v3553
    %v3555 = vand.u32 %v2617, 4294901760
    %v3556 = vsub.f32 %v2617, %v3555
    %3557 = vmatpush1.msra.mxu0 %v3556
    %v3558 = vand.u32 %v2621, 4294901760
    %v3559 = vsub.f32 %v2621, %v3558
    %3560 = vmatprep.subr.mxu0 %v3559
    %v3561 = vand.u32 %v2620, 4294901760
    %v3562 = vsub.f32 %v2620, %v3561
    %3563 = vmatpush1.msra.mxu0 %v3562
    %v3564 = vand.u32 %v2624, 4294901760
    %v3565 = vsub.f32 %v2624, %v3564
    %3566 = vmatprep.subr.mxu0 %v3565
    %v3567 = vand.u32 %v2623, 4294901760
    %v3568 = vsub.f32 %v2623, %v3567
    %3569 = vmatpush1.msra.mxu0 %v3568
    %v3570 = vand.u32 %v2627, 4294901760
    %v3571 = vsub.f32 %v2627, %v3570
    %3572 = vmatprep.subr.mxu0 %v3571
    %v3573 = vand.u32 %v2626, 4294901760
    %v3574 = vsub.f32 %v2626, %v3573
    %3575 = vmatpush1.msra.mxu0 %v3574
    %v3576 = vand.u32 %v2630, 4294901760
    %v3577 = vsub.f32 %v2630, %v3576
    %3578 = vmatprep.subr.mxu0 %v3577
    %v3579 = vand.u32 %v2629, 4294901760
    %v3580 = vsub.f32 %v2629, %v3579
    %3581 = vmatpush1.msra.mxu0 %v3580
    %v3582 = vand.u32 %v2633, 4294901760
    %v3583 = vsub.f32 %v2633, %v3582
    %3584 = vmatprep.subr.mxu0 %v3583
    %v3585 = vand.u32 %v2632, 4294901760
    %v3586 = vsub.f32 %v2632, %v3585
    %3587 = vmatpush1.msra.mxu0 %v3586
    %v3588 = vand.u32 %v2636, 4294901760
    %v3589 = vsub.f32 %v2636, %v3588
    %3590 = vmatprep.subr.mxu0 %v3589
    %v3591 = vand.u32 %v2635, 4294901760
    %v3592 = vsub.f32 %v2635, %v3591
    %3593 = vmatpush1.msra.mxu0 %v3592
    %v3594 = vand.u32 %v2639, 4294901760
    %v3595 = vsub.f32 %v2639, %v3594
    %3596 = vmatprep.subr.mxu0 %v3595
    %v3597 = vand.u32 %v2638, 4294901760
    %v3598 = vsub.f32 %v2638, %v3597
    %3599 = vmatpush1.msra.mxu0 %v3598
    %v3600 = vand.u32 %v2642, 4294901760
    %v3601 = vsub.f32 %v2642, %v3600
    %3602 = vmatprep.subr.mxu0 %v3601
    %v3603 = vand.u32 %v2641, 4294901760
    %v3604 = vsub.f32 %v2641, %v3603
    %3605 = vmatpush1.msra.mxu0 %v3604
    %v3606 = vand.u32 %v2645, 4294901760
    %v3607 = vsub.f32 %v2645, %v3606
    %3608 = vmatprep.subr.mxu0 %v3607
    %v3609 = vand.u32 %v2644, 4294901760
    %v3610 = vsub.f32 %v2644, %v3609
    %3611 = vmatpush1.msra.mxu0 %v3610
    %v3612 = vand.u32 %v2648, 4294901760
    %v3613 = vsub.f32 %v2648, %v3612
    %3614 = vmatprep.subr.mxu0 %v3613
    %v3615 = vand.u32 %v2647, 4294901760
    %v3616 = vsub.f32 %v2647, %v3615
    %3617 = vmatpush1.msra.mxu0 %v3616
    %v3618 = vand.u32 %v2651, 4294901760
    %v3619 = vsub.f32 %v2651, %v3618
    %3620 = vmatprep.subr.mxu0 %v3619
    %v3621 = vand.u32 %v2650, 4294901760
    %v3622 = vsub.f32 %v2650, %v3621
    %3623 = vmatpush1.msra.mxu0 %v3622
    %v3624 = vand.u32 %v2654, 4294901760
    %v3625 = vsub.f32 %v2654, %v3624
    %3626 = vmatprep.subr.mxu0 %v3625
    %v3627 = vand.u32 %v2653, 4294901760
    %v3628 = vsub.f32 %v2653, %v3627
    %3629 = vmatpush1.msra.mxu0 %v3628
    %v3630 = vand.u32 %v2657, 4294901760
    %v3631 = vsub.f32 %v2657, %v3630
    %3632 = vmatprep.subr.mxu0 %v3631
    %v3633 = vand.u32 %v2656, 4294901760
    %v3634 = vsub.f32 %v2656, %v3633
    %3635 = vmatpush1.msra.mxu0 %v3634
    %v3636 = vand.u32 %v2660, 4294901760
    %v3637 = vsub.f32 %v2660, %v3636
    %3638 = vmatprep.subr.mxu0 %v3637
    %v3639 = vand.u32 %v2659, 4294901760
    %v3640 = vsub.f32 %v2659, %v3639
    %3641 = vmatpush1.msra.mxu0 %v3640
    %v3642 = vand.u32 %v2663, 4294901760
    %v3643 = vsub.f32 %v2663, %v3642
    %3644 = vmatprep.subr.mxu0 %v3643
    %v3645 = vand.u32 %v2662, 4294901760
    %v3646 = vsub.f32 %v2662, %v3645
    %3647 = vmatpush1.msra.mxu0 %v3646
    %v3648 = vand.u32 %v2666, 4294901760
    %v3649 = vsub.f32 %v2666, %v3648
    %3650 = vmatprep.subr.mxu0 %v3649
    %v3651 = vand.u32 %v2665, 4294901760
    %v3652 = vsub.f32 %v2665, %v3651
    %3653 = vmatpush1.msra.mxu0 %v3652
    %v3654 = vand.u32 %v2669, 4294901760
    %v3655 = vsub.f32 %v2669, %v3654
    %3656 = vmatprep.subr.mxu0 %v3655
    %v3657 = vand.u32 %v2668, 4294901760
    %v3658 = vsub.f32 %v2668, %v3657
    %3659 = vmatpush1.msra.mxu0 %v3658
    %v3660 = vand.u32 %v2672, 4294901760
    %v3661 = vsub.f32 %v2672, %v3660
    %3662 = vmatprep.subr.mxu0 %v3661
    %v3663 = vand.u32 %v2671, 4294901760
    %v3664 = vsub.f32 %v2671, %v3663
    %3665 = vmatpush1.msra.mxu0 %v3664
    %v3666 = vand.u32 %v2675, 4294901760
    %v3667 = vsub.f32 %v2675, %v3666
    %3668 = vmatprep.subr.mxu0 %v3667
    %v3669 = vand.u32 %v2674, 4294901760
    %v3670 = vsub.f32 %v2674, %v3669
    %3671 = vmatpush1.msra.mxu0 %v3670
    %v3672 = vand.u32 %v2678, 4294901760
    %v3673 = vsub.f32 %v2678, %v3672
    %3674 = vmatprep.subr.mxu0 %v3673
    %v3675 = vand.u32 %v2677, 4294901760
    %v3676 = vsub.f32 %v2677, %v3675
    %3677 = vmatpush1.msra.mxu0 %v3676
    %v3678 = vand.u32 %v2681, 4294901760
    %v3679 = vsub.f32 %v2681, %v3678
    %3680 = vmatprep.subr.mxu0 %v3679
    %v3681 = vand.u32 %v2680, 4294901760
    %v3682 = vsub.f32 %v2680, %v3681
    %3683 = vmatpush1.msra.mxu0 %v3682
    %v3684 = vand.u32 %v2684, 4294901760
    %v3685 = vsub.f32 %v2684, %v3684
    %3686 = vmatprep.subr.mxu0 %v3685
    %v3687 = vand.u32 %v2683, 4294901760
    %v3688 = vsub.f32 %v2683, %v3687
    %3689 = vmatpush1.msra.mxu0 %v3688
    %v3690 = vand.u32 %v2687, 4294901760
    %v3691 = vsub.f32 %v2687, %v3690
    %3692 = vmatprep.subr.mxu0 %v3691
    %v3693 = vand.u32 %v2686, 4294901760
    %v3694 = vsub.f32 %v2686, %v3693
    %3695 = vmatpush1.msra.mxu0 %v3694
    %v3696 = vand.u32 %v2690, 4294901760
    %v3697 = vsub.f32 %v2690, %v3696
    %3698 = vmatprep.subr.mxu0 %v3697
    %v3699 = vand.u32 %v2689, 4294901760
    %v3700 = vsub.f32 %v2689, %v3699
    %3701 = vmatpush1.msra.mxu0 %v3700
    %v3702 = vand.u32 %v2565, 4294901760
    %v3703 = vsub.f32 %v2565, %v3702
    %3704 = vmatprep.mubr.f32.mxu0 %v3703
    %v3705 = vand.u32 %v2564, 4294901760
    %v3706 = vsub.f32 %v2564, %v3705
    %3707 = vmatmul.mubr.f32.gmra.mrb[0].mxu0 %v3706
    %v3708 = vpop.f32.mrb[0].mxu0
    %v3709 = vadd.f32 %v3450, %v3708
    %v3710 = vpop.f32.mrb[0].mxu0
    %v3711 = vadd.f32 %v3452, %v3710
    %v3712 = vand.u32 %v2569, 4294901760
    %v3713 = vsub.f32 %v2569, %v3712
    %3714 = vmatprep.mubr.f32.mxu0 %v3713
    %v3715 = vand.u32 %v2568, 4294901760
    %v3716 = vsub.f32 %v2568, %v3715
    %3717 = vmatmul.mubr.f32.gmra.mrb[0].mxu0 %v3716
    %v3718 = vpop.f32.mrb[0].mxu0
    %v3719 = vadd.f32 %v3458, %v3718
    %v3720 = vpop.f32.mrb[0].mxu0
    %v3721 = vadd.f32 %v3460, %v3720
    %v3722 = vand.u32 %v2573, 4294901760
    %v3723 = vsub.f32 %v2573, %v3722
    %3724 = vmatprep.mubr.f32.mxu0 %v3723
    %v3725 = vand.u32 %v2572, 4294901760
    %v3726 = vsub.f32 %v2572, %v3725
    %3727 = vmatmul.mubr.f32.gmra.mrb[0].mxu0 %v3726
    %v3728 = vpop.f32.mrb[0].mxu0
    %v3729 = vadd.f32 %v3466, %v3728
    %v3730 = vpop.f32.mrb[0].mxu0
    %v3731 = vadd.f32 %v3468, %v3730
    %v3732 = vand.u32 %v2577, 4294901760
    %v3733 = vsub.f32 %v2577, %v3732
    %3734 = vmatprep.mubr.f32.mxu0 %v3733
    %v3735 = vand.u32 %v2576, 4294901760
    %v3736 = vsub.f32 %v2576, %v3735
    %3737 = vmatmul.mubr.f32.gmra.mrb[0].mxu0 %v3736
    %v3738 = vpop.f32.mrb[0].mxu0
    %v3739 = vadd.f32 %v3474, %v3738
    %v3740 = vpop.f32.mrb[0].mxu0
    %v3741 = vadd.f32 %v3476, %v3740
    %v3742 = vand.u32 %v2581, 4294901760
    %v3743 = vsub.f32 %v2581, %v3742
    %3744 = vmatprep.mubr.f32.mxu0 %v3743
    %v3745 = vand.u32 %v2580, 4294901760
    %v3746 = vsub.f32 %v2580, %v3745
    %3747 = vmatmul.mubr.f32.gmra.mrb[0].mxu0 %v3746
    %v3748 = vpop.f32.mrb[0].mxu0
    %v3749 = vadd.f32 %v3482, %v3748
    %v3750 = vpop.f32.mrb[0].mxu0
    %v3751 = vadd.f32 %v3484, %v3750
    %v3752 = vand.u32 %v2585, 4294901760
    %v3753 = vsub.f32 %v2585, %v3752
    %3754 = vmatprep.mubr.f32.mxu0 %v3753
    %v3755 = vand.u32 %v2584, 4294901760
    %v3756 = vsub.f32 %v2584, %v3755
    %3757 = vmatmul.mubr.f32.gmra.mrb[0].mxu0 %v3756
    %v3758 = vpop.f32.mrb[0].mxu0
    %v3759 = vadd.f32 %v3490, %v3758
    %v3760 = vpop.f32.mrb[0].mxu0
    %v3761 = vadd.f32 %v3492, %v3760
    %v3762 = vand.u32 %v2589, 4294901760
    %v3763 = vsub.f32 %v2589, %v3762
    %3764 = vmatprep.mubr.f32.mxu0 %v3763
    %v3765 = vand.u32 %v2588, 4294901760
    %v3766 = vsub.f32 %v2588, %v3765
    %3767 = vmatmul.mubr.f32.gmra.mrb[0].mxu0 %v3766
    %v3768 = vpop.f32.mrb[0].mxu0
    %v3769 = vadd.f32 %v3498, %v3768
    %v3770 = vpop.f32.mrb[0].mxu0
    %v3771 = vadd.f32 %v3500, %v3770
    %v3772 = vand.u32 %v2593, 4294901760
    %v3773 = vsub.f32 %v2593, %v3772
    %3774 = vmatprep.mubr.f32.mxu0 %v3773
    %v3775 = vand.u32 %v2592, 4294901760
    %v3776 = vsub.f32 %v2592, %v3775
    %3777 = vmatmul.mubr.f32.gmra.mrb[0].mxu0 %v3776
    %v3778 = vpop.f32.mrb[0].mxu0
    %v3779 = vadd.f32 %v3506, %v3778
    %v3780 = vpop.f32.mrb[0].mxu0
    %v3781 = vadd.f32 %v3508, %v3780
    %3782 = vdwg.mxu0
    %v3783 = vand.u32 %v2597, 4294901760
    %3784 = vmatprep.subr.mxu0 %v3783
    %v3785 = vand.u32 %v2596, 4294901760
    %3786 = vmatpush1.msra.mxu0 %v3785
    %v3787 = vand.u32 %v2600, 4294901760
    %3788 = vmatprep.subr.mxu0 %v3787
    %v3789 = vand.u32 %v2599, 4294901760
    %3790 = vmatpush1.msra.mxu0 %v3789
    %v3791 = vand.u32 %v2603, 4294901760
    %3792 = vmatprep.subr.mxu0 %v3791
    %v3793 = vand.u32 %v2602, 4294901760
    %3794 = vmatpush1.msra.mxu0 %v3793
    %v3795 = vand.u32 %v2606, 4294901760
    %3796 = vmatprep.subr.mxu0 %v3795
    %v3797 = vand.u32 %v2605, 4294901760
    %3798 = vmatpush1.msra.mxu0 %v3797
    %v3799 = vand.u32 %v2609, 4294901760
    %3800 = vmatprep.subr.mxu0 %v3799
    %v3801 = vand.u32 %v2608, 4294901760
    %3802 = vmatpush1.msra.mxu0 %v3801
    %v3803 = vand.u32 %v2612, 4294901760
    %3804 = vmatprep.subr.mxu0 %v3803
    %v3805 = vand.u32 %v2611, 4294901760
    %3806 = vmatpush1.msra.mxu0 %v3805
    %v3807 = vand.u32 %v2615, 4294901760
    %3808 = vmatprep.subr.mxu0 %v3807
    %v3809 = vand.u32 %v2614, 4294901760
    %3810 = vmatpush1.msra.mxu0 %v3809
    %v3811 = vand.u32 %v2618, 4294901760
    %3812 = vmatprep.subr.mxu0 %v3811
    %v3813 = vand.u32 %v2617, 4294901760
    %3814 = vmatpush1.msra.mxu0 %v3813
    %v3815 = vand.u32 %v2621, 4294901760
    %3816 = vmatprep.subr.mxu0 %v3815
    %v3817 = vand.u32 %v2620, 4294901760
    %3818 = vmatpush1.msra.mxu0 %v3817
    %v3819 = vand.u32 %v2624, 4294901760
    %3820 = vmatprep.subr.mxu0 %v3819
    %v3821 = vand.u32 %v2623, 4294901760
    %3822 = vmatpush1.msra.mxu0 %v3821
    %v3823 = vand.u32 %v2627, 4294901760
    %3824 = vmatprep.subr.mxu0 %v3823
    %v3825 = vand.u32 %v2626, 4294901760
    %3826 = vmatpush1.msra.mxu0 %v3825
    %v3827 = vand.u32 %v2630, 4294901760
    %3828 = vmatprep.subr.mxu0 %v3827
    %v3829 = vand.u32 %v2629, 4294901760
    %3830 = vmatpush1.msra.mxu0 %v3829
    %v3831 = vand.u32 %v2633, 4294901760
    %3832 = vmatprep.subr.mxu0 %v3831
    %v3833 = vand.u32 %v2632, 4294901760
    %3834 = vmatpush1.msra.mxu0 %v3833
    %v3835 = vand.u32 %v2636, 4294901760
    %3836 = vmatprep.subr.mxu0 %v3835
    %v3837 = vand.u32 %v2635, 4294901760
    %3838 = vmatpush1.msra.mxu0 %v3837
    %v3839 = vand.u32 %v2639, 4294901760
    %3840 = vmatprep.subr.mxu0 %v3839
    %v3841 = vand.u32 %v2638, 4294901760
    %3842 = vmatpush1.msra.mxu0 %v3841
    %v3843 = vand.u32 %v2642, 4294901760
    %3844 = vmatprep.subr.mxu0 %v3843
    %v3845 = vand.u32 %v2641, 4294901760
    %3846 = vmatpush1.msra.mxu0 %v3845
    %v3847 = vand.u32 %v2645, 4294901760
    %3848 = vmatprep.subr.mxu0 %v3847
    %v3849 = vand.u32 %v2644, 4294901760
    %3850 = vmatpush1.msra.mxu0 %v3849
    %v3851 = vand.u32 %v2648, 4294901760
    %3852 = vmatprep.subr.mxu0 %v3851
    %v3853 = vand.u32 %v2647, 4294901760
    %3854 = vmatpush1.msra.mxu0 %v3853
    %v3855 = vand.u32 %v2651, 4294901760
    %3856 = vmatprep.subr.mxu0 %v3855
    %v3857 = vand.u32 %v2650, 4294901760
    %3858 = vmatpush1.msra.mxu0 %v3857
    %v3859 = vand.u32 %v2654, 4294901760
    %3860 = vmatprep.subr.mxu0 %v3859
    %v3861 = vand.u32 %v2653, 4294901760
    %3862 = vmatpush1.msra.mxu0 %v3861
    %v3863 = vand.u32 %v2657, 4294901760
    %3864 = vmatprep.subr.mxu0 %v3863
    %v3865 = vand.u32 %v2656, 4294901760
    %3866 = vmatpush1.msra.mxu0 %v3865
    %v3867 = vand.u32 %v2660, 4294901760
    %3868 = vmatprep.subr.mxu0 %v3867
    %v3869 = vand.u32 %v2659, 4294901760
    %3870 = vmatpush1.msra.mxu0 %v3869
    %v3871 = vand.u32 %v2663, 4294901760
    %3872 = vmatprep.subr.mxu0 %v3871
    %v3873 = vand.u32 %v2662, 4294901760
    %3874 = vmatpush1.msra.mxu0 %v3873
    %v3875 = vand.u32 %v2666, 4294901760
    %3876 = vmatprep.subr.mxu0 %v3875
    %v3877 = vand.u32 %v2665, 4294901760
    %3878 = vmatpush1.msra.mxu0 %v3877
    %v3879 = vand.u32 %v2669, 4294901760
    %3880 = vmatprep.subr.mxu0 %v3879
    %v3881 = vand.u32 %v2668, 4294901760
    %3882 = vmatpush1.msra.mxu0 %v3881
    %v3883 = vand.u32 %v2672, 4294901760
    %3884 = vmatprep.subr.mxu0 %v3883
    %v3885 = vand.u32 %v2671, 4294901760
    %3886 = vmatpush1.msra.mxu0 %v3885
    %v3887 = vand.u32 %v2675, 4294901760
    %3888 = vmatprep.subr.mxu0 %v3887
    %v3889 = vand.u32 %v2674, 4294901760
    %3890 = vmatpush1.msra.mxu0 %v3889
    %v3891 = vand.u32 %v2678, 4294901760
    %3892 = vmatprep.subr.mxu0 %v3891
    %v3893 = vand.u32 %v2677, 4294901760
    %3894 = vmatpush1.msra.mxu0 %v3893
    %v3895 = vand.u32 %v2681, 4294901760
    %3896 = vmatprep.subr.mxu0 %v3895
    %v3897 = vand.u32 %v2680, 4294901760
    %3898 = vmatpush1.msra.mxu0 %v3897
    %v3899 = vand.u32 %v2684, 4294901760
    %3900 = vmatprep.subr.mxu0 %v3899
    %v3901 = vand.u32 %v2683, 4294901760
    %3902 = vmatpush1.msra.mxu0 %v3901
    %v3903 = vand.u32 %v2687, 4294901760
    %3904 = vmatprep.subr.mxu0 %v3903
    %v3905 = vand.u32 %v2686, 4294901760
    %3906 = vmatpush1.msra.mxu0 %v3905
    %v3907 = vand.u32 %v2690, 4294901760
    %3908 = vmatprep.subr.mxu0 %v3907
    %v3909 = vand.u32 %v2689, 4294901760
    %3910 = vmatpush1.msra.mxu0 %v3909
    %v3911 = vand.u32 %v2565, 4294901760
    %v3912 = vsub.f32 %v2565, %v3911
    %v3913 = vand.u32 %v3912, 4294901760
    %3914 = vmatprep.mubr.f32.mxu0 %v3913
    %v3915 = vand.u32 %v2564, 4294901760
    %v3916 = vsub.f32 %v2564, %v3915
    %v3917 = vand.u32 %v3916, 4294901760
    %3918 = vmatmul.mubr.f32.gmra.mrb[0].mxu0 %v3917
    %v3919 = vpop.f32.mrb[0].mxu0
    %v3920 = vadd.f32 %v3709, %v3919
    %v3921 = vpop.f32.mrb[0].mxu0
    %v3922 = vadd.f32 %v3711, %v3921
    %v3923 = vand.u32 %v2569, 4294901760
    %v3924 = vsub.f32 %v2569, %v3923
    %v3925 = vand.u32 %v3924, 4294901760
    %3926 = vmatprep.mubr.f32.mxu0 %v3925
    %v3927 = vand.u32 %v2568, 4294901760
    %v3928 = vsub.f32 %v2568, %v3927
    %v3929 = vand.u32 %v3928, 4294901760
    %3930 = vmatmul.mubr.f32.gmra.mrb[0].mxu0 %v3929
    %v3931 = vpop.f32.mrb[0].mxu0
    %v3932 = vadd.f32 %v3719, %v3931
    %v3933 = vpop.f32.mrb[0].mxu0
    %v3934 = vadd.f32 %v3721, %v3933
    %v3935 = vand.u32 %v2573, 4294901760
    %v3936 = vsub.f32 %v2573, %v3935
    %v3937 = vand.u32 %v3936, 4294901760
    %3938 = vmatprep.mubr.f32.mxu0 %v3937
    %v3939 = vand.u32 %v2572, 4294901760
    %v3940 = vsub.f32 %v2572, %v3939
    %v3941 = vand.u32 %v3940, 4294901760
    %3942 = vmatmul.mubr.f32.gmra.mrb[0].mxu0 %v3941
    %v3943 = vpop.f32.mrb[0].mxu0
    %v3944 = vadd.f32 %v3729, %v3943
    %v3945 = vpop.f32.mrb[0].mxu0
    %v3946 = vadd.f32 %v3731, %v3945
    %v3947 = vand.u32 %v2577, 4294901760
    %v3948 = vsub.f32 %v2577, %v3947
    %v3949 = vand.u32 %v3948, 4294901760
    %3950 = vmatprep.mubr.f32.mxu0 %v3949
    %v3951 = vand.u32 %v2576, 4294901760
    %v3952 = vsub.f32 %v2576, %v3951
    %v3953 = vand.u32 %v3952, 4294901760
    %3954 = vmatmul.mubr.f32.gmra.mrb[0].mxu0 %v3953
    %v3955 = vpop.f32.mrb[0].mxu0
    %v3956 = vadd.f32 %v3739, %v3955
    %v3957 = vpop.f32.mrb[0].mxu0
    %v3958 = vadd.f32 %v3741, %v3957
    %v3959 = vand.u32 %v2581, 4294901760
    %v3960 = vsub.f32 %v2581, %v3959
    %v3961 = vand.u32 %v3960, 4294901760
    %3962 = vmatprep.mubr.f32.mxu0 %v3961
    %v3963 = vand.u32 %v2580, 4294901760
    %v3964 = vsub.f32 %v2580, %v3963
    %v3965 = vand.u32 %v3964, 4294901760
    %3966 = vmatmul.mubr.f32.gmra.mrb[0].mxu0 %v3965
    %v3967 = vpop.f32.mrb[0].mxu0
    %v3968 = vadd.f32 %v3749, %v3967
    %v3969 = vpop.f32.mrb[0].mxu0
    %v3970 = vadd.f32 %v3751, %v3969
    %v3971 = vand.u32 %v2585, 4294901760
    %v3972 = vsub.f32 %v2585, %v3971
    %v3973 = vand.u32 %v3972, 4294901760
    %3974 = vmatprep.mubr.f32.mxu0 %v3973
    %v3975 = vand.u32 %v2584, 4294901760
    %v3976 = vsub.f32 %v2584, %v3975
    %v3977 = vand.u32 %v3976, 4294901760
    %3978 = vmatmul.mubr.f32.gmra.mrb[0].mxu0 %v3977
    %v3979 = vpop.f32.mrb[0].mxu0
    %v3980 = vadd.f32 %v3759, %v3979
    %v3981 = vpop.f32.mrb[0].mxu0
    %v3982 = vadd.f32 %v3761, %v3981
    %v3983 = vand.u32 %v2589, 4294901760
    %v3984 = vsub.f32 %v2589, %v3983
    %v3985 = vand.u32 %v3984, 4294901760
    %3986 = vmatprep.mubr.f32.mxu0 %v3985
    %v3987 = vand.u32 %v2588, 4294901760
    %v3988 = vsub.f32 %v2588, %v3987
    %v3989 = vand.u32 %v3988, 4294901760
    %3990 = vmatmul.mubr.f32.gmra.mrb[0].mxu0 %v3989
    %v3991 = vpop.f32.mrb[0].mxu0
    %v3992 = vadd.f32 %v3769, %v3991
    %v3993 = vpop.f32.mrb[0].mxu0
    %v3994 = vadd.f32 %v3771, %v3993
    %v3995 = vand.u32 %v2593, 4294901760
    %v3996 = vsub.f32 %v2593, %v3995
    %v3997 = vand.u32 %v3996, 4294901760
    %3998 = vmatprep.mubr.f32.mxu0 %v3997
    %v3999 = vand.u32 %v2592, 4294901760
    %v4000 = vsub.f32 %v2592, %v3999
    %v4001 = vand.u32 %v4000, 4294901760
    %4002 = vmatmul.mubr.f32.gmra.mrb[0].mxu0 %v4001
    %v4003 = vpop.f32.mrb[0].mxu0
    %v4004 = vadd.f32 %v3779, %v4003
    %v4005 = vpop.f32.mrb[0].mxu0
    %v4006 = vadd.f32 %v3781, %v4005
    %4007 = vdwg.mxu0
    %v4008 = vand.u32 %v2597, 4294901760
    %v4009 = vsub.f32 %v2597, %v4008
    %v4010 = vand.u32 %v4009, 4294901760
    %4011 = vmatprep.subr.mxu0 %v4010
    %v4012 = vand.u32 %v2596, 4294901760
    %v4013 = vsub.f32 %v2596, %v4012
    %v4014 = vand.u32 %v4013, 4294901760
    %4015 = vmatpush1.msra.mxu0 %v4014
    %v4016 = vand.u32 %v2600, 4294901760
    %v4017 = vsub.f32 %v2600, %v4016
    %v4018 = vand.u32 %v4017, 4294901760
    %4019 = vmatprep.subr.mxu0 %v4018
    %v4020 = vand.u32 %v2599, 4294901760
    %v4021 = vsub.f32 %v2599, %v4020
    %v4022 = vand.u32 %v4021, 4294901760
    %4023 = vmatpush1.msra.mxu0 %v4022
    %v4024 = vand.u32 %v2603, 4294901760
    %v4025 = vsub.f32 %v2603, %v4024
    %v4026 = vand.u32 %v4025, 4294901760
    %4027 = vmatprep.subr.mxu0 %v4026
    %v4028 = vand.u32 %v2602, 4294901760
    %v4029 = vsub.f32 %v2602, %v4028
    %v4030 = vand.u32 %v4029, 4294901760
    %4031 = vmatpush1.msra.mxu0 %v4030
    %v4032 = vand.u32 %v2606, 4294901760
    %v4033 = vsub.f32 %v2606, %v4032
    %v4034 = vand.u32 %v4033, 4294901760
    %4035 = vmatprep.subr.mxu0 %v4034
    %v4036 = vand.u32 %v2605, 4294901760
    %v4037 = vsub.f32 %v2605, %v4036
    %v4038 = vand.u32 %v4037, 4294901760
    %4039 = vmatpush1.msra.mxu0 %v4038
    %v4040 = vand.u32 %v2609, 4294901760
    %v4041 = vsub.f32 %v2609, %v4040
    %v4042 = vand.u32 %v4041, 4294901760
    %4043 = vmatprep.subr.mxu0 %v4042
    %v4044 = vand.u32 %v2608, 4294901760
    %v4045 = vsub.f32 %v2608, %v4044
    %v4046 = vand.u32 %v4045, 4294901760
    %4047 = vmatpush1.msra.mxu0 %v4046
    %v4048 = vand.u32 %v2612, 4294901760
    %v4049 = vsub.f32 %v2612, %v4048
    %v4050 = vand.u32 %v4049, 4294901760
    %4051 = vmatprep.subr.mxu0 %v4050
    %v4052 = vand.u32 %v2611, 4294901760
    %v4053 = vsub.f32 %v2611, %v4052
    %v4054 = vand.u32 %v4053, 4294901760
    %4055 = vmatpush1.msra.mxu0 %v4054
    %v4056 = vand.u32 %v2615, 4294901760
    %v4057 = vsub.f32 %v2615, %v4056
    %v4058 = vand.u32 %v4057, 4294901760
    %4059 = vmatprep.subr.mxu0 %v4058
    %v4060 = vand.u32 %v2614, 4294901760
    %v4061 = vsub.f32 %v2614, %v4060
    %v4062 = vand.u32 %v4061, 4294901760
    %4063 = vmatpush1.msra.mxu0 %v4062
    %v4064 = vand.u32 %v2618, 4294901760
    %v4065 = vsub.f32 %v2618, %v4064
    %v4066 = vand.u32 %v4065, 4294901760
    %4067 = vmatprep.subr.mxu0 %v4066
    %v4068 = vand.u32 %v2617, 4294901760
    %v4069 = vsub.f32 %v2617, %v4068
    %v4070 = vand.u32 %v4069, 4294901760
    %4071 = vmatpush1.msra.mxu0 %v4070
    %v4072 = vand.u32 %v2621, 4294901760
    %v4073 = vsub.f32 %v2621, %v4072
    %v4074 = vand.u32 %v4073, 4294901760
    %4075 = vmatprep.subr.mxu0 %v4074
    %v4076 = vand.u32 %v2620, 4294901760
    %v4077 = vsub.f32 %v2620, %v4076
    %v4078 = vand.u32 %v4077, 4294901760
    %4079 = vmatpush1.msra.mxu0 %v4078
    %v4080 = vand.u32 %v2624, 4294901760
    %v4081 = vsub.f32 %v2624, %v4080
    %v4082 = vand.u32 %v4081, 4294901760
    %4083 = vmatprep.subr.mxu0 %v4082
    %v4084 = vand.u32 %v2623, 4294901760
    %v4085 = vsub.f32 %v2623, %v4084
    %v4086 = vand.u32 %v4085, 4294901760
    %4087 = vmatpush1.msra.mxu0 %v4086
    %v4088 = vand.u32 %v2627, 4294901760
    %v4089 = vsub.f32 %v2627, %v4088
    %v4090 = vand.u32 %v4089, 4294901760
    %4091 = vmatprep.subr.mxu0 %v4090
    %v4092 = vand.u32 %v2626, 4294901760
    %v4093 = vsub.f32 %v2626, %v4092
    %v4094 = vand.u32 %v4093, 4294901760
    %4095 = vmatpush1.msra.mxu0 %v4094
    %v4096 = vand.u32 %v2630, 4294901760
    %v4097 = vsub.f32 %v2630, %v4096
    %v4098 = vand.u32 %v4097, 4294901760
    %4099 = vmatprep.subr.mxu0 %v4098
    %v4100 = vand.u32 %v2629, 4294901760
    %v4101 = vsub.f32 %v2629, %v4100
    %v4102 = vand.u32 %v4101, 4294901760
    %4103 = vmatpush1.msra.mxu0 %v4102
    %v4104 = vand.u32 %v2633, 4294901760
    %v4105 = vsub.f32 %v2633, %v4104
    %v4106 = vand.u32 %v4105, 4294901760
    %4107 = vmatprep.subr.mxu0 %v4106
    %v4108 = vand.u32 %v2632, 4294901760
    %v4109 = vsub.f32 %v2632, %v4108
    %v4110 = vand.u32 %v4109, 4294901760
    %4111 = vmatpush1.msra.mxu0 %v4110
    %v4112 = vand.u32 %v2636, 4294901760
    %v4113 = vsub.f32 %v2636, %v4112
    %v4114 = vand.u32 %v4113, 4294901760
    %4115 = vmatprep.subr.mxu0 %v4114
    %v4116 = vand.u32 %v2635, 4294901760
    %v4117 = vsub.f32 %v2635, %v4116
    %v4118 = vand.u32 %v4117, 4294901760
    %4119 = vmatpush1.msra.mxu0 %v4118
    %v4120 = vand.u32 %v2639, 4294901760
    %v4121 = vsub.f32 %v2639, %v4120
    %v4122 = vand.u32 %v4121, 4294901760
    %4123 = vmatprep.subr.mxu0 %v4122
    %v4124 = vand.u32 %v2638, 4294901760
    %v4125 = vsub.f32 %v2638, %v4124
    %v4126 = vand.u32 %v4125, 4294901760
    %4127 = vmatpush1.msra.mxu0 %v4126
    %v4128 = vand.u32 %v2642, 4294901760
    %v4129 = vsub.f32 %v2642, %v4128
    %v4130 = vand.u32 %v4129, 4294901760
    %4131 = vmatprep.subr.mxu0 %v4130
    %v4132 = vand.u32 %v2641, 4294901760
    %v4133 = vsub.f32 %v2641, %v4132
    %v4134 = vand.u32 %v4133, 4294901760
    %4135 = vmatpush1.msra.mxu0 %v4134
    %v4136 = vand.u32 %v2645, 4294901760
    %v4137 = vsub.f32 %v2645, %v4136
    %v4138 = vand.u32 %v4137, 4294901760
    %4139 = vmatprep.subr.mxu0 %v4138
    %v4140 = vand.u32 %v2644, 4294901760
    %v4141 = vsub.f32 %v2644, %v4140
    %v4142 = vand.u32 %v4141, 4294901760
    %4143 = vmatpush1.msra.mxu0 %v4142
    %v4144 = vand.u32 %v2648, 4294901760
    %v4145 = vsub.f32 %v2648, %v4144
    %v4146 = vand.u32 %v4145, 4294901760
    %4147 = vmatprep.subr.mxu0 %v4146
    %v4148 = vand.u32 %v2647, 4294901760
    %v4149 = vsub.f32 %v2647, %v4148
    %v4150 = vand.u32 %v4149, 4294901760
    %4151 = vmatpush1.msra.mxu0 %v4150
    %v4152 = vand.u32 %v2651, 4294901760
    %v4153 = vsub.f32 %v2651, %v4152
    %v4154 = vand.u32 %v4153, 4294901760
    %4155 = vmatprep.subr.mxu0 %v4154
    %v4156 = vand.u32 %v2650, 4294901760
    %v4157 = vsub.f32 %v2650, %v4156
    %v4158 = vand.u32 %v4157, 4294901760
    %4159 = vmatpush1.msra.mxu0 %v4158
    %v4160 = vand.u32 %v2654, 4294901760
    %v4161 = vsub.f32 %v2654, %v4160
    %v4162 = vand.u32 %v4161, 4294901760
    %4163 = vmatprep.subr.mxu0 %v4162
    %v4164 = vand.u32 %v2653, 4294901760
    %v4165 = vsub.f32 %v2653, %v4164
    %v4166 = vand.u32 %v4165, 4294901760
    %4167 = vmatpush1.msra.mxu0 %v4166
    %v4168 = vand.u32 %v2657, 4294901760
    %v4169 = vsub.f32 %v2657, %v4168
    %v4170 = vand.u32 %v4169, 4294901760
    %4171 = vmatprep.subr.mxu0 %v4170
    %v4172 = vand.u32 %v2656, 4294901760
    %v4173 = vsub.f32 %v2656, %v4172
    %v4174 = vand.u32 %v4173, 4294901760
    %4175 = vmatpush1.msra.mxu0 %v4174
    %v4176 = vand.u32 %v2660, 4294901760
    %v4177 = vsub.f32 %v2660, %v4176
    %v4178 = vand.u32 %v4177, 4294901760
    %4179 = vmatprep.subr.mxu0 %v4178
    %v4180 = vand.u32 %v2659, 4294901760
    %v4181 = vsub.f32 %v2659, %v4180
    %v4182 = vand.u32 %v4181, 4294901760
    %4183 = vmatpush1.msra.mxu0 %v4182
    %v4184 = vand.u32 %v2663, 4294901760
    %v4185 = vsub.f32 %v2663, %v4184
    %v4186 = vand.u32 %v4185, 4294901760
    %4187 = vmatprep.subr.mxu0 %v4186
    %v4188 = vand.u32 %v2662, 4294901760
    %v4189 = vsub.f32 %v2662, %v4188
    %v4190 = vand.u32 %v4189, 4294901760
    %4191 = vmatpush1.msra.mxu0 %v4190
    %v4192 = vand.u32 %v2666, 4294901760
    %v4193 = vsub.f32 %v2666, %v4192
    %v4194 = vand.u32 %v4193, 4294901760
    %4195 = vmatprep.subr.mxu0 %v4194
    %v4196 = vand.u32 %v2665, 4294901760
    %v4197 = vsub.f32 %v2665, %v4196
    %v4198 = vand.u32 %v4197, 4294901760
    %4199 = vmatpush1.msra.mxu0 %v4198
    %v4200 = vand.u32 %v2669, 4294901760
    %v4201 = vsub.f32 %v2669, %v4200
    %v4202 = vand.u32 %v4201, 4294901760
    %4203 = vmatprep.subr.mxu0 %v4202
    %v4204 = vand.u32 %v2668, 4294901760
    %v4205 = vsub.f32 %v2668, %v4204
    %v4206 = vand.u32 %v4205, 4294901760
    %4207 = vmatpush1.msra.mxu0 %v4206
    %v4208 = vand.u32 %v2672, 4294901760
    %v4209 = vsub.f32 %v2672, %v4208
    %v4210 = vand.u32 %v4209, 4294901760
    %4211 = vmatprep.subr.mxu0 %v4210
    %v4212 = vand.u32 %v2671, 4294901760
    %v4213 = vsub.f32 %v2671, %v4212
    %v4214 = vand.u32 %v4213, 4294901760
    %4215 = vmatpush1.msra.mxu0 %v4214
    %v4216 = vand.u32 %v2675, 4294901760
    %v4217 = vsub.f32 %v2675, %v4216
    %v4218 = vand.u32 %v4217, 4294901760
    %4219 = vmatprep.subr.mxu0 %v4218
    %v4220 = vand.u32 %v2674, 4294901760
    %v4221 = vsub.f32 %v2674, %v4220
    %v4222 = vand.u32 %v4221, 4294901760
    %4223 = vmatpush1.msra.mxu0 %v4222
    %v4224 = vand.u32 %v2678, 4294901760
    %v4225 = vsub.f32 %v2678, %v4224
    %v4226 = vand.u32 %v4225, 4294901760
    %4227 = vmatprep.subr.mxu0 %v4226
    %v4228 = vand.u32 %v2677, 4294901760
    %v4229 = vsub.f32 %v2677, %v4228
    %v4230 = vand.u32 %v4229, 4294901760
    %4231 = vmatpush1.msra.mxu0 %v4230
    %v4232 = vand.u32 %v2681, 4294901760
    %v4233 = vsub.f32 %v2681, %v4232
    %v4234 = vand.u32 %v4233, 4294901760
    %4235 = vmatprep.subr.mxu0 %v4234
    %v4236 = vand.u32 %v2680, 4294901760
    %v4237 = vsub.f32 %v2680, %v4236
    %v4238 = vand.u32 %v4237, 4294901760
    %4239 = vmatpush1.msra.mxu0 %v4238
    %v4240 = vand.u32 %v2684, 4294901760
    %v4241 = vsub.f32 %v2684, %v4240
    %v4242 = vand.u32 %v4241, 4294901760
    %4243 = vmatprep.subr.mxu0 %v4242
    %v4244 = vand.u32 %v2683, 4294901760
    %v4245 = vsub.f32 %v2683, %v4244
    %v4246 = vand.u32 %v4245, 4294901760
    %4247 = vmatpush1.msra.mxu0 %v4246
    %v4248 = vand.u32 %v2687, 4294901760
    %v4249 = vsub.f32 %v2687, %v4248
    %v4250 = vand.u32 %v4249, 4294901760
    %4251 = vmatprep.subr.mxu0 %v4250
    %v4252 = vand.u32 %v2686, 4294901760
    %v4253 = vsub.f32 %v2686, %v4252
    %v4254 = vand.u32 %v4253, 4294901760
    %4255 = vmatpush1.msra.mxu0 %v4254
    %v4256 = vand.u32 %v2690, 4294901760
    %v4257 = vsub.f32 %v2690, %v4256
    %v4258 = vand.u32 %v4257, 4294901760
    %4259 = vmatprep.subr.mxu0 %v4258
    %v4260 = vand.u32 %v2689, 4294901760
    %v4261 = vsub.f32 %v2689, %v4260
    %v4262 = vand.u32 %v4261, 4294901760
    %4263 = vmatpush1.msra.mxu0 %v4262
    %v4264 = vand.u32 %v2565, 4294901760
    %4265 = vmatprep.mubr.f32.mxu0 %v4264
    %v4266 = vand.u32 %v2564, 4294901760
    %4267 = vmatmul.mubr.f32.gmra.mrb[0].mxu0 %v4266
    %v4268 = vpop.f32.mrb[0].mxu0
    %v4269 = vadd.f32 %v3920, %v4268
    %v4270 = vpop.f32.mrb[0].mxu0
    %v4271 = vadd.f32 %v3922, %v4270
    %v4272 = vand.u32 %v2569, 4294901760
    %4273 = vmatprep.mubr.f32.mxu0 %v4272
    %v4274 = vand.u32 %v2568, 4294901760
    %4275 = vmatmul.mubr.f32.gmra.mrb[0].mxu0 %v4274
    %v4276 = vpop.f32.mrb[0].mxu0
    %v4277 = vadd.f32 %v3932, %v4276
    %v4278 = vpop.f32.mrb[0].mxu0
    %v4279 = vadd.f32 %v3934, %v4278
    %v4280 = vand.u32 %v2573, 4294901760
    %4281 = vmatprep.mubr.f32.mxu0 %v4280
    %v4282 = vand.u32 %v2572, 4294901760
    %4283 = vmatmul.mubr.f32.gmra.mrb[0].mxu0 %v4282
    %v4284 = vpop.f32.mrb[0].mxu0
    %v4285 = vadd.f32 %v3944, %v4284
    %v4286 = vpop.f32.mrb[0].mxu0
    %v4287 = vadd.f32 %v3946, %v4286
    %v4288 = vand.u32 %v2577, 4294901760
    %4289 = vmatprep.mubr.f32.mxu0 %v4288
    %v4290 = vand.u32 %v2576, 4294901760
    %4291 = vmatmul.mubr.f32.gmra.mrb[0].mxu0 %v4290
    %v4292 = vpop.f32.mrb[0].mxu0
    %v4293 = vadd.f32 %v3956, %v4292
    %v4294 = vpop.f32.mrb[0].mxu0
    %v4295 = vadd.f32 %v3958, %v4294
    %v4296 = vand.u32 %v2581, 4294901760
    %4297 = vmatprep.mubr.f32.mxu0 %v4296
    %v4298 = vand.u32 %v2580, 4294901760
    %4299 = vmatmul.mubr.f32.gmra.mrb[0].mxu0 %v4298
    %v4300 = vpop.f32.mrb[0].mxu0
    %v4301 = vadd.f32 %v3968, %v4300
    %v4302 = vpop.f32.mrb[0].mxu0
    %v4303 = vadd.f32 %v3970, %v4302
    %v4304 = vand.u32 %v2585, 4294901760
    %4305 = vmatprep.mubr.f32.mxu0 %v4304
    %v4306 = vand.u32 %v2584, 4294901760
    %4307 = vmatmul.mubr.f32.gmra.mrb[0].mxu0 %v4306
    %v4308 = vpop.f32.mrb[0].mxu0
    %v4309 = vadd.f32 %v3980, %v4308
    %v4310 = vpop.f32.mrb[0].mxu0
    %v4311 = vadd.f32 %v3982, %v4310
    %v4312 = vand.u32 %v2589, 4294901760
    %4313 = vmatprep.mubr.f32.mxu0 %v4312
    %v4314 = vand.u32 %v2588, 4294901760
    %4315 = vmatmul.mubr.f32.gmra.mrb[0].mxu0 %v4314
    %v4316 = vpop.f32.mrb[0].mxu0
    %v4317 = vadd.f32 %v3992, %v4316
    %v4318 = vpop.f32.mrb[0].mxu0
    %v4319 = vadd.f32 %v3994, %v4318
    %v4320 = vand.u32 %v2593, 4294901760
    %4321 = vmatprep.mubr.f32.mxu0 %v4320
    %v4322 = vand.u32 %v2592, 4294901760
    %4323 = vmatmul.mubr.f32.gmra.mrb[0].mxu0 %v4322
    %v4324 = vpop.f32.mrb[0].mxu0
    %v4325 = vadd.f32 %v4004, %v4324
    %v4326 = vpop.f32.mrb[0].mxu0
    %v4327 = vadd.f32 %v4006, %v4326
    %4328 = vdwg.mxu0
    %v4329 = vand.u32 %v2597, 4294901760
    %4330 = vmatprep.subr.mxu0 %v4329
    %v4331 = vand.u32 %v2596, 4294901760
    %4332 = vmatpush1.msra.mxu0 %v4331
    %v4333 = vand.u32 %v2600, 4294901760
    %4334 = vmatprep.subr.mxu0 %v4333
    %v4335 = vand.u32 %v2599, 4294901760
    %4336 = vmatpush1.msra.mxu0 %v4335
    %v4337 = vand.u32 %v2603, 4294901760
    %4338 = vmatprep.subr.mxu0 %v4337
    %v4339 = vand.u32 %v2602, 4294901760
    %4340 = vmatpush1.msra.mxu0 %v4339
    %v4341 = vand.u32 %v2606, 4294901760
    %4342 = vmatprep.subr.mxu0 %v4341
    %v4343 = vand.u32 %v2605, 4294901760
    %4344 = vmatpush1.msra.mxu0 %v4343
    %v4345 = vand.u32 %v2609, 4294901760
    %4346 = vmatprep.subr.mxu0 %v4345
    %v4347 = vand.u32 %v2608, 4294901760
    %4348 = vmatpush1.msra.mxu0 %v4347
    %v4349 = vand.u32 %v2612, 4294901760
    %4350 = vmatprep.subr.mxu0 %v4349
    %v4351 = vand.u32 %v2611, 4294901760
    %4352 = vmatpush1.msra.mxu0 %v4351
    %v4353 = vand.u32 %v2615, 4294901760
    %4354 = vmatprep.subr.mxu0 %v4353
    %v4355 = vand.u32 %v2614, 4294901760
    %4356 = vmatpush1.msra.mxu0 %v4355
    %v4357 = vand.u32 %v2618, 4294901760
    %4358 = vmatprep.subr.mxu0 %v4357
    %v4359 = vand.u32 %v2617, 4294901760
    %4360 = vmatpush1.msra.mxu0 %v4359
    %v4361 = vand.u32 %v2621, 4294901760
    %4362 = vmatprep.subr.mxu0 %v4361
    %v4363 = vand.u32 %v2620, 4294901760
    %4364 = vmatpush1.msra.mxu0 %v4363
    %v4365 = vand.u32 %v2624, 4294901760
    %4366 = vmatprep.subr.mxu0 %v4365
    %v4367 = vand.u32 %v2623, 4294901760
    %4368 = vmatpush1.msra.mxu0 %v4367
    %v4369 = vand.u32 %v2627, 4294901760
    %4370 = vmatprep.subr.mxu0 %v4369
    %v4371 = vand.u32 %v2626, 4294901760
    %4372 = vmatpush1.msra.mxu0 %v4371
    %v4373 = vand.u32 %v2630, 4294901760
    %4374 = vmatprep.subr.mxu0 %v4373
    %v4375 = vand.u32 %v2629, 4294901760
    %4376 = vmatpush1.msra.mxu0 %v4375
    %v4377 = vand.u32 %v2633, 4294901760
    %4378 = vmatprep.subr.mxu0 %v4377
    %v4379 = vand.u32 %v2632, 4294901760
    %4380 = vmatpush1.msra.mxu0 %v4379
    %v4381 = vand.u32 %v2636, 4294901760
    %4382 = vmatprep.subr.mxu0 %v4381
    %v4383 = vand.u32 %v2635, 4294901760
    %4384 = vmatpush1.msra.mxu0 %v4383
    %v4385 = vand.u32 %v2639, 4294901760
    %4386 = vmatprep.subr.mxu0 %v4385
    %v4387 = vand.u32 %v2638, 4294901760
    %4388 = vmatpush1.msra.mxu0 %v4387
    %v4389 = vand.u32 %v2642, 4294901760
    %4390 = vmatprep.subr.mxu0 %v4389
    %v4391 = vand.u32 %v2641, 4294901760
    %4392 = vmatpush1.msra.mxu0 %v4391
    %v4393 = vand.u32 %v2645, 4294901760
    %4394 = vmatprep.subr.mxu0 %v4393
    %v4395 = vand.u32 %v2644, 4294901760
    %4396 = vmatpush1.msra.mxu0 %v4395
    %v4397 = vand.u32 %v2648, 4294901760
    %4398 = vmatprep.subr.mxu0 %v4397
    %v4399 = vand.u32 %v2647, 4294901760
    %4400 = vmatpush1.msra.mxu0 %v4399
    %v4401 = vand.u32 %v2651, 4294901760
    %4402 = vmatprep.subr.mxu0 %v4401
    %v4403 = vand.u32 %v2650, 4294901760
    %4404 = vmatpush1.msra.mxu0 %v4403
    %v4405 = vand.u32 %v2654, 4294901760
    %4406 = vmatprep.subr.mxu0 %v4405
    %v4407 = vand.u32 %v2653, 4294901760
    %4408 = vmatpush1.msra.mxu0 %v4407
    %v4409 = vand.u32 %v2657, 4294901760
    %4410 = vmatprep.subr.mxu0 %v4409
    %v4411 = vand.u32 %v2656, 4294901760
    %4412 = vmatpush1.msra.mxu0 %v4411
    %v4413 = vand.u32 %v2660, 4294901760
    %4414 = vmatprep.subr.mxu0 %v4413
    %v4415 = vand.u32 %v2659, 4294901760
    %4416 = vmatpush1.msra.mxu0 %v4415
    %v4417 = vand.u32 %v2663, 4294901760
    %4418 = vmatprep.subr.mxu0 %v4417
    %v4419 = vand.u32 %v2662, 4294901760
    %4420 = vmatpush1.msra.mxu0 %v4419
    %v4421 = vand.u32 %v2666, 4294901760
    %4422 = vmatprep.subr.mxu0 %v4421
    %v4423 = vand.u32 %v2665, 4294901760
    %4424 = vmatpush1.msra.mxu0 %v4423
    %v4425 = vand.u32 %v2669, 4294901760
    %4426 = vmatprep.subr.mxu0 %v4425
    %v4427 = vand.u32 %v2668, 4294901760
    %4428 = vmatpush1.msra.mxu0 %v4427
    %v4429 = vand.u32 %v2672, 4294901760
    %4430 = vmatprep.subr.mxu0 %v4429
    %v4431 = vand.u32 %v2671, 4294901760
    %4432 = vmatpush1.msra.mxu0 %v4431
    %v4433 = vand.u32 %v2675, 4294901760
    %4434 = vmatprep.subr.mxu0 %v4433
    %v4435 = vand.u32 %v2674, 4294901760
    %4436 = vmatpush1.msra.mxu0 %v4435
    %v4437 = vand.u32 %v2678, 4294901760
    %4438 = vmatprep.subr.mxu0 %v4437
    %v4439 = vand.u32 %v2677, 4294901760
    %4440 = vmatpush1.msra.mxu0 %v4439
    %v4441 = vand.u32 %v2681, 4294901760
    %4442 = vmatprep.subr.mxu0 %v4441
    %v4443 = vand.u32 %v2680, 4294901760
    %4444 = vmatpush1.msra.mxu0 %v4443
    %v4445 = vand.u32 %v2684, 4294901760
    %4446 = vmatprep.subr.mxu0 %v4445
    %v4447 = vand.u32 %v2683, 4294901760
    %4448 = vmatpush1.msra.mxu0 %v4447
    %v4449 = vand.u32 %v2687, 4294901760
    %4450 = vmatprep.subr.mxu0 %v4449
    %v4451 = vand.u32 %v2686, 4294901760
    %4452 = vmatpush1.msra.mxu0 %v4451
    %v4453 = vand.u32 %v2690, 4294901760
    %4454 = vmatprep.subr.mxu0 %v4453
    %v4455 = vand.u32 %v2689, 4294901760
    %4456 = vmatpush1.msra.mxu0 %v4455
    %v4457 = vand.u32 %v2565, 4294901760
    %4458 = vmatprep.mubr.f32.mxu0 %v4457
    %v4459 = vand.u32 %v2564, 4294901760
    %4460 = vmatmul.mubr.f32.gmra.mrb[0].mxu0 %v4459
    %v4461 = vpop.f32.mrb[0].mxu0
    %v4462 = vadd.f32 %v4269, %v4461
    %v4463 = vpop.f32.mrb[0].mxu0
    %v4464 = vadd.f32 %v4271, %v4463
    %v4465 = vand.u32 %v2569, 4294901760
    %4466 = vmatprep.mubr.f32.mxu0 %v4465
    %v4467 = vand.u32 %v2568, 4294901760
    %4468 = vmatmul.mubr.f32.gmra.mrb[0].mxu0 %v4467
    %v4469 = vpop.f32.mrb[0].mxu0
    %v4470 = vadd.f32 %v4277, %v4469
    %v4471 = vpop.f32.mrb[0].mxu0
    %v4472 = vadd.f32 %v4279, %v4471
    %v4473 = vand.u32 %v2573, 4294901760
    %4474 = vmatprep.mubr.f32.mxu0 %v4473
    %v4475 = vand.u32 %v2572, 4294901760
    %4476 = vmatmul.mubr.f32.gmra.mrb[0].mxu0 %v4475
    %v4477 = vpop.f32.mrb[0].mxu0
    %v4478 = vadd.f32 %v4285, %v4477
    %v4479 = vpop.f32.mrb[0].mxu0
    %v4480 = vadd.f32 %v4287, %v4479
    %v4481 = vand.u32 %v2577, 4294901760
    %4482 = vmatprep.mubr.f32.mxu0 %v4481
    %v4483 = vand.u32 %v2576, 4294901760
    %4484 = vmatmul.mubr.f32.gmra.mrb[0].mxu0 %v4483
    %v4485 = vpop.f32.mrb[0].mxu0
    %v4486 = vadd.f32 %v4293, %v4485
    %v4487 = vpop.f32.mrb[0].mxu0
    %v4488 = vadd.f32 %v4295, %v4487
    %v4489 = vand.u32 %v2581, 4294901760
    %4490 = vmatprep.mubr.f32.mxu0 %v4489
    %v4491 = vand.u32 %v2580, 4294901760
    %4492 = vmatmul.mubr.f32.gmra.mrb[0].mxu0 %v4491
    %v4493 = vpop.f32.mrb[0].mxu0
    %v4494 = vadd.f32 %v4301, %v4493
    %v4495 = vpop.f32.mrb[0].mxu0
    %v4496 = vadd.f32 %v4303, %v4495
    %v4497 = vand.u32 %v2585, 4294901760
    %4498 = vmatprep.mubr.f32.mxu0 %v4497
    %v4499 = vand.u32 %v2584, 4294901760
    %4500 = vmatmul.mubr.f32.gmra.mrb[0].mxu0 %v4499
    %v4501 = vpop.f32.mrb[0].mxu0
    %v4502 = vadd.f32 %v4309, %v4501
    %v4503 = vpop.f32.mrb[0].mxu0
    %v4504 = vadd.f32 %v4311, %v4503
    %v4505 = vand.u32 %v2589, 4294901760
    %4506 = vmatprep.mubr.f32.mxu0 %v4505
    %v4507 = vand.u32 %v2588, 4294901760
    %4508 = vmatmul.mubr.f32.gmra.mrb[0].mxu0 %v4507
    %v4509 = vpop.f32.mrb[0].mxu0
    %v4510 = vadd.f32 %v4317, %v4509
    %v4511 = vpop.f32.mrb[0].mxu0
    %v4512 = vadd.f32 %v4319, %v4511
    %v4513 = vand.u32 %v2593, 4294901760
    %4514 = vmatprep.mubr.f32.mxu0 %v4513
    %v4515 = vand.u32 %v2592, 4294901760
    %4516 = vmatmul.mubr.f32.gmra.mrb[0].mxu0 %v4515
    %v4517 = vpop.f32.mrb[0].mxu0
    %v4518 = vadd.f32 %v4325, %v4517
    %v4519 = vpop.f32.mrb[0].mxu0
    %v4520 = vadd.f32 %v4327, %v4519
    %4521 = vdwg.mxu0
    %v4522 = vand.u32 %v2693, 4294901760
    %4523 = vmatprep.subr.mxu0 %v4522
    %v4524 = vand.u32 %v2692, 4294901760
    %4525 = vmatpush1.msra.mxu0 %v4524
    %v4526 = vand.u32 %v2696, 4294901760
    %4527 = vmatprep.subr.mxu0 %v4526
    %v4528 = vand.u32 %v2695, 4294901760
    %4529 = vmatpush1.msra.mxu0 %v4528
    %v4530 = vand.u32 %v2699, 4294901760
    %4531 = vmatprep.subr.mxu0 %v4530
    %v4532 = vand.u32 %v2698, 4294901760
    %4533 = vmatpush1.msra.mxu0 %v4532
    %v4534 = vand.u32 %v2702, 4294901760
    %4535 = vmatprep.subr.mxu0 %v4534
    %v4536 = vand.u32 %v2701, 4294901760
    %4537 = vmatpush1.msra.mxu0 %v4536
    %v4538 = vand.u32 %v2705, 4294901760
    %4539 = vmatprep.subr.mxu0 %v4538
    %v4540 = vand.u32 %v2704, 4294901760
    %4541 = vmatpush1.msra.mxu0 %v4540
    %v4542 = vand.u32 %v2708, 4294901760
    %4543 = vmatprep.subr.mxu0 %v4542
    %v4544 = vand.u32 %v2707, 4294901760
    %4545 = vmatpush1.msra.mxu0 %v4544
    %v4546 = vand.u32 %v2711, 4294901760
    %4547 = vmatprep.subr.mxu0 %v4546
    %v4548 = vand.u32 %v2710, 4294901760
    %4549 = vmatpush1.msra.mxu0 %v4548
    %v4550 = vand.u32 %v2714, 4294901760
    %4551 = vmatprep.subr.mxu0 %v4550
    %v4552 = vand.u32 %v2713, 4294901760
    %4553 = vmatpush1.msra.mxu0 %v4552
    %v4554 = vand.u32 %v2717, 4294901760
    %4555 = vmatprep.subr.mxu0 %v4554
    %v4556 = vand.u32 %v2716, 4294901760
    %4557 = vmatpush1.msra.mxu0 %v4556
    %v4558 = vand.u32 %v2720, 4294901760
    %4559 = vmatprep.subr.mxu0 %v4558
    %v4560 = vand.u32 %v2719, 4294901760
    %4561 = vmatpush1.msra.mxu0 %v4560
    %v4562 = vand.u32 %v2723, 4294901760
    %4563 = vmatprep.subr.mxu0 %v4562
    %v4564 = vand.u32 %v2722, 4294901760
    %4565 = vmatpush1.msra.mxu0 %v4564
    %v4566 = vand.u32 %v2726, 4294901760
    %4567 = vmatprep.subr.mxu0 %v4566
    %v4568 = vand.u32 %v2725, 4294901760
    %4569 = vmatpush1.msra.mxu0 %v4568
    %v4570 = vand.u32 %v2729, 4294901760
    %4571 = vmatprep.subr.mxu0 %v4570
    %v4572 = vand.u32 %v2728, 4294901760
    %4573 = vmatpush1.msra.mxu0 %v4572
    %v4574 = vand.u32 %v2732, 4294901760
    %4575 = vmatprep.subr.mxu0 %v4574
    %v4576 = vand.u32 %v2731, 4294901760
    %4577 = vmatpush1.msra.mxu0 %v4576
    %v4578 = vand.u32 %v2735, 4294901760
    %4579 = vmatprep.subr.mxu0 %v4578
    %v4580 = vand.u32 %v2734, 4294901760
    %4581 = vmatpush1.msra.mxu0 %v4580
    %v4582 = vand.u32 %v2738, 4294901760
    %4583 = vmatprep.subr.mxu0 %v4582
    %v4584 = vand.u32 %v2737, 4294901760
    %4585 = vmatpush1.msra.mxu0 %v4584
    %v4586 = vand.u32 %v2741, 4294901760
    %4587 = vmatprep.subr.mxu0 %v4586
    %v4588 = vand.u32 %v2740, 4294901760
    %4589 = vmatpush1.msra.mxu0 %v4588
    %v4590 = vand.u32 %v2744, 4294901760
    %4591 = vmatprep.subr.mxu0 %v4590
    %v4592 = vand.u32 %v2743, 4294901760
    %4593 = vmatpush1.msra.mxu0 %v4592
    %v4594 = vand.u32 %v2747, 4294901760
    %4595 = vmatprep.subr.mxu0 %v4594
    %v4596 = vand.u32 %v2746, 4294901760
    %4597 = vmatpush1.msra.mxu0 %v4596
    %v4598 = vand.u32 %v2750, 4294901760
    %4599 = vmatprep.subr.mxu0 %v4598
    %v4600 = vand.u32 %v2749, 4294901760
    %4601 = vmatpush1.msra.mxu0 %v4600
    %v4602 = vand.u32 %v2753, 4294901760
    %4603 = vmatprep.subr.mxu0 %v4602
    %v4604 = vand.u32 %v2752, 4294901760
    %4605 = vmatpush1.msra.mxu0 %v4604
    %v4606 = vand.u32 %v2756, 4294901760
    %4607 = vmatprep.subr.mxu0 %v4606
    %v4608 = vand.u32 %v2755, 4294901760
    %4609 = vmatpush1.msra.mxu0 %v4608
    %v4610 = vand.u32 %v2759, 4294901760
    %4611 = vmatprep.subr.mxu0 %v4610
    %v4612 = vand.u32 %v2758, 4294901760
    %4613 = vmatpush1.msra.mxu0 %v4612
    %v4614 = vand.u32 %v2762, 4294901760
    %4615 = vmatprep.subr.mxu0 %v4614
    %v4616 = vand.u32 %v2761, 4294901760
    %4617 = vmatpush1.msra.mxu0 %v4616
    %v4618 = vand.u32 %v2765, 4294901760
    %4619 = vmatprep.subr.mxu0 %v4618
    %v4620 = vand.u32 %v2764, 4294901760
    %4621 = vmatpush1.msra.mxu0 %v4620
    %v4622 = vand.u32 %v2768, 4294901760
    %4623 = vmatprep.subr.mxu0 %v4622
    %v4624 = vand.u32 %v2767, 4294901760
    %4625 = vmatpush1.msra.mxu0 %v4624
    %v4626 = vand.u32 %v2771, 4294901760
    %4627 = vmatprep.subr.mxu0 %v4626
    %v4628 = vand.u32 %v2770, 4294901760
    %4629 = vmatpush1.msra.mxu0 %v4628
    %v4630 = vand.u32 %v2774, 4294901760
    %4631 = vmatprep.subr.mxu0 %v4630
    %v4632 = vand.u32 %v2773, 4294901760
    %4633 = vmatpush1.msra.mxu0 %v4632
    %v4634 = vand.u32 %v2777, 4294901760
    %4635 = vmatprep.subr.mxu0 %v4634
    %v4636 = vand.u32 %v2776, 4294901760
    %4637 = vmatpush1.msra.mxu0 %v4636
    %v4638 = vand.u32 %v2780, 4294901760
    %4639 = vmatprep.subr.mxu0 %v4638
    %v4640 = vand.u32 %v2779, 4294901760
    %4641 = vmatpush1.msra.mxu0 %v4640
    %v4642 = vand.u32 %v2783, 4294901760
    %4643 = vmatprep.subr.mxu0 %v4642
    %v4644 = vand.u32 %v2782, 4294901760
    %4645 = vmatpush1.msra.mxu0 %v4644
    %v4646 = vand.u32 %v2786, 4294901760
    %4647 = vmatprep.subr.mxu0 %v4646
    %v4648 = vand.u32 %v2785, 4294901760
    %4649 = vmatpush1.msra.mxu0 %v4648
    %v4650 = vand.u32 %v2567, 4294901760
    %v4651 = vsub.f32 %v2567, %v4650
    %v4652 = vand.u32 %v4651, 4294901760
    %v4653 = vsub.f32 %v4651, %v4652
    %v4654 = vand.u32 %v4653, 4294901760
    %4655 = vmatprep.mubr.f32.mxu0 %v4654
    %v4656 = vand.u32 %v2566, 4294901760
    %v4657 = vsub.f32 %v2566, %v4656
    %v4658 = vand.u32 %v4657, 4294901760
    %v4659 = vsub.f32 %v4657, %v4658
    %v4660 = vand.u32 %v4659, 4294901760
    %4661 = vmatmul.mubr.f32.gmra.mrb[0].mxu0 %v4660
    %v4662 = vpop.f32.mrb[0].mxu0
    %v4663 = vadd.f32 %v4462, %v4662
    %v4664 = vpop.f32.mrb[0].mxu0
    %v4665 = vadd.f32 %v4464, %v4664
    %v4666 = vand.u32 %v2571, 4294901760
    %v4667 = vsub.f32 %v2571, %v4666
    %v4668 = vand.u32 %v4667, 4294901760
    %v4669 = vsub.f32 %v4667, %v4668
    %v4670 = vand.u32 %v4669, 4294901760
    %4671 = vmatprep.mubr.f32.mxu0 %v4670
    %v4672 = vand.u32 %v2570, 4294901760
    %v4673 = vsub.f32 %v2570, %v4672
    %v4674 = vand.u32 %v4673, 4294901760
    %v4675 = vsub.f32 %v4673, %v4674
    %v4676 = vand.u32 %v4675, 4294901760
    %4677 = vmatmul.mubr.f32.gmra.mrb[0].mxu0 %v4676
    %v4678 = vpop.f32.mrb[0].mxu0
    %v4679 = vadd.f32 %v4470, %v4678
    %v4680 = vpop.f32.mrb[0].mxu0
    %v4681 = vadd.f32 %v4472, %v4680
    %v4682 = vand.u32 %v2575, 4294901760
    %v4683 = vsub.f32 %v2575, %v4682
    %v4684 = vand.u32 %v4683, 4294901760
    %v4685 = vsub.f32 %v4683, %v4684
    %v4686 = vand.u32 %v4685, 4294901760
    %4687 = vmatprep.mubr.f32.mxu0 %v4686
    %v4688 = vand.u32 %v2574, 4294901760
    %v4689 = vsub.f32 %v2574, %v4688
    %v4690 = vand.u32 %v4689, 4294901760
    %v4691 = vsub.f32 %v4689, %v4690
    %v4692 = vand.u32 %v4691, 4294901760
    %4693 = vmatmul.mubr.f32.gmra.mrb[0].mxu0 %v4692
    %v4694 = vpop.f32.mrb[0].mxu0
    %v4695 = vadd.f32 %v4478, %v4694
    %v4696 = vpop.f32.mrb[0].mxu0
    %v4697 = vadd.f32 %v4480, %v4696
    %v4698 = vand.u32 %v2579, 4294901760
    %v4699 = vsub.f32 %v2579, %v4698
    %v4700 = vand.u32 %v4699, 4294901760
    %v4701 = vsub.f32 %v4699, %v4700
    %v4702 = vand.u32 %v4701, 4294901760
    %4703 = vmatprep.mubr.f32.mxu0 %v4702
    %v4704 = vand.u32 %v2578, 4294901760
    %v4705 = vsub.f32 %v2578, %v4704
    %v4706 = vand.u32 %v4705, 4294901760
    %v4707 = vsub.f32 %v4705, %v4706
    %v4708 = vand.u32 %v4707, 4294901760
    %4709 = vmatmul.mubr.f32.gmra.mrb[0].mxu0 %v4708
    %v4710 = vpop.f32.mrb[0].mxu0
    %v4711 = vadd.f32 %v4486, %v4710
    %v4712 = vpop.f32.mrb[0].mxu0
    %v4713 = vadd.f32 %v4488, %v4712
    %v4714 = vand.u32 %v2583, 4294901760
    %v4715 = vsub.f32 %v2583, %v4714
    %v4716 = vand.u32 %v4715, 4294901760
    %v4717 = vsub.f32 %v4715, %v4716
    %v4718 = vand.u32 %v4717, 4294901760
    %4719 = vmatprep.mubr.f32.mxu0 %v4718
    %v4720 = vand.u32 %v2582, 4294901760
    %v4721 = vsub.f32 %v2582, %v4720
    %v4722 = vand.u32 %v4721, 4294901760
    %v4723 = vsub.f32 %v4721, %v4722
    %v4724 = vand.u32 %v4723, 4294901760
    %4725 = vmatmul.mubr.f32.gmra.mrb[0].mxu0 %v4724
    %v4726 = vpop.f32.mrb[0].mxu0
    %v4727 = vadd.f32 %v4494, %v4726
    %v4728 = vpop.f32.mrb[0].mxu0
    %v4729 = vadd.f32 %v4496, %v4728
    %v4730 = vand.u32 %v2587, 4294901760
    %v4731 = vsub.f32 %v2587, %v4730
    %v4732 = vand.u32 %v4731, 4294901760
    %v4733 = vsub.f32 %v4731, %v4732
    %v4734 = vand.u32 %v4733, 4294901760
    %4735 = vmatprep.mubr.f32.mxu0 %v4734
    %v4736 = vand.u32 %v2586, 4294901760
    %v4737 = vsub.f32 %v2586, %v4736
    %v4738 = vand.u32 %v4737, 4294901760
    %v4739 = vsub.f32 %v4737, %v4738
    %v4740 = vand.u32 %v4739, 4294901760
    %4741 = vmatmul.mubr.f32.gmra.mrb[0].mxu0 %v4740
    %v4742 = vpop.f32.mrb[0].mxu0
    %v4743 = vadd.f32 %v4502, %v4742
    %v4744 = vpop.f32.mrb[0].mxu0
    %v4745 = vadd.f32 %v4504, %v4744
    %v4746 = vand.u32 %v2591, 4294901760
    %v4747 = vsub.f32 %v2591, %v4746
    %v4748 = vand.u32 %v4747, 4294901760
    %v4749 = vsub.f32 %v4747, %v4748
    %v4750 = vand.u32 %v4749, 4294901760
    %4751 = vmatprep.mubr.f32.mxu0 %v4750
    %v4752 = vand.u32 %v2590, 4294901760
    %v4753 = vsub.f32 %v2590, %v4752
    %v4754 = vand.u32 %v4753, 4294901760
    %v4755 = vsub.f32 %v4753, %v4754
    %v4756 = vand.u32 %v4755, 4294901760
    %4757 = vmatmul.mubr.f32.gmra.mrb[0].mxu0 %v4756
    %v4758 = vpop.f32.mrb[0].mxu0
    %v4759 = vadd.f32 %v4510, %v4758
    %v4760 = vpop.f32.mrb[0].mxu0
    %v4761 = vadd.f32 %v4512, %v4760
    %v4762 = vand.u32 %v2595, 4294901760
    %v4763 = vsub.f32 %v2595, %v4762
    %v4764 = vand.u32 %v4763, 4294901760
    %v4765 = vsub.f32 %v4763, %v4764
    %v4766 = vand.u32 %v4765, 4294901760
    %4767 = vmatprep.mubr.f32.mxu0 %v4766
    %v4768 = vand.u32 %v2594, 4294901760
    %v4769 = vsub.f32 %v2594, %v4768
    %v4770 = vand.u32 %v4769, 4294901760
    %v4771 = vsub.f32 %v4769, %v4770
    %v4772 = vand.u32 %v4771, 4294901760
    %4773 = vmatmul.mubr.f32.gmra.mrb[0].mxu0 %v4772
    %v4774 = vpop.f32.mrb[0].mxu0
    %v4775 = vadd.f32 %v4518, %v4774
    %v4776 = vpop.f32.mrb[0].mxu0
    %v4777 = vadd.f32 %v4520, %v4776
    %4778 = vdwg.mxu0
    %v4779 = vand.u32 %v2693, 4294901760
    %v4780 = vsub.f32 %v2693, %v4779
    %v4781 = vand.u32 %v4780, 4294901760
    %v4782 = vsub.f32 %v4780, %v4781
    %v4783 = vand.u32 %v4782, 4294901760
    %4784 = vmatprep.subr.mxu0 %v4783
    %v4785 = vand.u32 %v2692, 4294901760
    %v4786 = vsub.f32 %v2692, %v4785
    %v4787 = vand.u32 %v4786, 4294901760
    %v4788 = vsub.f32 %v4786, %v4787
    %v4789 = vand.u32 %v4788, 4294901760
    %4790 = vmatpush1.msra.mxu0 %v4789
    %v4791 = vand.u32 %v2696, 4294901760
    %v4792 = vsub.f32 %v2696, %v4791
    %v4793 = vand.u32 %v4792, 4294901760
    %v4794 = vsub.f32 %v4792, %v4793
    %v4795 = vand.u32 %v4794, 4294901760
    %4796 = vmatprep.subr.mxu0 %v4795
    %v4797 = vand.u32 %v2695, 4294901760
    %v4798 = vsub.f32 %v2695, %v4797
    %v4799 = vand.u32 %v4798, 4294901760
    %v4800 = vsub.f32 %v4798, %v4799
    %v4801 = vand.u32 %v4800, 4294901760
    %4802 = vmatpush1.msra.mxu0 %v4801
    %v4803 = vand.u32 %v2699, 4294901760
    %v4804 = vsub.f32 %v2699, %v4803
    %v4805 = vand.u32 %v4804, 4294901760
    %v4806 = vsub.f32 %v4804, %v4805
    %v4807 = vand.u32 %v4806, 4294901760
    %4808 = vmatprep.subr.mxu0 %v4807
    %v4809 = vand.u32 %v2698, 4294901760
    %v4810 = vsub.f32 %v2698, %v4809
    %v4811 = vand.u32 %v4810, 4294901760
    %v4812 = vsub.f32 %v4810, %v4811
    %v4813 = vand.u32 %v4812, 4294901760
    %4814 = vmatpush1.msra.mxu0 %v4813
    %v4815 = vand.u32 %v2702, 4294901760
    %v4816 = vsub.f32 %v2702, %v4815
    %v4817 = vand.u32 %v4816, 4294901760
    %v4818 = vsub.f32 %v4816, %v4817
    %v4819 = vand.u32 %v4818, 4294901760
    %4820 = vmatprep.subr.mxu0 %v4819
    %v4821 = vand.u32 %v2701, 4294901760
    %v4822 = vsub.f32 %v2701, %v4821
    %v4823 = vand.u32 %v4822, 4294901760
    %v4824 = vsub.f32 %v4822, %v4823
    %v4825 = vand.u32 %v4824, 4294901760
    %4826 = vmatpush1.msra.mxu0 %v4825
    %v4827 = vand.u32 %v2705, 4294901760
    %v4828 = vsub.f32 %v2705, %v4827
    %v4829 = vand.u32 %v4828, 4294901760
    %v4830 = vsub.f32 %v4828, %v4829
    %v4831 = vand.u32 %v4830, 4294901760
    %4832 = vmatprep.subr.mxu0 %v4831
    %v4833 = vand.u32 %v2704, 4294901760
    %v4834 = vsub.f32 %v2704, %v4833
    %v4835 = vand.u32 %v4834, 4294901760
    %v4836 = vsub.f32 %v4834, %v4835
    %v4837 = vand.u32 %v4836, 4294901760
    %4838 = vmatpush1.msra.mxu0 %v4837
    %v4839 = vand.u32 %v2708, 4294901760
    %v4840 = vsub.f32 %v2708, %v4839
    %v4841 = vand.u32 %v4840, 4294901760
    %v4842 = vsub.f32 %v4840, %v4841
    %v4843 = vand.u32 %v4842, 4294901760
    %4844 = vmatprep.subr.mxu0 %v4843
    %v4845 = vand.u32 %v2707, 4294901760
    %v4846 = vsub.f32 %v2707, %v4845
    %v4847 = vand.u32 %v4846, 4294901760
    %v4848 = vsub.f32 %v4846, %v4847
    %v4849 = vand.u32 %v4848, 4294901760
    %4850 = vmatpush1.msra.mxu0 %v4849
    %v4851 = vand.u32 %v2711, 4294901760
    %v4852 = vsub.f32 %v2711, %v4851
    %v4853 = vand.u32 %v4852, 4294901760
    %v4854 = vsub.f32 %v4852, %v4853
    %v4855 = vand.u32 %v4854, 4294901760
    %4856 = vmatprep.subr.mxu0 %v4855
    %v4857 = vand.u32 %v2710, 4294901760
    %v4858 = vsub.f32 %v2710, %v4857
    %v4859 = vand.u32 %v4858, 4294901760
    %v4860 = vsub.f32 %v4858, %v4859
    %v4861 = vand.u32 %v4860, 4294901760
    %4862 = vmatpush1.msra.mxu0 %v4861
    %v4863 = vand.u32 %v2714, 4294901760
    %v4864 = vsub.f32 %v2714, %v4863
    %v4865 = vand.u32 %v4864, 4294901760
    %v4866 = vsub.f32 %v4864, %v4865
    %v4867 = vand.u32 %v4866, 4294901760
    %4868 = vmatprep.subr.mxu0 %v4867
    %v4869 = vand.u32 %v2713, 4294901760
    %v4870 = vsub.f32 %v2713, %v4869
    %v4871 = vand.u32 %v4870, 4294901760
    %v4872 = vsub.f32 %v4870, %v4871
    %v4873 = vand.u32 %v4872, 4294901760
    %4874 = vmatpush1.msra.mxu0 %v4873
    %v4875 = vand.u32 %v2717, 4294901760
    %v4876 = vsub.f32 %v2717, %v4875
    %v4877 = vand.u32 %v4876, 4294901760
    %v4878 = vsub.f32 %v4876, %v4877
    %v4879 = vand.u32 %v4878, 4294901760
    %4880 = vmatprep.subr.mxu0 %v4879
    %v4881 = vand.u32 %v2716, 4294901760
    %v4882 = vsub.f32 %v2716, %v4881
    %v4883 = vand.u32 %v4882, 4294901760
    %v4884 = vsub.f32 %v4882, %v4883
    %v4885 = vand.u32 %v4884, 4294901760
    %4886 = vmatpush1.msra.mxu0 %v4885
    %v4887 = vand.u32 %v2720, 4294901760
    %v4888 = vsub.f32 %v2720, %v4887
    %v4889 = vand.u32 %v4888, 4294901760
    %v4890 = vsub.f32 %v4888, %v4889
    %v4891 = vand.u32 %v4890, 4294901760
    %4892 = vmatprep.subr.mxu0 %v4891
    %v4893 = vand.u32 %v2719, 4294901760
    %v4894 = vsub.f32 %v2719, %v4893
    %v4895 = vand.u32 %v4894, 4294901760
    %v4896 = vsub.f32 %v4894, %v4895
    %v4897 = vand.u32 %v4896, 4294901760
    %4898 = vmatpush1.msra.mxu0 %v4897
    %v4899 = vand.u32 %v2723, 4294901760
    %v4900 = vsub.f32 %v2723, %v4899
    %v4901 = vand.u32 %v4900, 4294901760
    %v4902 = vsub.f32 %v4900, %v4901
    %v4903 = vand.u32 %v4902, 4294901760
    %4904 = vmatprep.subr.mxu0 %v4903
    %v4905 = vand.u32 %v2722, 4294901760
    %v4906 = vsub.f32 %v2722, %v4905
    %v4907 = vand.u32 %v4906, 4294901760
    %v4908 = vsub.f32 %v4906, %v4907
    %v4909 = vand.u32 %v4908, 4294901760
    %4910 = vmatpush1.msra.mxu0 %v4909
    %v4911 = vand.u32 %v2726, 4294901760
    %v4912 = vsub.f32 %v2726, %v4911
    %v4913 = vand.u32 %v4912, 4294901760
    %v4914 = vsub.f32 %v4912, %v4913
    %v4915 = vand.u32 %v4914, 4294901760
    %4916 = vmatprep.subr.mxu0 %v4915
    %v4917 = vand.u32 %v2725, 4294901760
    %v4918 = vsub.f32 %v2725, %v4917
    %v4919 = vand.u32 %v4918, 4294901760
    %v4920 = vsub.f32 %v4918, %v4919
    %v4921 = vand.u32 %v4920, 4294901760
    %4922 = vmatpush1.msra.mxu0 %v4921
    %v4923 = vand.u32 %v2729, 4294901760
    %v4924 = vsub.f32 %v2729, %v4923
    %v4925 = vand.u32 %v4924, 4294901760
    %v4926 = vsub.f32 %v4924, %v4925
    %v4927 = vand.u32 %v4926, 4294901760
    %4928 = vmatprep.subr.mxu0 %v4927
    %v4929 = vand.u32 %v2728, 4294901760
    %v4930 = vsub.f32 %v2728, %v4929
    %v4931 = vand.u32 %v4930, 4294901760
    %v4932 = vsub.f32 %v4930, %v4931
    %v4933 = vand.u32 %v4932, 4294901760
    %4934 = vmatpush1.msra.mxu0 %v4933
    %v4935 = vand.u32 %v2732, 4294901760
    %v4936 = vsub.f32 %v2732, %v4935
    %v4937 = vand.u32 %v4936, 4294901760
    %v4938 = vsub.f32 %v4936, %v4937
    %v4939 = vand.u32 %v4938, 4294901760
    %4940 = vmatprep.subr.mxu0 %v4939
    %v4941 = vand.u32 %v2731, 4294901760
    %v4942 = vsub.f32 %v2731, %v4941
    %v4943 = vand.u32 %v4942, 4294901760
    %v4944 = vsub.f32 %v4942, %v4943
    %v4945 = vand.u32 %v4944, 4294901760
    %4946 = vmatpush1.msra.mxu0 %v4945
    %v4947 = vand.u32 %v2735, 4294901760
    %v4948 = vsub.f32 %v2735, %v4947
    %v4949 = vand.u32 %v4948, 4294901760
    %v4950 = vsub.f32 %v4948, %v4949
    %v4951 = vand.u32 %v4950, 4294901760
    %4952 = vmatprep.subr.mxu0 %v4951
    %v4953 = vand.u32 %v2734, 4294901760
    %v4954 = vsub.f32 %v2734, %v4953
    %v4955 = vand.u32 %v4954, 4294901760
    %v4956 = vsub.f32 %v4954, %v4955
    %v4957 = vand.u32 %v4956, 4294901760
    %4958 = vmatpush1.msra.mxu0 %v4957
    %v4959 = vand.u32 %v2738, 4294901760
    %v4960 = vsub.f32 %v2738, %v4959
    %v4961 = vand.u32 %v4960, 4294901760
    %v4962 = vsub.f32 %v4960, %v4961
    %v4963 = vand.u32 %v4962, 4294901760
    %4964 = vmatprep.subr.mxu0 %v4963
    %v4965 = vand.u32 %v2737, 4294901760
    %v4966 = vsub.f32 %v2737, %v4965
    %v4967 = vand.u32 %v4966, 4294901760
    %v4968 = vsub.f32 %v4966, %v4967
    %v4969 = vand.u32 %v4968, 4294901760
    %4970 = vmatpush1.msra.mxu0 %v4969
    %v4971 = vand.u32 %v2741, 4294901760
    %v4972 = vsub.f32 %v2741, %v4971
    %v4973 = vand.u32 %v4972, 4294901760
    %v4974 = vsub.f32 %v4972, %v4973
    %v4975 = vand.u32 %v4974, 4294901760
    %4976 = vmatprep.subr.mxu0 %v4975
    %v4977 = vand.u32 %v2740, 4294901760
    %v4978 = vsub.f32 %v2740, %v4977
    %v4979 = vand.u32 %v4978, 4294901760
    %v4980 = vsub.f32 %v4978, %v4979
    %v4981 = vand.u32 %v4980, 4294901760
    %4982 = vmatpush1.msra.mxu0 %v4981
    %v4983 = vand.u32 %v2744, 4294901760
    %v4984 = vsub.f32 %v2744, %v4983
    %v4985 = vand.u32 %v4984, 4294901760
    %v4986 = vsub.f32 %v4984, %v4985
    %v4987 = vand.u32 %v4986, 4294901760
    %4988 = vmatprep.subr.mxu0 %v4987
    %v4989 = vand.u32 %v2743, 4294901760
    %v4990 = vsub.f32 %v2743, %v4989
    %v4991 = vand.u32 %v4990, 4294901760
    %v4992 = vsub.f32 %v4990, %v4991
    %v4993 = vand.u32 %v4992, 4294901760
    %4994 = vmatpush1.msra.mxu0 %v4993
    %v4995 = vand.u32 %v2747, 4294901760
    %v4996 = vsub.f32 %v2747, %v4995
    %v4997 = vand.u32 %v4996, 4294901760
    %v4998 = vsub.f32 %v4996, %v4997
    %v4999 = vand.u32 %v4998, 4294901760
    %5000 = vmatprep.subr.mxu0 %v4999
    %v5001 = vand.u32 %v2746, 4294901760
    %v5002 = vsub.f32 %v2746, %v5001
    %v5003 = vand.u32 %v5002, 4294901760
    %v5004 = vsub.f32 %v5002, %v5003
    %v5005 = vand.u32 %v5004, 4294901760
    %5006 = vmatpush1.msra.mxu0 %v5005
    %v5007 = vand.u32 %v2750, 4294901760
    %v5008 = vsub.f32 %v2750, %v5007
    %v5009 = vand.u32 %v5008, 4294901760
    %v5010 = vsub.f32 %v5008, %v5009
    %v5011 = vand.u32 %v5010, 4294901760
    %5012 = vmatprep.subr.mxu0 %v5011
    %v5013 = vand.u32 %v2749, 4294901760
    %v5014 = vsub.f32 %v2749, %v5013
    %v5015 = vand.u32 %v5014, 4294901760
    %v5016 = vsub.f32 %v5014, %v5015
    %v5017 = vand.u32 %v5016, 4294901760
    %5018 = vmatpush1.msra.mxu0 %v5017
    %v5019 = vand.u32 %v2753, 4294901760
    %v5020 = vsub.f32 %v2753, %v5019
    %v5021 = vand.u32 %v5020, 4294901760
    %v5022 = vsub.f32 %v5020, %v5021
    %v5023 = vand.u32 %v5022, 4294901760
    %5024 = vmatprep.subr.mxu0 %v5023
    %v5025 = vand.u32 %v2752, 4294901760
    %v5026 = vsub.f32 %v2752, %v5025
    %v5027 = vand.u32 %v5026, 4294901760
    %v5028 = vsub.f32 %v5026, %v5027
    %v5029 = vand.u32 %v5028, 4294901760
    %5030 = vmatpush1.msra.mxu0 %v5029
    %v5031 = vand.u32 %v2756, 4294901760
    %v5032 = vsub.f32 %v2756, %v5031
    %v5033 = vand.u32 %v5032, 4294901760
    %v5034 = vsub.f32 %v5032, %v5033
    %v5035 = vand.u32 %v5034, 4294901760
    %5036 = vmatprep.subr.mxu0 %v5035
    %v5037 = vand.u32 %v2755, 4294901760
    %v5038 = vsub.f32 %v2755, %v5037
    %v5039 = vand.u32 %v5038, 4294901760
    %v5040 = vsub.f32 %v5038, %v5039
    %v5041 = vand.u32 %v5040, 4294901760
    %5042 = vmatpush1.msra.mxu0 %v5041
    %v5043 = vand.u32 %v2759, 4294901760
    %v5044 = vsub.f32 %v2759, %v5043
    %v5045 = vand.u32 %v5044, 4294901760
    %v5046 = vsub.f32 %v5044, %v5045
    %v5047 = vand.u32 %v5046, 4294901760
    %5048 = vmatprep.subr.mxu0 %v5047
    %v5049 = vand.u32 %v2758, 4294901760
    %v5050 = vsub.f32 %v2758, %v5049
    %v5051 = vand.u32 %v5050, 4294901760
    %v5052 = vsub.f32 %v5050, %v5051
    %v5053 = vand.u32 %v5052, 4294901760
    %5054 = vmatpush1.msra.mxu0 %v5053
    %v5055 = vand.u32 %v2762, 4294901760
    %v5056 = vsub.f32 %v2762, %v5055
    %v5057 = vand.u32 %v5056, 4294901760
    %v5058 = vsub.f32 %v5056, %v5057
    %v5059 = vand.u32 %v5058, 4294901760
    %5060 = vmatprep.subr.mxu0 %v5059
    %v5061 = vand.u32 %v2761, 4294901760
    %v5062 = vsub.f32 %v2761, %v5061
    %v5063 = vand.u32 %v5062, 4294901760
    %v5064 = vsub.f32 %v5062, %v5063
    %v5065 = vand.u32 %v5064, 4294901760
    %5066 = vmatpush1.msra.mxu0 %v5065
    %v5067 = vand.u32 %v2765, 4294901760
    %v5068 = vsub.f32 %v2765, %v5067
    %v5069 = vand.u32 %v5068, 4294901760
    %v5070 = vsub.f32 %v5068, %v5069
    %v5071 = vand.u32 %v5070, 4294901760
    %5072 = vmatprep.subr.mxu0 %v5071
    %v5073 = vand.u32 %v2764, 4294901760
    %v5074 = vsub.f32 %v2764, %v5073
    %v5075 = vand.u32 %v5074, 4294901760
    %v5076 = vsub.f32 %v5074, %v5075
    %v5077 = vand.u32 %v5076, 4294901760
    %5078 = vmatpush1.msra.mxu0 %v5077
    %v5079 = vand.u32 %v2768, 4294901760
    %v5080 = vsub.f32 %v2768, %v5079
    %v5081 = vand.u32 %v5080, 4294901760
    %v5082 = vsub.f32 %v5080, %v5081
    %v5083 = vand.u32 %v5082, 4294901760
    %5084 = vmatprep.subr.mxu0 %v5083
    %v5085 = vand.u32 %v2767, 4294901760
    %v5086 = vsub.f32 %v2767, %v5085
    %v5087 = vand.u32 %v5086, 4294901760
    %v5088 = vsub.f32 %v5086, %v5087
    %v5089 = vand.u32 %v5088, 4294901760
    %5090 = vmatpush1.msra.mxu0 %v5089
    %v5091 = vand.u32 %v2771, 4294901760
    %v5092 = vsub.f32 %v2771, %v5091
    %v5093 = vand.u32 %v5092, 4294901760
    %v5094 = vsub.f32 %v5092, %v5093
    %v5095 = vand.u32 %v5094, 4294901760
    %5096 = vmatprep.subr.mxu0 %v5095
    %v5097 = vand.u32 %v2770, 4294901760
    %v5098 = vsub.f32 %v2770, %v5097
    %v5099 = vand.u32 %v5098, 4294901760
    %v5100 = vsub.f32 %v5098, %v5099
    %v5101 = vand.u32 %v5100, 4294901760
    %5102 = vmatpush1.msra.mxu0 %v5101
    %v5103 = vand.u32 %v2774, 4294901760
    %v5104 = vsub.f32 %v2774, %v5103
    %v5105 = vand.u32 %v5104, 4294901760
    %v5106 = vsub.f32 %v5104, %v5105
    %v5107 = vand.u32 %v5106, 4294901760
    %5108 = vmatprep.subr.mxu0 %v5107
    %v5109 = vand.u32 %v2773, 4294901760
    %v5110 = vsub.f32 %v2773, %v5109
    %v5111 = vand.u32 %v5110, 4294901760
    %v5112 = vsub.f32 %v5110, %v5111
    %v5113 = vand.u32 %v5112, 4294901760
    %5114 = vmatpush1.msra.mxu0 %v5113
    %v5115 = vand.u32 %v2777, 4294901760
    %v5116 = vsub.f32 %v2777, %v5115
    %v5117 = vand.u32 %v5116, 4294901760
    %v5118 = vsub.f32 %v5116, %v5117
    %v5119 = vand.u32 %v5118, 4294901760
    %5120 = vmatprep.subr.mxu0 %v5119
    %v5121 = vand.u32 %v2776, 4294901760
    %v5122 = vsub.f32 %v2776, %v5121
    %v5123 = vand.u32 %v5122, 4294901760
    %v5124 = vsub.f32 %v5122, %v5123
    %v5125 = vand.u32 %v5124, 4294901760
    %5126 = vmatpush1.msra.mxu0 %v5125
    %v5127 = vand.u32 %v2780, 4294901760
    %v5128 = vsub.f32 %v2780, %v5127
    %v5129 = vand.u32 %v5128, 4294901760
    %v5130 = vsub.f32 %v5128, %v5129
    %v5131 = vand.u32 %v5130, 4294901760
    %5132 = vmatprep.subr.mxu0 %v5131
    %v5133 = vand.u32 %v2779, 4294901760
    %v5134 = vsub.f32 %v2779, %v5133
    %v5135 = vand.u32 %v5134, 4294901760
    %v5136 = vsub.f32 %v5134, %v5135
    %v5137 = vand.u32 %v5136, 4294901760
    %5138 = vmatpush1.msra.mxu0 %v5137
    %v5139 = vand.u32 %v2783, 4294901760
    %v5140 = vsub.f32 %v2783, %v5139
    %v5141 = vand.u32 %v5140, 4294901760
    %v5142 = vsub.f32 %v5140, %v5141
    %v5143 = vand.u32 %v5142, 4294901760
    %5144 = vmatprep.subr.mxu0 %v5143
    %v5145 = vand.u32 %v2782, 4294901760
    %v5146 = vsub.f32 %v2782, %v5145
    %v5147 = vand.u32 %v5146, 4294901760
    %v5148 = vsub.f32 %v5146, %v5147
    %v5149 = vand.u32 %v5148, 4294901760
    %5150 = vmatpush1.msra.mxu0 %v5149
    %v5151 = vand.u32 %v2786, 4294901760
    %v5152 = vsub.f32 %v2786, %v5151
    %v5153 = vand.u32 %v5152, 4294901760
    %v5154 = vsub.f32 %v5152, %v5153
    %v5155 = vand.u32 %v5154, 4294901760
    %5156 = vmatprep.subr.mxu0 %v5155
    %v5157 = vand.u32 %v2785, 4294901760
    %v5158 = vsub.f32 %v2785, %v5157
    %v5159 = vand.u32 %v5158, 4294901760
    %v5160 = vsub.f32 %v5158, %v5159
    %v5161 = vand.u32 %v5160, 4294901760
    %5162 = vmatpush1.msra.mxu0 %v5161
    %v5163 = vand.u32 %v2567, 4294901760
    %5164 = vmatprep.mubr.f32.mxu0 %v5163
    %v5165 = vand.u32 %v2566, 4294901760
    %5166 = vmatmul.mubr.f32.gmra.mrb[0].mxu0 %v5165
    %v5167 = vpop.f32.mrb[0].mxu0
    %v5168 = vadd.f32 %v4663, %v5167
    %v5169 = vpop.f32.mrb[0].mxu0
    %v5170 = vadd.f32 %v4665, %v5169
    %v5171 = vand.u32 %v2571, 4294901760
    %5172 = vmatprep.mubr.f32.mxu0 %v5171
    %v5173 = vand.u32 %v2570, 4294901760
    %5174 = vmatmul.mubr.f32.gmra.mrb[0].mxu0 %v5173
    %v5175 = vpop.f32.mrb[0].mxu0
    %v5176 = vadd.f32 %v4679, %v5175
    %v5177 = vpop.f32.mrb[0].mxu0
    %v5178 = vadd.f32 %v4681, %v5177
    %v5179 = vand.u32 %v2575, 4294901760
    %5180 = vmatprep.mubr.f32.mxu0 %v5179
    %v5181 = vand.u32 %v2574, 4294901760
    %5182 = vmatmul.mubr.f32.gmra.mrb[0].mxu0 %v5181
    %v5183 = vpop.f32.mrb[0].mxu0
    %v5184 = vadd.f32 %v4695, %v5183
    %v5185 = vpop.f32.mrb[0].mxu0
    %v5186 = vadd.f32 %v4697, %v5185
    %v5187 = vand.u32 %v2579, 4294901760
    %5188 = vmatprep.mubr.f32.mxu0 %v5187
    %v5189 = vand.u32 %v2578, 4294901760
    %5190 = vmatmul.mubr.f32.gmra.mrb[0].mxu0 %v5189
    %v5191 = vpop.f32.mrb[0].mxu0
    %v5192 = vadd.f32 %v4711, %v5191
    %v5193 = vpop.f32.mrb[0].mxu0
    %v5194 = vadd.f32 %v4713, %v5193
    %v5195 = vand.u32 %v2583, 4294901760
    %5196 = vmatprep.mubr.f32.mxu0 %v5195
    %v5197 = vand.u32 %v2582, 4294901760
    %5198 = vmatmul.mubr.f32.gmra.mrb[0].mxu0 %v5197
    %v5199 = vpop.f32.mrb[0].mxu0
    %v5200 = vadd.f32 %v4727, %v5199
    %v5201 = vpop.f32.mrb[0].mxu0
    %v5202 = vadd.f32 %v4729, %v5201
    %v5203 = vand.u32 %v2587, 4294901760
    %5204 = vmatprep.mubr.f32.mxu0 %v5203
    %v5205 = vand.u32 %v2586, 4294901760
    %5206 = vmatmul.mubr.f32.gmra.mrb[0].mxu0 %v5205
    %v5207 = vpop.f32.mrb[0].mxu0
    %v5208 = vadd.f32 %v4743, %v5207
    %v5209 = vpop.f32.mrb[0].mxu0
    %v5210 = vadd.f32 %v4745, %v5209
    %v5211 = vand.u32 %v2591, 4294901760
    %5212 = vmatprep.mubr.f32.mxu0 %v5211
    %v5213 = vand.u32 %v2590, 4294901760
    %5214 = vmatmul.mubr.f32.gmra.mrb[0].mxu0 %v5213
    %v5215 = vpop.f32.mrb[0].mxu0
    %v5216 = vadd.f32 %v4759, %v5215
    %v5217 = vpop.f32.mrb[0].mxu0
    %v5218 = vadd.f32 %v4761, %v5217
    %v5219 = vand.u32 %v2595, 4294901760
    %5220 = vmatprep.mubr.f32.mxu0 %v5219
    %v5221 = vand.u32 %v2594, 4294901760
    %5222 = vmatmul.mubr.f32.gmra.mrb[0].mxu0 %v5221
    %v5223 = vpop.f32.mrb[0].mxu0
    %v5224 = vadd.f32 %v4775, %v5223
    %v5225 = vpop.f32.mrb[0].mxu0
    %v5226 = vadd.f32 %v4777, %v5225
    %5227 = vdwg.mxu0
    %v5228 = vand.u32 %v2693, 4294901760
    %v5229 = vsub.f32 %v2693, %v5228
    %5230 = vmatprep.subr.mxu0 %v5229
    %v5231 = vand.u32 %v2692, 4294901760
    %v5232 = vsub.f32 %v2692, %v5231
    %5233 = vmatpush1.msra.mxu0 %v5232
    %v5234 = vand.u32 %v2696, 4294901760
    %v5235 = vsub.f32 %v2696, %v5234
    %5236 = vmatprep.subr.mxu0 %v5235
    %v5237 = vand.u32 %v2695, 4294901760
    %v5238 = vsub.f32 %v2695, %v5237
    %5239 = vmatpush1.msra.mxu0 %v5238
    %v5240 = vand.u32 %v2699, 4294901760
    %v5241 = vsub.f32 %v2699, %v5240
    %5242 = vmatprep.subr.mxu0 %v5241
    %v5243 = vand.u32 %v2698, 4294901760
    %v5244 = vsub.f32 %v2698, %v5243
    %5245 = vmatpush1.msra.mxu0 %v5244
    %v5246 = vand.u32 %v2702, 4294901760
    %v5247 = vsub.f32 %v2702, %v5246
    %5248 = vmatprep.subr.mxu0 %v5247
    %v5249 = vand.u32 %v2701, 4294901760
    %v5250 = vsub.f32 %v2701, %v5249
    %5251 = vmatpush1.msra.mxu0 %v5250
    %v5252 = vand.u32 %v2705, 4294901760
    %v5253 = vsub.f32 %v2705, %v5252
    %5254 = vmatprep.subr.mxu0 %v5253
    %v5255 = vand.u32 %v2704, 4294901760
    %v5256 = vsub.f32 %v2704, %v5255
    %5257 = vmatpush1.msra.mxu0 %v5256
    %v5258 = vand.u32 %v2708, 4294901760
    %v5259 = vsub.f32 %v2708, %v5258
    %5260 = vmatprep.subr.mxu0 %v5259
    %v5261 = vand.u32 %v2707, 4294901760
    %v5262 = vsub.f32 %v2707, %v5261
    %5263 = vmatpush1.msra.mxu0 %v5262
    %v5264 = vand.u32 %v2711, 4294901760
    %v5265 = vsub.f32 %v2711, %v5264
    %5266 = vmatprep.subr.mxu0 %v5265
    %v5267 = vand.u32 %v2710, 4294901760
    %v5268 = vsub.f32 %v2710, %v5267
    %5269 = vmatpush1.msra.mxu0 %v5268
    %v5270 = vand.u32 %v2714, 4294901760
    %v5271 = vsub.f32 %v2714, %v5270
    %5272 = vmatprep.subr.mxu0 %v5271
    %v5273 = vand.u32 %v2713, 4294901760
    %v5274 = vsub.f32 %v2713, %v5273
    %5275 = vmatpush1.msra.mxu0 %v5274
    %v5276 = vand.u32 %v2717, 4294901760
    %v5277 = vsub.f32 %v2717, %v5276
    %5278 = vmatprep.subr.mxu0 %v5277
    %v5279 = vand.u32 %v2716, 4294901760
    %v5280 = vsub.f32 %v2716, %v5279
    %5281 = vmatpush1.msra.mxu0 %v5280
    %v5282 = vand.u32 %v2720, 4294901760
    %v5283 = vsub.f32 %v2720, %v5282
    %5284 = vmatprep.subr.mxu0 %v5283
    %v5285 = vand.u32 %v2719, 4294901760
    %v5286 = vsub.f32 %v2719, %v5285
    %5287 = vmatpush1.msra.mxu0 %v5286
    %v5288 = vand.u32 %v2723, 4294901760
    %v5289 = vsub.f32 %v2723, %v5288
    %5290 = vmatprep.subr.mxu0 %v5289
    %v5291 = vand.u32 %v2722, 4294901760
    %v5292 = vsub.f32 %v2722, %v5291
    %5293 = vmatpush1.msra.mxu0 %v5292
    %v5294 = vand.u32 %v2726, 4294901760
    %v5295 = vsub.f32 %v2726, %v5294
    %5296 = vmatprep.subr.mxu0 %v5295
    %v5297 = vand.u32 %v2725, 4294901760
    %v5298 = vsub.f32 %v2725, %v5297
    %5299 = vmatpush1.msra.mxu0 %v5298
    %v5300 = vand.u32 %v2729, 4294901760
    %v5301 = vsub.f32 %v2729, %v5300
    %5302 = vmatprep.subr.mxu0 %v5301
    %v5303 = vand.u32 %v2728, 4294901760
    %v5304 = vsub.f32 %v2728, %v5303
    %5305 = vmatpush1.msra.mxu0 %v5304
    %v5306 = vand.u32 %v2732, 4294901760
    %v5307 = vsub.f32 %v2732, %v5306
    %5308 = vmatprep.subr.mxu0 %v5307
    %v5309 = vand.u32 %v2731, 4294901760
    %v5310 = vsub.f32 %v2731, %v5309
    %5311 = vmatpush1.msra.mxu0 %v5310
    %v5312 = vand.u32 %v2735, 4294901760
    %v5313 = vsub.f32 %v2735, %v5312
    %5314 = vmatprep.subr.mxu0 %v5313
    %v5315 = vand.u32 %v2734, 4294901760
    %v5316 = vsub.f32 %v2734, %v5315
    %5317 = vmatpush1.msra.mxu0 %v5316
    %v5318 = vand.u32 %v2738, 4294901760
    %v5319 = vsub.f32 %v2738, %v5318
    %5320 = vmatprep.subr.mxu0 %v5319
    %v5321 = vand.u32 %v2737, 4294901760
    %v5322 = vsub.f32 %v2737, %v5321
    %5323 = vmatpush1.msra.mxu0 %v5322
    %v5324 = vand.u32 %v2741, 4294901760
    %v5325 = vsub.f32 %v2741, %v5324
    %5326 = vmatprep.subr.mxu0 %v5325
    %v5327 = vand.u32 %v2740, 4294901760
    %v5328 = vsub.f32 %v2740, %v5327
    %5329 = vmatpush1.msra.mxu0 %v5328
    %v5330 = vand.u32 %v2744, 4294901760
    %v5331 = vsub.f32 %v2744, %v5330
    %5332 = vmatprep.subr.mxu0 %v5331
    %v5333 = vand.u32 %v2743, 4294901760
    %v5334 = vsub.f32 %v2743, %v5333
    %5335 = vmatpush1.msra.mxu0 %v5334
    %v5336 = vand.u32 %v2747, 4294901760
    %v5337 = vsub.f32 %v2747, %v5336
    %5338 = vmatprep.subr.mxu0 %v5337
    %v5339 = vand.u32 %v2746, 4294901760
    %v5340 = vsub.f32 %v2746, %v5339
    %5341 = vmatpush1.msra.mxu0 %v5340
    %v5342 = vand.u32 %v2750, 4294901760
    %v5343 = vsub.f32 %v2750, %v5342
    %5344 = vmatprep.subr.mxu0 %v5343
    %v5345 = vand.u32 %v2749, 4294901760
    %v5346 = vsub.f32 %v2749, %v5345
    %5347 = vmatpush1.msra.mxu0 %v5346
    %v5348 = vand.u32 %v2753, 4294901760
    %v5349 = vsub.f32 %v2753, %v5348
    %5350 = vmatprep.subr.mxu0 %v5349
    %v5351 = vand.u32 %v2752, 4294901760
    %v5352 = vsub.f32 %v2752, %v5351
    %5353 = vmatpush1.msra.mxu0 %v5352
    %v5354 = vand.u32 %v2756, 4294901760
    %v5355 = vsub.f32 %v2756, %v5354
    %5356 = vmatprep.subr.mxu0 %v5355
    %v5357 = vand.u32 %v2755, 4294901760
    %v5358 = vsub.f32 %v2755, %v5357
    %5359 = vmatpush1.msra.mxu0 %v5358
    %v5360 = vand.u32 %v2759, 4294901760
    %v5361 = vsub.f32 %v2759, %v5360
    %5362 = vmatprep.subr.mxu0 %v5361
    %v5363 = vand.u32 %v2758, 4294901760
    %v5364 = vsub.f32 %v2758, %v5363
    %5365 = vmatpush1.msra.mxu0 %v5364
    %v5366 = vand.u32 %v2762, 4294901760
    %v5367 = vsub.f32 %v2762, %v5366
    %5368 = vmatprep.subr.mxu0 %v5367
    %v5369 = vand.u32 %v2761, 4294901760
    %v5370 = vsub.f32 %v2761, %v5369
    %5371 = vmatpush1.msra.mxu0 %v5370
    %v5372 = vand.u32 %v2765, 4294901760
    %v5373 = vsub.f32 %v2765, %v5372
    %5374 = vmatprep.subr.mxu0 %v5373
    %v5375 = vand.u32 %v2764, 4294901760
    %v5376 = vsub.f32 %v2764, %v5375
    %5377 = vmatpush1.msra.mxu0 %v5376
    %v5378 = vand.u32 %v2768, 4294901760
    %v5379 = vsub.f32 %v2768, %v5378
    %5380 = vmatprep.subr.mxu0 %v5379
    %v5381 = vand.u32 %v2767, 4294901760
    %v5382 = vsub.f32 %v2767, %v5381
    %5383 = vmatpush1.msra.mxu0 %v5382
    %v5384 = vand.u32 %v2771, 4294901760
    %v5385 = vsub.f32 %v2771, %v5384
    %5386 = vmatprep.subr.mxu0 %v5385
    %v5387 = vand.u32 %v2770, 4294901760
    %v5388 = vsub.f32 %v2770, %v5387
    %5389 = vmatpush1.msra.mxu0 %v5388
    %v5390 = vand.u32 %v2774, 4294901760
    %v5391 = vsub.f32 %v2774, %v5390
    %5392 = vmatprep.subr.mxu0 %v5391
    %v5393 = vand.u32 %v2773, 4294901760
    %v5394 = vsub.f32 %v2773, %v5393
    %5395 = vmatpush1.msra.mxu0 %v5394
    %v5396 = vand.u32 %v2777, 4294901760
    %v5397 = vsub.f32 %v2777, %v5396
    %5398 = vmatprep.subr.mxu0 %v5397
    %v5399 = vand.u32 %v2776, 4294901760
    %v5400 = vsub.f32 %v2776, %v5399
    %5401 = vmatpush1.msra.mxu0 %v5400
    %v5402 = vand.u32 %v2780, 4294901760
    %v5403 = vsub.f32 %v2780, %v5402
    %5404 = vmatprep.subr.mxu0 %v5403
    %v5405 = vand.u32 %v2779, 4294901760
    %v5406 = vsub.f32 %v2779, %v5405
    %5407 = vmatpush1.msra.mxu0 %v5406
    %v5408 = vand.u32 %v2783, 4294901760
    %v5409 = vsub.f32 %v2783, %v5408
    %5410 = vmatprep.subr.mxu0 %v5409
    %v5411 = vand.u32 %v2782, 4294901760
    %v5412 = vsub.f32 %v2782, %v5411
    %5413 = vmatpush1.msra.mxu0 %v5412
    %v5414 = vand.u32 %v2786, 4294901760
    %v5415 = vsub.f32 %v2786, %v5414
    %5416 = vmatprep.subr.mxu0 %v5415
    %v5417 = vand.u32 %v2785, 4294901760
    %v5418 = vsub.f32 %v2785, %v5417
    %5419 = vmatpush1.msra.mxu0 %v5418
    %v5420 = vand.u32 %v2567, 4294901760
    %v5421 = vsub.f32 %v2567, %v5420
    %5422 = vmatprep.mubr.f32.mxu0 %v5421
    %v5423 = vand.u32 %v2566, 4294901760
    %v5424 = vsub.f32 %v2566, %v5423
    %5425 = vmatmul.mubr.f32.gmra.mrb[0].mxu0 %v5424
    %v5426 = vpop.f32.mrb[0].mxu0
    %v5427 = vadd.f32 %v5168, %v5426
    %v5428 = vpop.f32.mrb[0].mxu0
    %v5429 = vadd.f32 %v5170, %v5428
    %v5430 = vand.u32 %v2571, 4294901760
    %v5431 = vsub.f32 %v2571, %v5430
    %5432 = vmatprep.mubr.f32.mxu0 %v5431
    %v5433 = vand.u32 %v2570, 4294901760
    %v5434 = vsub.f32 %v2570, %v5433
    %5435 = vmatmul.mubr.f32.gmra.mrb[0].mxu0 %v5434
    %v5436 = vpop.f32.mrb[0].mxu0
    %v5437 = vadd.f32 %v5176, %v5436
    %v5438 = vpop.f32.mrb[0].mxu0
    %v5439 = vadd.f32 %v5178, %v5438
    %v5440 = vand.u32 %v2575, 4294901760
    %v5441 = vsub.f32 %v2575, %v5440
    %5442 = vmatprep.mubr.f32.mxu0 %v5441
    %v5443 = vand.u32 %v2574, 4294901760
    %v5444 = vsub.f32 %v2574, %v5443
    %5445 = vmatmul.mubr.f32.gmra.mrb[0].mxu0 %v5444
    %v5446 = vpop.f32.mrb[0].mxu0
    %v5447 = vadd.f32 %v5184, %v5446
    %v5448 = vpop.f32.mrb[0].mxu0
    %v5449 = vadd.f32 %v5186, %v5448
    %v5450 = vand.u32 %v2579, 4294901760
    %v5451 = vsub.f32 %v2579, %v5450
    %5452 = vmatprep.mubr.f32.mxu0 %v5451
    %v5453 = vand.u32 %v2578, 4294901760
    %v5454 = vsub.f32 %v2578, %v5453
    %5455 = vmatmul.mubr.f32.gmra.mrb[0].mxu0 %v5454
    %v5456 = vpop.f32.mrb[0].mxu0
    %v5457 = vadd.f32 %v5192, %v5456
    %v5458 = vpop.f32.mrb[0].mxu0
    %v5459 = vadd.f32 %v5194, %v5458
    %v5460 = vand.u32 %v2583, 4294901760
    %v5461 = vsub.f32 %v2583, %v5460
    %5462 = vmatprep.mubr.f32.mxu0 %v5461
    %v5463 = vand.u32 %v2582, 4294901760
    %v5464 = vsub.f32 %v2582, %v5463
    %5465 = vmatmul.mubr.f32.gmra.mrb[0].mxu0 %v5464
    %v5466 = vpop.f32.mrb[0].mxu0
    %v5467 = vadd.f32 %v5200, %v5466
    %v5468 = vpop.f32.mrb[0].mxu0
    %v5469 = vadd.f32 %v5202, %v5468
    %v5470 = vand.u32 %v2587, 4294901760
    %v5471 = vsub.f32 %v2587, %v5470
    %5472 = vmatprep.mubr.f32.mxu0 %v5471
    %v5473 = vand.u32 %v2586, 4294901760
    %v5474 = vsub.f32 %v2586, %v5473
    %5475 = vmatmul.mubr.f32.gmra.mrb[0].mxu0 %v5474
    %v5476 = vpop.f32.mrb[0].mxu0
    %v5477 = vadd.f32 %v5208, %v5476
    %v5478 = vpop.f32.mrb[0].mxu0
    %v5479 = vadd.f32 %v5210, %v5478
    %v5480 = vand.u32 %v2591, 4294901760
    %v5481 = vsub.f32 %v2591, %v5480
    %5482 = vmatprep.mubr.f32.mxu0 %v5481
    %v5483 = vand.u32 %v2590, 4294901760
    %v5484 = vsub.f32 %v2590, %v5483
    %5485 = vmatmul.mubr.f32.gmra.mrb[0].mxu0 %v5484
    %v5486 = vpop.f32.mrb[0].mxu0
    %v5487 = vadd.f32 %v5216, %v5486
    %v5488 = vpop.f32.mrb[0].mxu0
    %v5489 = vadd.f32 %v5218, %v5488
    %v5490 = vand.u32 %v2595, 4294901760
    %v5491 = vsub.f32 %v2595, %v5490
    %5492 = vmatprep.mubr.f32.mxu0 %v5491
    %v5493 = vand.u32 %v2594, 4294901760
    %v5494 = vsub.f32 %v2594, %v5493
    %5495 = vmatmul.mubr.f32.gmra.mrb[0].mxu0 %v5494
    %v5496 = vpop.f32.mrb[0].mxu0
    %v5497 = vadd.f32 %v5224, %v5496
    %v5498 = vpop.f32.mrb[0].mxu0
    %v5499 = vadd.f32 %v5226, %v5498
    %5500 = vdwg.mxu0
    %v5501 = vand.u32 %v2693, 4294901760
    %5502 = vmatprep.subr.mxu0 %v5501
    %v5503 = vand.u32 %v2692, 4294901760
    %5504 = vmatpush1.msra.mxu0 %v5503
    %v5505 = vand.u32 %v2696, 4294901760
    %5506 = vmatprep.subr.mxu0 %v5505
    %v5507 = vand.u32 %v2695, 4294901760
    %5508 = vmatpush1.msra.mxu0 %v5507
    %v5509 = vand.u32 %v2699, 4294901760
    %5510 = vmatprep.subr.mxu0 %v5509
    %v5511 = vand.u32 %v2698, 4294901760
    %5512 = vmatpush1.msra.mxu0 %v5511
    %v5513 = vand.u32 %v2702, 4294901760
    %5514 = vmatprep.subr.mxu0 %v5513
    %v5515 = vand.u32 %v2701, 4294901760
    %5516 = vmatpush1.msra.mxu0 %v5515
    %v5517 = vand.u32 %v2705, 4294901760
    %5518 = vmatprep.subr.mxu0 %v5517
    %v5519 = vand.u32 %v2704, 4294901760
    %5520 = vmatpush1.msra.mxu0 %v5519
    %v5521 = vand.u32 %v2708, 4294901760
    %5522 = vmatprep.subr.mxu0 %v5521
    %v5523 = vand.u32 %v2707, 4294901760
    %5524 = vmatpush1.msra.mxu0 %v5523
    %v5525 = vand.u32 %v2711, 4294901760
    %5526 = vmatprep.subr.mxu0 %v5525
    %v5527 = vand.u32 %v2710, 4294901760
    %5528 = vmatpush1.msra.mxu0 %v5527
    %v5529 = vand.u32 %v2714, 4294901760
    %5530 = vmatprep.subr.mxu0 %v5529
    %v5531 = vand.u32 %v2713, 4294901760
    %5532 = vmatpush1.msra.mxu0 %v5531
    %v5533 = vand.u32 %v2717, 4294901760
    %5534 = vmatprep.subr.mxu0 %v5533
    %v5535 = vand.u32 %v2716, 4294901760
    %5536 = vmatpush1.msra.mxu0 %v5535
    %v5537 = vand.u32 %v2720, 4294901760
    %5538 = vmatprep.subr.mxu0 %v5537
    %v5539 = vand.u32 %v2719, 4294901760
    %5540 = vmatpush1.msra.mxu0 %v5539
    %v5541 = vand.u32 %v2723, 4294901760
    %5542 = vmatprep.subr.mxu0 %v5541
    %v5543 = vand.u32 %v2722, 4294901760
    %5544 = vmatpush1.msra.mxu0 %v5543
    %v5545 = vand.u32 %v2726, 4294901760
    %5546 = vmatprep.subr.mxu0 %v5545
    %v5547 = vand.u32 %v2725, 4294901760
    %5548 = vmatpush1.msra.mxu0 %v5547
    %v5549 = vand.u32 %v2729, 4294901760
    %5550 = vmatprep.subr.mxu0 %v5549
    %v5551 = vand.u32 %v2728, 4294901760
    %5552 = vmatpush1.msra.mxu0 %v5551
    %v5553 = vand.u32 %v2732, 4294901760
    %5554 = vmatprep.subr.mxu0 %v5553
    %v5555 = vand.u32 %v2731, 4294901760
    %5556 = vmatpush1.msra.mxu0 %v5555
    %v5557 = vand.u32 %v2735, 4294901760
    %5558 = vmatprep.subr.mxu0 %v5557
    %v5559 = vand.u32 %v2734, 4294901760
    %5560 = vmatpush1.msra.mxu0 %v5559
    %v5561 = vand.u32 %v2738, 4294901760
    %5562 = vmatprep.subr.mxu0 %v5561
    %v5563 = vand.u32 %v2737, 4294901760
    %5564 = vmatpush1.msra.mxu0 %v5563
    %v5565 = vand.u32 %v2741, 4294901760
    %5566 = vmatprep.subr.mxu0 %v5565
    %v5567 = vand.u32 %v2740, 4294901760
    %5568 = vmatpush1.msra.mxu0 %v5567
    %v5569 = vand.u32 %v2744, 4294901760
    %5570 = vmatprep.subr.mxu0 %v5569
    %v5571 = vand.u32 %v2743, 4294901760
    %5572 = vmatpush1.msra.mxu0 %v5571
    %v5573 = vand.u32 %v2747, 4294901760
    %5574 = vmatprep.subr.mxu0 %v5573
    %v5575 = vand.u32 %v2746, 4294901760
    %5576 = vmatpush1.msra.mxu0 %v5575
    %v5577 = vand.u32 %v2750, 4294901760
    %5578 = vmatprep.subr.mxu0 %v5577
    %v5579 = vand.u32 %v2749, 4294901760
    %5580 = vmatpush1.msra.mxu0 %v5579
    %v5581 = vand.u32 %v2753, 4294901760
    %5582 = vmatprep.subr.mxu0 %v5581
    %v5583 = vand.u32 %v2752, 4294901760
    %5584 = vmatpush1.msra.mxu0 %v5583
    %v5585 = vand.u32 %v2756, 4294901760
    %5586 = vmatprep.subr.mxu0 %v5585
    %v5587 = vand.u32 %v2755, 4294901760
    %5588 = vmatpush1.msra.mxu0 %v5587
    %v5589 = vand.u32 %v2759, 4294901760
    %5590 = vmatprep.subr.mxu0 %v5589
    %v5591 = vand.u32 %v2758, 4294901760
    %5592 = vmatpush1.msra.mxu0 %v5591
    %v5593 = vand.u32 %v2762, 4294901760
    %5594 = vmatprep.subr.mxu0 %v5593
    %v5595 = vand.u32 %v2761, 4294901760
    %5596 = vmatpush1.msra.mxu0 %v5595
    %v5597 = vand.u32 %v2765, 4294901760
    %5598 = vmatprep.subr.mxu0 %v5597
    %v5599 = vand.u32 %v2764, 4294901760
    %5600 = vmatpush1.msra.mxu0 %v5599
    %v5601 = vand.u32 %v2768, 4294901760
    %5602 = vmatprep.subr.mxu0 %v5601
    %v5603 = vand.u32 %v2767, 4294901760
    %5604 = vmatpush1.msra.mxu0 %v5603
    %v5605 = vand.u32 %v2771, 4294901760
    %5606 = vmatprep.subr.mxu0 %v5605
    %v5607 = vand.u32 %v2770, 4294901760
    %5608 = vmatpush1.msra.mxu0 %v5607
    %v5609 = vand.u32 %v2774, 4294901760
    %5610 = vmatprep.subr.mxu0 %v5609
    %v5611 = vand.u32 %v2773, 4294901760
    %5612 = vmatpush1.msra.mxu0 %v5611
    %v5613 = vand.u32 %v2777, 4294901760
    %5614 = vmatprep.subr.mxu0 %v5613
    %v5615 = vand.u32 %v2776, 4294901760
    %5616 = vmatpush1.msra.mxu0 %v5615
    %v5617 = vand.u32 %v2780, 4294901760
    %5618 = vmatprep.subr.mxu0 %v5617
    %v5619 = vand.u32 %v2779, 4294901760
    %5620 = vmatpush1.msra.mxu0 %v5619
    %v5621 = vand.u32 %v2783, 4294901760
    %5622 = vmatprep.subr.mxu0 %v5621
    %v5623 = vand.u32 %v2782, 4294901760
    %5624 = vmatpush1.msra.mxu0 %v5623
    %v5625 = vand.u32 %v2786, 4294901760
    %5626 = vmatprep.subr.mxu0 %v5625
    %v5627 = vand.u32 %v2785, 4294901760
    %5628 = vmatpush1.msra.mxu0 %v5627
    %v5629 = vand.u32 %v2567, 4294901760
    %v5630 = vsub.f32 %v2567, %v5629
    %v5631 = vand.u32 %v5630, 4294901760
    %5632 = vmatprep.mubr.f32.mxu0 %v5631
    %v5633 = vand.u32 %v2566, 4294901760
    %v5634 = vsub.f32 %v2566, %v5633
    %v5635 = vand.u32 %v5634, 4294901760
    %5636 = vmatmul.mubr.f32.gmra.mrb[0].mxu0 %v5635
    %v5637 = vpop.f32.mrb[0].mxu0
    %v5638 = vadd.f32 %v5427, %v5637
    %v5639 = vpop.f32.mrb[0].mxu0
    %v5640 = vadd.f32 %v5429, %v5639
    %v5641 = vand.u32 %v2571, 4294901760
    %v5642 = vsub.f32 %v2571, %v5641
    %v5643 = vand.u32 %v5642, 4294901760
    %5644 = vmatprep.mubr.f32.mxu0 %v5643
    %v5645 = vand.u32 %v2570, 4294901760
    %v5646 = vsub.f32 %v2570, %v5645
    %v5647 = vand.u32 %v5646, 4294901760
    %5648 = vmatmul.mubr.f32.gmra.mrb[0].mxu0 %v5647
    %v5649 = vpop.f32.mrb[0].mxu0
    %v5650 = vadd.f32 %v5437, %v5649
    %v5651 = vpop.f32.mrb[0].mxu0
    %v5652 = vadd.f32 %v5439, %v5651
    %v5653 = vand.u32 %v2575, 4294901760
    %v5654 = vsub.f32 %v2575, %v5653
    %v5655 = vand.u32 %v5654, 4294901760
    %5656 = vmatprep.mubr.f32.mxu0 %v5655
    %v5657 = vand.u32 %v2574, 4294901760
    %v5658 = vsub.f32 %v2574, %v5657
    %v5659 = vand.u32 %v5658, 4294901760
    %5660 = vmatmul.mubr.f32.gmra.mrb[0].mxu0 %v5659
    %v5661 = vpop.f32.mrb[0].mxu0
    %v5662 = vadd.f32 %v5447, %v5661
    %v5663 = vpop.f32.mrb[0].mxu0
    %v5664 = vadd.f32 %v5449, %v5663
    %v5665 = vand.u32 %v2579, 4294901760
    %v5666 = vsub.f32 %v2579, %v5665
    %v5667 = vand.u32 %v5666, 4294901760
    %5668 = vmatprep.mubr.f32.mxu0 %v5667
    %v5669 = vand.u32 %v2578, 4294901760
    %v5670 = vsub.f32 %v2578, %v5669
    %v5671 = vand.u32 %v5670, 4294901760
    %5672 = vmatmul.mubr.f32.gmra.mrb[0].mxu0 %v5671
    %v5673 = vpop.f32.mrb[0].mxu0
    %v5674 = vadd.f32 %v5457, %v5673
    %v5675 = vpop.f32.mrb[0].mxu0
    %v5676 = vadd.f32 %v5459, %v5675
    %v5677 = vand.u32 %v2583, 4294901760
    %v5678 = vsub.f32 %v2583, %v5677
    %v5679 = vand.u32 %v5678, 4294901760
    %5680 = vmatprep.mubr.f32.mxu0 %v5679
    %v5681 = vand.u32 %v2582, 4294901760
    %v5682 = vsub.f32 %v2582, %v5681
    %v5683 = vand.u32 %v5682, 4294901760
    %5684 = vmatmul.mubr.f32.gmra.mrb[0].mxu0 %v5683
    %v5685 = vpop.f32.mrb[0].mxu0
    %v5686 = vadd.f32 %v5467, %v5685
    %v5687 = vpop.f32.mrb[0].mxu0
    %v5688 = vadd.f32 %v5469, %v5687
    %v5689 = vand.u32 %v2587, 4294901760
    %v5690 = vsub.f32 %v2587, %v5689
    %v5691 = vand.u32 %v5690, 4294901760
    %5692 = vmatprep.mubr.f32.mxu0 %v5691
    %v5693 = vand.u32 %v2586, 4294901760
    %v5694 = vsub.f32 %v2586, %v5693
    %v5695 = vand.u32 %v5694, 4294901760
    %5696 = vmatmul.mubr.f32.gmra.mrb[0].mxu0 %v5695
    %v5697 = vpop.f32.mrb[0].mxu0
    %v5698 = vadd.f32 %v5477, %v5697
    %v5699 = vpop.f32.mrb[0].mxu0
    %v5700 = vadd.f32 %v5479, %v5699
    %v5701 = vand.u32 %v2591, 4294901760
    %v5702 = vsub.f32 %v2591, %v5701
    %v5703 = vand.u32 %v5702, 4294901760
    %5704 = vmatprep.mubr.f32.mxu0 %v5703
    %v5705 = vand.u32 %v2590, 4294901760
    %v5706 = vsub.f32 %v2590, %v5705
    %v5707 = vand.u32 %v5706, 4294901760
    %5708 = vmatmul.mubr.f32.gmra.mrb[0].mxu0 %v5707
    %v5709 = vpop.f32.mrb[0].mxu0
    %v5710 = vadd.f32 %v5487, %v5709
    %v5711 = vpop.f32.mrb[0].mxu0
    %v5712 = vadd.f32 %v5489, %v5711
    %v5713 = vand.u32 %v2595, 4294901760
    %v5714 = vsub.f32 %v2595, %v5713
    %v5715 = vand.u32 %v5714, 4294901760
    %5716 = vmatprep.mubr.f32.mxu0 %v5715
    %v5717 = vand.u32 %v2594, 4294901760
    %v5718 = vsub.f32 %v2594, %v5717
    %v5719 = vand.u32 %v5718, 4294901760
    %5720 = vmatmul.mubr.f32.gmra.mrb[0].mxu0 %v5719
    %v5721 = vpop.f32.mrb[0].mxu0
    %v5722 = vadd.f32 %v5497, %v5721
    %v5723 = vpop.f32.mrb[0].mxu0
    %v5724 = vadd.f32 %v5499, %v5723
    %5725 = vdwg.mxu0
    %v5726 = vand.u32 %v2693, 4294901760
    %v5727 = vsub.f32 %v2693, %v5726
    %v5728 = vand.u32 %v5727, 4294901760
    %5729 = vmatprep.subr.mxu0 %v5728
    %v5730 = vand.u32 %v2692, 4294901760
    %v5731 = vsub.f32 %v2692, %v5730
    %v5732 = vand.u32 %v5731, 4294901760
    %5733 = vmatpush1.msra.mxu0 %v5732
    %v5734 = vand.u32 %v2696, 4294901760
    %v5735 = vsub.f32 %v2696, %v5734
    %v5736 = vand.u32 %v5735, 4294901760
    %5737 = vmatprep.subr.mxu0 %v5736
    %v5738 = vand.u32 %v2695, 4294901760
    %v5739 = vsub.f32 %v2695, %v5738
    %v5740 = vand.u32 %v5739, 4294901760
    %5741 = vmatpush1.msra.mxu0 %v5740
    %v5742 = vand.u32 %v2699, 4294901760
    %v5743 = vsub.f32 %v2699, %v5742
    %v5744 = vand.u32 %v5743, 4294901760
    %5745 = vmatprep.subr.mxu0 %v5744
    %v5746 = vand.u32 %v2698, 4294901760
    %v5747 = vsub.f32 %v2698, %v5746
    %v5748 = vand.u32 %v5747, 4294901760
    %5749 = vmatpush1.msra.mxu0 %v5748
    %v5750 = vand.u32 %v2702, 4294901760
    %v5751 = vsub.f32 %v2702, %v5750
    %v5752 = vand.u32 %v5751, 4294901760
    %5753 = vmatprep.subr.mxu0 %v5752
    %v5754 = vand.u32 %v2701, 4294901760
    %v5755 = vsub.f32 %v2701, %v5754
    %v5756 = vand.u32 %v5755, 4294901760
    %5757 = vmatpush1.msra.mxu0 %v5756
    %v5758 = vand.u32 %v2705, 4294901760
    %v5759 = vsub.f32 %v2705, %v5758
    %v5760 = vand.u32 %v5759, 4294901760
    %5761 = vmatprep.subr.mxu0 %v5760
    %v5762 = vand.u32 %v2704, 4294901760
    %v5763 = vsub.f32 %v2704, %v5762
    %v5764 = vand.u32 %v5763, 4294901760
    %5765 = vmatpush1.msra.mxu0 %v5764
    %v5766 = vand.u32 %v2708, 4294901760
    %v5767 = vsub.f32 %v2708, %v5766
    %v5768 = vand.u32 %v5767, 4294901760
    %5769 = vmatprep.subr.mxu0 %v5768
    %v5770 = vand.u32 %v2707, 4294901760
    %v5771 = vsub.f32 %v2707, %v5770
    %v5772 = vand.u32 %v5771, 4294901760
    %5773 = vmatpush1.msra.mxu0 %v5772
    %v5774 = vand.u32 %v2711, 4294901760
    %v5775 = vsub.f32 %v2711, %v5774
    %v5776 = vand.u32 %v5775, 4294901760
    %5777 = vmatprep.subr.mxu0 %v5776
    %v5778 = vand.u32 %v2710, 4294901760
    %v5779 = vsub.f32 %v2710, %v5778
    %v5780 = vand.u32 %v5779, 4294901760
    %5781 = vmatpush1.msra.mxu0 %v5780
    %v5782 = vand.u32 %v2714, 4294901760
    %v5783 = vsub.f32 %v2714, %v5782
    %v5784 = vand.u32 %v5783, 4294901760
    %5785 = vmatprep.subr.mxu0 %v5784
    %v5786 = vand.u32 %v2713, 4294901760
    %v5787 = vsub.f32 %v2713, %v5786
    %v5788 = vand.u32 %v5787, 4294901760
    %5789 = vmatpush1.msra.mxu0 %v5788
    %v5790 = vand.u32 %v2717, 4294901760
    %v5791 = vsub.f32 %v2717, %v5790
    %v5792 = vand.u32 %v5791, 4294901760
    %5793 = vmatprep.subr.mxu0 %v5792
    %v5794 = vand.u32 %v2716, 4294901760
    %v5795 = vsub.f32 %v2716, %v5794
    %v5796 = vand.u32 %v5795, 4294901760
    %5797 = vmatpush1.msra.mxu0 %v5796
    %v5798 = vand.u32 %v2720, 4294901760
    %v5799 = vsub.f32 %v2720, %v5798
    %v5800 = vand.u32 %v5799, 4294901760
    %5801 = vmatprep.subr.mxu0 %v5800
    %v5802 = vand.u32 %v2719, 4294901760
    %v5803 = vsub.f32 %v2719, %v5802
    %v5804 = vand.u32 %v5803, 4294901760
    %5805 = vmatpush1.msra.mxu0 %v5804
    %v5806 = vand.u32 %v2723, 4294901760
    %v5807 = vsub.f32 %v2723, %v5806
    %v5808 = vand.u32 %v5807, 4294901760
    %5809 = vmatprep.subr.mxu0 %v5808
    %v5810 = vand.u32 %v2722, 4294901760
    %v5811 = vsub.f32 %v2722, %v5810
    %v5812 = vand.u32 %v5811, 4294901760
    %5813 = vmatpush1.msra.mxu0 %v5812
    %v5814 = vand.u32 %v2726, 4294901760
    %v5815 = vsub.f32 %v2726, %v5814
    %v5816 = vand.u32 %v5815, 4294901760
    %5817 = vmatprep.subr.mxu0 %v5816
    %v5818 = vand.u32 %v2725, 4294901760
    %v5819 = vsub.f32 %v2725, %v5818
    %v5820 = vand.u32 %v5819, 4294901760
    %5821 = vmatpush1.msra.mxu0 %v5820
    %v5822 = vand.u32 %v2729, 4294901760
    %v5823 = vsub.f32 %v2729, %v5822
    %v5824 = vand.u32 %v5823, 4294901760
    %5825 = vmatprep.subr.mxu0 %v5824
    %v5826 = vand.u32 %v2728, 4294901760
    %v5827 = vsub.f32 %v2728, %v5826
    %v5828 = vand.u32 %v5827, 4294901760
    %5829 = vmatpush1.msra.mxu0 %v5828
    %v5830 = vand.u32 %v2732, 4294901760
    %v5831 = vsub.f32 %v2732, %v5830
    %v5832 = vand.u32 %v5831, 4294901760
    %5833 = vmatprep.subr.mxu0 %v5832
    %v5834 = vand.u32 %v2731, 4294901760
    %v5835 = vsub.f32 %v2731, %v5834
    %v5836 = vand.u32 %v5835, 4294901760
    %5837 = vmatpush1.msra.mxu0 %v5836
    %v5838 = vand.u32 %v2735, 4294901760
    %v5839 = vsub.f32 %v2735, %v5838
    %v5840 = vand.u32 %v5839, 4294901760
    %5841 = vmatprep.subr.mxu0 %v5840
    %v5842 = vand.u32 %v2734, 4294901760
    %v5843 = vsub.f32 %v2734, %v5842
    %v5844 = vand.u32 %v5843, 4294901760
    %5845 = vmatpush1.msra.mxu0 %v5844
    %v5846 = vand.u32 %v2738, 4294901760
    %v5847 = vsub.f32 %v2738, %v5846
    %v5848 = vand.u32 %v5847, 4294901760
    %5849 = vmatprep.subr.mxu0 %v5848
    %v5850 = vand.u32 %v2737, 4294901760
    %v5851 = vsub.f32 %v2737, %v5850
    %v5852 = vand.u32 %v5851, 4294901760
    %5853 = vmatpush1.msra.mxu0 %v5852
    %v5854 = vand.u32 %v2741, 4294901760
    %v5855 = vsub.f32 %v2741, %v5854
    %v5856 = vand.u32 %v5855, 4294901760
    %5857 = vmatprep.subr.mxu0 %v5856
    %v5858 = vand.u32 %v2740, 4294901760
    %v5859 = vsub.f32 %v2740, %v5858
    %v5860 = vand.u32 %v5859, 4294901760
    %5861 = vmatpush1.msra.mxu0 %v5860
    %v5862 = vand.u32 %v2744, 4294901760
    %v5863 = vsub.f32 %v2744, %v5862
    %v5864 = vand.u32 %v5863, 4294901760
    %5865 = vmatprep.subr.mxu0 %v5864
    %v5866 = vand.u32 %v2743, 4294901760
    %v5867 = vsub.f32 %v2743, %v5866
    %v5868 = vand.u32 %v5867, 4294901760
    %5869 = vmatpush1.msra.mxu0 %v5868
    %v5870 = vand.u32 %v2747, 4294901760
    %v5871 = vsub.f32 %v2747, %v5870
    %v5872 = vand.u32 %v5871, 4294901760
    %5873 = vmatprep.subr.mxu0 %v5872
    %v5874 = vand.u32 %v2746, 4294901760
    %v5875 = vsub.f32 %v2746, %v5874
    %v5876 = vand.u32 %v5875, 4294901760
    %5877 = vmatpush1.msra.mxu0 %v5876
    %v5878 = vand.u32 %v2750, 4294901760
    %v5879 = vsub.f32 %v2750, %v5878
    %v5880 = vand.u32 %v5879, 4294901760
    %5881 = vmatprep.subr.mxu0 %v5880
    %v5882 = vand.u32 %v2749, 4294901760
    %v5883 = vsub.f32 %v2749, %v5882
    %v5884 = vand.u32 %v5883, 4294901760
    %5885 = vmatpush1.msra.mxu0 %v5884
    %v5886 = vand.u32 %v2753, 4294901760
    %v5887 = vsub.f32 %v2753, %v5886
    %v5888 = vand.u32 %v5887, 4294901760
    %5889 = vmatprep.subr.mxu0 %v5888
    %v5890 = vand.u32 %v2752, 4294901760
    %v5891 = vsub.f32 %v2752, %v5890
    %v5892 = vand.u32 %v5891, 4294901760
    %5893 = vmatpush1.msra.mxu0 %v5892
    %v5894 = vand.u32 %v2756, 4294901760
    %v5895 = vsub.f32 %v2756, %v5894
    %v5896 = vand.u32 %v5895, 4294901760
    %5897 = vmatprep.subr.mxu0 %v5896
    %v5898 = vand.u32 %v2755, 4294901760
    %v5899 = vsub.f32 %v2755, %v5898
    %v5900 = vand.u32 %v5899, 4294901760
    %5901 = vmatpush1.msra.mxu0 %v5900
    %v5902 = vand.u32 %v2759, 4294901760
    %v5903 = vsub.f32 %v2759, %v5902
    %v5904 = vand.u32 %v5903, 4294901760
    %5905 = vmatprep.subr.mxu0 %v5904
    %v5906 = vand.u32 %v2758, 4294901760
    %v5907 = vsub.f32 %v2758, %v5906
    %v5908 = vand.u32 %v5907, 4294901760
    %5909 = vmatpush1.msra.mxu0 %v5908
    %v5910 = vand.u32 %v2762, 4294901760
    %v5911 = vsub.f32 %v2762, %v5910
    %v5912 = vand.u32 %v5911, 4294901760
    %5913 = vmatprep.subr.mxu0 %v5912
    %v5914 = vand.u32 %v2761, 4294901760
    %v5915 = vsub.f32 %v2761, %v5914
    %v5916 = vand.u32 %v5915, 4294901760
    %5917 = vmatpush1.msra.mxu0 %v5916
    %v5918 = vand.u32 %v2765, 4294901760
    %v5919 = vsub.f32 %v2765, %v5918
    %v5920 = vand.u32 %v5919, 4294901760
    %5921 = vmatprep.subr.mxu0 %v5920
    %v5922 = vand.u32 %v2764, 4294901760
    %v5923 = vsub.f32 %v2764, %v5922
    %v5924 = vand.u32 %v5923, 4294901760
    %5925 = vmatpush1.msra.mxu0 %v5924
    %v5926 = vand.u32 %v2768, 4294901760
    %v5927 = vsub.f32 %v2768, %v5926
    %v5928 = vand.u32 %v5927, 4294901760
    %5929 = vmatprep.subr.mxu0 %v5928
    %v5930 = vand.u32 %v2767, 4294901760
    %v5931 = vsub.f32 %v2767, %v5930
    %v5932 = vand.u32 %v5931, 4294901760
    %5933 = vmatpush1.msra.mxu0 %v5932
    %v5934 = vand.u32 %v2771, 4294901760
    %v5935 = vsub.f32 %v2771, %v5934
    %v5936 = vand.u32 %v5935, 4294901760
    %5937 = vmatprep.subr.mxu0 %v5936
    %v5938 = vand.u32 %v2770, 4294901760
    %v5939 = vsub.f32 %v2770, %v5938
    %v5940 = vand.u32 %v5939, 4294901760
    %5941 = vmatpush1.msra.mxu0 %v5940
    %v5942 = vand.u32 %v2774, 4294901760
    %v5943 = vsub.f32 %v2774, %v5942
    %v5944 = vand.u32 %v5943, 4294901760
    %5945 = vmatprep.subr.mxu0 %v5944
    %v5946 = vand.u32 %v2773, 4294901760
    %v5947 = vsub.f32 %v2773, %v5946
    %v5948 = vand.u32 %v5947, 4294901760
    %5949 = vmatpush1.msra.mxu0 %v5948
    %v5950 = vand.u32 %v2777, 4294901760
    %v5951 = vsub.f32 %v2777, %v5950
    %v5952 = vand.u32 %v5951, 4294901760
    %5953 = vmatprep.subr.mxu0 %v5952
    %v5954 = vand.u32 %v2776, 4294901760
    %v5955 = vsub.f32 %v2776, %v5954
    %v5956 = vand.u32 %v5955, 4294901760
    %5957 = vmatpush1.msra.mxu0 %v5956
    %v5958 = vand.u32 %v2780, 4294901760
    %v5959 = vsub.f32 %v2780, %v5958
    %v5960 = vand.u32 %v5959, 4294901760
    %5961 = vmatprep.subr.mxu0 %v5960
    %v5962 = vand.u32 %v2779, 4294901760
    %v5963 = vsub.f32 %v2779, %v5962
    %v5964 = vand.u32 %v5963, 4294901760
    %5965 = vmatpush1.msra.mxu0 %v5964
    %v5966 = vand.u32 %v2783, 4294901760
    %v5967 = vsub.f32 %v2783, %v5966
    %v5968 = vand.u32 %v5967, 4294901760
    %5969 = vmatprep.subr.mxu0 %v5968
    %v5970 = vand.u32 %v2782, 4294901760
    %v5971 = vsub.f32 %v2782, %v5970
    %v5972 = vand.u32 %v5971, 4294901760
    %5973 = vmatpush1.msra.mxu0 %v5972
    %v5974 = vand.u32 %v2786, 4294901760
    %v5975 = vsub.f32 %v2786, %v5974
    %v5976 = vand.u32 %v5975, 4294901760
    %5977 = vmatprep.subr.mxu0 %v5976
    %v5978 = vand.u32 %v2785, 4294901760
    %v5979 = vsub.f32 %v2785, %v5978
    %v5980 = vand.u32 %v5979, 4294901760
    %5981 = vmatpush1.msra.mxu0 %v5980
    %v5982 = vand.u32 %v2567, 4294901760
    %5983 = vmatprep.mubr.f32.mxu0 %v5982
    %v5984 = vand.u32 %v2566, 4294901760
    %5985 = vmatmul.mubr.f32.gmra.mrb[0].mxu0 %v5984
    %v5986 = vpop.f32.mrb[0].mxu0
    %v5987 = vadd.f32 %v5638, %v5986
    %v5988 = vpop.f32.mrb[0].mxu0
    %v5989 = vadd.f32 %v5640, %v5988
    %v5990 = vand.u32 %v2571, 4294901760
    %5991 = vmatprep.mubr.f32.mxu0 %v5990
    %v5992 = vand.u32 %v2570, 4294901760
    %5993 = vmatmul.mubr.f32.gmra.mrb[0].mxu0 %v5992
    %v5994 = vpop.f32.mrb[0].mxu0
    %v5995 = vadd.f32 %v5650, %v5994
    %v5996 = vpop.f32.mrb[0].mxu0
    %v5997 = vadd.f32 %v5652, %v5996
    %v5998 = vand.u32 %v2575, 4294901760
    %5999 = vmatprep.mubr.f32.mxu0 %v5998
    %v6000 = vand.u32 %v2574, 4294901760
    %6001 = vmatmul.mubr.f32.gmra.mrb[0].mxu0 %v6000
    %v6002 = vpop.f32.mrb[0].mxu0
    %v6003 = vadd.f32 %v5662, %v6002
    %v6004 = vpop.f32.mrb[0].mxu0
    %v6005 = vadd.f32 %v5664, %v6004
    %v6006 = vand.u32 %v2579, 4294901760
    %6007 = vmatprep.mubr.f32.mxu0 %v6006
    %v6008 = vand.u32 %v2578, 4294901760
    %6009 = vmatmul.mubr.f32.gmra.mrb[0].mxu0 %v6008
    %v6010 = vpop.f32.mrb[0].mxu0
    %v6011 = vadd.f32 %v5674, %v6010
    %v6012 = vpop.f32.mrb[0].mxu0
    %v6013 = vadd.f32 %v5676, %v6012
    %v6014 = vand.u32 %v2583, 4294901760
    %6015 = vmatprep.mubr.f32.mxu0 %v6014
    %v6016 = vand.u32 %v2582, 4294901760
    %6017 = vmatmul.mubr.f32.gmra.mrb[0].mxu0 %v6016
    %v6018 = vpop.f32.mrb[0].mxu0
    %v6019 = vadd.f32 %v5686, %v6018
    %v6020 = vpop.f32.mrb[0].mxu0
    %v6021 = vadd.f32 %v5688, %v6020
    %v6022 = vand.u32 %v2587, 4294901760
    %6023 = vmatprep.mubr.f32.mxu0 %v6022
    %v6024 = vand.u32 %v2586, 4294901760
    %6025 = vmatmul.mubr.f32.gmra.mrb[0].mxu0 %v6024
    %v6026 = vpop.f32.mrb[0].mxu0
    %v6027 = vadd.f32 %v5698, %v6026
    %v6028 = vpop.f32.mrb[0].mxu0
    %v6029 = vadd.f32 %v5700, %v6028
    %v6030 = vand.u32 %v2591, 4294901760
    %6031 = vmatprep.mubr.f32.mxu0 %v6030
    %v6032 = vand.u32 %v2590, 4294901760
    %6033 = vmatmul.mubr.f32.gmra.mrb[0].mxu0 %v6032
    %v6034 = vpop.f32.mrb[0].mxu0
    %v6035 = vadd.f32 %v5710, %v6034
    %v6036 = vpop.f32.mrb[0].mxu0
    %v6037 = vadd.f32 %v5712, %v6036
    %v6038 = vand.u32 %v2595, 4294901760
    %6039 = vmatprep.mubr.f32.mxu0 %v6038
    %v6040 = vand.u32 %v2594, 4294901760
    %6041 = vmatmul.mubr.f32.gmra.mrb[0].mxu0 %v6040
    %v6042 = vpop.f32.mrb[0].mxu0
    %v6043 = vadd.f32 %v5722, %v6042
    %v6044 = vpop.f32.mrb[0].mxu0
    %v6045 = vadd.f32 %v5724, %v6044
    %6046 = vdwg.mxu0
    %v6047 = vand.u32 %v2693, 4294901760
    %6048 = vmatprep.subr.mxu0 %v6047
    %v6049 = vand.u32 %v2692, 4294901760
    %6050 = vmatpush1.msra.mxu0 %v6049
    %v6051 = vand.u32 %v2696, 4294901760
    %6052 = vmatprep.subr.mxu0 %v6051
    %v6053 = vand.u32 %v2695, 4294901760
    %6054 = vmatpush1.msra.mxu0 %v6053
    %v6055 = vand.u32 %v2699, 4294901760
    %6056 = vmatprep.subr.mxu0 %v6055
    %v6057 = vand.u32 %v2698, 4294901760
    %6058 = vmatpush1.msra.mxu0 %v6057
    %v6059 = vand.u32 %v2702, 4294901760
    %6060 = vmatprep.subr.mxu0 %v6059
    %v6061 = vand.u32 %v2701, 4294901760
    %6062 = vmatpush1.msra.mxu0 %v6061
    %v6063 = vand.u32 %v2705, 4294901760
    %6064 = vmatprep.subr.mxu0 %v6063
    %v6065 = vand.u32 %v2704, 4294901760
    %6066 = vmatpush1.msra.mxu0 %v6065
    %v6067 = vand.u32 %v2708, 4294901760
    %6068 = vmatprep.subr.mxu0 %v6067
    %v6069 = vand.u32 %v2707, 4294901760
    %6070 = vmatpush1.msra.mxu0 %v6069
    %v6071 = vand.u32 %v2711, 4294901760
    %6072 = vmatprep.subr.mxu0 %v6071
    %v6073 = vand.u32 %v2710, 4294901760
    %6074 = vmatpush1.msra.mxu0 %v6073
    %v6075 = vand.u32 %v2714, 4294901760
    %6076 = vmatprep.subr.mxu0 %v6075
    %v6077 = vand.u32 %v2713, 4294901760
    %6078 = vmatpush1.msra.mxu0 %v6077
    %v6079 = vand.u32 %v2717, 4294901760
    %6080 = vmatprep.subr.mxu0 %v6079
    %v6081 = vand.u32 %v2716, 4294901760
    %6082 = vmatpush1.msra.mxu0 %v6081
    %v6083 = vand.u32 %v2720, 4294901760
    %6084 = vmatprep.subr.mxu0 %v6083
    %v6085 = vand.u32 %v2719, 4294901760
    %6086 = vmatpush1.msra.mxu0 %v6085
    %v6087 = vand.u32 %v2723, 4294901760
    %6088 = vmatprep.subr.mxu0 %v6087
    %v6089 = vand.u32 %v2722, 4294901760
    %6090 = vmatpush1.msra.mxu0 %v6089
    %v6091 = vand.u32 %v2726, 4294901760
    %6092 = vmatprep.subr.mxu0 %v6091
    %v6093 = vand.u32 %v2725, 4294901760
    %6094 = vmatpush1.msra.mxu0 %v6093
    %v6095 = vand.u32 %v2729, 4294901760
    %6096 = vmatprep.subr.mxu0 %v6095
    %v6097 = vand.u32 %v2728, 4294901760
    %6098 = vmatpush1.msra.mxu0 %v6097
    %v6099 = vand.u32 %v2732, 4294901760
    %6100 = vmatprep.subr.mxu0 %v6099
    %v6101 = vand.u32 %v2731, 4294901760
    %6102 = vmatpush1.msra.mxu0 %v6101
    %v6103 = vand.u32 %v2735, 4294901760
    %6104 = vmatprep.subr.mxu0 %v6103
    %v6105 = vand.u32 %v2734, 4294901760
    %6106 = vmatpush1.msra.mxu0 %v6105
    %v6107 = vand.u32 %v2738, 4294901760
    %6108 = vmatprep.subr.mxu0 %v6107
    %v6109 = vand.u32 %v2737, 4294901760
    %6110 = vmatpush1.msra.mxu0 %v6109
    %v6111 = vand.u32 %v2741, 4294901760
    %6112 = vmatprep.subr.mxu0 %v6111
    %v6113 = vand.u32 %v2740, 4294901760
    %6114 = vmatpush1.msra.mxu0 %v6113
    %v6115 = vand.u32 %v2744, 4294901760
    %6116 = vmatprep.subr.mxu0 %v6115
    %v6117 = vand.u32 %v2743, 4294901760
    %6118 = vmatpush1.msra.mxu0 %v6117
    %v6119 = vand.u32 %v2747, 4294901760
    %6120 = vmatprep.subr.mxu0 %v6119
    %v6121 = vand.u32 %v2746, 4294901760
    %6122 = vmatpush1.msra.mxu0 %v6121
    %v6123 = vand.u32 %v2750, 4294901760
    %6124 = vmatprep.subr.mxu0 %v6123
    %v6125 = vand.u32 %v2749, 4294901760
    %6126 = vmatpush1.msra.mxu0 %v6125
    %v6127 = vand.u32 %v2753, 4294901760
    %6128 = vmatprep.subr.mxu0 %v6127
    %v6129 = vand.u32 %v2752, 4294901760
    %6130 = vmatpush1.msra.mxu0 %v6129
    %v6131 = vand.u32 %v2756, 4294901760
    %6132 = vmatprep.subr.mxu0 %v6131
    %v6133 = vand.u32 %v2755, 4294901760
    %6134 = vmatpush1.msra.mxu0 %v6133
    %v6135 = vand.u32 %v2759, 4294901760
    %6136 = vmatprep.subr.mxu0 %v6135
    %v6137 = vand.u32 %v2758, 4294901760
    %6138 = vmatpush1.msra.mxu0 %v6137
    %v6139 = vand.u32 %v2762, 4294901760
    %6140 = vmatprep.subr.mxu0 %v6139
    %v6141 = vand.u32 %v2761, 4294901760
    %6142 = vmatpush1.msra.mxu0 %v6141
    %v6143 = vand.u32 %v2765, 4294901760
    %6144 = vmatprep.subr.mxu0 %v6143
    %v6145 = vand.u32 %v2764, 4294901760
    %6146 = vmatpush1.msra.mxu0 %v6145
    %v6147 = vand.u32 %v2768, 4294901760
    %6148 = vmatprep.subr.mxu0 %v6147
    %v6149 = vand.u32 %v2767, 4294901760
    %6150 = vmatpush1.msra.mxu0 %v6149
    %v6151 = vand.u32 %v2771, 4294901760
    %6152 = vmatprep.subr.mxu0 %v6151
    %v6153 = vand.u32 %v2770, 4294901760
    %6154 = vmatpush1.msra.mxu0 %v6153
    %v6155 = vand.u32 %v2774, 4294901760
    %6156 = vmatprep.subr.mxu0 %v6155
    %v6157 = vand.u32 %v2773, 4294901760
    %6158 = vmatpush1.msra.mxu0 %v6157
    %v6159 = vand.u32 %v2777, 4294901760
    %6160 = vmatprep.subr.mxu0 %v6159
    %v6161 = vand.u32 %v2776, 4294901760
    %6162 = vmatpush1.msra.mxu0 %v6161
    %v6163 = vand.u32 %v2780, 4294901760
    %6164 = vmatprep.subr.mxu0 %v6163
    %v6165 = vand.u32 %v2779, 4294901760
    %6166 = vmatpush1.msra.mxu0 %v6165
    %v6167 = vand.u32 %v2783, 4294901760
    %6168 = vmatprep.subr.mxu0 %v6167
    %v6169 = vand.u32 %v2782, 4294901760
    %6170 = vmatpush1.msra.mxu0 %v6169
    %v6171 = vand.u32 %v2786, 4294901760
    %6172 = vmatprep.subr.mxu0 %v6171
    %v6173 = vand.u32 %v2785, 4294901760
    %6174 = vmatpush1.msra.mxu0 %v6173
    %v6175 = vand.u32 %v2567, 4294901760
    %6176 = vmatprep.mubr.f32.mxu0 %v6175
    %v6177 = vand.u32 %v2566, 4294901760
    %6178 = vmatmul.mubr.f32.gmra.mrb[0].mxu0 %v6177
    %v6179 = vpop.f32.mrb[0].mxu0
    %v6180 = vadd.f32 %v5987, %v6179
    %v6181 = vpop.f32.mrb[0].mxu0
    %v6182 = vadd.f32 %v5989, %v6181
    %v6183 = vand.u32 %v2571, 4294901760
    %6184 = vmatprep.mubr.f32.mxu0 %v6183
    %v6185 = vand.u32 %v2570, 4294901760
    %6186 = vmatmul.mubr.f32.gmra.mrb[0].mxu0 %v6185
    %v6187 = vpop.f32.mrb[0].mxu0
    %v6188 = vadd.f32 %v5995, %v6187
    %v6189 = vpop.f32.mrb[0].mxu0
    %v6190 = vadd.f32 %v5997, %v6189
    %v6191 = vand.u32 %v2575, 4294901760
    %6192 = vmatprep.mubr.f32.mxu0 %v6191
    %v6193 = vand.u32 %v2574, 4294901760
    %6194 = vmatmul.mubr.f32.gmra.mrb[0].mxu0 %v6193
    %v6195 = vpop.f32.mrb[0].mxu0
    %v6196 = vadd.f32 %v6003, %v6195
    %v6197 = vpop.f32.mrb[0].mxu0
    %v6198 = vadd.f32 %v6005, %v6197
    %v6199 = vand.u32 %v2579, 4294901760
    %6200 = vmatprep.mubr.f32.mxu0 %v6199
    %v6201 = vand.u32 %v2578, 4294901760
    %6202 = vmatmul.mubr.f32.gmra.mrb[0].mxu0 %v6201
    %v6203 = vpop.f32.mrb[0].mxu0
    %v6204 = vadd.f32 %v6011, %v6203
    %v6205 = vpop.f32.mrb[0].mxu0
    %v6206 = vadd.f32 %v6013, %v6205
    %v6207 = vand.u32 %v2583, 4294901760
    %6208 = vmatprep.mubr.f32.mxu0 %v6207
    %v6209 = vand.u32 %v2582, 4294901760
    %6210 = vmatmul.mubr.f32.gmra.mrb[0].mxu0 %v6209
    %v6211 = vpop.f32.mrb[0].mxu0
    %v6212 = vadd.f32 %v6019, %v6211
    %v6213 = vpop.f32.mrb[0].mxu0
    %v6214 = vadd.f32 %v6021, %v6213
    %v6215 = vand.u32 %v2587, 4294901760
    %6216 = vmatprep.mubr.f32.mxu0 %v6215
    %v6217 = vand.u32 %v2586, 4294901760
    %6218 = vmatmul.mubr.f32.gmra.mrb[0].mxu0 %v6217
    %v6219 = vpop.f32.mrb[0].mxu0
    %v6220 = vadd.f32 %v6027, %v6219
    %v6221 = vpop.f32.mrb[0].mxu0
    %v6222 = vadd.f32 %v6029, %v6221
    %v6223 = vand.u32 %v2591, 4294901760
    %6224 = vmatprep.mubr.f32.mxu0 %v6223
    %v6225 = vand.u32 %v2590, 4294901760
    %6226 = vmatmul.mubr.f32.gmra.mrb[0].mxu0 %v6225
    %v6227 = vpop.f32.mrb[0].mxu0
    %v6228 = vadd.f32 %v6035, %v6227
    %v6229 = vpop.f32.mrb[0].mxu0
    %v6230 = vadd.f32 %v6037, %v6229
    %v6231 = vand.u32 %v2595, 4294901760
    %6232 = vmatprep.mubr.f32.mxu0 %v6231
    %v6233 = vand.u32 %v2594, 4294901760
    %6234 = vmatmul.mubr.f32.gmra.mrb[0].mxu0 %v6233
    %v6235 = vpop.f32.mrb[0].mxu0
    %v6236 = vadd.f32 %v6043, %v6235
    %v6237 = vpop.f32.mrb[0].mxu0
    %v6238 = vadd.f32 %v6045, %v6237
    %6239 = vdwg.mxu0
    %6240 = vmatprep.subr.mxu0 0.0
    %v6241 = vand.u32 %v2598, 4294901760
    %6242 = vmatpush1.msra.mxu0 %v6241
    %6243 = vmatprep.subr.mxu0 0.0
    %v6244 = vand.u32 %v2601, 4294901760
    %6245 = vmatpush1.msra.mxu0 %v6244
    %6246 = vmatprep.subr.mxu0 0.0
    %v6247 = vand.u32 %v2604, 4294901760
    %6248 = vmatpush1.msra.mxu0 %v6247
    %6249 = vmatprep.subr.mxu0 0.0
    %v6250 = vand.u32 %v2607, 4294901760
    %6251 = vmatpush1.msra.mxu0 %v6250
    %6252 = vmatprep.subr.mxu0 0.0
    %v6253 = vand.u32 %v2610, 4294901760
    %6254 = vmatpush1.msra.mxu0 %v6253
    %6255 = vmatprep.subr.mxu0 0.0
    %v6256 = vand.u32 %v2613, 4294901760
    %6257 = vmatpush1.msra.mxu0 %v6256
    %6258 = vmatprep.subr.mxu0 0.0
    %v6259 = vand.u32 %v2616, 4294901760
    %6260 = vmatpush1.msra.mxu0 %v6259
    %6261 = vmatprep.subr.mxu0 0.0
    %v6262 = vand.u32 %v2619, 4294901760
    %6263 = vmatpush1.msra.mxu0 %v6262
    %6264 = vmatprep.subr.mxu0 0.0
    %v6265 = vand.u32 %v2622, 4294901760
    %6266 = vmatpush1.msra.mxu0 %v6265
    %6267 = vmatprep.subr.mxu0 0.0
    %v6268 = vand.u32 %v2625, 4294901760
    %6269 = vmatpush1.msra.mxu0 %v6268
    %6270 = vmatprep.subr.mxu0 0.0
    %v6271 = vand.u32 %v2628, 4294901760
    %6272 = vmatpush1.msra.mxu0 %v6271
    %6273 = vmatprep.subr.mxu0 0.0
    %v6274 = vand.u32 %v2631, 4294901760
    %6275 = vmatpush1.msra.mxu0 %v6274
    %6276 = vmatprep.subr.mxu0 0.0
    %v6277 = vand.u32 %v2634, 4294901760
    %6278 = vmatpush1.msra.mxu0 %v6277
    %6279 = vmatprep.subr.mxu0 0.0
    %v6280 = vand.u32 %v2637, 4294901760
    %6281 = vmatpush1.msra.mxu0 %v6280
    %6282 = vmatprep.subr.mxu0 0.0
    %v6283 = vand.u32 %v2640, 4294901760
    %6284 = vmatpush1.msra.mxu0 %v6283
    %6285 = vmatprep.subr.mxu0 0.0
    %v6286 = vand.u32 %v2643, 4294901760
    %6287 = vmatpush1.msra.mxu0 %v6286
    %6288 = vmatprep.subr.mxu0 0.0
    %v6289 = vand.u32 %v2646, 4294901760
    %6290 = vmatpush1.msra.mxu0 %v6289
    %6291 = vmatprep.subr.mxu0 0.0
    %v6292 = vand.u32 %v2649, 4294901760
    %6293 = vmatpush1.msra.mxu0 %v6292
    %6294 = vmatprep.subr.mxu0 0.0
    %v6295 = vand.u32 %v2652, 4294901760
    %6296 = vmatpush1.msra.mxu0 %v6295
    %6297 = vmatprep.subr.mxu0 0.0
    %v6298 = vand.u32 %v2655, 4294901760
    %6299 = vmatpush1.msra.mxu0 %v6298
    %6300 = vmatprep.subr.mxu0 0.0
    %v6301 = vand.u32 %v2658, 4294901760
    %6302 = vmatpush1.msra.mxu0 %v6301
    %6303 = vmatprep.subr.mxu0 0.0
    %v6304 = vand.u32 %v2661, 4294901760
    %6305 = vmatpush1.msra.mxu0 %v6304
    %6306 = vmatprep.subr.mxu0 0.0
    %v6307 = vand.u32 %v2664, 4294901760
    %6308 = vmatpush1.msra.mxu0 %v6307
    %6309 = vmatprep.subr.mxu0 0.0
    %v6310 = vand.u32 %v2667, 4294901760
    %6311 = vmatpush1.msra.mxu0 %v6310
    %6312 = vmatprep.subr.mxu0 0.0
    %v6313 = vand.u32 %v2670, 4294901760
    %6314 = vmatpush1.msra.mxu0 %v6313
    %6315 = vmatprep.subr.mxu0 0.0
    %v6316 = vand.u32 %v2673, 4294901760
    %6317 = vmatpush1.msra.mxu0 %v6316
    %6318 = vmatprep.subr.mxu0 0.0
    %v6319 = vand.u32 %v2676, 4294901760
    %6320 = vmatpush1.msra.mxu0 %v6319
    %6321 = vmatprep.subr.mxu0 0.0
    %v6322 = vand.u32 %v2679, 4294901760
    %6323 = vmatpush1.msra.mxu0 %v6322
    %6324 = vmatprep.subr.mxu0 0.0
    %v6325 = vand.u32 %v2682, 4294901760
    %6326 = vmatpush1.msra.mxu0 %v6325
    %6327 = vmatprep.subr.mxu0 0.0
    %v6328 = vand.u32 %v2685, 4294901760
    %6329 = vmatpush1.msra.mxu0 %v6328
    %6330 = vmatprep.subr.mxu0 0.0
    %v6331 = vand.u32 %v2688, 4294901760
    %6332 = vmatpush1.msra.mxu0 %v6331
    %6333 = vmatprep.subr.mxu0 0.0
    %v6334 = vand.u32 %v2691, 4294901760
    %6335 = vmatpush1.msra.mxu0 %v6334
    %v6336 = vand.u32 %v2565, 4294901760
    %v6337 = vsub.f32 %v2565, %v6336
    %v6338 = vand.u32 %v6337, 4294901760
    %v6339 = vsub.f32 %v6337, %v6338
    %v6340 = vand.u32 %v6339, 4294901760
    %6341 = vmatprep.mubr.f32.mxu0 %v6340
    %v6342 = vand.u32 %v2564, 4294901760
    %v6343 = vsub.f32 %v2564, %v6342
    %v6344 = vand.u32 %v6343, 4294901760
    %v6345 = vsub.f32 %v6343, %v6344
    %v6346 = vand.u32 %v6345, 4294901760
    %6347 = vmatmul.mubr.f32.gmra.mrb[0].mxu0 %v6346
    %v6348 = vpop.f32.mrb[0].mxu0
    %v6349 = vadd.f32 %v2800, %v6348
    %v6350 = vpop.f32.mrb[0].mxu0
    %v6351 = vand.u32 %v2569, 4294901760
    %v6352 = vsub.f32 %v2569, %v6351
    %v6353 = vand.u32 %v6352, 4294901760
    %v6354 = vsub.f32 %v6352, %v6353
    %v6355 = vand.u32 %v6354, 4294901760
    %6356 = vmatprep.mubr.f32.mxu0 %v6355
    %v6357 = vand.u32 %v2568, 4294901760
    %v6358 = vsub.f32 %v2568, %v6357
    %v6359 = vand.u32 %v6358, 4294901760
    %v6360 = vsub.f32 %v6358, %v6359
    %v6361 = vand.u32 %v6360, 4294901760
    %6362 = vmatmul.mubr.f32.gmra.mrb[0].mxu0 %v6361
    %v6363 = vpop.f32.mrb[0].mxu0
    %v6364 = vadd.f32 %v2800, %v6363
    %v6365 = vpop.f32.mrb[0].mxu0
    %v6366 = vand.u32 %v2573, 4294901760
    %v6367 = vsub.f32 %v2573, %v6366
    %v6368 = vand.u32 %v6367, 4294901760
    %v6369 = vsub.f32 %v6367, %v6368
    %v6370 = vand.u32 %v6369, 4294901760
    %6371 = vmatprep.mubr.f32.mxu0 %v6370
    %v6372 = vand.u32 %v2572, 4294901760
    %v6373 = vsub.f32 %v2572, %v6372
    %v6374 = vand.u32 %v6373, 4294901760
    %v6375 = vsub.f32 %v6373, %v6374
    %v6376 = vand.u32 %v6375, 4294901760
    %6377 = vmatmul.mubr.f32.gmra.mrb[0].mxu0 %v6376
    %v6378 = vpop.f32.mrb[0].mxu0
    %v6379 = vadd.f32 %v2800, %v6378
    %v6380 = vpop.f32.mrb[0].mxu0
    %v6381 = vand.u32 %v2577, 4294901760
    %v6382 = vsub.f32 %v2577, %v6381
    %v6383 = vand.u32 %v6382, 4294901760
    %v6384 = vsub.f32 %v6382, %v6383
    %v6385 = vand.u32 %v6384, 4294901760
    %6386 = vmatprep.mubr.f32.mxu0 %v6385
    %v6387 = vand.u32 %v2576, 4294901760
    %v6388 = vsub.f32 %v2576, %v6387
    %v6389 = vand.u32 %v6388, 4294901760
    %v6390 = vsub.f32 %v6388, %v6389
    %v6391 = vand.u32 %v6390, 4294901760
    %6392 = vmatmul.mubr.f32.gmra.mrb[0].mxu0 %v6391
    %v6393 = vpop.f32.mrb[0].mxu0
    %v6394 = vadd.f32 %v2800, %v6393
    %v6395 = vpop.f32.mrb[0].mxu0
    %v6396 = vand.u32 %v2581, 4294901760
    %v6397 = vsub.f32 %v2581, %v6396
    %v6398 = vand.u32 %v6397, 4294901760
    %v6399 = vsub.f32 %v6397, %v6398
    %v6400 = vand.u32 %v6399, 4294901760
    %6401 = vmatprep.mubr.f32.mxu0 %v6400
    %v6402 = vand.u32 %v2580, 4294901760
    %v6403 = vsub.f32 %v2580, %v6402
    %v6404 = vand.u32 %v6403, 4294901760
    %v6405 = vsub.f32 %v6403, %v6404
    %v6406 = vand.u32 %v6405, 4294901760
    %6407 = vmatmul.mubr.f32.gmra.mrb[0].mxu0 %v6406
    %v6408 = vpop.f32.mrb[0].mxu0
    %v6409 = vadd.f32 %v2800, %v6408
    %v6410 = vpop.f32.mrb[0].mxu0
    %v6411 = vand.u32 %v2585, 4294901760
    %v6412 = vsub.f32 %v2585, %v6411
    %v6413 = vand.u32 %v6412, 4294901760
    %v6414 = vsub.f32 %v6412, %v6413
    %v6415 = vand.u32 %v6414, 4294901760
    %6416 = vmatprep.mubr.f32.mxu0 %v6415
    %v6417 = vand.u32 %v2584, 4294901760
    %v6418 = vsub.f32 %v2584, %v6417
    %v6419 = vand.u32 %v6418, 4294901760
    %v6420 = vsub.f32 %v6418, %v6419
    %v6421 = vand.u32 %v6420, 4294901760
    %6422 = vmatmul.mubr.f32.gmra.mrb[0].mxu0 %v6421
    %v6423 = vpop.f32.mrb[0].mxu0
    %v6424 = vadd.f32 %v2800, %v6423
    %v6425 = vpop.f32.mrb[0].mxu0
    %v6426 = vand.u32 %v2589, 4294901760
    %v6427 = vsub.f32 %v2589, %v6426
    %v6428 = vand.u32 %v6427, 4294901760
    %v6429 = vsub.f32 %v6427, %v6428
    %v6430 = vand.u32 %v6429, 4294901760
    %6431 = vmatprep.mubr.f32.mxu0 %v6430
    %v6432 = vand.u32 %v2588, 4294901760
    %v6433 = vsub.f32 %v2588, %v6432
    %v6434 = vand.u32 %v6433, 4294901760
    %v6435 = vsub.f32 %v6433, %v6434
    %v6436 = vand.u32 %v6435, 4294901760
    %6437 = vmatmul.mubr.f32.gmra.mrb[0].mxu0 %v6436
    %v6438 = vpop.f32.mrb[0].mxu0
    %v6439 = vadd.f32 %v2800, %v6438
    %v6440 = vpop.f32.mrb[0].mxu0
    %v6441 = vand.u32 %v2593, 4294901760
    %v6442 = vsub.f32 %v2593, %v6441
    %v6443 = vand.u32 %v6442, 4294901760
    %v6444 = vsub.f32 %v6442, %v6443
    %v6445 = vand.u32 %v6444, 4294901760
    %6446 = vmatprep.mubr.f32.mxu0 %v6445
    %v6447 = vand.u32 %v2592, 4294901760
    %v6448 = vsub.f32 %v2592, %v6447
    %v6449 = vand.u32 %v6448, 4294901760
    %v6450 = vsub.f32 %v6448, %v6449
    %v6451 = vand.u32 %v6450, 4294901760
    %6452 = vmatmul.mubr.f32.gmra.mrb[0].mxu0 %v6451
    %v6453 = vpop.f32.mrb[0].mxu0
    %v6454 = vadd.f32 %v2800, %v6453
    %v6455 = vpop.f32.mrb[0].mxu0
    %6456 = vdwg.mxu0
    %6457 = vmatprep.subr.mxu0 0.0
    %v6458 = vand.u32 %v2598, 4294901760
    %v6459 = vsub.f32 %v2598, %v6458
    %v6460 = vand.u32 %v6459, 4294901760
    %v6461 = vsub.f32 %v6459, %v6460
    %v6462 = vand.u32 %v6461, 4294901760
    %6463 = vmatpush1.msra.mxu0 %v6462
    %6464 = vmatprep.subr.mxu0 0.0
    %v6465 = vand.u32 %v2601, 4294901760
    %v6466 = vsub.f32 %v2601, %v6465
    %v6467 = vand.u32 %v6466, 4294901760
    %v6468 = vsub.f32 %v6466, %v6467
    %v6469 = vand.u32 %v6468, 4294901760
    %6470 = vmatpush1.msra.mxu0 %v6469
    %6471 = vmatprep.subr.mxu0 0.0
    %v6472 = vand.u32 %v2604, 4294901760
    %v6473 = vsub.f32 %v2604, %v6472
    %v6474 = vand.u32 %v6473, 4294901760
    %v6475 = vsub.f32 %v6473, %v6474
    %v6476 = vand.u32 %v6475, 4294901760
    %6477 = vmatpush1.msra.mxu0 %v6476
    %6478 = vmatprep.subr.mxu0 0.0
    %v6479 = vand.u32 %v2607, 4294901760
    %v6480 = vsub.f32 %v2607, %v6479
    %v6481 = vand.u32 %v6480, 4294901760
    %v6482 = vsub.f32 %v6480, %v6481
    %v6483 = vand.u32 %v6482, 4294901760
    %6484 = vmatpush1.msra.mxu0 %v6483
    %6485 = vmatprep.subr.mxu0 0.0
    %v6486 = vand.u32 %v2610, 4294901760
    %v6487 = vsub.f32 %v2610, %v6486
    %v6488 = vand.u32 %v6487, 4294901760
    %v6489 = vsub.f32 %v6487, %v6488
    %v6490 = vand.u32 %v6489, 4294901760
    %6491 = vmatpush1.msra.mxu0 %v6490
    %6492 = vmatprep.subr.mxu0 0.0
    %v6493 = vand.u32 %v2613, 4294901760
    %v6494 = vsub.f32 %v2613, %v6493
    %v6495 = vand.u32 %v6494, 4294901760
    %v6496 = vsub.f32 %v6494, %v6495
    %v6497 = vand.u32 %v6496, 4294901760
    %6498 = vmatpush1.msra.mxu0 %v6497
    %6499 = vmatprep.subr.mxu0 0.0
    %v6500 = vand.u32 %v2616, 4294901760
    %v6501 = vsub.f32 %v2616, %v6500
    %v6502 = vand.u32 %v6501, 4294901760
    %v6503 = vsub.f32 %v6501, %v6502
    %v6504 = vand.u32 %v6503, 4294901760
    %6505 = vmatpush1.msra.mxu0 %v6504
    %6506 = vmatprep.subr.mxu0 0.0
    %v6507 = vand.u32 %v2619, 4294901760
    %v6508 = vsub.f32 %v2619, %v6507
    %v6509 = vand.u32 %v6508, 4294901760
    %v6510 = vsub.f32 %v6508, %v6509
    %v6511 = vand.u32 %v6510, 4294901760
    %6512 = vmatpush1.msra.mxu0 %v6511
    %6513 = vmatprep.subr.mxu0 0.0
    %v6514 = vand.u32 %v2622, 4294901760
    %v6515 = vsub.f32 %v2622, %v6514
    %v6516 = vand.u32 %v6515, 4294901760
    %v6517 = vsub.f32 %v6515, %v6516
    %v6518 = vand.u32 %v6517, 4294901760
    %6519 = vmatpush1.msra.mxu0 %v6518
    %6520 = vmatprep.subr.mxu0 0.0
    %v6521 = vand.u32 %v2625, 4294901760
    %v6522 = vsub.f32 %v2625, %v6521
    %v6523 = vand.u32 %v6522, 4294901760
    %v6524 = vsub.f32 %v6522, %v6523
    %v6525 = vand.u32 %v6524, 4294901760
    %6526 = vmatpush1.msra.mxu0 %v6525
    %6527 = vmatprep.subr.mxu0 0.0
    %v6528 = vand.u32 %v2628, 4294901760
    %v6529 = vsub.f32 %v2628, %v6528
    %v6530 = vand.u32 %v6529, 4294901760
    %v6531 = vsub.f32 %v6529, %v6530
    %v6532 = vand.u32 %v6531, 4294901760
    %6533 = vmatpush1.msra.mxu0 %v6532
    %6534 = vmatprep.subr.mxu0 0.0
    %v6535 = vand.u32 %v2631, 4294901760
    %v6536 = vsub.f32 %v2631, %v6535
    %v6537 = vand.u32 %v6536, 4294901760
    %v6538 = vsub.f32 %v6536, %v6537
    %v6539 = vand.u32 %v6538, 4294901760
    %6540 = vmatpush1.msra.mxu0 %v6539
    %6541 = vmatprep.subr.mxu0 0.0
    %v6542 = vand.u32 %v2634, 4294901760
    %v6543 = vsub.f32 %v2634, %v6542
    %v6544 = vand.u32 %v6543, 4294901760
    %v6545 = vsub.f32 %v6543, %v6544
    %v6546 = vand.u32 %v6545, 4294901760
    %6547 = vmatpush1.msra.mxu0 %v6546
    %6548 = vmatprep.subr.mxu0 0.0
    %v6549 = vand.u32 %v2637, 4294901760
    %v6550 = vsub.f32 %v2637, %v6549
    %v6551 = vand.u32 %v6550, 4294901760
    %v6552 = vsub.f32 %v6550, %v6551
    %v6553 = vand.u32 %v6552, 4294901760
    %6554 = vmatpush1.msra.mxu0 %v6553
    %6555 = vmatprep.subr.mxu0 0.0
    %v6556 = vand.u32 %v2640, 4294901760
    %v6557 = vsub.f32 %v2640, %v6556
    %v6558 = vand.u32 %v6557, 4294901760
    %v6559 = vsub.f32 %v6557, %v6558
    %v6560 = vand.u32 %v6559, 4294901760
    %6561 = vmatpush1.msra.mxu0 %v6560
    %6562 = vmatprep.subr.mxu0 0.0
    %v6563 = vand.u32 %v2643, 4294901760
    %v6564 = vsub.f32 %v2643, %v6563
    %v6565 = vand.u32 %v6564, 4294901760
    %v6566 = vsub.f32 %v6564, %v6565
    %v6567 = vand.u32 %v6566, 4294901760
    %6568 = vmatpush1.msra.mxu0 %v6567
    %6569 = vmatprep.subr.mxu0 0.0
    %v6570 = vand.u32 %v2646, 4294901760
    %v6571 = vsub.f32 %v2646, %v6570
    %v6572 = vand.u32 %v6571, 4294901760
    %v6573 = vsub.f32 %v6571, %v6572
    %v6574 = vand.u32 %v6573, 4294901760
    %6575 = vmatpush1.msra.mxu0 %v6574
    %6576 = vmatprep.subr.mxu0 0.0
    %v6577 = vand.u32 %v2649, 4294901760
    %v6578 = vsub.f32 %v2649, %v6577
    %v6579 = vand.u32 %v6578, 4294901760
    %v6580 = vsub.f32 %v6578, %v6579
    %v6581 = vand.u32 %v6580, 4294901760
    %6582 = vmatpush1.msra.mxu0 %v6581
    %6583 = vmatprep.subr.mxu0 0.0
    %v6584 = vand.u32 %v2652, 4294901760
    %v6585 = vsub.f32 %v2652, %v6584
    %v6586 = vand.u32 %v6585, 4294901760
    %v6587 = vsub.f32 %v6585, %v6586
    %v6588 = vand.u32 %v6587, 4294901760
    %6589 = vmatpush1.msra.mxu0 %v6588
    %6590 = vmatprep.subr.mxu0 0.0
    %v6591 = vand.u32 %v2655, 4294901760
    %v6592 = vsub.f32 %v2655, %v6591
    %v6593 = vand.u32 %v6592, 4294901760
    %v6594 = vsub.f32 %v6592, %v6593
    %v6595 = vand.u32 %v6594, 4294901760
    %6596 = vmatpush1.msra.mxu0 %v6595
    %6597 = vmatprep.subr.mxu0 0.0
    %v6598 = vand.u32 %v2658, 4294901760
    %v6599 = vsub.f32 %v2658, %v6598
    %v6600 = vand.u32 %v6599, 4294901760
    %v6601 = vsub.f32 %v6599, %v6600
    %v6602 = vand.u32 %v6601, 4294901760
    %6603 = vmatpush1.msra.mxu0 %v6602
    %6604 = vmatprep.subr.mxu0 0.0
    %v6605 = vand.u32 %v2661, 4294901760
    %v6606 = vsub.f32 %v2661, %v6605
    %v6607 = vand.u32 %v6606, 4294901760
    %v6608 = vsub.f32 %v6606, %v6607
    %v6609 = vand.u32 %v6608, 4294901760
    %6610 = vmatpush1.msra.mxu0 %v6609
    %6611 = vmatprep.subr.mxu0 0.0
    %v6612 = vand.u32 %v2664, 4294901760
    %v6613 = vsub.f32 %v2664, %v6612
    %v6614 = vand.u32 %v6613, 4294901760
    %v6615 = vsub.f32 %v6613, %v6614
    %v6616 = vand.u32 %v6615, 4294901760
    %6617 = vmatpush1.msra.mxu0 %v6616
    %6618 = vmatprep.subr.mxu0 0.0
    %v6619 = vand.u32 %v2667, 4294901760
    %v6620 = vsub.f32 %v2667, %v6619
    %v6621 = vand.u32 %v6620, 4294901760
    %v6622 = vsub.f32 %v6620, %v6621
    %v6623 = vand.u32 %v6622, 4294901760
    %6624 = vmatpush1.msra.mxu0 %v6623
    %6625 = vmatprep.subr.mxu0 0.0
    %v6626 = vand.u32 %v2670, 4294901760
    %v6627 = vsub.f32 %v2670, %v6626
    %v6628 = vand.u32 %v6627, 4294901760
    %v6629 = vsub.f32 %v6627, %v6628
    %v6630 = vand.u32 %v6629, 4294901760
    %6631 = vmatpush1.msra.mxu0 %v6630
    %6632 = vmatprep.subr.mxu0 0.0
    %v6633 = vand.u32 %v2673, 4294901760
    %v6634 = vsub.f32 %v2673, %v6633
    %v6635 = vand.u32 %v6634, 4294901760
    %v6636 = vsub.f32 %v6634, %v6635
    %v6637 = vand.u32 %v6636, 4294901760
    %6638 = vmatpush1.msra.mxu0 %v6637
    %6639 = vmatprep.subr.mxu0 0.0
    %v6640 = vand.u32 %v2676, 4294901760
    %v6641 = vsub.f32 %v2676, %v6640
    %v6642 = vand.u32 %v6641, 4294901760
    %v6643 = vsub.f32 %v6641, %v6642
    %v6644 = vand.u32 %v6643, 4294901760
    %6645 = vmatpush1.msra.mxu0 %v6644
    %6646 = vmatprep.subr.mxu0 0.0
    %v6647 = vand.u32 %v2679, 4294901760
    %v6648 = vsub.f32 %v2679, %v6647
    %v6649 = vand.u32 %v6648, 4294901760
    %v6650 = vsub.f32 %v6648, %v6649
    %v6651 = vand.u32 %v6650, 4294901760
    %6652 = vmatpush1.msra.mxu0 %v6651
    %6653 = vmatprep.subr.mxu0 0.0
    %v6654 = vand.u32 %v2682, 4294901760
    %v6655 = vsub.f32 %v2682, %v6654
    %v6656 = vand.u32 %v6655, 4294901760
    %v6657 = vsub.f32 %v6655, %v6656
    %v6658 = vand.u32 %v6657, 4294901760
    %6659 = vmatpush1.msra.mxu0 %v6658
    %6660 = vmatprep.subr.mxu0 0.0
    %v6661 = vand.u32 %v2685, 4294901760
    %v6662 = vsub.f32 %v2685, %v6661
    %v6663 = vand.u32 %v6662, 4294901760
    %v6664 = vsub.f32 %v6662, %v6663
    %v6665 = vand.u32 %v6664, 4294901760
    %6666 = vmatpush1.msra.mxu0 %v6665
    %6667 = vmatprep.subr.mxu0 0.0
    %v6668 = vand.u32 %v2688, 4294901760
    %v6669 = vsub.f32 %v2688, %v6668
    %v6670 = vand.u32 %v6669, 4294901760
    %v6671 = vsub.f32 %v6669, %v6670
    %v6672 = vand.u32 %v6671, 4294901760
    %6673 = vmatpush1.msra.mxu0 %v6672
    %6674 = vmatprep.subr.mxu0 0.0
    %v6675 = vand.u32 %v2691, 4294901760
    %v6676 = vsub.f32 %v2691, %v6675
    %v6677 = vand.u32 %v6676, 4294901760
    %v6678 = vsub.f32 %v6676, %v6677
    %v6679 = vand.u32 %v6678, 4294901760
    %6680 = vmatpush1.msra.mxu0 %v6679
    %v6681 = vand.u32 %v2565, 4294901760
    %6682 = vmatprep.mubr.f32.mxu0 %v6681
    %v6683 = vand.u32 %v2564, 4294901760
    %6684 = vmatmul.mubr.f32.gmra.mrb[0].mxu0 %v6683
    %v6685 = vpop.f32.mrb[0].mxu0
    %v6686 = vadd.f32 %v6349, %v6685
    %v6687 = vpop.f32.mrb[0].mxu0
    %v6688 = vand.u32 %v2569, 4294901760
    %6689 = vmatprep.mubr.f32.mxu0 %v6688
    %v6690 = vand.u32 %v2568, 4294901760
    %6691 = vmatmul.mubr.f32.gmra.mrb[0].mxu0 %v6690
    %v6692 = vpop.f32.mrb[0].mxu0
    %v6693 = vadd.f32 %v6364, %v6692
    %v6694 = vpop.f32.mrb[0].mxu0
    %v6695 = vand.u32 %v2573, 4294901760
    %6696 = vmatprep.mubr.f32.mxu0 %v6695
    %v6697 = vand.u32 %v2572, 4294901760
    %6698 = vmatmul.mubr.f32.gmra.mrb[0].mxu0 %v6697
    %v6699 = vpop.f32.mrb[0].mxu0
    %v6700 = vadd.f32 %v6379, %v6699
    %v6701 = vpop.f32.mrb[0].mxu0
    %v6702 = vand.u32 %v2577, 4294901760
    %6703 = vmatprep.mubr.f32.mxu0 %v6702
    %v6704 = vand.u32 %v2576, 4294901760
    %6705 = vmatmul.mubr.f32.gmra.mrb[0].mxu0 %v6704
    %v6706 = vpop.f32.mrb[0].mxu0
    %v6707 = vadd.f32 %v6394, %v6706
    %v6708 = vpop.f32.mrb[0].mxu0
    %v6709 = vand.u32 %v2581, 4294901760
    %6710 = vmatprep.mubr.f32.mxu0 %v6709
    %v6711 = vand.u32 %v2580, 4294901760
    %6712 = vmatmul.mubr.f32.gmra.mrb[0].mxu0 %v6711
    %v6713 = vpop.f32.mrb[0].mxu0
    %v6714 = vadd.f32 %v6409, %v6713
    %v6715 = vpop.f32.mrb[0].mxu0
    %v6716 = vand.u32 %v2585, 4294901760
    %6717 = vmatprep.mubr.f32.mxu0 %v6716
    %v6718 = vand.u32 %v2584, 4294901760
    %6719 = vmatmul.mubr.f32.gmra.mrb[0].mxu0 %v6718
    %v6720 = vpop.f32.mrb[0].mxu0
    %v6721 = vadd.f32 %v6424, %v6720
    %v6722 = vpop.f32.mrb[0].mxu0
    %v6723 = vand.u32 %v2589, 4294901760
    %6724 = vmatprep.mubr.f32.mxu0 %v6723
    %v6725 = vand.u32 %v2588, 4294901760
    %6726 = vmatmul.mubr.f32.gmra.mrb[0].mxu0 %v6725
    %v6727 = vpop.f32.mrb[0].mxu0
    %v6728 = vadd.f32 %v6439, %v6727
    %v6729 = vpop.f32.mrb[0].mxu0
    %v6730 = vand.u32 %v2593, 4294901760
    %6731 = vmatprep.mubr.f32.mxu0 %v6730
    %v6732 = vand.u32 %v2592, 4294901760
    %6733 = vmatmul.mubr.f32.gmra.mrb[0].mxu0 %v6732
    %v6734 = vpop.f32.mrb[0].mxu0
    %v6735 = vadd.f32 %v6454, %v6734
    %v6736 = vpop.f32.mrb[0].mxu0
    %6737 = vdwg.mxu0
    %6738 = vmatprep.subr.mxu0 0.0
    %v6739 = vand.u32 %v2598, 4294901760
    %v6740 = vsub.f32 %v2598, %v6739
    %6741 = vmatpush1.msra.mxu0 %v6740
    %6742 = vmatprep.subr.mxu0 0.0
    %v6743 = vand.u32 %v2601, 4294901760
    %v6744 = vsub.f32 %v2601, %v6743
    %6745 = vmatpush1.msra.mxu0 %v6744
    %6746 = vmatprep.subr.mxu0 0.0
    %v6747 = vand.u32 %v2604, 4294901760
    %v6748 = vsub.f32 %v2604, %v6747
    %6749 = vmatpush1.msra.mxu0 %v6748
    %6750 = vmatprep.subr.mxu0 0.0
    %v6751 = vand.u32 %v2607, 4294901760
    %v6752 = vsub.f32 %v2607, %v6751
    %6753 = vmatpush1.msra.mxu0 %v6752
    %6754 = vmatprep.subr.mxu0 0.0
    %v6755 = vand.u32 %v2610, 4294901760
    %v6756 = vsub.f32 %v2610, %v6755
    %6757 = vmatpush1.msra.mxu0 %v6756
    %6758 = vmatprep.subr.mxu0 0.0
    %v6759 = vand.u32 %v2613, 4294901760
    %v6760 = vsub.f32 %v2613, %v6759
    %6761 = vmatpush1.msra.mxu0 %v6760
    %6762 = vmatprep.subr.mxu0 0.0
    %v6763 = vand.u32 %v2616, 4294901760
    %v6764 = vsub.f32 %v2616, %v6763
    %6765 = vmatpush1.msra.mxu0 %v6764
    %6766 = vmatprep.subr.mxu0 0.0
    %v6767 = vand.u32 %v2619, 4294901760
    %v6768 = vsub.f32 %v2619, %v6767
    %6769 = vmatpush1.msra.mxu0 %v6768
    %6770 = vmatprep.subr.mxu0 0.0
    %v6771 = vand.u32 %v2622, 4294901760
    %v6772 = vsub.f32 %v2622, %v6771
    %6773 = vmatpush1.msra.mxu0 %v6772
    %6774 = vmatprep.subr.mxu0 0.0
    %v6775 = vand.u32 %v2625, 4294901760
    %v6776 = vsub.f32 %v2625, %v6775
    %6777 = vmatpush1.msra.mxu0 %v6776
    %6778 = vmatprep.subr.mxu0 0.0
    %v6779 = vand.u32 %v2628, 4294901760
    %v6780 = vsub.f32 %v2628, %v6779
    %6781 = vmatpush1.msra.mxu0 %v6780
    %6782 = vmatprep.subr.mxu0 0.0
    %v6783 = vand.u32 %v2631, 4294901760
    %v6784 = vsub.f32 %v2631, %v6783
    %6785 = vmatpush1.msra.mxu0 %v6784
    %6786 = vmatprep.subr.mxu0 0.0
    %v6787 = vand.u32 %v2634, 4294901760
    %v6788 = vsub.f32 %v2634, %v6787
    %6789 = vmatpush1.msra.mxu0 %v6788
    %6790 = vmatprep.subr.mxu0 0.0
    %v6791 = vand.u32 %v2637, 4294901760
    %v6792 = vsub.f32 %v2637, %v6791
    %6793 = vmatpush1.msra.mxu0 %v6792
    %6794 = vmatprep.subr.mxu0 0.0
    %v6795 = vand.u32 %v2640, 4294901760
    %v6796 = vsub.f32 %v2640, %v6795
    %6797 = vmatpush1.msra.mxu0 %v6796
    %6798 = vmatprep.subr.mxu0 0.0
    %v6799 = vand.u32 %v2643, 4294901760
    %v6800 = vsub.f32 %v2643, %v6799
    %6801 = vmatpush1.msra.mxu0 %v6800
    %6802 = vmatprep.subr.mxu0 0.0
    %v6803 = vand.u32 %v2646, 4294901760
    %v6804 = vsub.f32 %v2646, %v6803
    %6805 = vmatpush1.msra.mxu0 %v6804
    %6806 = vmatprep.subr.mxu0 0.0
    %v6807 = vand.u32 %v2649, 4294901760
    %v6808 = vsub.f32 %v2649, %v6807
    %6809 = vmatpush1.msra.mxu0 %v6808
    %6810 = vmatprep.subr.mxu0 0.0
    %v6811 = vand.u32 %v2652, 4294901760
    %v6812 = vsub.f32 %v2652, %v6811
    %6813 = vmatpush1.msra.mxu0 %v6812
    %6814 = vmatprep.subr.mxu0 0.0
    %v6815 = vand.u32 %v2655, 4294901760
    %v6816 = vsub.f32 %v2655, %v6815
    %6817 = vmatpush1.msra.mxu0 %v6816
    %6818 = vmatprep.subr.mxu0 0.0
    %v6819 = vand.u32 %v2658, 4294901760
    %v6820 = vsub.f32 %v2658, %v6819
    %6821 = vmatpush1.msra.mxu0 %v6820
    %6822 = vmatprep.subr.mxu0 0.0
    %v6823 = vand.u32 %v2661, 4294901760
    %v6824 = vsub.f32 %v2661, %v6823
    %6825 = vmatpush1.msra.mxu0 %v6824
    %6826 = vmatprep.subr.mxu0 0.0
    %v6827 = vand.u32 %v2664, 4294901760
    %v6828 = vsub.f32 %v2664, %v6827
    %6829 = vmatpush1.msra.mxu0 %v6828
    %6830 = vmatprep.subr.mxu0 0.0
    %v6831 = vand.u32 %v2667, 4294901760
    %v6832 = vsub.f32 %v2667, %v6831
    %6833 = vmatpush1.msra.mxu0 %v6832
    %6834 = vmatprep.subr.mxu0 0.0
    %v6835 = vand.u32 %v2670, 4294901760
    %v6836 = vsub.f32 %v2670, %v6835
    %6837 = vmatpush1.msra.mxu0 %v6836
    %6838 = vmatprep.subr.mxu0 0.0
    %v6839 = vand.u32 %v2673, 4294901760
    %v6840 = vsub.f32 %v2673, %v6839
    %6841 = vmatpush1.msra.mxu0 %v6840
    %6842 = vmatprep.subr.mxu0 0.0
    %v6843 = vand.u32 %v2676, 4294901760
    %v6844 = vsub.f32 %v2676, %v6843
    %6845 = vmatpush1.msra.mxu0 %v6844
    %6846 = vmatprep.subr.mxu0 0.0
    %v6847 = vand.u32 %v2679, 4294901760
    %v6848 = vsub.f32 %v2679, %v6847
    %6849 = vmatpush1.msra.mxu0 %v6848
    %6850 = vmatprep.subr.mxu0 0.0
    %v6851 = vand.u32 %v2682, 4294901760
    %v6852 = vsub.f32 %v2682, %v6851
    %6853 = vmatpush1.msra.mxu0 %v6852
    %6854 = vmatprep.subr.mxu0 0.0
    %v6855 = vand.u32 %v2685, 4294901760
    %v6856 = vsub.f32 %v2685, %v6855
    %6857 = vmatpush1.msra.mxu0 %v6856
    %6858 = vmatprep.subr.mxu0 0.0
    %v6859 = vand.u32 %v2688, 4294901760
    %v6860 = vsub.f32 %v2688, %v6859
    %6861 = vmatpush1.msra.mxu0 %v6860
    %6862 = vmatprep.subr.mxu0 0.0
    %v6863 = vand.u32 %v2691, 4294901760
    %v6864 = vsub.f32 %v2691, %v6863
    %6865 = vmatpush1.msra.mxu0 %v6864
    %v6866 = vand.u32 %v2565, 4294901760
    %v6867 = vsub.f32 %v2565, %v6866
    %6868 = vmatprep.mubr.f32.mxu0 %v6867
    %v6869 = vand.u32 %v2564, 4294901760
    %v6870 = vsub.f32 %v2564, %v6869
    %6871 = vmatmul.mubr.f32.gmra.mrb[0].mxu0 %v6870
    %v6872 = vpop.f32.mrb[0].mxu0
    %v6873 = vadd.f32 %v6686, %v6872
    %v6874 = vpop.f32.mrb[0].mxu0
    %v6875 = vand.u32 %v2569, 4294901760
    %v6876 = vsub.f32 %v2569, %v6875
    %6877 = vmatprep.mubr.f32.mxu0 %v6876
    %v6878 = vand.u32 %v2568, 4294901760
    %v6879 = vsub.f32 %v2568, %v6878
    %6880 = vmatmul.mubr.f32.gmra.mrb[0].mxu0 %v6879
    %v6881 = vpop.f32.mrb[0].mxu0
    %v6882 = vadd.f32 %v6693, %v6881
    %v6883 = vpop.f32.mrb[0].mxu0
    %v6884 = vand.u32 %v2573, 4294901760
    %v6885 = vsub.f32 %v2573, %v6884
    %6886 = vmatprep.mubr.f32.mxu0 %v6885
    %v6887 = vand.u32 %v2572, 4294901760
    %v6888 = vsub.f32 %v2572, %v6887
    %6889 = vmatmul.mubr.f32.gmra.mrb[0].mxu0 %v6888
    %v6890 = vpop.f32.mrb[0].mxu0
    %v6891 = vadd.f32 %v6700, %v6890
    %v6892 = vpop.f32.mrb[0].mxu0
    %v6893 = vand.u32 %v2577, 4294901760
    %v6894 = vsub.f32 %v2577, %v6893
    %6895 = vmatprep.mubr.f32.mxu0 %v6894
    %v6896 = vand.u32 %v2576, 4294901760
    %v6897 = vsub.f32 %v2576, %v6896
    %6898 = vmatmul.mubr.f32.gmra.mrb[0].mxu0 %v6897
    %v6899 = vpop.f32.mrb[0].mxu0
    %v6900 = vadd.f32 %v6707, %v6899
    %v6901 = vpop.f32.mrb[0].mxu0
    %v6902 = vand.u32 %v2581, 4294901760
    %v6903 = vsub.f32 %v2581, %v6902
    %6904 = vmatprep.mubr.f32.mxu0 %v6903
    %v6905 = vand.u32 %v2580, 4294901760
    %v6906 = vsub.f32 %v2580, %v6905
    %6907 = vmatmul.mubr.f32.gmra.mrb[0].mxu0 %v6906
    %v6908 = vpop.f32.mrb[0].mxu0
    %v6909 = vadd.f32 %v6714, %v6908
    %v6910 = vpop.f32.mrb[0].mxu0
    %v6911 = vand.u32 %v2585, 4294901760
    %v6912 = vsub.f32 %v2585, %v6911
    %6913 = vmatprep.mubr.f32.mxu0 %v6912
    %v6914 = vand.u32 %v2584, 4294901760
    %v6915 = vsub.f32 %v2584, %v6914
    %6916 = vmatmul.mubr.f32.gmra.mrb[0].mxu0 %v6915
    %v6917 = vpop.f32.mrb[0].mxu0
    %v6918 = vadd.f32 %v6721, %v6917
    %v6919 = vpop.f32.mrb[0].mxu0
    %v6920 = vand.u32 %v2589, 4294901760
    %v6921 = vsub.f32 %v2589, %v6920
    %6922 = vmatprep.mubr.f32.mxu0 %v6921
    %v6923 = vand.u32 %v2588, 4294901760
    %v6924 = vsub.f32 %v2588, %v6923
    %6925 = vmatmul.mubr.f32.gmra.mrb[0].mxu0 %v6924
    %v6926 = vpop.f32.mrb[0].mxu0
    %v6927 = vadd.f32 %v6728, %v6926
    %v6928 = vpop.f32.mrb[0].mxu0
    %v6929 = vand.u32 %v2593, 4294901760
    %v6930 = vsub.f32 %v2593, %v6929
    %6931 = vmatprep.mubr.f32.mxu0 %v6930
    %v6932 = vand.u32 %v2592, 4294901760
    %v6933 = vsub.f32 %v2592, %v6932
    %6934 = vmatmul.mubr.f32.gmra.mrb[0].mxu0 %v6933
    %v6935 = vpop.f32.mrb[0].mxu0
    %v6936 = vadd.f32 %v6735, %v6935
    %v6937 = vpop.f32.mrb[0].mxu0
    %6938 = vdwg.mxu0
    %6939 = vmatprep.subr.mxu0 0.0
    %v6940 = vand.u32 %v2598, 4294901760
    %6941 = vmatpush1.msra.mxu0 %v6940
    %6942 = vmatprep.subr.mxu0 0.0
    %v6943 = vand.u32 %v2601, 4294901760
    %6944 = vmatpush1.msra.mxu0 %v6943
    %6945 = vmatprep.subr.mxu0 0.0
    %v6946 = vand.u32 %v2604, 4294901760
    %6947 = vmatpush1.msra.mxu0 %v6946
    %6948 = vmatprep.subr.mxu0 0.0
    %v6949 = vand.u32 %v2607, 4294901760
    %6950 = vmatpush1.msra.mxu0 %v6949
    %6951 = vmatprep.subr.mxu0 0.0
    %v6952 = vand.u32 %v2610, 4294901760
    %6953 = vmatpush1.msra.mxu0 %v6952
    %6954 = vmatprep.subr.mxu0 0.0
    %v6955 = vand.u32 %v2613, 4294901760
    %6956 = vmatpush1.msra.mxu0 %v6955
    %6957 = vmatprep.subr.mxu0 0.0
    %v6958 = vand.u32 %v2616, 4294901760
    %6959 = vmatpush1.msra.mxu0 %v6958
    %6960 = vmatprep.subr.mxu0 0.0
    %v6961 = vand.u32 %v2619, 4294901760
    %6962 = vmatpush1.msra.mxu0 %v6961
    %6963 = vmatprep.subr.mxu0 0.0
    %v6964 = vand.u32 %v2622, 4294901760
    %6965 = vmatpush1.msra.mxu0 %v6964
    %6966 = vmatprep.subr.mxu0 0.0
    %v6967 = vand.u32 %v2625, 4294901760
    %6968 = vmatpush1.msra.mxu0 %v6967
    %6969 = vmatprep.subr.mxu0 0.0
    %v6970 = vand.u32 %v2628, 4294901760
    %6971 = vmatpush1.msra.mxu0 %v6970
    %6972 = vmatprep.subr.mxu0 0.0
    %v6973 = vand.u32 %v2631, 4294901760
    %6974 = vmatpush1.msra.mxu0 %v6973
    %6975 = vmatprep.subr.mxu0 0.0
    %v6976 = vand.u32 %v2634, 4294901760
    %6977 = vmatpush1.msra.mxu0 %v6976
    %6978 = vmatprep.subr.mxu0 0.0
    %v6979 = vand.u32 %v2637, 4294901760
    %6980 = vmatpush1.msra.mxu0 %v6979
    %6981 = vmatprep.subr.mxu0 0.0
    %v6982 = vand.u32 %v2640, 4294901760
    %6983 = vmatpush1.msra.mxu0 %v6982
    %6984 = vmatprep.subr.mxu0 0.0
    %v6985 = vand.u32 %v2643, 4294901760
    %6986 = vmatpush1.msra.mxu0 %v6985
    %6987 = vmatprep.subr.mxu0 0.0
    %v6988 = vand.u32 %v2646, 4294901760
    %6989 = vmatpush1.msra.mxu0 %v6988
    %6990 = vmatprep.subr.mxu0 0.0
    %v6991 = vand.u32 %v2649, 4294901760
    %6992 = vmatpush1.msra.mxu0 %v6991
    %6993 = vmatprep.subr.mxu0 0.0
    %v6994 = vand.u32 %v2652, 4294901760
    %6995 = vmatpush1.msra.mxu0 %v6994
    %6996 = vmatprep.subr.mxu0 0.0
    %v6997 = vand.u32 %v2655, 4294901760
    %6998 = vmatpush1.msra.mxu0 %v6997
    %6999 = vmatprep.subr.mxu0 0.0
    %v7000 = vand.u32 %v2658, 4294901760
    %7001 = vmatpush1.msra.mxu0 %v7000
    %7002 = vmatprep.subr.mxu0 0.0
    %v7003 = vand.u32 %v2661, 4294901760
    %7004 = vmatpush1.msra.mxu0 %v7003
    %7005 = vmatprep.subr.mxu0 0.0
    %v7006 = vand.u32 %v2664, 4294901760
    %7007 = vmatpush1.msra.mxu0 %v7006
    %7008 = vmatprep.subr.mxu0 0.0
    %v7009 = vand.u32 %v2667, 4294901760
    %7010 = vmatpush1.msra.mxu0 %v7009
    %7011 = vmatprep.subr.mxu0 0.0
    %v7012 = vand.u32 %v2670, 4294901760
    %7013 = vmatpush1.msra.mxu0 %v7012
    %7014 = vmatprep.subr.mxu0 0.0
    %v7015 = vand.u32 %v2673, 4294901760
    %7016 = vmatpush1.msra.mxu0 %v7015
    %7017 = vmatprep.subr.mxu0 0.0
    %v7018 = vand.u32 %v2676, 4294901760
    %7019 = vmatpush1.msra.mxu0 %v7018
    %7020 = vmatprep.subr.mxu0 0.0
    %v7021 = vand.u32 %v2679, 4294901760
    %7022 = vmatpush1.msra.mxu0 %v7021
    %7023 = vmatprep.subr.mxu0 0.0
    %v7024 = vand.u32 %v2682, 4294901760
    %7025 = vmatpush1.msra.mxu0 %v7024
    %7026 = vmatprep.subr.mxu0 0.0
    %v7027 = vand.u32 %v2685, 4294901760
    %7028 = vmatpush1.msra.mxu0 %v7027
    %7029 = vmatprep.subr.mxu0 0.0
    %v7030 = vand.u32 %v2688, 4294901760
    %7031 = vmatpush1.msra.mxu0 %v7030
    %7032 = vmatprep.subr.mxu0 0.0
    %v7033 = vand.u32 %v2691, 4294901760
    %7034 = vmatpush1.msra.mxu0 %v7033
    %v7035 = vand.u32 %v2565, 4294901760
    %v7036 = vsub.f32 %v2565, %v7035
    %v7037 = vand.u32 %v7036, 4294901760
    %7038 = vmatprep.mubr.f32.mxu0 %v7037
    %v7039 = vand.u32 %v2564, 4294901760
    %v7040 = vsub.f32 %v2564, %v7039
    %v7041 = vand.u32 %v7040, 4294901760
    %7042 = vmatmul.mubr.f32.gmra.mrb[0].mxu0 %v7041
    %v7043 = vpop.f32.mrb[0].mxu0
    %v7044 = vadd.f32 %v6873, %v7043
    %v7045 = vpop.f32.mrb[0].mxu0
    %v7046 = vand.u32 %v2569, 4294901760
    %v7047 = vsub.f32 %v2569, %v7046
    %v7048 = vand.u32 %v7047, 4294901760
    %7049 = vmatprep.mubr.f32.mxu0 %v7048
    %v7050 = vand.u32 %v2568, 4294901760
    %v7051 = vsub.f32 %v2568, %v7050
    %v7052 = vand.u32 %v7051, 4294901760
    %7053 = vmatmul.mubr.f32.gmra.mrb[0].mxu0 %v7052
    %v7054 = vpop.f32.mrb[0].mxu0
    %v7055 = vadd.f32 %v6882, %v7054
    %v7056 = vpop.f32.mrb[0].mxu0
    %v7057 = vand.u32 %v2573, 4294901760
    %v7058 = vsub.f32 %v2573, %v7057
    %v7059 = vand.u32 %v7058, 4294901760
    %7060 = vmatprep.mubr.f32.mxu0 %v7059
    %v7061 = vand.u32 %v2572, 4294901760
    %v7062 = vsub.f32 %v2572, %v7061
    %v7063 = vand.u32 %v7062, 4294901760
    %7064 = vmatmul.mubr.f32.gmra.mrb[0].mxu0 %v7063
    %v7065 = vpop.f32.mrb[0].mxu0
    %v7066 = vadd.f32 %v6891, %v7065
    %v7067 = vpop.f32.mrb[0].mxu0
    %v7068 = vand.u32 %v2577, 4294901760
    %v7069 = vsub.f32 %v2577, %v7068
    %v7070 = vand.u32 %v7069, 4294901760
    %7071 = vmatprep.mubr.f32.mxu0 %v7070
    %v7072 = vand.u32 %v2576, 4294901760
    %v7073 = vsub.f32 %v2576, %v7072
    %v7074 = vand.u32 %v7073, 4294901760
    %7075 = vmatmul.mubr.f32.gmra.mrb[0].mxu0 %v7074
    %v7076 = vpop.f32.mrb[0].mxu0
    %v7077 = vadd.f32 %v6900, %v7076
    %v7078 = vpop.f32.mrb[0].mxu0
    %v7079 = vand.u32 %v2581, 4294901760
    %v7080 = vsub.f32 %v2581, %v7079
    %v7081 = vand.u32 %v7080, 4294901760
    %7082 = vmatprep.mubr.f32.mxu0 %v7081
    %v7083 = vand.u32 %v2580, 4294901760
    %v7084 = vsub.f32 %v2580, %v7083
    %v7085 = vand.u32 %v7084, 4294901760
    %7086 = vmatmul.mubr.f32.gmra.mrb[0].mxu0 %v7085
    %v7087 = vpop.f32.mrb[0].mxu0
    %v7088 = vadd.f32 %v6909, %v7087
    %v7089 = vpop.f32.mrb[0].mxu0
    %v7090 = vand.u32 %v2585, 4294901760
    %v7091 = vsub.f32 %v2585, %v7090
    %v7092 = vand.u32 %v7091, 4294901760
    %7093 = vmatprep.mubr.f32.mxu0 %v7092
    %v7094 = vand.u32 %v2584, 4294901760
    %v7095 = vsub.f32 %v2584, %v7094
    %v7096 = vand.u32 %v7095, 4294901760
    %7097 = vmatmul.mubr.f32.gmra.mrb[0].mxu0 %v7096
    %v7098 = vpop.f32.mrb[0].mxu0
    %v7099 = vadd.f32 %v6918, %v7098
    %v7100 = vpop.f32.mrb[0].mxu0
    %v7101 = vand.u32 %v2589, 4294901760
    %v7102 = vsub.f32 %v2589, %v7101
    %v7103 = vand.u32 %v7102, 4294901760
    %7104 = vmatprep.mubr.f32.mxu0 %v7103
    %v7105 = vand.u32 %v2588, 4294901760
    %v7106 = vsub.f32 %v2588, %v7105
    %v7107 = vand.u32 %v7106, 4294901760
    %7108 = vmatmul.mubr.f32.gmra.mrb[0].mxu0 %v7107
    %v7109 = vpop.f32.mrb[0].mxu0
    %v7110 = vadd.f32 %v6927, %v7109
    %v7111 = vpop.f32.mrb[0].mxu0
    %v7112 = vand.u32 %v2593, 4294901760
    %v7113 = vsub.f32 %v2593, %v7112
    %v7114 = vand.u32 %v7113, 4294901760
    %7115 = vmatprep.mubr.f32.mxu0 %v7114
    %v7116 = vand.u32 %v2592, 4294901760
    %v7117 = vsub.f32 %v2592, %v7116
    %v7118 = vand.u32 %v7117, 4294901760
    %7119 = vmatmul.mubr.f32.gmra.mrb[0].mxu0 %v7118
    %v7120 = vpop.f32.mrb[0].mxu0
    %v7121 = vadd.f32 %v6936, %v7120
    %v7122 = vpop.f32.mrb[0].mxu0
    %7123 = vdwg.mxu0
    %7124 = vmatprep.subr.mxu0 0.0
    %v7125 = vand.u32 %v2598, 4294901760
    %v7126 = vsub.f32 %v2598, %v7125
    %v7127 = vand.u32 %v7126, 4294901760
    %7128 = vmatpush1.msra.mxu0 %v7127
    %7129 = vmatprep.subr.mxu0 0.0
    %v7130 = vand.u32 %v2601, 4294901760
    %v7131 = vsub.f32 %v2601, %v7130
    %v7132 = vand.u32 %v7131, 4294901760
    %7133 = vmatpush1.msra.mxu0 %v7132
    %7134 = vmatprep.subr.mxu0 0.0
    %v7135 = vand.u32 %v2604, 4294901760
    %v7136 = vsub.f32 %v2604, %v7135
    %v7137 = vand.u32 %v7136, 4294901760
    %7138 = vmatpush1.msra.mxu0 %v7137
    %7139 = vmatprep.subr.mxu0 0.0
    %v7140 = vand.u32 %v2607, 4294901760
    %v7141 = vsub.f32 %v2607, %v7140
    %v7142 = vand.u32 %v7141, 4294901760
    %7143 = vmatpush1.msra.mxu0 %v7142
    %7144 = vmatprep.subr.mxu0 0.0
    %v7145 = vand.u32 %v2610, 4294901760
    %v7146 = vsub.f32 %v2610, %v7145
    %v7147 = vand.u32 %v7146, 4294901760
    %7148 = vmatpush1.msra.mxu0 %v7147
    %7149 = vmatprep.subr.mxu0 0.0
    %v7150 = vand.u32 %v2613, 4294901760
    %v7151 = vsub.f32 %v2613, %v7150
    %v7152 = vand.u32 %v7151, 4294901760
    %7153 = vmatpush1.msra.mxu0 %v7152
    %7154 = vmatprep.subr.mxu0 0.0
    %v7155 = vand.u32 %v2616, 4294901760
    %v7156 = vsub.f32 %v2616, %v7155
    %v7157 = vand.u32 %v7156, 4294901760
    %7158 = vmatpush1.msra.mxu0 %v7157
    %7159 = vmatprep.subr.mxu0 0.0
    %v7160 = vand.u32 %v2619, 4294901760
    %v7161 = vsub.f32 %v2619, %v7160
    %v7162 = vand.u32 %v7161, 4294901760
    %7163 = vmatpush1.msra.mxu0 %v7162
    %7164 = vmatprep.subr.mxu0 0.0
    %v7165 = vand.u32 %v2622, 4294901760
    %v7166 = vsub.f32 %v2622, %v7165
    %v7167 = vand.u32 %v7166, 4294901760
    %7168 = vmatpush1.msra.mxu0 %v7167
    %7169 = vmatprep.subr.mxu0 0.0
    %v7170 = vand.u32 %v2625, 4294901760
    %v7171 = vsub.f32 %v2625, %v7170
    %v7172 = vand.u32 %v7171, 4294901760
    %7173 = vmatpush1.msra.mxu0 %v7172
    %7174 = vmatprep.subr.mxu0 0.0
    %v7175 = vand.u32 %v2628, 4294901760
    %v7176 = vsub.f32 %v2628, %v7175
    %v7177 = vand.u32 %v7176, 4294901760
    %7178 = vmatpush1.msra.mxu0 %v7177
    %7179 = vmatprep.subr.mxu0 0.0
    %v7180 = vand.u32 %v2631, 4294901760
    %v7181 = vsub.f32 %v2631, %v7180
    %v7182 = vand.u32 %v7181, 4294901760
    %7183 = vmatpush1.msra.mxu0 %v7182
    %7184 = vmatprep.subr.mxu0 0.0
    %v7185 = vand.u32 %v2634, 4294901760
    %v7186 = vsub.f32 %v2634, %v7185
    %v7187 = vand.u32 %v7186, 4294901760
    %7188 = vmatpush1.msra.mxu0 %v7187
    %7189 = vmatprep.subr.mxu0 0.0
    %v7190 = vand.u32 %v2637, 4294901760
    %v7191 = vsub.f32 %v2637, %v7190
    %v7192 = vand.u32 %v7191, 4294901760
    %7193 = vmatpush1.msra.mxu0 %v7192
    %7194 = vmatprep.subr.mxu0 0.0
    %v7195 = vand.u32 %v2640, 4294901760
    %v7196 = vsub.f32 %v2640, %v7195
    %v7197 = vand.u32 %v7196, 4294901760
    %7198 = vmatpush1.msra.mxu0 %v7197
    %7199 = vmatprep.subr.mxu0 0.0
    %v7200 = vand.u32 %v2643, 4294901760
    %v7201 = vsub.f32 %v2643, %v7200
    %v7202 = vand.u32 %v7201, 4294901760
    %7203 = vmatpush1.msra.mxu0 %v7202
    %7204 = vmatprep.subr.mxu0 0.0
    %v7205 = vand.u32 %v2646, 4294901760
    %v7206 = vsub.f32 %v2646, %v7205
    %v7207 = vand.u32 %v7206, 4294901760
    %7208 = vmatpush1.msra.mxu0 %v7207
    %7209 = vmatprep.subr.mxu0 0.0
    %v7210 = vand.u32 %v2649, 4294901760
    %v7211 = vsub.f32 %v2649, %v7210
    %v7212 = vand.u32 %v7211, 4294901760
    %7213 = vmatpush1.msra.mxu0 %v7212
    %7214 = vmatprep.subr.mxu0 0.0
    %v7215 = vand.u32 %v2652, 4294901760
    %v7216 = vsub.f32 %v2652, %v7215
    %v7217 = vand.u32 %v7216, 4294901760
    %7218 = vmatpush1.msra.mxu0 %v7217
    %7219 = vmatprep.subr.mxu0 0.0
    %v7220 = vand.u32 %v2655, 4294901760
    %v7221 = vsub.f32 %v2655, %v7220
    %v7222 = vand.u32 %v7221, 4294901760
    %7223 = vmatpush1.msra.mxu0 %v7222
    %7224 = vmatprep.subr.mxu0 0.0
    %v7225 = vand.u32 %v2658, 4294901760
    %v7226 = vsub.f32 %v2658, %v7225
    %v7227 = vand.u32 %v7226, 4294901760
    %7228 = vmatpush1.msra.mxu0 %v7227
    %7229 = vmatprep.subr.mxu0 0.0
    %v7230 = vand.u32 %v2661, 4294901760
    %v7231 = vsub.f32 %v2661, %v7230
    %v7232 = vand.u32 %v7231, 4294901760
    %7233 = vmatpush1.msra.mxu0 %v7232
    %7234 = vmatprep.subr.mxu0 0.0
    %v7235 = vand.u32 %v2664, 4294901760
    %v7236 = vsub.f32 %v2664, %v7235
    %v7237 = vand.u32 %v7236, 4294901760
    %7238 = vmatpush1.msra.mxu0 %v7237
    %7239 = vmatprep.subr.mxu0 0.0
    %v7240 = vand.u32 %v2667, 4294901760
    %v7241 = vsub.f32 %v2667, %v7240
    %v7242 = vand.u32 %v7241, 4294901760
    %7243 = vmatpush1.msra.mxu0 %v7242
    %7244 = vmatprep.subr.mxu0 0.0
    %v7245 = vand.u32 %v2670, 4294901760
    %v7246 = vsub.f32 %v2670, %v7245
    %v7247 = vand.u32 %v7246, 4294901760
    %7248 = vmatpush1.msra.mxu0 %v7247
    %7249 = vmatprep.subr.mxu0 0.0
    %v7250 = vand.u32 %v2673, 4294901760
    %v7251 = vsub.f32 %v2673, %v7250
    %v7252 = vand.u32 %v7251, 4294901760
    %7253 = vmatpush1.msra.mxu0 %v7252
    %7254 = vmatprep.subr.mxu0 0.0
    %v7255 = vand.u32 %v2676, 4294901760
    %v7256 = vsub.f32 %v2676, %v7255
    %v7257 = vand.u32 %v7256, 4294901760
    %7258 = vmatpush1.msra.mxu0 %v7257
    %7259 = vmatprep.subr.mxu0 0.0
    %v7260 = vand.u32 %v2679, 4294901760
    %v7261 = vsub.f32 %v2679, %v7260
    %v7262 = vand.u32 %v7261, 4294901760
    %7263 = vmatpush1.msra.mxu0 %v7262
    %7264 = vmatprep.subr.mxu0 0.0
    %v7265 = vand.u32 %v2682, 4294901760
    %v7266 = vsub.f32 %v2682, %v7265
    %v7267 = vand.u32 %v7266, 4294901760
    %7268 = vmatpush1.msra.mxu0 %v7267
    %7269 = vmatprep.subr.mxu0 0.0
    %v7270 = vand.u32 %v2685, 4294901760
    %v7271 = vsub.f32 %v2685, %v7270
    %v7272 = vand.u32 %v7271, 4294901760
    %7273 = vmatpush1.msra.mxu0 %v7272
    %7274 = vmatprep.subr.mxu0 0.0
    %v7275 = vand.u32 %v2688, 4294901760
    %v7276 = vsub.f32 %v2688, %v7275
    %v7277 = vand.u32 %v7276, 4294901760
    %7278 = vmatpush1.msra.mxu0 %v7277
    %7279 = vmatprep.subr.mxu0 0.0
    %v7280 = vand.u32 %v2691, 4294901760
    %v7281 = vsub.f32 %v2691, %v7280
    %v7282 = vand.u32 %v7281, 4294901760
    %7283 = vmatpush1.msra.mxu0 %v7282
    %v7284 = vand.u32 %v2565, 4294901760
    %7285 = vmatprep.mubr.f32.mxu0 %v7284
    %v7286 = vand.u32 %v2564, 4294901760
    %7287 = vmatmul.mubr.f32.gmra.mrb[0].mxu0 %v7286
    %v7288 = vpop.f32.mrb[0].mxu0
    %v7289 = vadd.f32 %v7044, %v7288
    %v7290 = vpop.f32.mrb[0].mxu0
    %v7291 = vand.u32 %v2569, 4294901760
    %7292 = vmatprep.mubr.f32.mxu0 %v7291
    %v7293 = vand.u32 %v2568, 4294901760
    %7294 = vmatmul.mubr.f32.gmra.mrb[0].mxu0 %v7293
    %v7295 = vpop.f32.mrb[0].mxu0
    %v7296 = vadd.f32 %v7055, %v7295
    %v7297 = vpop.f32.mrb[0].mxu0
    %v7298 = vand.u32 %v2573, 4294901760
    %7299 = vmatprep.mubr.f32.mxu0 %v7298
    %v7300 = vand.u32 %v2572, 4294901760
    %7301 = vmatmul.mubr.f32.gmra.mrb[0].mxu0 %v7300
    %v7302 = vpop.f32.mrb[0].mxu0
    %v7303 = vadd.f32 %v7066, %v7302
    %v7304 = vpop.f32.mrb[0].mxu0
    %v7305 = vand.u32 %v2577, 4294901760
    %7306 = vmatprep.mubr.f32.mxu0 %v7305
    %v7307 = vand.u32 %v2576, 4294901760
    %7308 = vmatmul.mubr.f32.gmra.mrb[0].mxu0 %v7307
    %v7309 = vpop.f32.mrb[0].mxu0
    %v7310 = vadd.f32 %v7077, %v7309
    %v7311 = vpop.f32.mrb[0].mxu0
    %v7312 = vand.u32 %v2581, 4294901760
    %7313 = vmatprep.mubr.f32.mxu0 %v7312
    %v7314 = vand.u32 %v2580, 4294901760
    %7315 = vmatmul.mubr.f32.gmra.mrb[0].mxu0 %v7314
    %v7316 = vpop.f32.mrb[0].mxu0
    %v7317 = vadd.f32 %v7088, %v7316
    %v7318 = vpop.f32.mrb[0].mxu0
    %v7319 = vand.u32 %v2585, 4294901760
    %7320 = vmatprep.mubr.f32.mxu0 %v7319
    %v7321 = vand.u32 %v2584, 4294901760
    %7322 = vmatmul.mubr.f32.gmra.mrb[0].mxu0 %v7321
    %v7323 = vpop.f32.mrb[0].mxu0
    %v7324 = vadd.f32 %v7099, %v7323
    %v7325 = vpop.f32.mrb[0].mxu0
    %v7326 = vand.u32 %v2589, 4294901760
    %7327 = vmatprep.mubr.f32.mxu0 %v7326
    %v7328 = vand.u32 %v2588, 4294901760
    %7329 = vmatmul.mubr.f32.gmra.mrb[0].mxu0 %v7328
    %v7330 = vpop.f32.mrb[0].mxu0
    %v7331 = vadd.f32 %v7110, %v7330
    %v7332 = vpop.f32.mrb[0].mxu0
    %v7333 = vand.u32 %v2593, 4294901760
    %7334 = vmatprep.mubr.f32.mxu0 %v7333
    %v7335 = vand.u32 %v2592, 4294901760
    %7336 = vmatmul.mubr.f32.gmra.mrb[0].mxu0 %v7335
    %v7337 = vpop.f32.mrb[0].mxu0
    %v7338 = vadd.f32 %v7121, %v7337
    %v7339 = vpop.f32.mrb[0].mxu0
    %7340 = vdwg.mxu0
    %7341 = vmatprep.subr.mxu0 0.0
    %v7342 = vand.u32 %v2598, 4294901760
    %7343 = vmatpush1.msra.mxu0 %v7342
    %7344 = vmatprep.subr.mxu0 0.0
    %v7345 = vand.u32 %v2601, 4294901760
    %7346 = vmatpush1.msra.mxu0 %v7345
    %7347 = vmatprep.subr.mxu0 0.0
    %v7348 = vand.u32 %v2604, 4294901760
    %7349 = vmatpush1.msra.mxu0 %v7348
    %7350 = vmatprep.subr.mxu0 0.0
    %v7351 = vand.u32 %v2607, 4294901760
    %7352 = vmatpush1.msra.mxu0 %v7351
    %7353 = vmatprep.subr.mxu0 0.0
    %v7354 = vand.u32 %v2610, 4294901760
    %7355 = vmatpush1.msra.mxu0 %v7354
    %7356 = vmatprep.subr.mxu0 0.0
    %v7357 = vand.u32 %v2613, 4294901760
    %7358 = vmatpush1.msra.mxu0 %v7357
    %7359 = vmatprep.subr.mxu0 0.0
    %v7360 = vand.u32 %v2616, 4294901760
    %7361 = vmatpush1.msra.mxu0 %v7360
    %7362 = vmatprep.subr.mxu0 0.0
    %v7363 = vand.u32 %v2619, 4294901760
    %7364 = vmatpush1.msra.mxu0 %v7363
    %7365 = vmatprep.subr.mxu0 0.0
    %v7366 = vand.u32 %v2622, 4294901760
    %7367 = vmatpush1.msra.mxu0 %v7366
    %7368 = vmatprep.subr.mxu0 0.0
    %v7369 = vand.u32 %v2625, 4294901760
    %7370 = vmatpush1.msra.mxu0 %v7369
    %7371 = vmatprep.subr.mxu0 0.0
    %v7372 = vand.u32 %v2628, 4294901760
    %7373 = vmatpush1.msra.mxu0 %v7372
    %7374 = vmatprep.subr.mxu0 0.0
    %v7375 = vand.u32 %v2631, 4294901760
    %7376 = vmatpush1.msra.mxu0 %v7375
    %7377 = vmatprep.subr.mxu0 0.0
    %v7378 = vand.u32 %v2634, 4294901760
    %7379 = vmatpush1.msra.mxu0 %v7378
    %7380 = vmatprep.subr.mxu0 0.0
    %v7381 = vand.u32 %v2637, 4294901760
    %7382 = vmatpush1.msra.mxu0 %v7381
    %7383 = vmatprep.subr.mxu0 0.0
    %v7384 = vand.u32 %v2640, 4294901760
    %7385 = vmatpush1.msra.mxu0 %v7384
    %7386 = vmatprep.subr.mxu0 0.0
    %v7387 = vand.u32 %v2643, 4294901760
    %7388 = vmatpush1.msra.mxu0 %v7387
    %7389 = vmatprep.subr.mxu0 0.0
    %v7390 = vand.u32 %v2646, 4294901760
    %7391 = vmatpush1.msra.mxu0 %v7390
    %7392 = vmatprep.subr.mxu0 0.0
    %v7393 = vand.u32 %v2649, 4294901760
    %7394 = vmatpush1.msra.mxu0 %v7393
    %7395 = vmatprep.subr.mxu0 0.0
    %v7396 = vand.u32 %v2652, 4294901760
    %7397 = vmatpush1.msra.mxu0 %v7396
    %7398 = vmatprep.subr.mxu0 0.0
    %v7399 = vand.u32 %v2655, 4294901760
    %7400 = vmatpush1.msra.mxu0 %v7399
    %7401 = vmatprep.subr.mxu0 0.0
    %v7402 = vand.u32 %v2658, 4294901760
    %7403 = vmatpush1.msra.mxu0 %v7402
    %7404 = vmatprep.subr.mxu0 0.0
    %v7405 = vand.u32 %v2661, 4294901760
    %7406 = vmatpush1.msra.mxu0 %v7405
    %7407 = vmatprep.subr.mxu0 0.0
    %v7408 = vand.u32 %v2664, 4294901760
    %7409 = vmatpush1.msra.mxu0 %v7408
    %7410 = vmatprep.subr.mxu0 0.0
    %v7411 = vand.u32 %v2667, 4294901760
    %7412 = vmatpush1.msra.mxu0 %v7411
    %7413 = vmatprep.subr.mxu0 0.0
    %v7414 = vand.u32 %v2670, 4294901760
    %7415 = vmatpush1.msra.mxu0 %v7414
    %7416 = vmatprep.subr.mxu0 0.0
    %v7417 = vand.u32 %v2673, 4294901760
    %7418 = vmatpush1.msra.mxu0 %v7417
    %7419 = vmatprep.subr.mxu0 0.0
    %v7420 = vand.u32 %v2676, 4294901760
    %7421 = vmatpush1.msra.mxu0 %v7420
    %7422 = vmatprep.subr.mxu0 0.0
    %v7423 = vand.u32 %v2679, 4294901760
    %7424 = vmatpush1.msra.mxu0 %v7423
    %7425 = vmatprep.subr.mxu0 0.0
    %v7426 = vand.u32 %v2682, 4294901760
    %7427 = vmatpush1.msra.mxu0 %v7426
    %7428 = vmatprep.subr.mxu0 0.0
    %v7429 = vand.u32 %v2685, 4294901760
    %7430 = vmatpush1.msra.mxu0 %v7429
    %7431 = vmatprep.subr.mxu0 0.0
    %v7432 = vand.u32 %v2688, 4294901760
    %7433 = vmatpush1.msra.mxu0 %v7432
    %7434 = vmatprep.subr.mxu0 0.0
    %v7435 = vand.u32 %v2691, 4294901760
    %7436 = vmatpush1.msra.mxu0 %v7435
    %v7437 = vand.u32 %v2565, 4294901760
    %7438 = vmatprep.mubr.f32.mxu0 %v7437
    %v7439 = vand.u32 %v2564, 4294901760
    %7440 = vmatmul.mubr.f32.gmra.mrb[0].mxu0 %v7439
    %v7441 = vpop.f32.mrb[0].mxu0
    %v7442 = vadd.f32 %v7289, %v7441
    %v7443 = vpop.f32.mrb[0].mxu0
    %v7444 = vand.u32 %v2569, 4294901760
    %7445 = vmatprep.mubr.f32.mxu0 %v7444
    %v7446 = vand.u32 %v2568, 4294901760
    %7447 = vmatmul.mubr.f32.gmra.mrb[0].mxu0 %v7446
    %v7448 = vpop.f32.mrb[0].mxu0
    %v7449 = vadd.f32 %v7296, %v7448
    %v7450 = vpop.f32.mrb[0].mxu0
    %v7451 = vand.u32 %v2573, 4294901760
    %7452 = vmatprep.mubr.f32.mxu0 %v7451
    %v7453 = vand.u32 %v2572, 4294901760
    %7454 = vmatmul.mubr.f32.gmra.mrb[0].mxu0 %v7453
    %v7455 = vpop.f32.mrb[0].mxu0
    %v7456 = vadd.f32 %v7303, %v7455
    %v7457 = vpop.f32.mrb[0].mxu0
    %v7458 = vand.u32 %v2577, 4294901760
    %7459 = vmatprep.mubr.f32.mxu0 %v7458
    %v7460 = vand.u32 %v2576, 4294901760
    %7461 = vmatmul.mubr.f32.gmra.mrb[0].mxu0 %v7460
    %v7462 = vpop.f32.mrb[0].mxu0
    %v7463 = vadd.f32 %v7310, %v7462
    %v7464 = vpop.f32.mrb[0].mxu0
    %v7465 = vand.u32 %v2581, 4294901760
    %7466 = vmatprep.mubr.f32.mxu0 %v7465
    %v7467 = vand.u32 %v2580, 4294901760
    %7468 = vmatmul.mubr.f32.gmra.mrb[0].mxu0 %v7467
    %v7469 = vpop.f32.mrb[0].mxu0
    %v7470 = vadd.f32 %v7317, %v7469
    %v7471 = vpop.f32.mrb[0].mxu0
    %v7472 = vand.u32 %v2585, 4294901760
    %7473 = vmatprep.mubr.f32.mxu0 %v7472
    %v7474 = vand.u32 %v2584, 4294901760
    %7475 = vmatmul.mubr.f32.gmra.mrb[0].mxu0 %v7474
    %v7476 = vpop.f32.mrb[0].mxu0
    %v7477 = vadd.f32 %v7324, %v7476
    %v7478 = vpop.f32.mrb[0].mxu0
    %v7479 = vand.u32 %v2589, 4294901760
    %7480 = vmatprep.mubr.f32.mxu0 %v7479
    %v7481 = vand.u32 %v2588, 4294901760
    %7482 = vmatmul.mubr.f32.gmra.mrb[0].mxu0 %v7481
    %v7483 = vpop.f32.mrb[0].mxu0
    %v7484 = vadd.f32 %v7331, %v7483
    %v7485 = vpop.f32.mrb[0].mxu0
    %v7486 = vand.u32 %v2593, 4294901760
    %7487 = vmatprep.mubr.f32.mxu0 %v7486
    %v7488 = vand.u32 %v2592, 4294901760
    %7489 = vmatmul.mubr.f32.gmra.mrb[0].mxu0 %v7488
    %v7490 = vpop.f32.mrb[0].mxu0
    %v7491 = vadd.f32 %v7338, %v7490
    %v7492 = vpop.f32.mrb[0].mxu0
    %7493 = vdwg.mxu0
    %7494 = vmatprep.subr.mxu0 0.0
    %v7495 = vand.u32 %v2694, 4294901760
    %7496 = vmatpush1.msra.mxu0 %v7495
    %7497 = vmatprep.subr.mxu0 0.0
    %v7498 = vand.u32 %v2697, 4294901760
    %7499 = vmatpush1.msra.mxu0 %v7498
    %7500 = vmatprep.subr.mxu0 0.0
    %v7501 = vand.u32 %v2700, 4294901760
    %7502 = vmatpush1.msra.mxu0 %v7501
    %7503 = vmatprep.subr.mxu0 0.0
    %v7504 = vand.u32 %v2703, 4294901760
    %7505 = vmatpush1.msra.mxu0 %v7504
    %7506 = vmatprep.subr.mxu0 0.0
    %v7507 = vand.u32 %v2706, 4294901760
    %7508 = vmatpush1.msra.mxu0 %v7507
    %7509 = vmatprep.subr.mxu0 0.0
    %v7510 = vand.u32 %v2709, 4294901760
    %7511 = vmatpush1.msra.mxu0 %v7510
    %7512 = vmatprep.subr.mxu0 0.0
    %v7513 = vand.u32 %v2712, 4294901760
    %7514 = vmatpush1.msra.mxu0 %v7513
    %7515 = vmatprep.subr.mxu0 0.0
    %v7516 = vand.u32 %v2715, 4294901760
    %7517 = vmatpush1.msra.mxu0 %v7516
    %7518 = vmatprep.subr.mxu0 0.0
    %v7519 = vand.u32 %v2718, 4294901760
    %7520 = vmatpush1.msra.mxu0 %v7519
    %7521 = vmatprep.subr.mxu0 0.0
    %v7522 = vand.u32 %v2721, 4294901760
    %7523 = vmatpush1.msra.mxu0 %v7522
    %7524 = vmatprep.subr.mxu0 0.0
    %v7525 = vand.u32 %v2724, 4294901760
    %7526 = vmatpush1.msra.mxu0 %v7525
    %7527 = vmatprep.subr.mxu0 0.0
    %v7528 = vand.u32 %v2727, 4294901760
    %7529 = vmatpush1.msra.mxu0 %v7528
    %7530 = vmatprep.subr.mxu0 0.0
    %v7531 = vand.u32 %v2730, 4294901760
    %7532 = vmatpush1.msra.mxu0 %v7531
    %7533 = vmatprep.subr.mxu0 0.0
    %v7534 = vand.u32 %v2733, 4294901760
    %7535 = vmatpush1.msra.mxu0 %v7534
    %7536 = vmatprep.subr.mxu0 0.0
    %v7537 = vand.u32 %v2736, 4294901760
    %7538 = vmatpush1.msra.mxu0 %v7537
    %7539 = vmatprep.subr.mxu0 0.0
    %v7540 = vand.u32 %v2739, 4294901760
    %7541 = vmatpush1.msra.mxu0 %v7540
    %7542 = vmatprep.subr.mxu0 0.0
    %v7543 = vand.u32 %v2742, 4294901760
    %7544 = vmatpush1.msra.mxu0 %v7543
    %7545 = vmatprep.subr.mxu0 0.0
    %v7546 = vand.u32 %v2745, 4294901760
    %7547 = vmatpush1.msra.mxu0 %v7546
    %7548 = vmatprep.subr.mxu0 0.0
    %v7549 = vand.u32 %v2748, 4294901760
    %7550 = vmatpush1.msra.mxu0 %v7549
    %7551 = vmatprep.subr.mxu0 0.0
    %v7552 = vand.u32 %v2751, 4294901760
    %7553 = vmatpush1.msra.mxu0 %v7552
    %7554 = vmatprep.subr.mxu0 0.0
    %v7555 = vand.u32 %v2754, 4294901760
    %7556 = vmatpush1.msra.mxu0 %v7555
    %7557 = vmatprep.subr.mxu0 0.0
    %v7558 = vand.u32 %v2757, 4294901760
    %7559 = vmatpush1.msra.mxu0 %v7558
    %7560 = vmatprep.subr.mxu0 0.0
    %v7561 = vand.u32 %v2760, 4294901760
    %7562 = vmatpush1.msra.mxu0 %v7561
    %7563 = vmatprep.subr.mxu0 0.0
    %v7564 = vand.u32 %v2763, 4294901760
    %7565 = vmatpush1.msra.mxu0 %v7564
    %7566 = vmatprep.subr.mxu0 0.0
    %v7567 = vand.u32 %v2766, 4294901760
    %7568 = vmatpush1.msra.mxu0 %v7567
    %7569 = vmatprep.subr.mxu0 0.0
    %v7570 = vand.u32 %v2769, 4294901760
    %7571 = vmatpush1.msra.mxu0 %v7570
    %7572 = vmatprep.subr.mxu0 0.0
    %v7573 = vand.u32 %v2772, 4294901760
    %7574 = vmatpush1.msra.mxu0 %v7573
    %7575 = vmatprep.subr.mxu0 0.0
    %v7576 = vand.u32 %v2775, 4294901760
    %7577 = vmatpush1.msra.mxu0 %v7576
    %7578 = vmatprep.subr.mxu0 0.0
    %v7579 = vand.u32 %v2778, 4294901760
    %7580 = vmatpush1.msra.mxu0 %v7579
    %7581 = vmatprep.subr.mxu0 0.0
    %v7582 = vand.u32 %v2781, 4294901760
    %7583 = vmatpush1.msra.mxu0 %v7582
    %7584 = vmatprep.subr.mxu0 0.0
    %v7585 = vand.u32 %v2784, 4294901760
    %7586 = vmatpush1.msra.mxu0 %v7585
    %7587 = vmatprep.subr.mxu0 0.0
    %v7588 = vand.u32 %v2787, 4294901760
    %7589 = vmatpush1.msra.mxu0 %v7588
    %v7590 = vand.u32 %v2567, 4294901760
    %v7591 = vsub.f32 %v2567, %v7590
    %v7592 = vand.u32 %v7591, 4294901760
    %v7593 = vsub.f32 %v7591, %v7592
    %v7594 = vand.u32 %v7593, 4294901760
    %7595 = vmatprep.mubr.f32.mxu0 %v7594
    %v7596 = vand.u32 %v2566, 4294901760
    %v7597 = vsub.f32 %v2566, %v7596
    %v7598 = vand.u32 %v7597, 4294901760
    %v7599 = vsub.f32 %v7597, %v7598
    %v7600 = vand.u32 %v7599, 4294901760
    %7601 = vmatmul.mubr.f32.gmra.mrb[0].mxu0 %v7600
    %v7602 = vpop.f32.mrb[0].mxu0
    %v7603 = vadd.f32 %v7442, %v7602
    %v7604 = vpop.f32.mrb[0].mxu0
    %v7605 = vand.u32 %v2571, 4294901760
    %v7606 = vsub.f32 %v2571, %v7605
    %v7607 = vand.u32 %v7606, 4294901760
    %v7608 = vsub.f32 %v7606, %v7607
    %v7609 = vand.u32 %v7608, 4294901760
    %7610 = vmatprep.mubr.f32.mxu0 %v7609
    %v7611 = vand.u32 %v2570, 4294901760
    %v7612 = vsub.f32 %v2570, %v7611
    %v7613 = vand.u32 %v7612, 4294901760
    %v7614 = vsub.f32 %v7612, %v7613
    %v7615 = vand.u32 %v7614, 4294901760
    %7616 = vmatmul.mubr.f32.gmra.mrb[0].mxu0 %v7615
    %v7617 = vpop.f32.mrb[0].mxu0
    %v7618 = vadd.f32 %v7449, %v7617
    %v7619 = vpop.f32.mrb[0].mxu0
    %v7620 = vand.u32 %v2575, 4294901760
    %v7621 = vsub.f32 %v2575, %v7620
    %v7622 = vand.u32 %v7621, 4294901760
    %v7623 = vsub.f32 %v7621, %v7622
    %v7624 = vand.u32 %v7623, 4294901760
    %7625 = vmatprep.mubr.f32.mxu0 %v7624
    %v7626 = vand.u32 %v2574, 4294901760
    %v7627 = vsub.f32 %v2574, %v7626
    %v7628 = vand.u32 %v7627, 4294901760
    %v7629 = vsub.f32 %v7627, %v7628
    %v7630 = vand.u32 %v7629, 4294901760
    %7631 = vmatmul.mubr.f32.gmra.mrb[0].mxu0 %v7630
    %v7632 = vpop.f32.mrb[0].mxu0
    %v7633 = vadd.f32 %v7456, %v7632
    %v7634 = vpop.f32.mrb[0].mxu0
    %v7635 = vand.u32 %v2579, 4294901760
    %v7636 = vsub.f32 %v2579, %v7635
    %v7637 = vand.u32 %v7636, 4294901760
    %v7638 = vsub.f32 %v7636, %v7637
    %v7639 = vand.u32 %v7638, 4294901760
    %7640 = vmatprep.mubr.f32.mxu0 %v7639
    %v7641 = vand.u32 %v2578, 4294901760
    %v7642 = vsub.f32 %v2578, %v7641
    %v7643 = vand.u32 %v7642, 4294901760
    %v7644 = vsub.f32 %v7642, %v7643
    %v7645 = vand.u32 %v7644, 4294901760
    %7646 = vmatmul.mubr.f32.gmra.mrb[0].mxu0 %v7645
    %v7647 = vpop.f32.mrb[0].mxu0
    %v7648 = vadd.f32 %v7463, %v7647
    %v7649 = vpop.f32.mrb[0].mxu0
    %v7650 = vand.u32 %v2583, 4294901760
    %v7651 = vsub.f32 %v2583, %v7650
    %v7652 = vand.u32 %v7651, 4294901760
    %v7653 = vsub.f32 %v7651, %v7652
    %v7654 = vand.u32 %v7653, 4294901760
    %7655 = vmatprep.mubr.f32.mxu0 %v7654
    %v7656 = vand.u32 %v2582, 4294901760
    %v7657 = vsub.f32 %v2582, %v7656
    %v7658 = vand.u32 %v7657, 4294901760
    %v7659 = vsub.f32 %v7657, %v7658
    %v7660 = vand.u32 %v7659, 4294901760
    %7661 = vmatmul.mubr.f32.gmra.mrb[0].mxu0 %v7660
    %v7662 = vpop.f32.mrb[0].mxu0
    %v7663 = vadd.f32 %v7470, %v7662
    %v7664 = vpop.f32.mrb[0].mxu0
    %v7665 = vand.u32 %v2587, 4294901760
    %v7666 = vsub.f32 %v2587, %v7665
    %v7667 = vand.u32 %v7666, 4294901760
    %v7668 = vsub.f32 %v7666, %v7667
    %v7669 = vand.u32 %v7668, 4294901760
    %7670 = vmatprep.mubr.f32.mxu0 %v7669
    %v7671 = vand.u32 %v2586, 4294901760
    %v7672 = vsub.f32 %v2586, %v7671
    %v7673 = vand.u32 %v7672, 4294901760
    %v7674 = vsub.f32 %v7672, %v7673
    %v7675 = vand.u32 %v7674, 4294901760
    %7676 = vmatmul.mubr.f32.gmra.mrb[0].mxu0 %v7675
    %v7677 = vpop.f32.mrb[0].mxu0
    %v7678 = vadd.f32 %v7477, %v7677
    %v7679 = vpop.f32.mrb[0].mxu0
    %v7680 = vand.u32 %v2591, 4294901760
    %v7681 = vsub.f32 %v2591, %v7680
    %v7682 = vand.u32 %v7681, 4294901760
    %v7683 = vsub.f32 %v7681, %v7682
    %v7684 = vand.u32 %v7683, 4294901760
    %7685 = vmatprep.mubr.f32.mxu0 %v7684
    %v7686 = vand.u32 %v2590, 4294901760
    %v7687 = vsub.f32 %v2590, %v7686
    %v7688 = vand.u32 %v7687, 4294901760
    %v7689 = vsub.f32 %v7687, %v7688
    %v7690 = vand.u32 %v7689, 4294901760
    %7691 = vmatmul.mubr.f32.gmra.mrb[0].mxu0 %v7690
    %v7692 = vpop.f32.mrb[0].mxu0
    %v7693 = vadd.f32 %v7484, %v7692
    %v7694 = vpop.f32.mrb[0].mxu0
    %v7695 = vand.u32 %v2595, 4294901760
    %v7696 = vsub.f32 %v2595, %v7695
    %v7697 = vand.u32 %v7696, 4294901760
    %v7698 = vsub.f32 %v7696, %v7697
    %v7699 = vand.u32 %v7698, 4294901760
    %7700 = vmatprep.mubr.f32.mxu0 %v7699
    %v7701 = vand.u32 %v2594, 4294901760
    %v7702 = vsub.f32 %v2594, %v7701
    %v7703 = vand.u32 %v7702, 4294901760
    %v7704 = vsub.f32 %v7702, %v7703
    %v7705 = vand.u32 %v7704, 4294901760
    %7706 = vmatmul.mubr.f32.gmra.mrb[0].mxu0 %v7705
    %v7707 = vpop.f32.mrb[0].mxu0
    %v7708 = vadd.f32 %v7491, %v7707
    %v7709 = vpop.f32.mrb[0].mxu0
    %7710 = vdwg.mxu0
    %7711 = vmatprep.subr.mxu0 0.0
    %v7712 = vand.u32 %v2694, 4294901760
    %v7713 = vsub.f32 %v2694, %v7712
    %v7714 = vand.u32 %v7713, 4294901760
    %v7715 = vsub.f32 %v7713, %v7714
    %v7716 = vand.u32 %v7715, 4294901760
    %7717 = vmatpush1.msra.mxu0 %v7716
    %7718 = vmatprep.subr.mxu0 0.0
    %v7719 = vand.u32 %v2697, 4294901760
    %v7720 = vsub.f32 %v2697, %v7719
    %v7721 = vand.u32 %v7720, 4294901760
    %v7722 = vsub.f32 %v7720, %v7721
    %v7723 = vand.u32 %v7722, 4294901760
    %7724 = vmatpush1.msra.mxu0 %v7723
    %7725 = vmatprep.subr.mxu0 0.0
    %v7726 = vand.u32 %v2700, 4294901760
    %v7727 = vsub.f32 %v2700, %v7726
    %v7728 = vand.u32 %v7727, 4294901760
    %v7729 = vsub.f32 %v7727, %v7728
    %v7730 = vand.u32 %v7729, 4294901760
    %7731 = vmatpush1.msra.mxu0 %v7730
    %7732 = vmatprep.subr.mxu0 0.0
    %v7733 = vand.u32 %v2703, 4294901760
    %v7734 = vsub.f32 %v2703, %v7733
    %v7735 = vand.u32 %v7734, 4294901760
    %v7736 = vsub.f32 %v7734, %v7735
    %v7737 = vand.u32 %v7736, 4294901760
    %7738 = vmatpush1.msra.mxu0 %v7737
    %7739 = vmatprep.subr.mxu0 0.0
    %v7740 = vand.u32 %v2706, 4294901760
    %v7741 = vsub.f32 %v2706, %v7740
    %v7742 = vand.u32 %v7741, 4294901760
    %v7743 = vsub.f32 %v7741, %v7742
    %v7744 = vand.u32 %v7743, 4294901760
    %7745 = vmatpush1.msra.mxu0 %v7744
    %7746 = vmatprep.subr.mxu0 0.0
    %v7747 = vand.u32 %v2709, 4294901760
    %v7748 = vsub.f32 %v2709, %v7747
    %v7749 = vand.u32 %v7748, 4294901760
    %v7750 = vsub.f32 %v7748, %v7749
    %v7751 = vand.u32 %v7750, 4294901760
    %7752 = vmatpush1.msra.mxu0 %v7751
    %7753 = vmatprep.subr.mxu0 0.0
    %v7754 = vand.u32 %v2712, 4294901760
    %v7755 = vsub.f32 %v2712, %v7754
    %v7756 = vand.u32 %v7755, 4294901760
    %v7757 = vsub.f32 %v7755, %v7756
    %v7758 = vand.u32 %v7757, 4294901760
    %7759 = vmatpush1.msra.mxu0 %v7758
    %7760 = vmatprep.subr.mxu0 0.0
    %v7761 = vand.u32 %v2715, 4294901760
    %v7762 = vsub.f32 %v2715, %v7761
    %v7763 = vand.u32 %v7762, 4294901760
    %v7764 = vsub.f32 %v7762, %v7763
    %v7765 = vand.u32 %v7764, 4294901760
    %7766 = vmatpush1.msra.mxu0 %v7765
    %7767 = vmatprep.subr.mxu0 0.0
    %v7768 = vand.u32 %v2718, 4294901760
    %v7769 = vsub.f32 %v2718, %v7768
    %v7770 = vand.u32 %v7769, 4294901760
    %v7771 = vsub.f32 %v7769, %v7770
    %v7772 = vand.u32 %v7771, 4294901760
    %7773 = vmatpush1.msra.mxu0 %v7772
    %7774 = vmatprep.subr.mxu0 0.0
    %v7775 = vand.u32 %v2721, 4294901760
    %v7776 = vsub.f32 %v2721, %v7775
    %v7777 = vand.u32 %v7776, 4294901760
    %v7778 = vsub.f32 %v7776, %v7777
    %v7779 = vand.u32 %v7778, 4294901760
    %7780 = vmatpush1.msra.mxu0 %v7779
    %7781 = vmatprep.subr.mxu0 0.0
    %v7782 = vand.u32 %v2724, 4294901760
    %v7783 = vsub.f32 %v2724, %v7782
    %v7784 = vand.u32 %v7783, 4294901760
    %v7785 = vsub.f32 %v7783, %v7784
    %v7786 = vand.u32 %v7785, 4294901760
    %7787 = vmatpush1.msra.mxu0 %v7786
    %7788 = vmatprep.subr.mxu0 0.0
    %v7789 = vand.u32 %v2727, 4294901760
    %v7790 = vsub.f32 %v2727, %v7789
    %v7791 = vand.u32 %v7790, 4294901760
    %v7792 = vsub.f32 %v7790, %v7791
    %v7793 = vand.u32 %v7792, 4294901760
    %7794 = vmatpush1.msra.mxu0 %v7793
    %7795 = vmatprep.subr.mxu0 0.0
    %v7796 = vand.u32 %v2730, 4294901760
    %v7797 = vsub.f32 %v2730, %v7796
    %v7798 = vand.u32 %v7797, 4294901760
    %v7799 = vsub.f32 %v7797, %v7798
    %v7800 = vand.u32 %v7799, 4294901760
    %7801 = vmatpush1.msra.mxu0 %v7800
    %7802 = vmatprep.subr.mxu0 0.0
    %v7803 = vand.u32 %v2733, 4294901760
    %v7804 = vsub.f32 %v2733, %v7803
    %v7805 = vand.u32 %v7804, 4294901760
    %v7806 = vsub.f32 %v7804, %v7805
    %v7807 = vand.u32 %v7806, 4294901760
    %7808 = vmatpush1.msra.mxu0 %v7807
    %7809 = vmatprep.subr.mxu0 0.0
    %v7810 = vand.u32 %v2736, 4294901760
    %v7811 = vsub.f32 %v2736, %v7810
    %v7812 = vand.u32 %v7811, 4294901760
    %v7813 = vsub.f32 %v7811, %v7812
    %v7814 = vand.u32 %v7813, 4294901760
    %7815 = vmatpush1.msra.mxu0 %v7814
    %7816 = vmatprep.subr.mxu0 0.0
    %v7817 = vand.u32 %v2739, 4294901760
    %v7818 = vsub.f32 %v2739, %v7817
    %v7819 = vand.u32 %v7818, 4294901760
    %v7820 = vsub.f32 %v7818, %v7819
    %v7821 = vand.u32 %v7820, 4294901760
    %7822 = vmatpush1.msra.mxu0 %v7821
    %7823 = vmatprep.subr.mxu0 0.0
    %v7824 = vand.u32 %v2742, 4294901760
    %v7825 = vsub.f32 %v2742, %v7824
    %v7826 = vand.u32 %v7825, 4294901760
    %v7827 = vsub.f32 %v7825, %v7826
    %v7828 = vand.u32 %v7827, 4294901760
    %7829 = vmatpush1.msra.mxu0 %v7828
    %7830 = vmatprep.subr.mxu0 0.0
    %v7831 = vand.u32 %v2745, 4294901760
    %v7832 = vsub.f32 %v2745, %v7831
    %v7833 = vand.u32 %v7832, 4294901760
    %v7834 = vsub.f32 %v7832, %v7833
    %v7835 = vand.u32 %v7834, 4294901760
    %7836 = vmatpush1.msra.mxu0 %v7835
    %7837 = vmatprep.subr.mxu0 0.0
    %v7838 = vand.u32 %v2748, 4294901760
    %v7839 = vsub.f32 %v2748, %v7838
    %v7840 = vand.u32 %v7839, 4294901760
    %v7841 = vsub.f32 %v7839, %v7840
    %v7842 = vand.u32 %v7841, 4294901760
    %7843 = vmatpush1.msra.mxu0 %v7842
    %7844 = vmatprep.subr.mxu0 0.0
    %v7845 = vand.u32 %v2751, 4294901760
    %v7846 = vsub.f32 %v2751, %v7845
    %v7847 = vand.u32 %v7846, 4294901760
    %v7848 = vsub.f32 %v7846, %v7847
    %v7849 = vand.u32 %v7848, 4294901760
    %7850 = vmatpush1.msra.mxu0 %v7849
    %7851 = vmatprep.subr.mxu0 0.0
    %v7852 = vand.u32 %v2754, 4294901760
    %v7853 = vsub.f32 %v2754, %v7852
    %v7854 = vand.u32 %v7853, 4294901760
    %v7855 = vsub.f32 %v7853, %v7854
    %v7856 = vand.u32 %v7855, 4294901760
    %7857 = vmatpush1.msra.mxu0 %v7856
    %7858 = vmatprep.subr.mxu0 0.0
    %v7859 = vand.u32 %v2757, 4294901760
    %v7860 = vsub.f32 %v2757, %v7859
    %v7861 = vand.u32 %v7860, 4294901760
    %v7862 = vsub.f32 %v7860, %v7861
    %v7863 = vand.u32 %v7862, 4294901760
    %7864 = vmatpush1.msra.mxu0 %v7863
    %7865 = vmatprep.subr.mxu0 0.0
    %v7866 = vand.u32 %v2760, 4294901760
    %v7867 = vsub.f32 %v2760, %v7866
    %v7868 = vand.u32 %v7867, 4294901760
    %v7869 = vsub.f32 %v7867, %v7868
    %v7870 = vand.u32 %v7869, 4294901760
    %7871 = vmatpush1.msra.mxu0 %v7870
    %7872 = vmatprep.subr.mxu0 0.0
    %v7873 = vand.u32 %v2763, 4294901760
    %v7874 = vsub.f32 %v2763, %v7873
    %v7875 = vand.u32 %v7874, 4294901760
    %v7876 = vsub.f32 %v7874, %v7875
    %v7877 = vand.u32 %v7876, 4294901760
    %7878 = vmatpush1.msra.mxu0 %v7877
    %7879 = vmatprep.subr.mxu0 0.0
    %v7880 = vand.u32 %v2766, 4294901760
    %v7881 = vsub.f32 %v2766, %v7880
    %v7882 = vand.u32 %v7881, 4294901760
    %v7883 = vsub.f32 %v7881, %v7882
    %v7884 = vand.u32 %v7883, 4294901760
    %7885 = vmatpush1.msra.mxu0 %v7884
    %7886 = vmatprep.subr.mxu0 0.0
    %v7887 = vand.u32 %v2769, 4294901760
    %v7888 = vsub.f32 %v2769, %v7887
    %v7889 = vand.u32 %v7888, 4294901760
    %v7890 = vsub.f32 %v7888, %v7889
    %v7891 = vand.u32 %v7890, 4294901760
    %7892 = vmatpush1.msra.mxu0 %v7891
    %7893 = vmatprep.subr.mxu0 0.0
    %v7894 = vand.u32 %v2772, 4294901760
    %v7895 = vsub.f32 %v2772, %v7894
    %v7896 = vand.u32 %v7895, 4294901760
    %v7897 = vsub.f32 %v7895, %v7896
    %v7898 = vand.u32 %v7897, 4294901760
    %7899 = vmatpush1.msra.mxu0 %v7898
    %7900 = vmatprep.subr.mxu0 0.0
    %v7901 = vand.u32 %v2775, 4294901760
    %v7902 = vsub.f32 %v2775, %v7901
    %v7903 = vand.u32 %v7902, 4294901760
    %v7904 = vsub.f32 %v7902, %v7903
    %v7905 = vand.u32 %v7904, 4294901760
    %7906 = vmatpush1.msra.mxu0 %v7905
    %7907 = vmatprep.subr.mxu0 0.0
    %v7908 = vand.u32 %v2778, 4294901760
    %v7909 = vsub.f32 %v2778, %v7908
    %v7910 = vand.u32 %v7909, 4294901760
    %v7911 = vsub.f32 %v7909, %v7910
    %v7912 = vand.u32 %v7911, 4294901760
    %7913 = vmatpush1.msra.mxu0 %v7912
    %7914 = vmatprep.subr.mxu0 0.0
    %v7915 = vand.u32 %v2781, 4294901760
    %v7916 = vsub.f32 %v2781, %v7915
    %v7917 = vand.u32 %v7916, 4294901760
    %v7918 = vsub.f32 %v7916, %v7917
    %v7919 = vand.u32 %v7918, 4294901760
    %7920 = vmatpush1.msra.mxu0 %v7919
    %7921 = vmatprep.subr.mxu0 0.0
    %v7922 = vand.u32 %v2784, 4294901760
    %v7923 = vsub.f32 %v2784, %v7922
    %v7924 = vand.u32 %v7923, 4294901760
    %v7925 = vsub.f32 %v7923, %v7924
    %v7926 = vand.u32 %v7925, 4294901760
    %7927 = vmatpush1.msra.mxu0 %v7926
    %7928 = vmatprep.subr.mxu0 0.0
    %v7929 = vand.u32 %v2787, 4294901760
    %v7930 = vsub.f32 %v2787, %v7929
    %v7931 = vand.u32 %v7930, 4294901760
    %v7932 = vsub.f32 %v7930, %v7931
    %v7933 = vand.u32 %v7932, 4294901760
    %7934 = vmatpush1.msra.mxu0 %v7933
    %v7935 = vand.u32 %v2567, 4294901760
    %7936 = vmatprep.mubr.f32.mxu0 %v7935
    %v7937 = vand.u32 %v2566, 4294901760
    %7938 = vmatmul.mubr.f32.gmra.mrb[0].mxu0 %v7937
    %v7939 = vpop.f32.mrb[0].mxu0
    %v7940 = vadd.f32 %v7603, %v7939
    %v7941 = vpop.f32.mrb[0].mxu0
    %v7942 = vand.u32 %v2571, 4294901760
    %7943 = vmatprep.mubr.f32.mxu0 %v7942
    %v7944 = vand.u32 %v2570, 4294901760
    %7945 = vmatmul.mubr.f32.gmra.mrb[0].mxu0 %v7944
    %v7946 = vpop.f32.mrb[0].mxu0
    %v7947 = vadd.f32 %v7618, %v7946
    %v7948 = vpop.f32.mrb[0].mxu0
    %v7949 = vand.u32 %v2575, 4294901760
    %7950 = vmatprep.mubr.f32.mxu0 %v7949
    %v7951 = vand.u32 %v2574, 4294901760
    %7952 = vmatmul.mubr.f32.gmra.mrb[0].mxu0 %v7951
    %v7953 = vpop.f32.mrb[0].mxu0
    %v7954 = vadd.f32 %v7633, %v7953
    %v7955 = vpop.f32.mrb[0].mxu0
    %v7956 = vand.u32 %v2579, 4294901760
    %7957 = vmatprep.mubr.f32.mxu0 %v7956
    %v7958 = vand.u32 %v2578, 4294901760
    %7959 = vmatmul.mubr.f32.gmra.mrb[0].mxu0 %v7958
    %v7960 = vpop.f32.mrb[0].mxu0
    %v7961 = vadd.f32 %v7648, %v7960
    %v7962 = vpop.f32.mrb[0].mxu0
    %v7963 = vand.u32 %v2583, 4294901760
    %7964 = vmatprep.mubr.f32.mxu0 %v7963
    %v7965 = vand.u32 %v2582, 4294901760
    %7966 = vmatmul.mubr.f32.gmra.mrb[0].mxu0 %v7965
    %v7967 = vpop.f32.mrb[0].mxu0
    %v7968 = vadd.f32 %v7663, %v7967
    %v7969 = vpop.f32.mrb[0].mxu0
    %v7970 = vand.u32 %v2587, 4294901760
    %7971 = vmatprep.mubr.f32.mxu0 %v7970
    %v7972 = vand.u32 %v2586, 4294901760
    %7973 = vmatmul.mubr.f32.gmra.mrb[0].mxu0 %v7972
    %v7974 = vpop.f32.mrb[0].mxu0
    %v7975 = vadd.f32 %v7678, %v7974
    %v7976 = vpop.f32.mrb[0].mxu0
    %v7977 = vand.u32 %v2591, 4294901760
    %7978 = vmatprep.mubr.f32.mxu0 %v7977
    %v7979 = vand.u32 %v2590, 4294901760
    %7980 = vmatmul.mubr.f32.gmra.mrb[0].mxu0 %v7979
    %v7981 = vpop.f32.mrb[0].mxu0
    %v7982 = vadd.f32 %v7693, %v7981
    %v7983 = vpop.f32.mrb[0].mxu0
    %v7984 = vand.u32 %v2595, 4294901760
    %7985 = vmatprep.mubr.f32.mxu0 %v7984
    %v7986 = vand.u32 %v2594, 4294901760
    %7987 = vmatmul.mubr.f32.gmra.mrb[0].mxu0 %v7986
    %v7988 = vpop.f32.mrb[0].mxu0
    %v7989 = vadd.f32 %v7708, %v7988
    %v7990 = vpop.f32.mrb[0].mxu0
    %7991 = vdwg.mxu0
    %7992 = vmatprep.subr.mxu0 0.0
    %v7993 = vand.u32 %v2694, 4294901760
    %v7994 = vsub.f32 %v2694, %v7993
    %7995 = vmatpush1.msra.mxu0 %v7994
    %7996 = vmatprep.subr.mxu0 0.0
    %v7997 = vand.u32 %v2697, 4294901760
    %v7998 = vsub.f32 %v2697, %v7997
    %7999 = vmatpush1.msra.mxu0 %v7998
    %8000 = vmatprep.subr.mxu0 0.0
    %v8001 = vand.u32 %v2700, 4294901760
    %v8002 = vsub.f32 %v2700, %v8001
    %8003 = vmatpush1.msra.mxu0 %v8002
    %8004 = vmatprep.subr.mxu0 0.0
    %v8005 = vand.u32 %v2703, 4294901760
    %v8006 = vsub.f32 %v2703, %v8005
    %8007 = vmatpush1.msra.mxu0 %v8006
    %8008 = vmatprep.subr.mxu0 0.0
    %v8009 = vand.u32 %v2706, 4294901760
    %v8010 = vsub.f32 %v2706, %v8009
    %8011 = vmatpush1.msra.mxu0 %v8010
    %8012 = vmatprep.subr.mxu0 0.0
    %v8013 = vand.u32 %v2709, 4294901760
    %v8014 = vsub.f32 %v2709, %v8013
    %8015 = vmatpush1.msra.mxu0 %v8014
    %8016 = vmatprep.subr.mxu0 0.0
    %v8017 = vand.u32 %v2712, 4294901760
    %v8018 = vsub.f32 %v2712, %v8017
    %8019 = vmatpush1.msra.mxu0 %v8018
    %8020 = vmatprep.subr.mxu0 0.0
    %v8021 = vand.u32 %v2715, 4294901760
    %v8022 = vsub.f32 %v2715, %v8021
    %8023 = vmatpush1.msra.mxu0 %v8022
    %8024 = vmatprep.subr.mxu0 0.0
    %v8025 = vand.u32 %v2718, 4294901760
    %v8026 = vsub.f32 %v2718, %v8025
    %8027 = vmatpush1.msra.mxu0 %v8026
    %8028 = vmatprep.subr.mxu0 0.0
    %v8029 = vand.u32 %v2721, 4294901760
    %v8030 = vsub.f32 %v2721, %v8029
    %8031 = vmatpush1.msra.mxu0 %v8030
    %8032 = vmatprep.subr.mxu0 0.0
    %v8033 = vand.u32 %v2724, 4294901760
    %v8034 = vsub.f32 %v2724, %v8033
    %8035 = vmatpush1.msra.mxu0 %v8034
    %8036 = vmatprep.subr.mxu0 0.0
    %v8037 = vand.u32 %v2727, 4294901760
    %v8038 = vsub.f32 %v2727, %v8037
    %8039 = vmatpush1.msra.mxu0 %v8038
    %8040 = vmatprep.subr.mxu0 0.0
    %v8041 = vand.u32 %v2730, 4294901760
    %v8042 = vsub.f32 %v2730, %v8041
    %8043 = vmatpush1.msra.mxu0 %v8042
    %8044 = vmatprep.subr.mxu0 0.0
    %v8045 = vand.u32 %v2733, 4294901760
    %v8046 = vsub.f32 %v2733, %v8045
    %8047 = vmatpush1.msra.mxu0 %v8046
    %8048 = vmatprep.subr.mxu0 0.0
    %v8049 = vand.u32 %v2736, 4294901760
    %v8050 = vsub.f32 %v2736, %v8049
    %8051 = vmatpush1.msra.mxu0 %v8050
    %8052 = vmatprep.subr.mxu0 0.0
    %v8053 = vand.u32 %v2739, 4294901760
    %v8054 = vsub.f32 %v2739, %v8053
    %8055 = vmatpush1.msra.mxu0 %v8054
    %8056 = vmatprep.subr.mxu0 0.0
    %v8057 = vand.u32 %v2742, 4294901760
    %v8058 = vsub.f32 %v2742, %v8057
    %8059 = vmatpush1.msra.mxu0 %v8058
    %8060 = vmatprep.subr.mxu0 0.0
    %v8061 = vand.u32 %v2745, 4294901760
    %v8062 = vsub.f32 %v2745, %v8061
    %8063 = vmatpush1.msra.mxu0 %v8062
    %8064 = vmatprep.subr.mxu0 0.0
    %v8065 = vand.u32 %v2748, 4294901760
    %v8066 = vsub.f32 %v2748, %v8065
    %8067 = vmatpush1.msra.mxu0 %v8066
    %8068 = vmatprep.subr.mxu0 0.0
    %v8069 = vand.u32 %v2751, 4294901760
    %v8070 = vsub.f32 %v2751, %v8069
    %8071 = vmatpush1.msra.mxu0 %v8070
    %8072 = vmatprep.subr.mxu0 0.0
    %v8073 = vand.u32 %v2754, 4294901760
    %v8074 = vsub.f32 %v2754, %v8073
    %8075 = vmatpush1.msra.mxu0 %v8074
    %8076 = vmatprep.subr.mxu0 0.0
    %v8077 = vand.u32 %v2757, 4294901760
    %v8078 = vsub.f32 %v2757, %v8077
    %8079 = vmatpush1.msra.mxu0 %v8078
    %8080 = vmatprep.subr.mxu0 0.0
    %v8081 = vand.u32 %v2760, 4294901760
    %v8082 = vsub.f32 %v2760, %v8081
    %8083 = vmatpush1.msra.mxu0 %v8082
    %8084 = vmatprep.subr.mxu0 0.0
    %v8085 = vand.u32 %v2763, 4294901760
    %v8086 = vsub.f32 %v2763, %v8085
    %8087 = vmatpush1.msra.mxu0 %v8086
    %8088 = vmatprep.subr.mxu0 0.0
    %v8089 = vand.u32 %v2766, 4294901760
    %v8090 = vsub.f32 %v2766, %v8089
    %8091 = vmatpush1.msra.mxu0 %v8090
    %8092 = vmatprep.subr.mxu0 0.0
    %v8093 = vand.u32 %v2769, 4294901760
    %v8094 = vsub.f32 %v2769, %v8093
    %8095 = vmatpush1.msra.mxu0 %v8094
    %8096 = vmatprep.subr.mxu0 0.0
    %v8097 = vand.u32 %v2772, 4294901760
    %v8098 = vsub.f32 %v2772, %v8097
    %8099 = vmatpush1.msra.mxu0 %v8098
    %8100 = vmatprep.subr.mxu0 0.0
    %v8101 = vand.u32 %v2775, 4294901760
    %v8102 = vsub.f32 %v2775, %v8101
    %8103 = vmatpush1.msra.mxu0 %v8102
    %8104 = vmatprep.subr.mxu0 0.0
    %v8105 = vand.u32 %v2778, 4294901760
    %v8106 = vsub.f32 %v2778, %v8105
    %8107 = vmatpush1.msra.mxu0 %v8106
    %8108 = vmatprep.subr.mxu0 0.0
    %v8109 = vand.u32 %v2781, 4294901760
    %v8110 = vsub.f32 %v2781, %v8109
    %8111 = vmatpush1.msra.mxu0 %v8110
    %8112 = vmatprep.subr.mxu0 0.0
    %v8113 = vand.u32 %v2784, 4294901760
    %v8114 = vsub.f32 %v2784, %v8113
    %8115 = vmatpush1.msra.mxu0 %v8114
    %8116 = vmatprep.subr.mxu0 0.0
    %v8117 = vand.u32 %v2787, 4294901760
    %v8118 = vsub.f32 %v2787, %v8117
    %8119 = vmatpush1.msra.mxu0 %v8118
    %v8120 = vand.u32 %v2567, 4294901760
    %v8121 = vsub.f32 %v2567, %v8120
    %8122 = vmatprep.mubr.f32.mxu0 %v8121
    %v8123 = vand.u32 %v2566, 4294901760
    %v8124 = vsub.f32 %v2566, %v8123
    %8125 = vmatmul.mubr.f32.gmra.mrb[0].mxu0 %v8124
    %v8126 = vpop.f32.mrb[0].mxu0
    %v8127 = vadd.f32 %v7940, %v8126
    %v8128 = vpop.f32.mrb[0].mxu0
    %v8129 = vand.u32 %v2571, 4294901760
    %v8130 = vsub.f32 %v2571, %v8129
    %8131 = vmatprep.mubr.f32.mxu0 %v8130
    %v8132 = vand.u32 %v2570, 4294901760
    %v8133 = vsub.f32 %v2570, %v8132
    %8134 = vmatmul.mubr.f32.gmra.mrb[0].mxu0 %v8133
    %v8135 = vpop.f32.mrb[0].mxu0
    %v8136 = vadd.f32 %v7947, %v8135
    %v8137 = vpop.f32.mrb[0].mxu0
    %v8138 = vand.u32 %v2575, 4294901760
    %v8139 = vsub.f32 %v2575, %v8138
    %8140 = vmatprep.mubr.f32.mxu0 %v8139
    %v8141 = vand.u32 %v2574, 4294901760
    %v8142 = vsub.f32 %v2574, %v8141
    %8143 = vmatmul.mubr.f32.gmra.mrb[0].mxu0 %v8142
    %v8144 = vpop.f32.mrb[0].mxu0
    %v8145 = vadd.f32 %v7954, %v8144
    %v8146 = vpop.f32.mrb[0].mxu0
    %v8147 = vand.u32 %v2579, 4294901760
    %v8148 = vsub.f32 %v2579, %v8147
    %8149 = vmatprep.mubr.f32.mxu0 %v8148
    %v8150 = vand.u32 %v2578, 4294901760
    %v8151 = vsub.f32 %v2578, %v8150
    %8152 = vmatmul.mubr.f32.gmra.mrb[0].mxu0 %v8151
    %v8153 = vpop.f32.mrb[0].mxu0
    %v8154 = vadd.f32 %v7961, %v8153
    %v8155 = vpop.f32.mrb[0].mxu0
    %v8156 = vand.u32 %v2583, 4294901760
    %v8157 = vsub.f32 %v2583, %v8156
    %8158 = vmatprep.mubr.f32.mxu0 %v8157
    %v8159 = vand.u32 %v2582, 4294901760
    %v8160 = vsub.f32 %v2582, %v8159
    %8161 = vmatmul.mubr.f32.gmra.mrb[0].mxu0 %v8160
    %v8162 = vpop.f32.mrb[0].mxu0
    %v8163 = vadd.f32 %v7968, %v8162
    %v8164 = vpop.f32.mrb[0].mxu0
    %v8165 = vand.u32 %v2587, 4294901760
    %v8166 = vsub.f32 %v2587, %v8165
    %8167 = vmatprep.mubr.f32.mxu0 %v8166
    %v8168 = vand.u32 %v2586, 4294901760
    %v8169 = vsub.f32 %v2586, %v8168
    %8170 = vmatmul.mubr.f32.gmra.mrb[0].mxu0 %v8169
    %v8171 = vpop.f32.mrb[0].mxu0
    %v8172 = vadd.f32 %v7975, %v8171
    %v8173 = vpop.f32.mrb[0].mxu0
    %v8174 = vand.u32 %v2591, 4294901760
    %v8175 = vsub.f32 %v2591, %v8174
    %8176 = vmatprep.mubr.f32.mxu0 %v8175
    %v8177 = vand.u32 %v2590, 4294901760
    %v8178 = vsub.f32 %v2590, %v8177
    %8179 = vmatmul.mubr.f32.gmra.mrb[0].mxu0 %v8178
    %v8180 = vpop.f32.mrb[0].mxu0
    %v8181 = vadd.f32 %v7982, %v8180
    %v8182 = vpop.f32.mrb[0].mxu0
    %v8183 = vand.u32 %v2595, 4294901760
    %v8184 = vsub.f32 %v2595, %v8183
    %8185 = vmatprep.mubr.f32.mxu0 %v8184
    %v8186 = vand.u32 %v2594, 4294901760
    %v8187 = vsub.f32 %v2594, %v8186
    %8188 = vmatmul.mubr.f32.gmra.mrb[0].mxu0 %v8187
    %v8189 = vpop.f32.mrb[0].mxu0
    %v8190 = vadd.f32 %v7989, %v8189
    %v8191 = vpop.f32.mrb[0].mxu0
    %8192 = vdwg.mxu0
    %8193 = vmatprep.subr.mxu0 0.0
    %v8194 = vand.u32 %v2694, 4294901760
    %8195 = vmatpush1.msra.mxu0 %v8194
    %8196 = vmatprep.subr.mxu0 0.0
    %v8197 = vand.u32 %v2697, 4294901760
    %8198 = vmatpush1.msra.mxu0 %v8197
    %8199 = vmatprep.subr.mxu0 0.0
    %v8200 = vand.u32 %v2700, 4294901760
    %8201 = vmatpush1.msra.mxu0 %v8200
    %8202 = vmatprep.subr.mxu0 0.0
    %v8203 = vand.u32 %v2703, 4294901760
    %8204 = vmatpush1.msra.mxu0 %v8203
    %8205 = vmatprep.subr.mxu0 0.0
    %v8206 = vand.u32 %v2706, 4294901760
    %8207 = vmatpush1.msra.mxu0 %v8206
    %8208 = vmatprep.subr.mxu0 0.0
    %v8209 = vand.u32 %v2709, 4294901760
    %8210 = vmatpush1.msra.mxu0 %v8209
    %8211 = vmatprep.subr.mxu0 0.0
    %v8212 = vand.u32 %v2712, 4294901760
    %8213 = vmatpush1.msra.mxu0 %v8212
    %8214 = vmatprep.subr.mxu0 0.0
    %v8215 = vand.u32 %v2715, 4294901760
    %8216 = vmatpush1.msra.mxu0 %v8215
    %8217 = vmatprep.subr.mxu0 0.0
    %v8218 = vand.u32 %v2718, 4294901760
    %8219 = vmatpush1.msra.mxu0 %v8218
    %8220 = vmatprep.subr.mxu0 0.0
    %v8221 = vand.u32 %v2721, 4294901760
    %8222 = vmatpush1.msra.mxu0 %v8221
    %8223 = vmatprep.subr.mxu0 0.0
    %v8224 = vand.u32 %v2724, 4294901760
    %8225 = vmatpush1.msra.mxu0 %v8224
    %8226 = vmatprep.subr.mxu0 0.0
    %v8227 = vand.u32 %v2727, 4294901760
    %8228 = vmatpush1.msra.mxu0 %v8227
    %8229 = vmatprep.subr.mxu0 0.0
    %v8230 = vand.u32 %v2730, 4294901760
    %8231 = vmatpush1.msra.mxu0 %v8230
    %8232 = vmatprep.subr.mxu0 0.0
    %v8233 = vand.u32 %v2733, 4294901760
    %8234 = vmatpush1.msra.mxu0 %v8233
    %8235 = vmatprep.subr.mxu0 0.0
    %v8236 = vand.u32 %v2736, 4294901760
    %8237 = vmatpush1.msra.mxu0 %v8236
    %8238 = vmatprep.subr.mxu0 0.0
    %v8239 = vand.u32 %v2739, 4294901760
    %8240 = vmatpush1.msra.mxu0 %v8239
    %8241 = vmatprep.subr.mxu0 0.0
    %v8242 = vand.u32 %v2742, 4294901760
    %8243 = vmatpush1.msra.mxu0 %v8242
    %8244 = vmatprep.subr.mxu0 0.0
    %v8245 = vand.u32 %v2745, 4294901760
    %8246 = vmatpush1.msra.mxu0 %v8245
    %8247 = vmatprep.subr.mxu0 0.0
    %v8248 = vand.u32 %v2748, 4294901760
    %8249 = vmatpush1.msra.mxu0 %v8248
    %8250 = vmatprep.subr.mxu0 0.0
    %v8251 = vand.u32 %v2751, 4294901760
    %8252 = vmatpush1.msra.mxu0 %v8251
    %8253 = vmatprep.subr.mxu0 0.0
    %v8254 = vand.u32 %v2754, 4294901760
    %8255 = vmatpush1.msra.mxu0 %v8254
    %8256 = vmatprep.subr.mxu0 0.0
    %v8257 = vand.u32 %v2757, 4294901760
    %8258 = vmatpush1.msra.mxu0 %v8257
    %8259 = vmatprep.subr.mxu0 0.0
    %v8260 = vand.u32 %v2760, 4294901760
    %8261 = vmatpush1.msra.mxu0 %v8260
    %8262 = vmatprep.subr.mxu0 0.0
    %v8263 = vand.u32 %v2763, 4294901760
    %8264 = vmatpush1.msra.mxu0 %v8263
    %8265 = vmatprep.subr.mxu0 0.0
    %v8266 = vand.u32 %v2766, 4294901760
    %8267 = vmatpush1.msra.mxu0 %v8266
    %8268 = vmatprep.subr.mxu0 0.0
    %v8269 = vand.u32 %v2769, 4294901760
    %8270 = vmatpush1.msra.mxu0 %v8269
    %8271 = vmatprep.subr.mxu0 0.0
    %v8272 = vand.u32 %v2772, 4294901760
    %8273 = vmatpush1.msra.mxu0 %v8272
    %8274 = vmatprep.subr.mxu0 0.0
    %v8275 = vand.u32 %v2775, 4294901760
    %8276 = vmatpush1.msra.mxu0 %v8275
    %8277 = vmatprep.subr.mxu0 0.0
    %v8278 = vand.u32 %v2778, 4294901760
    %8279 = vmatpush1.msra.mxu0 %v8278
    %8280 = vmatprep.subr.mxu0 0.0
    %v8281 = vand.u32 %v2781, 4294901760
    %8282 = vmatpush1.msra.mxu0 %v8281
    %8283 = vmatprep.subr.mxu0 0.0
    %v8284 = vand.u32 %v2784, 4294901760
    %8285 = vmatpush1.msra.mxu0 %v8284
    %8286 = vmatprep.subr.mxu0 0.0
    %v8287 = vand.u32 %v2787, 4294901760
    %8288 = vmatpush1.msra.mxu0 %v8287
    %v8289 = vand.u32 %v2567, 4294901760
    %v8290 = vsub.f32 %v2567, %v8289
    %v8291 = vand.u32 %v8290, 4294901760
    %8292 = vmatprep.mubr.f32.mxu0 %v8291
    %v8293 = vand.u32 %v2566, 4294901760
    %v8294 = vsub.f32 %v2566, %v8293
    %v8295 = vand.u32 %v8294, 4294901760
    %8296 = vmatmul.mubr.f32.gmra.mrb[0].mxu0 %v8295
    %v8297 = vpop.f32.mrb[0].mxu0
    %v8298 = vadd.f32 %v8127, %v8297
    %v8299 = vpop.f32.mrb[0].mxu0
    %v8300 = vand.u32 %v2571, 4294901760
    %v8301 = vsub.f32 %v2571, %v8300
    %v8302 = vand.u32 %v8301, 4294901760
    %8303 = vmatprep.mubr.f32.mxu0 %v8302
    %v8304 = vand.u32 %v2570, 4294901760
    %v8305 = vsub.f32 %v2570, %v8304
    %v8306 = vand.u32 %v8305, 4294901760
    %8307 = vmatmul.mubr.f32.gmra.mrb[0].mxu0 %v8306
    %v8308 = vpop.f32.mrb[0].mxu0
    %v8309 = vadd.f32 %v8136, %v8308
    %v8310 = vpop.f32.mrb[0].mxu0
    %v8311 = vand.u32 %v2575, 4294901760
    %v8312 = vsub.f32 %v2575, %v8311
    %v8313 = vand.u32 %v8312, 4294901760
    %8314 = vmatprep.mubr.f32.mxu0 %v8313
    %v8315 = vand.u32 %v2574, 4294901760
    %v8316 = vsub.f32 %v2574, %v8315
    %v8317 = vand.u32 %v8316, 4294901760
    %8318 = vmatmul.mubr.f32.gmra.mrb[0].mxu0 %v8317
    %v8319 = vpop.f32.mrb[0].mxu0
    %v8320 = vadd.f32 %v8145, %v8319
    %v8321 = vpop.f32.mrb[0].mxu0
    %v8322 = vand.u32 %v2579, 4294901760
    %v8323 = vsub.f32 %v2579, %v8322
    %v8324 = vand.u32 %v8323, 4294901760
    %8325 = vmatprep.mubr.f32.mxu0 %v8324
    %v8326 = vand.u32 %v2578, 4294901760
    %v8327 = vsub.f32 %v2578, %v8326
    %v8328 = vand.u32 %v8327, 4294901760
    %8329 = vmatmul.mubr.f32.gmra.mrb[0].mxu0 %v8328
    %v8330 = vpop.f32.mrb[0].mxu0
    %v8331 = vadd.f32 %v8154, %v8330
    %v8332 = vpop.f32.mrb[0].mxu0
    %v8333 = vand.u32 %v2583, 4294901760
    %v8334 = vsub.f32 %v2583, %v8333
    %v8335 = vand.u32 %v8334, 4294901760
    %8336 = vmatprep.mubr.f32.mxu0 %v8335
    %v8337 = vand.u32 %v2582, 4294901760
    %v8338 = vsub.f32 %v2582, %v8337
    %v8339 = vand.u32 %v8338, 4294901760
    %8340 = vmatmul.mubr.f32.gmra.mrb[0].mxu0 %v8339
    %v8341 = vpop.f32.mrb[0].mxu0
    %v8342 = vadd.f32 %v8163, %v8341
    %v8343 = vpop.f32.mrb[0].mxu0
    %v8344 = vand.u32 %v2587, 4294901760
    %v8345 = vsub.f32 %v2587, %v8344
    %v8346 = vand.u32 %v8345, 4294901760
    %8347 = vmatprep.mubr.f32.mxu0 %v8346
    %v8348 = vand.u32 %v2586, 4294901760
    %v8349 = vsub.f32 %v2586, %v8348
    %v8350 = vand.u32 %v8349, 4294901760
    %8351 = vmatmul.mubr.f32.gmra.mrb[0].mxu0 %v8350
    %v8352 = vpop.f32.mrb[0].mxu0
    %v8353 = vadd.f32 %v8172, %v8352
    %v8354 = vpop.f32.mrb[0].mxu0
    %v8355 = vand.u32 %v2591, 4294901760
    %v8356 = vsub.f32 %v2591, %v8355
    %v8357 = vand.u32 %v8356, 4294901760
    %8358 = vmatprep.mubr.f32.mxu0 %v8357
    %v8359 = vand.u32 %v2590, 4294901760
    %v8360 = vsub.f32 %v2590, %v8359
    %v8361 = vand.u32 %v8360, 4294901760
    %8362 = vmatmul.mubr.f32.gmra.mrb[0].mxu0 %v8361
    %v8363 = vpop.f32.mrb[0].mxu0
    %v8364 = vadd.f32 %v8181, %v8363
    %v8365 = vpop.f32.mrb[0].mxu0
    %v8366 = vand.u32 %v2595, 4294901760
    %v8367 = vsub.f32 %v2595, %v8366
    %v8368 = vand.u32 %v8367, 4294901760
    %8369 = vmatprep.mubr.f32.mxu0 %v8368
    %v8370 = vand.u32 %v2594, 4294901760
    %v8371 = vsub.f32 %v2594, %v8370
    %v8372 = vand.u32 %v8371, 4294901760
    %8373 = vmatmul.mubr.f32.gmra.mrb[0].mxu0 %v8372
    %v8374 = vpop.f32.mrb[0].mxu0
    %v8375 = vadd.f32 %v8190, %v8374
    %v8376 = vpop.f32.mrb[0].mxu0
    %8377 = vdwg.mxu0
    %8378 = vmatprep.subr.mxu0 0.0
    %v8379 = vand.u32 %v2694, 4294901760
    %v8380 = vsub.f32 %v2694, %v8379
    %v8381 = vand.u32 %v8380, 4294901760
    %8382 = vmatpush1.msra.mxu0 %v8381
    %8383 = vmatprep.subr.mxu0 0.0
    %v8384 = vand.u32 %v2697, 4294901760
    %v8385 = vsub.f32 %v2697, %v8384
    %v8386 = vand.u32 %v8385, 4294901760
    %8387 = vmatpush1.msra.mxu0 %v8386
    %8388 = vmatprep.subr.mxu0 0.0
    %v8389 = vand.u32 %v2700, 4294901760
    %v8390 = vsub.f32 %v2700, %v8389
    %v8391 = vand.u32 %v8390, 4294901760
    %8392 = vmatpush1.msra.mxu0 %v8391
    %8393 = vmatprep.subr.mxu0 0.0
    %v8394 = vand.u32 %v2703, 4294901760
    %v8395 = vsub.f32 %v2703, %v8394
    %v8396 = vand.u32 %v8395, 4294901760
    %8397 = vmatpush1.msra.mxu0 %v8396
    %8398 = vmatprep.subr.mxu0 0.0
    %v8399 = vand.u32 %v2706, 4294901760
    %v8400 = vsub.f32 %v2706, %v8399
    %v8401 = vand.u32 %v8400, 4294901760
    %8402 = vmatpush1.msra.mxu0 %v8401
    %8403 = vmatprep.subr.mxu0 0.0
    %v8404 = vand.u32 %v2709, 4294901760
    %v8405 = vsub.f32 %v2709, %v8404
    %v8406 = vand.u32 %v8405, 4294901760
    %8407 = vmatpush1.msra.mxu0 %v8406
    %8408 = vmatprep.subr.mxu0 0.0
    %v8409 = vand.u32 %v2712, 4294901760
    %v8410 = vsub.f32 %v2712, %v8409
    %v8411 = vand.u32 %v8410, 4294901760
    %8412 = vmatpush1.msra.mxu0 %v8411
    %8413 = vmatprep.subr.mxu0 0.0
    %v8414 = vand.u32 %v2715, 4294901760
    %v8415 = vsub.f32 %v2715, %v8414
    %v8416 = vand.u32 %v8415, 4294901760
    %8417 = vmatpush1.msra.mxu0 %v8416
    %8418 = vmatprep.subr.mxu0 0.0
    %v8419 = vand.u32 %v2718, 4294901760
    %v8420 = vsub.f32 %v2718, %v8419
    %v8421 = vand.u32 %v8420, 4294901760
    %8422 = vmatpush1.msra.mxu0 %v8421
    %8423 = vmatprep.subr.mxu0 0.0
    %v8424 = vand.u32 %v2721, 4294901760
    %v8425 = vsub.f32 %v2721, %v8424
    %v8426 = vand.u32 %v8425, 4294901760
    %8427 = vmatpush1.msra.mxu0 %v8426
    %8428 = vmatprep.subr.mxu0 0.0
    %v8429 = vand.u32 %v2724, 4294901760
    %v8430 = vsub.f32 %v2724, %v8429
    %v8431 = vand.u32 %v8430, 4294901760
    %8432 = vmatpush1.msra.mxu0 %v8431
    %8433 = vmatprep.subr.mxu0 0.0
    %v8434 = vand.u32 %v2727, 4294901760
    %v8435 = vsub.f32 %v2727, %v8434
    %v8436 = vand.u32 %v8435, 4294901760
    %8437 = vmatpush1.msra.mxu0 %v8436
    %8438 = vmatprep.subr.mxu0 0.0
    %v8439 = vand.u32 %v2730, 4294901760
    %v8440 = vsub.f32 %v2730, %v8439
    %v8441 = vand.u32 %v8440, 4294901760
    %8442 = vmatpush1.msra.mxu0 %v8441
    %8443 = vmatprep.subr.mxu0 0.0
    %v8444 = vand.u32 %v2733, 4294901760
    %v8445 = vsub.f32 %v2733, %v8444
    %v8446 = vand.u32 %v8445, 4294901760
    %8447 = vmatpush1.msra.mxu0 %v8446
    %8448 = vmatprep.subr.mxu0 0.0
    %v8449 = vand.u32 %v2736, 4294901760
    %v8450 = vsub.f32 %v2736, %v8449
    %v8451 = vand.u32 %v8450, 4294901760
    %8452 = vmatpush1.msra.mxu0 %v8451
    %8453 = vmatprep.subr.mxu0 0.0
    %v8454 = vand.u32 %v2739, 4294901760
    %v8455 = vsub.f32 %v2739, %v8454
    %v8456 = vand.u32 %v8455, 4294901760
    %8457 = vmatpush1.msra.mxu0 %v8456
    %8458 = vmatprep.subr.mxu0 0.0
    %v8459 = vand.u32 %v2742, 4294901760
    %v8460 = vsub.f32 %v2742, %v8459
    %v8461 = vand.u32 %v8460, 4294901760
    %8462 = vmatpush1.msra.mxu0 %v8461
    %8463 = vmatprep.subr.mxu0 0.0
    %v8464 = vand.u32 %v2745, 4294901760
    %v8465 = vsub.f32 %v2745, %v8464
    %v8466 = vand.u32 %v8465, 4294901760
    %8467 = vmatpush1.msra.mxu0 %v8466
    %8468 = vmatprep.subr.mxu0 0.0
    %v8469 = vand.u32 %v2748, 4294901760
    %v8470 = vsub.f32 %v2748, %v8469
    %v8471 = vand.u32 %v8470, 4294901760
    %8472 = vmatpush1.msra.mxu0 %v8471
    %8473 = vmatprep.subr.mxu0 0.0
    %v8474 = vand.u32 %v2751, 4294901760
    %v8475 = vsub.f32 %v2751, %v8474
    %v8476 = vand.u32 %v8475, 4294901760
    %8477 = vmatpush1.msra.mxu0 %v8476
    %8478 = vmatprep.subr.mxu0 0.0
    %v8479 = vand.u32 %v2754, 4294901760
    %v8480 = vsub.f32 %v2754, %v8479
    %v8481 = vand.u32 %v8480, 4294901760
    %8482 = vmatpush1.msra.mxu0 %v8481
    %8483 = vmatprep.subr.mxu0 0.0
    %v8484 = vand.u32 %v2757, 4294901760
    %v8485 = vsub.f32 %v2757, %v8484
    %v8486 = vand.u32 %v8485, 4294901760
    %8487 = vmatpush1.msra.mxu0 %v8486
    %8488 = vmatprep.subr.mxu0 0.0
    %v8489 = vand.u32 %v2760, 4294901760
    %v8490 = vsub.f32 %v2760, %v8489
    %v8491 = vand.u32 %v8490, 4294901760
    %8492 = vmatpush1.msra.mxu0 %v8491
    %8493 = vmatprep.subr.mxu0 0.0
    %v8494 = vand.u32 %v2763, 4294901760
    %v8495 = vsub.f32 %v2763, %v8494
    %v8496 = vand.u32 %v8495, 4294901760
    %8497 = vmatpush1.msra.mxu0 %v8496
    %8498 = vmatprep.subr.mxu0 0.0
    %v8499 = vand.u32 %v2766, 4294901760
    %v8500 = vsub.f32 %v2766, %v8499
    %v8501 = vand.u32 %v8500, 4294901760
    %8502 = vmatpush1.msra.mxu0 %v8501
    %8503 = vmatprep.subr.mxu0 0.0
    %v8504 = vand.u32 %v2769, 4294901760
    %v8505 = vsub.f32 %v2769, %v8504
    %v8506 = vand.u32 %v8505, 4294901760
    %8507 = vmatpush1.msra.mxu0 %v8506
    %8508 = vmatprep.subr.mxu0 0.0
    %v8509 = vand.u32 %v2772, 4294901760
    %v8510 = vsub.f32 %v2772, %v8509
    %v8511 = vand.u32 %v8510, 4294901760
    %8512 = vmatpush1.msra.mxu0 %v8511
    %8513 = vmatprep.subr.mxu0 0.0
    %v8514 = vand.u32 %v2775, 4294901760
    %v8515 = vsub.f32 %v2775, %v8514
    %v8516 = vand.u32 %v8515, 4294901760
    %8517 = vmatpush1.msra.mxu0 %v8516
    %8518 = vmatprep.subr.mxu0 0.0
    %v8519 = vand.u32 %v2778, 4294901760
    %v8520 = vsub.f32 %v2778, %v8519
    %v8521 = vand.u32 %v8520, 4294901760
    %8522 = vmatpush1.msra.mxu0 %v8521
    %8523 = vmatprep.subr.mxu0 0.0
    %v8524 = vand.u32 %v2781, 4294901760
    %v8525 = vsub.f32 %v2781, %v8524
    %v8526 = vand.u32 %v8525, 4294901760
    %8527 = vmatpush1.msra.mxu0 %v8526
    %8528 = vmatprep.subr.mxu0 0.0
    %v8529 = vand.u32 %v2784, 4294901760
    %v8530 = vsub.f32 %v2784, %v8529
    %v8531 = vand.u32 %v8530, 4294901760
    %8532 = vmatpush1.msra.mxu0 %v8531
    %8533 = vmatprep.subr.mxu0 0.0
    %v8534 = vand.u32 %v2787, 4294901760
    %v8535 = vsub.f32 %v2787, %v8534
    %v8536 = vand.u32 %v8535, 4294901760
    %8537 = vmatpush1.msra.mxu0 %v8536
    %v8538 = vand.u32 %v2567, 4294901760
    %8539 = vmatprep.mubr.f32.mxu0 %v8538
    %v8540 = vand.u32 %v2566, 4294901760
    %8541 = vmatmul.mubr.f32.gmra.mrb[0].mxu0 %v8540
    %v8542 = vpop.f32.mrb[0].mxu0
    %v8543 = vadd.f32 %v8298, %v8542
    %v8544 = vpop.f32.mrb[0].mxu0
    %v8545 = vand.u32 %v2571, 4294901760
    %8546 = vmatprep.mubr.f32.mxu0 %v8545
    %v8547 = vand.u32 %v2570, 4294901760
    %8548 = vmatmul.mubr.f32.gmra.mrb[0].mxu0 %v8547
    %v8549 = vpop.f32.mrb[0].mxu0
    %v8550 = vadd.f32 %v8309, %v8549
    %v8551 = vpop.f32.mrb[0].mxu0
    %v8552 = vand.u32 %v2575, 4294901760
    %8553 = vmatprep.mubr.f32.mxu0 %v8552
    %v8554 = vand.u32 %v2574, 4294901760
    %8555 = vmatmul.mubr.f32.gmra.mrb[0].mxu0 %v8554
    %v8556 = vpop.f32.mrb[0].mxu0
    %v8557 = vadd.f32 %v8320, %v8556
    %v8558 = vpop.f32.mrb[0].mxu0
    %v8559 = vand.u32 %v2579, 4294901760
    %8560 = vmatprep.mubr.f32.mxu0 %v8559
    %v8561 = vand.u32 %v2578, 4294901760
    %8562 = vmatmul.mubr.f32.gmra.mrb[0].mxu0 %v8561
    %v8563 = vpop.f32.mrb[0].mxu0
    %v8564 = vadd.f32 %v8331, %v8563
    %v8565 = vpop.f32.mrb[0].mxu0
    %v8566 = vand.u32 %v2583, 4294901760
    %8567 = vmatprep.mubr.f32.mxu0 %v8566
    %v8568 = vand.u32 %v2582, 4294901760
    %8569 = vmatmul.mubr.f32.gmra.mrb[0].mxu0 %v8568
    %v8570 = vpop.f32.mrb[0].mxu0
    %v8571 = vadd.f32 %v8342, %v8570
    %v8572 = vpop.f32.mrb[0].mxu0
    %v8573 = vand.u32 %v2587, 4294901760
    %8574 = vmatprep.mubr.f32.mxu0 %v8573
    %v8575 = vand.u32 %v2586, 4294901760
    %8576 = vmatmul.mubr.f32.gmra.mrb[0].mxu0 %v8575
    %v8577 = vpop.f32.mrb[0].mxu0
    %v8578 = vadd.f32 %v8353, %v8577
    %v8579 = vpop.f32.mrb[0].mxu0
    %v8580 = vand.u32 %v2591, 4294901760
    %8581 = vmatprep.mubr.f32.mxu0 %v8580
    %v8582 = vand.u32 %v2590, 4294901760
    %8583 = vmatmul.mubr.f32.gmra.mrb[0].mxu0 %v8582
    %v8584 = vpop.f32.mrb[0].mxu0
    %v8585 = vadd.f32 %v8364, %v8584
    %v8586 = vpop.f32.mrb[0].mxu0
    %v8587 = vand.u32 %v2595, 4294901760
    %8588 = vmatprep.mubr.f32.mxu0 %v8587
    %v8589 = vand.u32 %v2594, 4294901760
    %8590 = vmatmul.mubr.f32.gmra.mrb[0].mxu0 %v8589
    %v8591 = vpop.f32.mrb[0].mxu0
    %v8592 = vadd.f32 %v8375, %v8591
    %v8593 = vpop.f32.mrb[0].mxu0
    %8594 = vdwg.mxu0
    %8595 = vmatprep.subr.mxu0 0.0
    %v8596 = vand.u32 %v2694, 4294901760
    %8597 = vmatpush1.msra.mxu0 %v8596
    %8598 = vmatprep.subr.mxu0 0.0
    %v8599 = vand.u32 %v2697, 4294901760
    %8600 = vmatpush1.msra.mxu0 %v8599
    %8601 = vmatprep.subr.mxu0 0.0
    %v8602 = vand.u32 %v2700, 4294901760
    %8603 = vmatpush1.msra.mxu0 %v8602
    %8604 = vmatprep.subr.mxu0 0.0
    %v8605 = vand.u32 %v2703, 4294901760
    %8606 = vmatpush1.msra.mxu0 %v8605
    %8607 = vmatprep.subr.mxu0 0.0
    %v8608 = vand.u32 %v2706, 4294901760
    %8609 = vmatpush1.msra.mxu0 %v8608
    %8610 = vmatprep.subr.mxu0 0.0
    %v8611 = vand.u32 %v2709, 4294901760
    %8612 = vmatpush1.msra.mxu0 %v8611
    %8613 = vmatprep.subr.mxu0 0.0
    %v8614 = vand.u32 %v2712, 4294901760
    %8615 = vmatpush1.msra.mxu0 %v8614
    %8616 = vmatprep.subr.mxu0 0.0
    %v8617 = vand.u32 %v2715, 4294901760
    %8618 = vmatpush1.msra.mxu0 %v8617
    %8619 = vmatprep.subr.mxu0 0.0
    %v8620 = vand.u32 %v2718, 4294901760
    %8621 = vmatpush1.msra.mxu0 %v8620
    %8622 = vmatprep.subr.mxu0 0.0
    %v8623 = vand.u32 %v2721, 4294901760
    %8624 = vmatpush1.msra.mxu0 %v8623
    %8625 = vmatprep.subr.mxu0 0.0
    %v8626 = vand.u32 %v2724, 4294901760
    %8627 = vmatpush1.msra.mxu0 %v8626
    %8628 = vmatprep.subr.mxu0 0.0
    %v8629 = vand.u32 %v2727, 4294901760
    %8630 = vmatpush1.msra.mxu0 %v8629
    %8631 = vmatprep.subr.mxu0 0.0
    %v8632 = vand.u32 %v2730, 4294901760
    %8633 = vmatpush1.msra.mxu0 %v8632
    %8634 = vmatprep.subr.mxu0 0.0
    %v8635 = vand.u32 %v2733, 4294901760
    %8636 = vmatpush1.msra.mxu0 %v8635
    %8637 = vmatprep.subr.mxu0 0.0
    %v8638 = vand.u32 %v2736, 4294901760
    %8639 = vmatpush1.msra.mxu0 %v8638
    %8640 = vmatprep.subr.mxu0 0.0
    %v8641 = vand.u32 %v2739, 4294901760
    %8642 = vmatpush1.msra.mxu0 %v8641
    %8643 = vmatprep.subr.mxu0 0.0
    %v8644 = vand.u32 %v2742, 4294901760
    %8645 = vmatpush1.msra.mxu0 %v8644
    %8646 = vmatprep.subr.mxu0 0.0
    %v8647 = vand.u32 %v2745, 4294901760
    %8648 = vmatpush1.msra.mxu0 %v8647
    %8649 = vmatprep.subr.mxu0 0.0
    %v8650 = vand.u32 %v2748, 4294901760
    %8651 = vmatpush1.msra.mxu0 %v8650
    %8652 = vmatprep.subr.mxu0 0.0
    %v8653 = vand.u32 %v2751, 4294901760
    %8654 = vmatpush1.msra.mxu0 %v8653
    %8655 = vmatprep.subr.mxu0 0.0
    %v8656 = vand.u32 %v2754, 4294901760
    %8657 = vmatpush1.msra.mxu0 %v8656
    %8658 = vmatprep.subr.mxu0 0.0
    %v8659 = vand.u32 %v2757, 4294901760
    %8660 = vmatpush1.msra.mxu0 %v8659
    %8661 = vmatprep.subr.mxu0 0.0
    %v8662 = vand.u32 %v2760, 4294901760
    %8663 = vmatpush1.msra.mxu0 %v8662
    %8664 = vmatprep.subr.mxu0 0.0
    %v8665 = vand.u32 %v2763, 4294901760
    %8666 = vmatpush1.msra.mxu0 %v8665
    %8667 = vmatprep.subr.mxu0 0.0
    %v8668 = vand.u32 %v2766, 4294901760
    %8669 = vmatpush1.msra.mxu0 %v8668
    %8670 = vmatprep.subr.mxu0 0.0
    %v8671 = vand.u32 %v2769, 4294901760
    %8672 = vmatpush1.msra.mxu0 %v8671
    %8673 = vmatprep.subr.mxu0 0.0
    %v8674 = vand.u32 %v2772, 4294901760
    %8675 = vmatpush1.msra.mxu0 %v8674
    %8676 = vmatprep.subr.mxu0 0.0
    %v8677 = vand.u32 %v2775, 4294901760
    %8678 = vmatpush1.msra.mxu0 %v8677
    %8679 = vmatprep.subr.mxu0 0.0
    %v8680 = vand.u32 %v2778, 4294901760
    %8681 = vmatpush1.msra.mxu0 %v8680
    %8682 = vmatprep.subr.mxu0 0.0
    %v8683 = vand.u32 %v2781, 4294901760
    %8684 = vmatpush1.msra.mxu0 %v8683
    %8685 = vmatprep.subr.mxu0 0.0
    %v8686 = vand.u32 %v2784, 4294901760
    %8687 = vmatpush1.msra.mxu0 %v8686
    %8688 = vmatprep.subr.mxu0 0.0
    %v8689 = vand.u32 %v2787, 4294901760
    %8690 = vmatpush1.msra.mxu0 %v8689
    %v8691 = vand.u32 %v2567, 4294901760
    %8692 = vmatprep.mubr.f32.mxu0 %v8691
    %v8693 = vand.u32 %v2566, 4294901760
    %8694 = vmatmul.mubr.f32.gmra.mrb[0].mxu0 %v8693
    %v8695 = vpop.f32.mrb[0].mxu0
    %v8696 = vadd.f32 %v8543, %v8695
    %v8697 = vpop.f32.mrb[0].mxu0
    %v8698 = vand.u32 %v2571, 4294901760
    %8699 = vmatprep.mubr.f32.mxu0 %v8698
    %v8700 = vand.u32 %v2570, 4294901760
    %8701 = vmatmul.mubr.f32.gmra.mrb[0].mxu0 %v8700
    %v8702 = vpop.f32.mrb[0].mxu0
    %v8703 = vadd.f32 %v8550, %v8702
    %v8704 = vpop.f32.mrb[0].mxu0
    %v8705 = vand.u32 %v2575, 4294901760
    %8706 = vmatprep.mubr.f32.mxu0 %v8705
    %v8707 = vand.u32 %v2574, 4294901760
    %8708 = vmatmul.mubr.f32.gmra.mrb[0].mxu0 %v8707
    %v8709 = vpop.f32.mrb[0].mxu0
    %v8710 = vadd.f32 %v8557, %v8709
    %v8711 = vpop.f32.mrb[0].mxu0
    %v8712 = vand.u32 %v2579, 4294901760
    %8713 = vmatprep.mubr.f32.mxu0 %v8712
    %v8714 = vand.u32 %v2578, 4294901760
    %8715 = vmatmul.mubr.f32.gmra.mrb[0].mxu0 %v8714
    %v8716 = vpop.f32.mrb[0].mxu0
    %v8717 = vadd.f32 %v8564, %v8716
    %v8718 = vpop.f32.mrb[0].mxu0
    %v8719 = vand.u32 %v2583, 4294901760
    %8720 = vmatprep.mubr.f32.mxu0 %v8719
    %v8721 = vand.u32 %v2582, 4294901760
    %8722 = vmatmul.mubr.f32.gmra.mrb[0].mxu0 %v8721
    %v8723 = vpop.f32.mrb[0].mxu0
    %v8724 = vadd.f32 %v8571, %v8723
    %v8725 = vpop.f32.mrb[0].mxu0
    %v8726 = vand.u32 %v2587, 4294901760
    %8727 = vmatprep.mubr.f32.mxu0 %v8726
    %v8728 = vand.u32 %v2586, 4294901760
    %8729 = vmatmul.mubr.f32.gmra.mrb[0].mxu0 %v8728
    %v8730 = vpop.f32.mrb[0].mxu0
    %v8731 = vadd.f32 %v8578, %v8730
    %v8732 = vpop.f32.mrb[0].mxu0
    %v8733 = vand.u32 %v2591, 4294901760
    %8734 = vmatprep.mubr.f32.mxu0 %v8733
    %v8735 = vand.u32 %v2590, 4294901760
    %8736 = vmatmul.mubr.f32.gmra.mrb[0].mxu0 %v8735
    %v8737 = vpop.f32.mrb[0].mxu0
    %v8738 = vadd.f32 %v8585, %v8737
    %v8739 = vpop.f32.mrb[0].mxu0
    %v8740 = vand.u32 %v2595, 4294901760
    %8741 = vmatprep.mubr.f32.mxu0 %v8740
    %v8742 = vand.u32 %v2594, 4294901760
    %8743 = vmatmul.mubr.f32.gmra.mrb[0].mxu0 %v8742
    %v8744 = vpop.f32.mrb[0].mxu0
    %v8745 = vadd.f32 %v8592, %v8744
    %v8746 = vpop.f32.mrb[0].mxu0
    %8747 = vdwg.mxu0
    %v8748 = vmax.f32 %v6180, 0.0
    %v8749 = vmax.f32 %v6182, 0.0
    %v8750 = vmax.f32 %v8696, 0.0
    %v8751 = vmax.f32 %v6188, 0.0
    %v8752 = vmax.f32 %v6190, 0.0
    %v8753 = vmax.f32 %v8703, 0.0
    %v8754 = vmax.f32 %v6196, 0.0
    %v8755 = vmax.f32 %v6198, 0.0
    %v8756 = vmax.f32 %v8710, 0.0
    %v8757 = vmax.f32 %v6204, 0.0
    %v8758 = vmax.f32 %v6206, 0.0
    %v8759 = vmax.f32 %v8717, 0.0
    %v8760 = vmax.f32 %v6212, 0.0
    %v8761 = vmax.f32 %v6214, 0.0
    %v8762 = vmax.f32 %v8724, 0.0
    %v8763 = vmax.f32 %v6220, 0.0
    %v8764 = vmax.f32 %v6222, 0.0
    %v8765 = vmax.f32 %v8731, 0.0
    %v8766 = vmax.f32 %v6228, 0.0
    %v8767 = vmax.f32 %v6230, 0.0
    %v8768 = vmax.f32 %v8738, 0.0
    %v8769 = vmax.f32 %v6236, 0.0
    %v8770 = vmax.f32 %v6238, 0.0
    %v8771 = vmax.f32 %v8745, 0.0
    %v8773 = vlaneseq
    %v8774 = vshrl.u32 %v8773, 7
    %v8775 = vsub.s32 0, %v8774
    %v8776 = vrot.slane %v72, %v8775
    %v8777 = vlaneseq
    %v8778 = vshrl.u32 %v8777, 7
    %v8779 = vsub.s32 1, %v8778
    %v8780 = vrot.slane %v72, %v8779
    %v8781 = vlaneseq
    %v8782 = vshrl.u32 %v8781, 7
    %v8783 = vsub.s32 2, %v8782
    %v8784 = vrot.slane %v72, %v8783
    %v8788 = vmul.f32 %v8748, %v8776
    %v8789 = vmul.f32 %v8749, %v8780
    %v8790 = vmul.f32 %v8750, %v8784
    %v8791 = vmul.f32 %v8751, %v8776
    %v8792 = vmul.f32 %v8752, %v8780
    %v8793 = vmul.f32 %v8753, %v8784
    %v8794 = vmul.f32 %v8754, %v8776
    %v8795 = vmul.f32 %v8755, %v8780
    %v8796 = vmul.f32 %v8756, %v8784
    %v8797 = vmul.f32 %v8757, %v8776
    %v8798 = vmul.f32 %v8758, %v8780
    %v8799 = vmul.f32 %v8759, %v8784
    %v8800 = vmul.f32 %v8760, %v8776
    %v8801 = vmul.f32 %v8761, %v8780
    %v8802 = vmul.f32 %v8762, %v8784
    %v8803 = vmul.f32 %v8763, %v8776
    %v8804 = vmul.f32 %v8764, %v8780
    %v8805 = vmul.f32 %v8765, %v8784
    %v8806 = vmul.f32 %v8766, %v8776
    %v8807 = vmul.f32 %v8767, %v8780
    %v8808 = vmul.f32 %v8768, %v8784
    %v8809 = vmul.f32 %v8769, %v8776
    %v8810 = vmul.f32 %v8770, %v8780
    %v8811 = vmul.f32 %v8771, %v8784
    %v8812 = vadd.f32 %v8788, %v8789
    %v8813 = vadd.f32 %v8812, %v8790
    %8814 = vadd.xlane.f32.xlu0 %v8813
    %v8815 = vpop.xlane.xlu0 %8814
    %v8816 = vadd.f32 %v8791, %v8792
    %v8817 = vadd.f32 %v8816, %v8793
    %8818 = vadd.xlane.f32.xlu0 %v8817
    %v8819 = vpop.xlane.xlu0 %8818
    %v8820 = vadd.f32 %v8794, %v8795
    %v8821 = vadd.f32 %v8820, %v8796
    %8822 = vadd.xlane.f32.xlu0 %v8821
    %v8823 = vpop.xlane.xlu0 %8822
    %v8824 = vadd.f32 %v8797, %v8798
    %v8825 = vadd.f32 %v8824, %v8799
    %8826 = vadd.xlane.f32.xlu0 %v8825
    %v8827 = vpop.xlane.xlu0 %8826
    %v8828 = vadd.f32 %v8800, %v8801
    %v8829 = vadd.f32 %v8828, %v8802
    %8830 = vadd.xlane.f32.xlu0 %v8829
    %v8831 = vpop.xlane.xlu0 %8830
    %v8832 = vadd.f32 %v8803, %v8804
    %v8833 = vadd.f32 %v8832, %v8805
    %8834 = vadd.xlane.f32.xlu0 %v8833
    %v8835 = vpop.xlane.xlu0 %8834
    %v8836 = vadd.f32 %v8806, %v8807
    %v8837 = vadd.f32 %v8836, %v8808
    %8838 = vadd.xlane.f32.xlu0 %v8837
    %v8839 = vpop.xlane.xlu0 %8838
    %v8840 = vadd.f32 %v8809, %v8810
    %v8841 = vadd.f32 %v8840, %v8811
    %8842 = vadd.xlane.f32.xlu0 %v8841
    %v8843 = vpop.xlane.xlu0 %8842
    %v8844 = vstv %s74
    %v8845 = vadd.f32 %v8815, %v8844
    %v8846 = vadd.f32 %v8819, %v8844
    %v8847 = vadd.f32 %v8823, %v8844
    %v8848 = vadd.f32 %v8827, %v8844
    %v8849 = vadd.f32 %v8831, %v8844
    %v8850 = vadd.f32 %v8835, %v8844
    %v8851 = vadd.f32 %v8839, %v8844
    %v8852 = vadd.f32 %v8843, %v8844
    %v8861 = vlaneseq
    %v8862 = vand.u32 %v8861, 127
    %v8863 = vlaneseq
    %v8864 = vshrl.u32 %v8863, 7
    %v8865 = vsub.s32 %v8862, %v8864
    %v8866 = vrot.slane %v8845, %v8865
    %v8867 = vadd.s32 %v8862, 4294967288
    %v8868 = vlaneseq
    %v8869 = vshrl.u32 %v8868, 7
    %v8870 = vsub.s32 %v8867, %v8869
    %v8871 = vrot.slane %v8846, %v8870
    %vm8872 = vcmask 130112
    %v8873 = vsel %vm8872, %v8871, %v8866
    %v8874 = vadd.s32 %v8862, 4294967280
    %v8875 = vlaneseq
    %v8876 = vshrl.u32 %v8875, 7
    %v8877 = vsub.s32 %v8874, %v8876
    %v8878 = vrot.slane %v8847, %v8877
    %vm8879 = vcmask 195712
    %v8880 = vsel %vm8879, %v8878, %v8873
    %v8881 = vadd.s32 %v8862, 4294967272
    %v8882 = vlaneseq
    %v8883 = vshrl.u32 %v8882, 7
    %v8884 = vsub.s32 %v8881, %v8883
    %v8885 = vrot.slane %v8848, %v8884
    %vm8886 = vcmask 261312
    %v8887 = vsel %vm8886, %v8885, %v8880
    %v8888 = vadd.s32 %v8862, 4294967264
    %v8889 = vlaneseq
    %v8890 = vshrl.u32 %v8889, 7
    %v8891 = vsub.s32 %v8888, %v8890
    %v8892 = vrot.slane %v8849, %v8891
    %vm8893 = vcmask 326912
    %v8894 = vsel %vm8893, %v8892, %v8887
    %v8895 = vadd.s32 %v8862, 4294967256
    %v8896 = vlaneseq
    %v8897 = vshrl.u32 %v8896, 7
    %v8898 = vsub.s32 %v8895, %v8897
    %v8899 = vrot.slane %v8850, %v8898
    %vm8900 = vcmask 392512
    %v8901 = vsel %vm8900, %v8899, %v8894
    %v8902 = vadd.s32 %v8862, 4294967248
    %v8903 = vlaneseq
    %v8904 = vshrl.u32 %v8903, 7
    %v8905 = vsub.s32 %v8902, %v8904
    %v8906 = vrot.slane %v8851, %v8905
    %vm8907 = vcmask 458112
    %v8908 = vsel %vm8907, %v8906, %v8901
    %v8909 = vadd.s32 %v8862, 4294967240
    %v8910 = vlaneseq
    %v8911 = vshrl.u32 %v8910, 7
    %v8912 = vsub.s32 %v8909, %v8911
    %v8913 = vrot.slane %v8852, %v8912
    %vm8914 = vcmask 523712
    %v8915 = vsel %vm8914, %v8913, %v8908
    %vm8917 = vcmask 516096
    %8918 = vst.msk [vmem:[#allocation9] sm:$0x1] %vm8917, %v8915
    // Predicated region
    $region42: #{tpu_custom_call.1} parent=1 // pred_check
      _
    $region43: #{tpu_custom_call.1} parent=1 // pred_check_branch
      %8920 = sbr.rel (0) target = $region45
    $region44: #{tpu_custom_call.1} parent=1 // pred_region
      %s8922 = ssub.s32 16, 16
      %8923 = vsyncadd [#allocation5], %s8922
      %s8925 = sshll.u32 [#allocation9], 4
      %s8926 = int_to_ptr.vmem [resolvable:$true] %s8925
      %8928 = dma.vmem_to_hbm [thread:$0]  %s8926, 16, %s7, [#allocation5]
    $region45: #{tpu_custom_call.1} parent=1 // pred_fallthru
      _
    // Predicated region
    $region46: #{tpu_custom_call.1} parent=1 // pred_check
      _
    $region47: #{tpu_custom_call.1} parent=1 // pred_check_branch
      %8930 = sbr.rel (0) target = $region49
    $region48: #{tpu_custom_call.1} parent=1 // pred_region
      %8931 = dma.done [#allocation5], 16
    $region49: #{tpu_custom_call.1} parent=1 // pred_fallthru
      _
    %8932 = vsyncpa [#allocation4], 1
    %8933 = vsyncpa [#allocation7], 1
    %8934 = vsyncpa [#allocation5], 1

</llo_original>
